<compile_context>
chip_gen: v5e
topology: v5e:2x2
jax: 0.10.0
libtpu: 0.0.40
codegen_flags: <defaults>
</compile_context>

<pallas_src>
import math

import numpy as np
import jax
import jax.numpy as jnp
from jax.experimental import pallas as pl
from jax.experimental.pallas import tpu as pltpu

# ---------------- small Swin config (swin-tiny-like, scaled down) ----------------
IMG = 16          # input spatial size
PATCH = 4         # patch size -> 4x4 patch grid
IN_CH = 3         # RGB
EMBED = 32        # embed_dim
DEPTHS = (2, 2)   # two stages, 2 blocks each (2nd block of stage 0 is shifted)
NUM_HEADS = (2, 4)
WINDOW = 2        # window size
MLP_RATIO = 2
LN_EPS = 1e-5

VMEM = pltpu.MemorySpace.VMEM

_BIG_NEG = -1e9       # cross-window / cross-image pairs: exp() underflows to exactly 0.0
_SHIFT_MASK = -100.0  # HF Swin shifted-window mask value (kept bit-identical)


# =========================================================================
# static (host / numpy) construction of the dense per-block attention bias
# =========================================================================
def _relative_position_index(ws):
    coords = np.stack(np.meshgrid(np.arange(ws), np.arange(ws), indexing="ij"))
    flat = coords.reshape(2, -1)
    rel = flat[:, :, None] - flat[:, None, :]
    rel = rel.transpose(1, 2, 0).astype(np.int64)
    rel[:, :, 0] += ws - 1
    rel[:, :, 1] += ws - 1
    rel[:, :, 0] *= 2 * ws - 1
    return rel.sum(-1)                                     # (ws*ws, ws*ws)


def _dense_bias_layout(H, W, ws, shift):
    """(Shifted-)window attention re-expressed as dense attention over all H*W
    tokens in ORIGINAL token order: static (L, L) rel-pos index + additive mask."""
    L = H * W
    rpi = _relative_position_index(ws)
    img_mask = np.zeros((H, W), np.float32)
    if shift > 0:
        cnt = 0
        for hs in (slice(0, H - ws), slice(H - ws, H - shift), slice(H - shift, H)):
            for wsl in (slice(0, W - ws), slice(W - ws, W - shift), slice(W - shift, W)):
                img_mask[hs, wsl] = cnt
                cnt += 1
    idx = np.zeros((L, L), np.int64)
    add = np.full((L, L), _BIG_NEG, np.float32)
    for pq in range(L * L):
        pp, qq = divmod(pq, L)
        hp, wp = divmod(pp, W)
        hq, wq = divmod(qq, W)
        hps, wps = (hp - shift) % H, (wp - shift) % W      # coords after cyclic shift
        hqs, wqs = (hq - shift) % H, (wq - shift) % W
        if (hps // ws, wps // ws) != (hqs // ws, wqs // ws):
            continue                                       # different window -> _BIG_NEG
        rp = (hps % ws) * ws + (wps % ws)
        rq = (hqs % ws) * ws + (wqs % ws)
        idx[pp, qq] = rpi[rp, rq]
        masked = shift > 0 and img_mask[hps, wps] != img_mask[hqs, wqs]
        add[pp, qq] = _SHIFT_MASK if masked else 0.0
    return idx, add


def _build_attn_bias(rel_table, H, W, ws, shift, heads):
    """rel_table ((2*ws-1)^2, heads) -> dense (heads, L, L) attention bias."""
    idx, add = _dense_bias_layout(H, W, ws, shift)
    L = H * W
    gathered = jnp.take(rel_table, jnp.asarray(idx.reshape(-1)), axis=0)
    gathered = gathered.reshape(L, L, heads).transpose(2, 0, 1)   # (heads, L, L)
    add = jnp.asarray(add)[None, :, :]
    return jnp.where(add <= _BIG_NEG * 0.5, _BIG_NEG, gathered + add).astype(jnp.float32)


# =========================================================================
# parameters (deterministic synthetic)
# =========================================================================
class _Keys:
    def __init__(self, key):
        self._key = key

    def next(self):
        self._key, k = jax.random.split(self._key)
        return k


def _w(kg, shape):
    return 0.02 * jax.random.normal(kg.next(), shape, jnp.float32)


def _ones_row(n):
    return jnp.ones((1, n), jnp.float32)


def _zeros_row(n):
    return jnp.zeros((1, n), jnp.float32)


def init_params(key):
    # TODO(synk): synthetic weights stand in for the 'microsoft/swin-tiny' checkpoint
    # (no file / network access allowed in-script).
    kg = _Keys(key)
    dims = [EMBED * (2 ** i) for i in range(len(DEPTHS))]
    res = (IMG // PATCH, IMG // PATCH)

    p = {}
    # patch embedding: Conv2d(IN_CH, EMBED, k=PATCH, s=PATCH) == matmul over unfolded patches
    p["patch_w"] = _w(kg, (IN_CH * PATCH * PATCH, EMBED))
    p["patch_b"] = _zeros_row(EMBED)
    p["embed_ln_g"] = _ones_row(EMBED)
    p["embed_ln_b"] = _zeros_row(EMBED)

    stages = []
    for s, depth in enumerate(DEPTHS):
        dim = dims[s]
        heads = NUM_HEADS[s]
        ws = WINDOW if min(res) > WINDOW else min(res)
        blocks = []
        for bi in range(depth):
            shift = 0 if (bi % 2 == 0 or min(res) <= WINDOW) else WINDOW // 2
            qw, kw, vw = _w(kg, (dim, dim)), _w(kg, (dim, dim)), _w(kg, (dim, dim))
            rel_table = _w(kg, ((2 * ws - 1) ** 2, heads))
            blocks.append({
                "ln1_g": _ones_row(dim), "ln1_b": _zeros_row(dim),
                "qkv_w": jnp.concatenate([qw, kw, vw], axis=1),      # fused QKV weight
                "qkv_b": _zeros_row(3 * dim),
                "proj_w": _w(kg, (dim, dim)), "proj_b": _zeros_row(dim),
                # window partition / shift / rel-pos bias folded into one static
                # dense bias over the full (L x L) token grid of this stage.
                "attn_bias": _build_attn_bias(rel_table, res[0], res[1], ws, shift, heads),
                "ln2_g": _ones_row(dim), "ln2_b": _zeros_row(dim),
                "fc1_w": _w(kg, (dim, MLP_RATIO * dim)), "fc1_b": _zeros_row(MLP_RATIO * dim),
                "fc2_w": _w(kg, (MLP_RATIO * dim, dim)), "fc2_b": _zeros_row(dim),
            })
        stage = {"blocks": blocks}
        if s < len(DEPTHS) - 1:                  # SwinPatchMerging between stages
            stage["merge_norm_g"] = _ones_row(4 * dim)
            stage["merge_norm_b"] = _zeros_row(4 * dim)
            stage["merge_w"] = _w(kg, (4 * dim, 2 * dim))  # Linear(4C, 2C, bias=False)
            res = (res[0] // 2, res[1] // 2)
        stages.append(stage)
    p["stages"] = stages

    p["final_ln_g"] = _ones_row(dims[-1])
    p["final_ln_b"] = _zeros_row(dims[-1])

    # external SwinPatchMerging (downsample_last=True), dim = last stage dim
    last_dim = dims[-1]
    p["ds_norm_g"] = _ones_row(4 * last_dim)
    p["ds_norm_b"] = _zeros_row(4 * last_dim)
    p["ds_w"] = _w(kg, (4 * last_dim, 2 * last_dim))
    return p


# =========================================================================
# batch-derived static helpers (built in the wrapper, tiny constants)
# =========================================================================
def _block_diag_bias(bias, B):
    """(heads, L, L) per-image bias -> (heads, B*L, B*L) block-diagonal bias.
    Off-diagonal (cross-image) blocks get _BIG_NEG -> softmax prob exactly 0."""
    heads, L, _ = bias.shape
    out = jnp.full((heads, B * L, B * L), _BIG_NEG, jnp.float32)
    for b in range(B):
        out = out.at[:, b * L:(b + 1) * L, b * L:(b + 1) * L].set(bias)
    return out


def _merge_select(B, H, W):
    """4 static 0/1 selection matrices (4, B*H*W/4, B*H*W) so the 2x2 neighborhood
    gather of SwinPatchMerging becomes 4 matmuls (HF order: f0,f1,f2,f3)."""
    Hm, Wm = H // 2, W // 2
    Lin, Lout = H * W, Hm * Wm
    sel = np.zeros((4, B * Lout, B * Lin), np.float32)
    offs = [(0, 0), (1, 0), (0, 1), (1, 1)]
    for k, (dh, dw) in enumerate(offs):
        for b in range(B):
            for i in range(Hm):
                for j in range(Wm):
                    r = b * Lout + i * Wm + j
                    c = b * Lin + (2 * i + dh) * W + (2 * j + dw)
                    sel[k, r, c] = 1.0
    return jnp.asarray(sel)


def _pool_matrix(B, L):
    """(B, B*L) averaging matrix: adaptive-avg pool over each image's tokens."""
    m = np.zeros((B, B * L), np.float32)
    for b in range(B):
        m[b, b * L:(b + 1) * L] = 1.0 / L
    return jnp.asarray(m)


# =========================================================================
# in-kernel helpers (all values stay 2-D and VMEM/vreg-resident)
# =========================================================================
def _ln(x, g_ref, b_ref, eps=LN_EPS):
    mu = jnp.mean(x, axis=-1, keepdims=True)
    var = jnp.mean(jnp.square(x - mu), axis=-1, keepdims=True)
    return (x - mu) * jax.lax.rsqrt(var + eps) * g_ref[...] + b_ref[...]


def _linear(x, w_ref, b_ref=None):
    y = jnp.dot(x, w_ref[...], preferred_element_type=jnp.float32)
    if b_ref is not None:
        y = y + b_ref[...]
    return y


def _erf(x):
    # TODO(synk): exact lax.erf lowering inside Mosaic is not relied upon; use
    # Abramowitz-Stegun 7.1.26 (|err| <= 1.5e-7, f32-level exact) built from exp.
    p = 0.3275911
    a1, a2, a3, a4, a5 = 0.254829592, -0.284496736, 1.421413741, -1.453152027, 1.061405429
    ax = jnp.abs(x)
    t = 1.0 / (1.0 + p * ax)
    poly = ((((a5 * t + a4) * t + a3) * t + a2) * t + a1) * t
    y = 1.0 - poly * jnp.exp(-(ax * ax))
    return jnp.where(x < 0.0, -y, y)


def _gelu(x):
    return 0.5 * x * (1.0 + _erf(x * (1.0 / math.sqrt(2.0))))


def _swin_block(x, blk, C, heads):
    """One Swin block on the batched token matrix: (B*L, C) -> (B*L, C).
    Windowing / cyclic shift / batching live entirely in the static block-diagonal
    dense attention bias, so this is plain 2-D math on full tiles."""
    Dh = C // heads
    scale = 1.0 / math.sqrt(Dh)

    shortcut = x
    h = _ln(x, blk["ln1_g"], blk["ln1_b"])
    qkv = _linear(h, blk["qkv_w"], blk["qkv_b"])          # (B*L, 3C) fused QKV
    ctx_parts = []
    for hd in range(heads):                               # 2 or 4, unrolled at trace time
        q = qkv[:, hd * Dh:(hd + 1) * Dh]
        k = qkv[:, C + hd * Dh:C + (hd + 1) * Dh]
        v = qkv[:, 2 * C + hd * Dh:2 * C + (hd + 1) * Dh]
        s = jax.lax.dot_general(q, k, (((1,), (1,)), ((), ())),
                                preferred_element_type=jnp.float32) * scale   # (BL, BL)
        s = s + blk["attn_bias"][hd]                      # rel-pos + window + batch mask
        s = s - jnp.max(s, axis=-1, keepdims=True)
        e = jnp.exp(s)
        probs = e / jnp.sum(e, axis=-1, keepdims=True)
        ctx_parts.append(jnp.dot(probs, v, preferred_element_type=jnp.float32))  # (BL, Dh)
    ctx = jnp.concatenate(ctx_parts, axis=-1)             # (B*L, C)
    x = shortcut + _linear(ctx, blk["proj_w"], blk["proj_b"])

    # MLP: LN -> fc1 -> GELU -> fc2, residual
    y = _ln(x, blk["ln2_g"], blk["ln2_b"])
    y = _linear(y, blk["fc1_w"], blk["fc1_b"])
    y = _gelu(y)
    y = _linear(y, blk["fc2_w"], blk["fc2_b"])
    return x + y


def _patch_merge(x, sel_ref, g_ref, b_ref, w_ref):
    """HF SwinPatchMerging on the batched token matrix: (B*H*W, C) -> (B*H*W/4, 2C).
    2x2 neighborhood gather = 4 static selection matmuls (MXU), then LN(4C) and a
    bias-free Linear(4C, 2C)."""
    parts = [jnp.dot(sel_ref[k], x, preferred_element_type=jnp.float32) for k in range(4)]
    merged = jnp.concatenate(parts, axis=-1)              # (B*H*W/4, 4C)
    merged = _ln(merged, g_ref, b_ref)
    return jnp.dot(merged, w_ref[...], preferred_element_type=jnp.float32)


# =========================================================================
# the single fused forward kernel (one invocation == whole batch)
# =========================================================================
def _make_kernel(treedef, n_leaves):
    def kernel(patches_ref, *rest):
        params = jax.tree_util.tree_unflatten(treedef, list(rest[:n_leaves]))
        hs0_ref, hs1_ref, hs2_ref, last_ref, pool_ref, ds_ref = rest[n_leaves:]

        # ---- patch embedding (conv-as-matmul) + LN ----
        x = _linear(patches_ref[...], params["patch_w"], params["patch_b"])
        x = _ln(x, params["embed_ln_g"], params["embed_ln_b"])            # (B*16, 32)
        hs0_ref[...] = x

        # ---- stage 0: two blocks at 4x4 / C=32 / 2 heads (second block shifted) ----
        st0 = params["stages"][0]
        for blk in st0["blocks"]:
            x = _swin_block(x, blk, C=EMBED, heads=NUM_HEADS[0])
        x = _patch_merge(x, params["merge0_sel"], st0["merge_norm_g"],
                         st0["merge_norm_b"], st0["merge_w"])             # (B*4, 64)
        hs1_ref[...] = x

        # ---- stage 1: two blocks at 2x2 / C=64 / 4 heads (no shift possible) ----
        st1 = params["stages"][1]
        for blk in st1["blocks"]:
            x = _swin_block(x, blk, C=2 * EMBED, heads=NUM_HEADS[1])
        hs2_ref[...] = x                                                  # (B*4, 64)

        # ---- SwinModel tail: final LayerNorm + adaptive-avg pooler ----
        last = _ln(x, params["final_ln_g"], params["final_ln_b"])
        last_ref[...] = last
        pool_ref[...] = jnp.dot(params["pool_mat"][...], last,
                                preferred_element_type=jnp.float32)       # (B, 64)

        # ---- external SwinPatchMerging (downsample_last=True) on pre-LN output ----
        ds_ref[...] = _patch_merge(x, params["ds_sel"], params["ds_norm_g"],
                                   params["ds_norm_b"], params["ds_w"])   # (B, 128)

    return kernel


def swin_forward(params, pixel_values):
    """pixel_values: (B, 3, 16, 16) NCHW.  Whole forward = ONE pallas_call, no grid."""
    B = pixel_values.shape[0]
    Hp = Wp = IMG // PATCH                                  # 4x4 patch grid
    L0, C0 = Hp * Wp, EMBED                                 # (16, 32)
    L1, C1 = L0 // 4, 2 * EMBED                             # (4, 64)
    PF = IN_CH * PATCH * PATCH                              # 48

    # stride==kernel conv == unfold: the only non-Pallas data op in the forward.
    patches = (pixel_values
               .reshape(B, IN_CH, Hp, PATCH, Wp, PATCH)
               .transpose(0, 2, 4, 1, 3, 5)
               .reshape(B * L0, PF))

    # batch-derived static constants: block-diag attention biases, merge selection
    # matrices, pooling matrix (all tiny, computed at trace time).
    call_params = dict(params)
    stages = []
    for stage in params["stages"]:
        blocks = []
        for blk in stage["blocks"]:
            nb = dict(blk)
            nb["attn_bias"] = _block_diag_bias(blk["attn_bias"], B)
            blocks.append(nb)
        ns = dict(stage)
        ns["blocks"] = blocks
        stages.append(ns)
    call_params["stages"] = stages
    call_params["merge0_sel"] = _merge_select(B, Hp, Wp)          # (4, B*4, B*16)
    call_params["ds_sel"] = _merge_select(B, Hp // 2, Wp // 2)    # (4, B*1, B*4)
    call_params["pool_mat"] = _pool_matrix(B, L1)                 # (B, B*4)

    leaves, treedef = jax.tree_util.tree_flatten(call_params)
    n_leaves = len(leaves)

    out_shape = (
        jax.ShapeDtypeStruct((B * L0, C0), jnp.float32),     # hidden_states[0]
        jax.ShapeDtypeStruct((B * L1, C1), jnp.float32),     # hidden_states[1]
        jax.ShapeDtypeStruct((B * L1, C1), jnp.float32),     # hidden_states[2]
        jax.ShapeDtypeStruct((B * L1, C1), jnp.float32),     # last_hidden_state
        jax.ShapeDtypeStruct((B, C1), jnp.float32),          # pooler_output
        jax.ShapeDtypeStruct((B, 2 * C1), jnp.float32),      # out_downsampled
    )
    vmem_spec = pl.BlockSpec(memory_space=VMEM)

    hs0, hs1, hs2, last, pooled, ds = pl.pallas_call(
        _make_kernel(treedef, n_leaves),
        out_shape=out_shape,
        in_specs=[vmem_spec] * (1 + n_leaves),               # everything VMEM-resident
        out_specs=(vmem_spec,) * 6,
    )(patches, *leaves)

    out = {
        "last_hidden_state": last.reshape(B, L1, C1),        # (B, 4, 64)
        "pooler_output": pooled,                             # (B, 64)
        "hidden_states": (hs0.reshape(B, L0, C0),            # (B, 16, 32)
                          hs1.reshape(B, L1, C1),            # (B, 4, 64)
                          hs2.reshape(B, L1, C1)),           # (B, 4, 64)
    }
    return out, ds.reshape(B, 1, 2 * C1)                     # out_downsampled: (B, 1, 128)


if __name__ == "__main__":
    key = jax.random.PRNGKey(0)
    pkey, xkey = jax.random.split(key)
    params = init_params(pkey)
    x = jax.random.normal(xkey, (2, IN_CH, IMG, IMG), jnp.float32)   # NCHW like PyTorch

    fwd = jax.jit(swin_forward)
    out, out_downsampled = fwd(params, x)
    jax.block_until_ready((out, out_downsampled))

    assert out["last_hidden_state"].shape == (2, 4, 64)
    assert out["pooler_output"].shape == (2, 64)
    assert out["hidden_states"][0].shape == (2, 16, 32)
    assert out["hidden_states"][1].shape == (2, 4, 64)
    assert out["hidden_states"][2].shape == (2, 4, 64)
    assert out_downsampled.shape == (2, 1, 128)
    assert bool(jnp.isfinite(out["last_hidden_state"]).all())
    assert bool(jnp.isfinite(out["pooler_output"]).all())
    assert bool(jnp.isfinite(out_downsampled).all())
    print("KERNEL_OK")
</pallas_src>

<mosaic_0001>
module attributes {stable_mosaic.version = 11 : i64} {
  func.func @kernel(%arg0: memref<32x48xf32, #tpu.memory_space<vmem>>, %arg1: memref<1x256xf32, #tpu.memory_space<vmem>>, %arg2: memref<1x256xf32, #tpu.memory_space<vmem>>, %arg3: memref<4x2x8xf32, #tpu.memory_space<vmem>>, %arg4: memref<256x128xf32, #tpu.memory_space<vmem>>, %arg5: memref<1x32xf32, #tpu.memory_space<vmem>>, %arg6: memref<1x32xf32, #tpu.memory_space<vmem>>, %arg7: memref<1x64xf32, #tpu.memory_space<vmem>>, %arg8: memref<1x64xf32, #tpu.memory_space<vmem>>, %arg9: memref<4x8x32xf32, #tpu.memory_space<vmem>>, %arg10: memref<1x32xf32, #tpu.memory_space<vmem>>, %arg11: memref<48x32xf32, #tpu.memory_space<vmem>>, %arg12: memref<2x8xf32, #tpu.memory_space<vmem>>, %arg13: memref<2x32x32xf32, #tpu.memory_space<vmem>>, %arg14: memref<1x64xf32, #tpu.memory_space<vmem>>, %arg15: memref<32x64xf32, #tpu.memory_space<vmem>>, %arg16: memref<1x32xf32, #tpu.memory_space<vmem>>, %arg17: memref<64x32xf32, #tpu.memory_space<vmem>>, %arg18: memref<1x32xf32, #tpu.memory_space<vmem>>, %arg19: memref<1x32xf32, #tpu.memory_space<vmem>>, %arg20: memref<1x32xf32, #tpu.memory_space<vmem>>, %arg21: memref<1x32xf32, #tpu.memory_space<vmem>>, %arg22: memref<1x32xf32, #tpu.memory_space<vmem>>, %arg23: memref<32x32xf32, #tpu.memory_space<vmem>>, %arg24: memref<1x96xf32, #tpu.memory_space<vmem>>, %arg25: memref<32x96xf32, #tpu.memory_space<vmem>>, %arg26: memref<2x32x32xf32, #tpu.memory_space<vmem>>, %arg27: memref<1x64xf32, #tpu.memory_space<vmem>>, %arg28: memref<32x64xf32, #tpu.memory_space<vmem>>, %arg29: memref<1x32xf32, #tpu.memory_space<vmem>>, %arg30: memref<64x32xf32, #tpu.memory_space<vmem>>, %arg31: memref<1x32xf32, #tpu.memory_space<vmem>>, %arg32: memref<1x32xf32, #tpu.memory_space<vmem>>, %arg33: memref<1x32xf32, #tpu.memory_space<vmem>>, %arg34: memref<1x32xf32, #tpu.memory_space<vmem>>, %arg35: memref<1x32xf32, #tpu.memory_space<vmem>>, %arg36: memref<32x32xf32, #tpu.memory_space<vmem>>, %arg37: memref<1x96xf32, #tpu.memory_space<vmem>>, %arg38: memref<32x96xf32, #tpu.memory_space<vmem>>, %arg39: memref<1x128xf32, #tpu.memory_space<vmem>>, %arg40: memref<1x128xf32, #tpu.memory_space<vmem>>, %arg41: memref<128x64xf32, #tpu.memory_space<vmem>>, %arg42: memref<4x8x8xf32, #tpu.memory_space<vmem>>, %arg43: memref<1x128xf32, #tpu.memory_space<vmem>>, %arg44: memref<64x128xf32, #tpu.memory_space<vmem>>, %arg45: memref<1x64xf32, #tpu.memory_space<vmem>>, %arg46: memref<128x64xf32, #tpu.memory_space<vmem>>, %arg47: memref<1x64xf32, #tpu.memory_space<vmem>>, %arg48: memref<1x64xf32, #tpu.memory_space<vmem>>, %arg49: memref<1x64xf32, #tpu.memory_space<vmem>>, %arg50: memref<1x64xf32, #tpu.memory_space<vmem>>, %arg51: memref<1x64xf32, #tpu.memory_space<vmem>>, %arg52: memref<64x64xf32, #tpu.memory_space<vmem>>, %arg53: memref<1x192xf32, #tpu.memory_space<vmem>>, %arg54: memref<64x192xf32, #tpu.memory_space<vmem>>, %arg55: memref<4x8x8xf32, #tpu.memory_space<vmem>>, %arg56: memref<1x128xf32, #tpu.memory_space<vmem>>, %arg57: memref<64x128xf32, #tpu.memory_space<vmem>>, %arg58: memref<1x64xf32, #tpu.memory_space<vmem>>, %arg59: memref<128x64xf32, #tpu.memory_space<vmem>>, %arg60: memref<1x64xf32, #tpu.memory_space<vmem>>, %arg61: memref<1x64xf32, #tpu.memory_space<vmem>>, %arg62: memref<1x64xf32, #tpu.memory_space<vmem>>, %arg63: memref<1x64xf32, #tpu.memory_space<vmem>>, %arg64: memref<1x64xf32, #tpu.memory_space<vmem>>, %arg65: memref<64x64xf32, #tpu.memory_space<vmem>>, %arg66: memref<1x192xf32, #tpu.memory_space<vmem>>, %arg67: memref<64x192xf32, #tpu.memory_space<vmem>>, %arg68: memref<32x32xf32, #tpu.memory_space<vmem>>, %arg69: memref<8x64xf32, #tpu.memory_space<vmem>>, %arg70: memref<8x64xf32, #tpu.memory_space<vmem>>, %arg71: memref<8x64xf32, #tpu.memory_space<vmem>>, %arg72: memref<2x64xf32, #tpu.memory_space<vmem>>, %arg73: memref<2x128xf32, #tpu.memory_space<vmem>>) attributes {dimension_semantics = [], scalar_prefetch = 0 : i64, scratch_operands = 0 : i64, tpu.core_type = #tpu.core_type<tc>} {
    %c0 = arith.constant 0 : index
    %c0_0 = arith.constant 0 : index
    %0 = vector.load %arg0[%c0, %c0_0] : memref<32x48xf32, #tpu.memory_space<vmem>>, vector<32x48xf32>
    %c0_1 = arith.constant 0 : index
    %c0_2 = arith.constant 0 : index
    %1 = vector.load %arg11[%c0_1, %c0_2] : memref<48x32xf32, #tpu.memory_space<vmem>>, vector<48x32xf32>
    %cst = arith.constant dense<0.000000e+00> : vector<32x32xf32>
    %2 = tpu.matmul %0, %1, %cst {dimension_numbers = #tpu.dot_dimension_numbers<[1], [0], [0], [1], [0, 0, 1, 1], [], []>} : vector<32x48xf32>, vector<48x32xf32>, vector<32x32xf32> -> vector<32x32xf32>
    %c0_3 = arith.constant 0 : index
    %c0_4 = arith.constant 0 : index
    %3 = vector.load %arg10[%c0_3, %c0_4] : memref<1x32xf32, #tpu.memory_space<vmem>>, vector<1x32xf32>
    %4 = vector.broadcast %3 : vector<1x32xf32> to vector<32x32xf32>
    %5 = arith.addf %2, %4 : vector<32x32xf32>
    %cst_5 = arith.constant dense<0.000000e+00> : vector<32xf32>
    %6 = vector.multi_reduction <add>, %5, %cst_5 [1] : vector<32x32xf32> to vector<32xf32>
    %7 = vector.shape_cast %6 : vector<32xf32> to vector<32x1xf32>
    %cst_6 = arith.constant 3.200000e+01 : f32
    %8 = vector.broadcast %cst_6 : f32 to vector<32x1xf32>
    %9 = arith.divf %7, %8 : vector<32x1xf32>
    %10 = vector.broadcast %9 : vector<32x1xf32> to vector<32x32xf32>
    %11 = arith.subf %5, %10 : vector<32x32xf32>
    %12 = arith.mulf %11, %11 : vector<32x32xf32>
    %cst_7 = arith.constant dense<0.000000e+00> : vector<32xf32>
    %13 = vector.multi_reduction <add>, %12, %cst_7 [1] : vector<32x32xf32> to vector<32xf32>
    %14 = vector.shape_cast %13 : vector<32xf32> to vector<32x1xf32>
    %cst_8 = arith.constant 3.200000e+01 : f32
    %15 = vector.broadcast %cst_8 : f32 to vector<32x1xf32>
    %16 = arith.divf %14, %15 : vector<32x1xf32>
    %17 = vector.broadcast %9 : vector<32x1xf32> to vector<32x32xf32>
    %18 = arith.subf %5, %17 : vector<32x32xf32>
    %cst_9 = arith.constant 9.99999974E-6 : f32
    %19 = vector.broadcast %cst_9 : f32 to vector<32x1xf32>
    %20 = arith.addf %16, %19 : vector<32x1xf32>
    %21 = math.rsqrt %20 : vector<32x1xf32>
    %22 = vector.broadcast %21 : vector<32x1xf32> to vector<32x32xf32>
    %23 = arith.mulf %18, %22 : vector<32x32xf32>
    %c0_10 = arith.constant 0 : index
    %c0_11 = arith.constant 0 : index
    %24 = vector.load %arg6[%c0_10, %c0_11] : memref<1x32xf32, #tpu.memory_space<vmem>>, vector<1x32xf32>
    %25 = vector.broadcast %24 : vector<1x32xf32> to vector<32x32xf32>
    %26 = arith.mulf %23, %25 : vector<32x32xf32>
    %c0_12 = arith.constant 0 : index
    %c0_13 = arith.constant 0 : index
    %27 = vector.load %arg5[%c0_12, %c0_13] : memref<1x32xf32, #tpu.memory_space<vmem>>, vector<1x32xf32>
    %28 = vector.broadcast %27 : vector<1x32xf32> to vector<32x32xf32>
    %29 = arith.addf %26, %28 : vector<32x32xf32>
    %c0_14 = arith.constant 0 : index
    %c0_15 = arith.constant 0 : index
    %30 = vector.load %arg68[%c0_14, %c0_15] : memref<32x32xf32, #tpu.memory_space<vmem>>, vector<32x32xf32>
    tpu.vector_store %arg68[%c0_14, %c0_15], %29 {strides = array<i32>} : memref<32x32xf32, #tpu.memory_space<vmem>>, vector<32x32xf32>,
    %cst_16 = arith.constant dense<0.000000e+00> : vector<32xf32>
    %31 = vector.multi_reduction <add>, %29, %cst_16 [1] : vector<32x32xf32> to vector<32xf32>
    %32 = vector.shape_cast %31 : vector<32xf32> to vector<32x1xf32>
    %cst_17 = arith.constant 3.200000e+01 : f32
    %33 = vector.broadcast %cst_17 : f32 to vector<32x1xf32>
    %34 = arith.divf %32, %33 : vector<32x1xf32>
    %35 = vector.broadcast %34 : vector<32x1xf32> to vector<32x32xf32>
    %36 = arith.subf %29, %35 : vector<32x32xf32>
    %37 = arith.mulf %36, %36 : vector<32x32xf32>
    %cst_18 = arith.constant dense<0.000000e+00> : vector<32xf32>
    %38 = vector.multi_reduction <add>, %37, %cst_18 [1] : vector<32x32xf32> to vector<32xf32>
    %39 = vector.shape_cast %38 : vector<32xf32> to vector<32x1xf32>
    %cst_19 = arith.constant 3.200000e+01 : f32
    %40 = vector.broadcast %cst_19 : f32 to vector<32x1xf32>
    %41 = arith.divf %39, %40 : vector<32x1xf32>
    %42 = vector.broadcast %34 : vector<32x1xf32> to vector<32x32xf32>
    %43 = arith.subf %29, %42 : vector<32x32xf32>
    %cst_20 = arith.constant 9.99999974E-6 : f32
    %44 = vector.broadcast %cst_20 : f32 to vector<32x1xf32>
    %45 = arith.addf %41, %44 : vector<32x1xf32>
    %46 = math.rsqrt %45 : vector<32x1xf32>
    %47 = vector.broadcast %46 : vector<32x1xf32> to vector<32x32xf32>
    %48 = arith.mulf %43, %47 : vector<32x32xf32>
    %c0_21 = arith.constant 0 : index
    %c0_22 = arith.constant 0 : index
    %49 = vector.load %arg19[%c0_21, %c0_22] : memref<1x32xf32, #tpu.memory_space<vmem>>, vector<1x32xf32>
    %50 = vector.broadcast %49 : vector<1x32xf32> to vector<32x32xf32>
    %51 = arith.mulf %48, %50 : vector<32x32xf32>
    %c0_23 = arith.constant 0 : index
    %c0_24 = arith.constant 0 : index
    %52 = vector.load %arg18[%c0_23, %c0_24] : memref<1x32xf32, #tpu.memory_space<vmem>>, vector<1x32xf32>
    %53 = vector.broadcast %52 : vector<1x32xf32> to vector<32x32xf32>
    %54 = arith.addf %51, %53 : vector<32x32xf32>
    %c0_25 = arith.constant 0 : index
    %c0_26 = arith.constant 0 : index
    %55 = vector.load %arg25[%c0_25, %c0_26] : memref<32x96xf32, #tpu.memory_space<vmem>>, vector<32x96xf32>
    %cst_27 = arith.constant dense<0.000000e+00> : vector<32x96xf32>
    %56 = tpu.matmul %54, %55, %cst_27 {dimension_numbers = #tpu.dot_dimension_numbers<[1], [0], [0], [1], [0, 0, 1, 1], [], []>} : vector<32x32xf32>, vector<32x96xf32>, vector<32x96xf32> -> vector<32x96xf32>
    %c0_28 = arith.constant 0 : index
    %c0_29 = arith.constant 0 : index
    %57 = vector.load %arg24[%c0_28, %c0_29] : memref<1x96xf32, #tpu.memory_space<vmem>>, vector<1x96xf32>
    %58 = vector.broadcast %57 : vector<1x96xf32> to vector<32x96xf32>
    %59 = arith.addf %56, %58 : vector<32x96xf32>
    %60 = vector.extract_strided_slice %59 {offsets = [0, 0], sizes = [32, 16], strides = [1, 1]} : vector<32x96xf32> to vector<32x16xf32>
    %61 = vector.extract_strided_slice %59 {offsets = [0, 32], sizes = [32, 16], strides = [1, 1]} : vector<32x96xf32> to vector<32x16xf32>
    %62 = vector.extract_strided_slice %59 {offsets = [0, 64], sizes = [32, 16], strides = [1, 1]} : vector<32x96xf32> to vector<32x16xf32>
    %cst_30 = arith.constant dense<0.000000e+00> : vector<32x32xf32>
    %63 = tpu.matmul %60, %61, %cst_30 {dimension_numbers = #tpu.dot_dimension_numbers<[1], [1], [0], [0], [0, 0, 1, 0], [], []>} : vector<32x16xf32>, vector<32x16xf32>, vector<32x32xf32> -> vector<32x32xf32>
    %cst_31 = arith.constant 2.500000e-01 : f32
    %64 = vector.broadcast %cst_31 : f32 to vector<32x32xf32>
    %65 = arith.mulf %63, %64 : vector<32x32xf32>
    %c0_32 = arith.constant 0 : index
    %c0_33 = arith.constant 0 : index
    %c0_34 = arith.constant 0 : index
    %66 = vector.load %arg13[%c0_32, %c0_33, %c0_34] : memref<2x32x32xf32, #tpu.memory_space<vmem>>, vector<1x32x32xf32>
    %67 = vector.shape_cast %66 : vector<1x32x32xf32> to vector<32x32xf32>
    %68 = arith.addf %65, %67 : vector<32x32xf32>
    %cst_35 = arith.constant dense<0xFF800000> : vector<32xf32>
    %69 = vector.multi_reduction <maximumf>, %68, %cst_35 [1] : vector<32x32xf32> to vector<32xf32>
    %70 = vector.shape_cast %69 : vector<32xf32> to vector<32x1xf32>
    %71 = vector.broadcast %70 : vector<32x1xf32> to vector<32x32xf32>
    %72 = arith.subf %68, %71 : vector<32x32xf32>
    %73 = math.exp %72 : vector<32x32xf32>
    %cst_36 = arith.constant dense<0.000000e+00> : vector<32xf32>
    %74 = vector.multi_reduction <add>, %73, %cst_36 [1] : vector<32x32xf32> to vector<32xf32>
    %75 = vector.shape_cast %74 : vector<32xf32> to vector<32x1xf32>
    %76 = vector.broadcast %75 : vector<32x1xf32> to vector<32x32xf32>
    %77 = arith.divf %73, %76 : vector<32x32xf32>
    %cst_37 = arith.constant dense<0.000000e+00> : vector<32x16xf32>
    %78 = tpu.matmul %77, %62, %cst_37 {dimension_numbers = #tpu.dot_dimension_numbers<[1], [0], [0], [1], [0, 0, 1, 1], [], []>} : vector<32x32xf32>, vector<32x16xf32>, vector<32x16xf32> -> vector<32x16xf32>
    %79 = vector.extract_strided_slice %59 {offsets = [0, 16], sizes = [32, 16], strides = [1, 1]} : vector<32x96xf32> to vector<32x16xf32>
    %80 = vector.extract_strided_slice %59 {offsets = [0, 48], sizes = [32, 16], strides = [1, 1]} : vector<32x96xf32> to vector<32x16xf32>
    %81 = vector.extract_strided_slice %59 {offsets = [0, 80], sizes = [32, 16], strides = [1, 1]} : vector<32x96xf32> to vector<32x16xf32>
    %cst_38 = arith.constant dense<0.000000e+00> : vector<32x32xf32>
    %82 = tpu.matmul %79, %80, %cst_38 {dimension_numbers = #tpu.dot_dimension_numbers<[1], [1], [0], [0], [0, 0, 1, 0], [], []>} : vector<32x16xf32>, vector<32x16xf32>, vector<32x32xf32> -> vector<32x32xf32>
    %cst_39 = arith.constant 2.500000e-01 : f32
    %83 = vector.broadcast %cst_39 : f32 to vector<32x32xf32>
    %84 = arith.mulf %82, %83 : vector<32x32xf32>
    %c1 = arith.constant 1 : index
    %c0_40 = arith.constant 0 : index
    %c0_41 = arith.constant 0 : index
    %85 = vector.load %arg13[%c1, %c0_40, %c0_41] : memref<2x32x32xf32, #tpu.memory_space<vmem>>, vector<1x32x32xf32>
    %86 = vector.shape_cast %85 : vector<1x32x32xf32> to vector<32x32xf32>
    %87 = arith.addf %84, %86 : vector<32x32xf32>
    %cst_42 = arith.constant dense<0xFF800000> : vector<32xf32>
    %88 = vector.multi_reduction <maximumf>, %87, %cst_42 [1] : vector<32x32xf32> to vector<32xf32>
    %89 = vector.shape_cast %88 : vector<32xf32> to vector<32x1xf32>
    %90 = vector.broadcast %89 : vector<32x1xf32> to vector<32x32xf32>
    %91 = arith.subf %87, %90 : vector<32x32xf32>
    %92 = math.exp %91 : vector<32x32xf32>
    %cst_43 = arith.constant dense<0.000000e+00> : vector<32xf32>
    %93 = vector.multi_reduction <add>, %92, %cst_43 [1] : vector<32x32xf32> to vector<32xf32>
    %94 = vector.shape_cast %93 : vector<32xf32> to vector<32x1xf32>
    %95 = vector.broadcast %94 : vector<32x1xf32> to vector<32x32xf32>
    %96 = arith.divf %92, %95 : vector<32x32xf32>
    %cst_44 = arith.constant dense<0.000000e+00> : vector<32x16xf32>
    %97 = tpu.matmul %96, %81, %cst_44 {dimension_numbers = #tpu.dot_dimension_numbers<[1], [0], [0], [1], [0, 0, 1, 1], [], []>} : vector<32x32xf32>, vector<32x16xf32>, vector<32x16xf32> -> vector<32x16xf32>
    %98 = tpu.concatenate %78, %97 in 1 : vector<32x16xf32>, vector<32x16xf32> -> vector<32x32xf32>
    %c0_45 = arith.constant 0 : index
    %c0_46 = arith.constant 0 : index
    %99 = vector.load %arg23[%c0_45, %c0_46] : memref<32x32xf32, #tpu.memory_space<vmem>>, vector<32x32xf32>
    %cst_47 = arith.constant dense<0.000000e+00> : vector<32x32xf32>
    %100 = tpu.matmul %98, %99, %cst_47 {dimension_numbers = #tpu.dot_dimension_numbers<[1], [0], [0], [1], [0, 0, 1, 1], [], []>} : vector<32x32xf32>, vector<32x32xf32>, vector<32x32xf32> -> vector<32x32xf32>
    %c0_48 = arith.constant 0 : index
    %c0_49 = arith.constant 0 : index
    %101 = vector.load %arg22[%c0_48, %c0_49] : memref<1x32xf32, #tpu.memory_space<vmem>>, vector<1x32xf32>
    %102 = vector.broadcast %101 : vector<1x32xf32> to vector<32x32xf32>
    %103 = arith.addf %100, %102 : vector<32x32xf32>
    %104 = arith.addf %29, %103 : vector<32x32xf32>
    %cst_50 = arith.constant dense<0.000000e+00> : vector<32xf32>
    %105 = vector.multi_reduction <add>, %104, %cst_50 [1] : vector<32x32xf32> to vector<32xf32>
    %106 = vector.shape_cast %105 : vector<32xf32> to vector<32x1xf32>
    %cst_51 = arith.constant 3.200000e+01 : f32
    %107 = vector.broadcast %cst_51 : f32 to vector<32x1xf32>
    %108 = arith.divf %106, %107 : vector<32x1xf32>
    %109 = vector.broadcast %108 : vector<32x1xf32> to vector<32x32xf32>
    %110 = arith.subf %104, %109 : vector<32x32xf32>
    %111 = arith.mulf %110, %110 : vector<32x32xf32>
    %cst_52 = arith.constant dense<0.000000e+00> : vector<32xf32>
    %112 = vector.multi_reduction <add>, %111, %cst_52 [1] : vector<32x32xf32> to vector<32xf32>
    %113 = vector.shape_cast %112 : vector<32xf32> to vector<32x1xf32>
    %cst_53 = arith.constant 3.200000e+01 : f32
    %114 = vector.broadcast %cst_53 : f32 to vector<32x1xf32>
    %115 = arith.divf %113, %114 : vector<32x1xf32>
    %116 = vector.broadcast %108 : vector<32x1xf32> to vector<32x32xf32>
    %117 = arith.subf %104, %116 : vector<32x32xf32>
    %cst_54 = arith.constant 9.99999974E-6 : f32
    %118 = vector.broadcast %cst_54 : f32 to vector<32x1xf32>
    %119 = arith.addf %115, %118 : vector<32x1xf32>
    %120 = math.rsqrt %119 : vector<32x1xf32>
    %121 = vector.broadcast %120 : vector<32x1xf32> to vector<32x32xf32>
    %122 = arith.mulf %117, %121 : vector<32x32xf32>
    %c0_55 = arith.constant 0 : index
    %c0_56 = arith.constant 0 : index
    %123 = vector.load %arg21[%c0_55, %c0_56] : memref<1x32xf32, #tpu.memory_space<vmem>>, vector<1x32xf32>
    %124 = vector.broadcast %123 : vector<1x32xf32> to vector<32x32xf32>
    %125 = arith.mulf %122, %124 : vector<32x32xf32>
    %c0_57 = arith.constant 0 : index
    %c0_58 = arith.constant 0 : index
    %126 = vector.load %arg20[%c0_57, %c0_58] : memref<1x32xf32, #tpu.memory_space<vmem>>, vector<1x32xf32>
    %127 = vector.broadcast %126 : vector<1x32xf32> to vector<32x32xf32>
    %128 = arith.addf %125, %127 : vector<32x32xf32>
    %c0_59 = arith.constant 0 : index
    %c0_60 = arith.constant 0 : index
    %129 = vector.load %arg15[%c0_59, %c0_60] : memref<32x64xf32, #tpu.memory_space<vmem>>, vector<32x64xf32>
    %cst_61 = arith.constant dense<0.000000e+00> : vector<32x64xf32>
    %130 = tpu.matmul %128, %129, %cst_61 {dimension_numbers = #tpu.dot_dimension_numbers<[1], [0], [0], [1], [0, 0, 1, 1], [], []>} : vector<32x32xf32>, vector<32x64xf32>, vector<32x64xf32> -> vector<32x64xf32>
    %c0_62 = arith.constant 0 : index
    %c0_63 = arith.constant 0 : index
    %131 = vector.load %arg14[%c0_62, %c0_63] : memref<1x64xf32, #tpu.memory_space<vmem>>, vector<1x64xf32>
    %132 = vector.broadcast %131 : vector<1x64xf32> to vector<32x64xf32>
    %133 = arith.addf %130, %132 : vector<32x64xf32>
    %cst_64 = arith.constant 5.000000e-01 : f32
    %134 = vector.broadcast %cst_64 : f32 to vector<32x64xf32>
    %135 = arith.mulf %134, %133 : vector<32x64xf32>
    %cst_65 = arith.constant 0.707106769 : f32
    %136 = vector.broadcast %cst_65 : f32 to vector<32x64xf32>
    %137 = arith.mulf %133, %136 : vector<32x64xf32>
    %138 = math.absf %137 : vector<32x64xf32>
    %cst_66 = arith.constant 0.327591091 : f32
    %139 = vector.broadcast %cst_66 : f32 to vector<32x64xf32>
    %140 = arith.mulf %139, %138 : vector<32x64xf32>
    %cst_67 = arith.constant 1.000000e+00 : f32
    %141 = vector.broadcast %cst_67 : f32 to vector<32x64xf32>
    %142 = arith.addf %141, %140 : vector<32x64xf32>
    %cst_68 = arith.constant 1.000000e+00 : f32
    %143 = vector.broadcast %cst_68 : f32 to vector<32x64xf32>
    %144 = arith.divf %143, %142 : vector<32x64xf32>
    %cst_69 = arith.constant 1.06140542 : f32
    %145 = vector.broadcast %cst_69 : f32 to vector<32x64xf32>
    %146 = arith.mulf %145, %144 : vector<32x64xf32>
    %cst_70 = arith.constant -1.45315206 : f32
    %147 = vector.broadcast %cst_70 : f32 to vector<32x64xf32>
    %148 = arith.addf %146, %147 : vector<32x64xf32>
    %149 = arith.mulf %148, %144 : vector<32x64xf32>
    %cst_71 = arith.constant 1.42141378 : f32
    %150 = vector.broadcast %cst_71 : f32 to vector<32x64xf32>
    %151 = arith.addf %149, %150 : vector<32x64xf32>
    %152 = arith.mulf %151, %144 : vector<32x64xf32>
    %cst_72 = arith.constant -0.284496725 : f32
    %153 = vector.broadcast %cst_72 : f32 to vector<32x64xf32>
    %154 = arith.addf %152, %153 : vector<32x64xf32>
    %155 = arith.mulf %154, %144 : vector<32x64xf32>
    %cst_73 = arith.constant 0.254829586 : f32
    %156 = vector.broadcast %cst_73 : f32 to vector<32x64xf32>
    %157 = arith.addf %155, %156 : vector<32x64xf32>
    %158 = arith.mulf %157, %144 : vector<32x64xf32>
    %159 = arith.mulf %138, %138 : vector<32x64xf32>
    %cst_74 = arith.constant 0.000000e+00 : f32
    %160 = vector.broadcast %cst_74 : f32 to vector<32x64xf32>
    %161 = arith.subf %160, %159 : vector<32x64xf32>
    %162 = math.exp %161 : vector<32x64xf32>
    %163 = arith.mulf %158, %162 : vector<32x64xf32>
    %cst_75 = arith.constant 1.000000e+00 : f32
    %164 = vector.broadcast %cst_75 : f32 to vector<32x64xf32>
    %165 = arith.subf %164, %163 : vector<32x64xf32>
    %cst_76 = arith.constant 0.000000e+00 : f32
    %166 = vector.broadcast %cst_76 : f32 to vector<32x64xf32>
    %167 = arith.cmpf olt, %137, %166 : vector<32x64xf32>
    %cst_77 = arith.constant 0.000000e+00 : f32
    %168 = vector.broadcast %cst_77 : f32 to vector<32x64xf32>
    %169 = arith.subf %168, %165 : vector<32x64xf32>
    %170 = arith.select %167, %169, %165 : vector<32x64xi1>, vector<32x64xf32>
    %cst_78 = arith.constant 1.000000e+00 : f32
    %171 = vector.broadcast %cst_78 : f32 to vector<32x64xf32>
    %172 = arith.addf %171, %170 : vector<32x64xf32>
    %173 = arith.mulf %135, %172 : vector<32x64xf32>
    %c0_79 = arith.constant 0 : index
    %c0_80 = arith.constant 0 : index
    %174 = vector.load %arg17[%c0_79, %c0_80] : memref<64x32xf32, #tpu.memory_space<vmem>>, vector<64x32xf32>
    %cst_81 = arith.constant dense<0.000000e+00> : vector<32x32xf32>
    %175 = tpu.matmul %173, %174, %cst_81 {dimension_numbers = #tpu.dot_dimension_numbers<[1], [0], [0], [1], [0, 0, 1, 1], [], []>} : vector<32x64xf32>, vector<64x32xf32>, vector<32x32xf32> -> vector<32x32xf32>
    %c0_82 = arith.constant 0 : index
    %c0_83 = arith.constant 0 : index
    %176 = vector.load %arg16[%c0_82, %c0_83] : memref<1x32xf32, #tpu.memory_space<vmem>>, vector<1x32xf32>
    %177 = vector.broadcast %176 : vector<1x32xf32> to vector<32x32xf32>
    %178 = arith.addf %175, %177 : vector<32x32xf32>
    %179 = arith.addf %104, %178 : vector<32x32xf32>
    %cst_84 = arith.constant dense<0.000000e+00> : vector<32xf32>
    %180 = vector.multi_reduction <add>, %179, %cst_84 [1] : vector<32x32xf32> to vector<32xf32>
    %181 = vector.shape_cast %180 : vector<32xf32> to vector<32x1xf32>
    %cst_85 = arith.constant 3.200000e+01 : f32
    %182 = vector.broadcast %cst_85 : f32 to vector<32x1xf32>
    %183 = arith.divf %181, %182 : vector<32x1xf32>
    %184 = vector.broadcast %183 : vector<32x1xf32> to vector<32x32xf32>
    %185 = arith.subf %179, %184 : vector<32x32xf32>
    %186 = arith.mulf %185, %185 : vector<32x32xf32>
    %cst_86 = arith.constant dense<0.000000e+00> : vector<32xf32>
    %187 = vector.multi_reduction <add>, %186, %cst_86 [1] : vector<32x32xf32> to vector<32xf32>
    %188 = vector.shape_cast %187 : vector<32xf32> to vector<32x1xf32>
    %cst_87 = arith.constant 3.200000e+01 : f32
    %189 = vector.broadcast %cst_87 : f32 to vector<32x1xf32>
    %190 = arith.divf %188, %189 : vector<32x1xf32>
    %191 = vector.broadcast %183 : vector<32x1xf32> to vector<32x32xf32>
    %192 = arith.subf %179, %191 : vector<32x32xf32>
    %cst_88 = arith.constant 9.99999974E-6 : f32
    %193 = vector.broadcast %cst_88 : f32 to vector<32x1xf32>
    %194 = arith.addf %190, %193 : vector<32x1xf32>
    %195 = math.rsqrt %194 : vector<32x1xf32>
    %196 = vector.broadcast %195 : vector<32x1xf32> to vector<32x32xf32>
    %197 = arith.mulf %192, %196 : vector<32x32xf32>
    %c0_89 = arith.constant 0 : index
    %c0_90 = arith.constant 0 : index
    %198 = vector.load %arg32[%c0_89, %c0_90] : memref<1x32xf32, #tpu.memory_space<vmem>>, vector<1x32xf32>
    %199 = vector.broadcast %198 : vector<1x32xf32> to vector<32x32xf32>
    %200 = arith.mulf %197, %199 : vector<32x32xf32>
    %c0_91 = arith.constant 0 : index
    %c0_92 = arith.constant 0 : index
    %201 = vector.load %arg31[%c0_91, %c0_92] : memref<1x32xf32, #tpu.memory_space<vmem>>, vector<1x32xf32>
    %202 = vector.broadcast %201 : vector<1x32xf32> to vector<32x32xf32>
    %203 = arith.addf %200, %202 : vector<32x32xf32>
    %c0_93 = arith.constant 0 : index
    %c0_94 = arith.constant 0 : index
    %204 = vector.load %arg38[%c0_93, %c0_94] : memref<32x96xf32, #tpu.memory_space<vmem>>, vector<32x96xf32>
    %cst_95 = arith.constant dense<0.000000e+00> : vector<32x96xf32>
    %205 = tpu.matmul %203, %204, %cst_95 {dimension_numbers = #tpu.dot_dimension_numbers<[1], [0], [0], [1], [0, 0, 1, 1], [], []>} : vector<32x32xf32>, vector<32x96xf32>, vector<32x96xf32> -> vector<32x96xf32>
    %c0_96 = arith.constant 0 : index
    %c0_97 = arith.constant 0 : index
    %206 = vector.load %arg37[%c0_96, %c0_97] : memref<1x96xf32, #tpu.memory_space<vmem>>, vector<1x96xf32>
    %207 = vector.broadcast %206 : vector<1x96xf32> to vector<32x96xf32>
    %208 = arith.addf %205, %207 : vector<32x96xf32>
    %209 = vector.extract_strided_slice %208 {offsets = [0, 0], sizes = [32, 16], strides = [1, 1]} : vector<32x96xf32> to vector<32x16xf32>
    %210 = vector.extract_strided_slice %208 {offsets = [0, 32], sizes = [32, 16], strides = [1, 1]} : vector<32x96xf32> to vector<32x16xf32>
    %211 = vector.extract_strided_slice %208 {offsets = [0, 64], sizes = [32, 16], strides = [1, 1]} : vector<32x96xf32> to vector<32x16xf32>
    %cst_98 = arith.constant dense<0.000000e+00> : vector<32x32xf32>
    %212 = tpu.matmul %209, %210, %cst_98 {dimension_numbers = #tpu.dot_dimension_numbers<[1], [1], [0], [0], [0, 0, 1, 0], [], []>} : vector<32x16xf32>, vector<32x16xf32>, vector<32x32xf32> -> vector<32x32xf32>
    %cst_99 = arith.constant 2.500000e-01 : f32
    %213 = vector.broadcast %cst_99 : f32 to vector<32x32xf32>
    %214 = arith.mulf %212, %213 : vector<32x32xf32>
    %c0_100 = arith.constant 0 : index
    %c0_101 = arith.constant 0 : index
    %c0_102 = arith.constant 0 : index
    %215 = vector.load %arg26[%c0_100, %c0_101, %c0_102] : memref<2x32x32xf32, #tpu.memory_space<vmem>>, vector<1x32x32xf32>
    %216 = vector.shape_cast %215 : vector<1x32x32xf32> to vector<32x32xf32>
    %217 = arith.addf %214, %216 : vector<32x32xf32>
    %cst_103 = arith.constant dense<0xFF800000> : vector<32xf32>
    %218 = vector.multi_reduction <maximumf>, %217, %cst_103 [1] : vector<32x32xf32> to vector<32xf32>
    %219 = vector.shape_cast %218 : vector<32xf32> to vector<32x1xf32>
    %220 = vector.broadcast %219 : vector<32x1xf32> to vector<32x32xf32>
    %221 = arith.subf %217, %220 : vector<32x32xf32>
    %222 = math.exp %221 : vector<32x32xf32>
    %cst_104 = arith.constant dense<0.000000e+00> : vector<32xf32>
    %223 = vector.multi_reduction <add>, %222, %cst_104 [1] : vector<32x32xf32> to vector<32xf32>
    %224 = vector.shape_cast %223 : vector<32xf32> to vector<32x1xf32>
    %225 = vector.broadcast %224 : vector<32x1xf32> to vector<32x32xf32>
    %226 = arith.divf %222, %225 : vector<32x32xf32>
    %cst_105 = arith.constant dense<0.000000e+00> : vector<32x16xf32>
    %227 = tpu.matmul %226, %211, %cst_105 {dimension_numbers = #tpu.dot_dimension_numbers<[1], [0], [0], [1], [0, 0, 1, 1], [], []>} : vector<32x32xf32>, vector<32x16xf32>, vector<32x16xf32> -> vector<32x16xf32>
    %228 = vector.extract_strided_slice %208 {offsets = [0, 16], sizes = [32, 16], strides = [1, 1]} : vector<32x96xf32> to vector<32x16xf32>
    %229 = vector.extract_strided_slice %208 {offsets = [0, 48], sizes = [32, 16], strides = [1, 1]} : vector<32x96xf32> to vector<32x16xf32>
    %230 = vector.extract_strided_slice %208 {offsets = [0, 80], sizes = [32, 16], strides = [1, 1]} : vector<32x96xf32> to vector<32x16xf32>
    %cst_106 = arith.constant dense<0.000000e+00> : vector<32x32xf32>
    %231 = tpu.matmul %228, %229, %cst_106 {dimension_numbers = #tpu.dot_dimension_numbers<[1], [1], [0], [0], [0, 0, 1, 0], [], []>} : vector<32x16xf32>, vector<32x16xf32>, vector<32x32xf32> -> vector<32x32xf32>
    %cst_107 = arith.constant 2.500000e-01 : f32
    %232 = vector.broadcast %cst_107 : f32 to vector<32x32xf32>
    %233 = arith.mulf %231, %232 : vector<32x32xf32>
    %c1_108 = arith.constant 1 : index
    %c0_109 = arith.constant 0 : index
    %c0_110 = arith.constant 0 : index
    %234 = vector.load %arg26[%c1_108, %c0_109, %c0_110] : memref<2x32x32xf32, #tpu.memory_space<vmem>>, vector<1x32x32xf32>
    %235 = vector.shape_cast %234 : vector<1x32x32xf32> to vector<32x32xf32>
    %236 = arith.addf %233, %235 : vector<32x32xf32>
    %cst_111 = arith.constant dense<0xFF800000> : vector<32xf32>
    %237 = vector.multi_reduction <maximumf>, %236, %cst_111 [1] : vector<32x32xf32> to vector<32xf32>
    %238 = vector.shape_cast %237 : vector<32xf32> to vector<32x1xf32>
    %239 = vector.broadcast %238 : vector<32x1xf32> to vector<32x32xf32>
    %240 = arith.subf %236, %239 : vector<32x32xf32>
    %241 = math.exp %240 : vector<32x32xf32>
    %cst_112 = arith.constant dense<0.000000e+00> : vector<32xf32>
    %242 = vector.multi_reduction <add>, %241, %cst_112 [1] : vector<32x32xf32> to vector<32xf32>
    %243 = vector.shape_cast %242 : vector<32xf32> to vector<32x1xf32>
    %244 = vector.broadcast %243 : vector<32x1xf32> to vector<32x32xf32>
    %245 = arith.divf %241, %244 : vector<32x32xf32>
    %cst_113 = arith.constant dense<0.000000e+00> : vector<32x16xf32>
    %246 = tpu.matmul %245, %230, %cst_113 {dimension_numbers = #tpu.dot_dimension_numbers<[1], [0], [0], [1], [0, 0, 1, 1], [], []>} : vector<32x32xf32>, vector<32x16xf32>, vector<32x16xf32> -> vector<32x16xf32>
    %247 = tpu.concatenate %227, %246 in 1 : vector<32x16xf32>, vector<32x16xf32> -> vector<32x32xf32>
    %c0_114 = arith.constant 0 : index
    %c0_115 = arith.constant 0 : index
    %248 = vector.load %arg36[%c0_114, %c0_115] : memref<32x32xf32, #tpu.memory_space<vmem>>, vector<32x32xf32>
    %cst_116 = arith.constant dense<0.000000e+00> : vector<32x32xf32>
    %249 = tpu.matmul %247, %248, %cst_116 {dimension_numbers = #tpu.dot_dimension_numbers<[1], [0], [0], [1], [0, 0, 1, 1], [], []>} : vector<32x32xf32>, vector<32x32xf32>, vector<32x32xf32> -> vector<32x32xf32>
    %c0_117 = arith.constant 0 : index
    %c0_118 = arith.constant 0 : index
    %250 = vector.load %arg35[%c0_117, %c0_118] : memref<1x32xf32, #tpu.memory_space<vmem>>, vector<1x32xf32>
    %251 = vector.broadcast %250 : vector<1x32xf32> to vector<32x32xf32>
    %252 = arith.addf %249, %251 : vector<32x32xf32>
    %253 = arith.addf %179, %252 : vector<32x32xf32>
    %cst_119 = arith.constant dense<0.000000e+00> : vector<32xf32>
    %254 = vector.multi_reduction <add>, %253, %cst_119 [1] : vector<32x32xf32> to vector<32xf32>
    %255 = vector.shape_cast %254 : vector<32xf32> to vector<32x1xf32>
    %cst_120 = arith.constant 3.200000e+01 : f32
    %256 = vector.broadcast %cst_120 : f32 to vector<32x1xf32>
    %257 = arith.divf %255, %256 : vector<32x1xf32>
    %258 = vector.broadcast %257 : vector<32x1xf32> to vector<32x32xf32>
    %259 = arith.subf %253, %258 : vector<32x32xf32>
    %260 = arith.mulf %259, %259 : vector<32x32xf32>
    %cst_121 = arith.constant dense<0.000000e+00> : vector<32xf32>
    %261 = vector.multi_reduction <add>, %260, %cst_121 [1] : vector<32x32xf32> to vector<32xf32>
    %262 = vector.shape_cast %261 : vector<32xf32> to vector<32x1xf32>
    %cst_122 = arith.constant 3.200000e+01 : f32
    %263 = vector.broadcast %cst_122 : f32 to vector<32x1xf32>
    %264 = arith.divf %262, %263 : vector<32x1xf32>
    %265 = vector.broadcast %257 : vector<32x1xf32> to vector<32x32xf32>
    %266 = arith.subf %253, %265 : vector<32x32xf32>
    %cst_123 = arith.constant 9.99999974E-6 : f32
    %267 = vector.broadcast %cst_123 : f32 to vector<32x1xf32>
    %268 = arith.addf %264, %267 : vector<32x1xf32>
    %269 = math.rsqrt %268 : vector<32x1xf32>
    %270 = vector.broadcast %269 : vector<32x1xf32> to vector<32x32xf32>
    %271 = arith.mulf %266, %270 : vector<32x32xf32>
    %c0_124 = arith.constant 0 : index
    %c0_125 = arith.constant 0 : index
    %272 = vector.load %arg34[%c0_124, %c0_125] : memref<1x32xf32, #tpu.memory_space<vmem>>, vector<1x32xf32>
    %273 = vector.broadcast %272 : vector<1x32xf32> to vector<32x32xf32>
    %274 = arith.mulf %271, %273 : vector<32x32xf32>
    %c0_126 = arith.constant 0 : index
    %c0_127 = arith.constant 0 : index
    %275 = vector.load %arg33[%c0_126, %c0_127] : memref<1x32xf32, #tpu.memory_space<vmem>>, vector<1x32xf32>
    %276 = vector.broadcast %275 : vector<1x32xf32> to vector<32x32xf32>
    %277 = arith.addf %274, %276 : vector<32x32xf32>
    %c0_128 = arith.constant 0 : index
    %c0_129 = arith.constant 0 : index
    %278 = vector.load %arg28[%c0_128, %c0_129] : memref<32x64xf32, #tpu.memory_space<vmem>>, vector<32x64xf32>
    %cst_130 = arith.constant dense<0.000000e+00> : vector<32x64xf32>
    %279 = tpu.matmul %277, %278, %cst_130 {dimension_numbers = #tpu.dot_dimension_numbers<[1], [0], [0], [1], [0, 0, 1, 1], [], []>} : vector<32x32xf32>, vector<32x64xf32>, vector<32x64xf32> -> vector<32x64xf32>
    %c0_131 = arith.constant 0 : index
    %c0_132 = arith.constant 0 : index
    %280 = vector.load %arg27[%c0_131, %c0_132] : memref<1x64xf32, #tpu.memory_space<vmem>>, vector<1x64xf32>
    %281 = vector.broadcast %280 : vector<1x64xf32> to vector<32x64xf32>
    %282 = arith.addf %279, %281 : vector<32x64xf32>
    %cst_133 = arith.constant 5.000000e-01 : f32
    %283 = vector.broadcast %cst_133 : f32 to vector<32x64xf32>
    %284 = arith.mulf %283, %282 : vector<32x64xf32>
    %cst_134 = arith.constant 0.707106769 : f32
    %285 = vector.broadcast %cst_134 : f32 to vector<32x64xf32>
    %286 = arith.mulf %282, %285 : vector<32x64xf32>
    %287 = math.absf %286 : vector<32x64xf32>
    %cst_135 = arith.constant 0.327591091 : f32
    %288 = vector.broadcast %cst_135 : f32 to vector<32x64xf32>
    %289 = arith.mulf %288, %287 : vector<32x64xf32>
    %cst_136 = arith.constant 1.000000e+00 : f32
    %290 = vector.broadcast %cst_136 : f32 to vector<32x64xf32>
    %291 = arith.addf %290, %289 : vector<32x64xf32>
    %cst_137 = arith.constant 1.000000e+00 : f32
    %292 = vector.broadcast %cst_137 : f32 to vector<32x64xf32>
    %293 = arith.divf %292, %291 : vector<32x64xf32>
    %cst_138 = arith.constant 1.06140542 : f32
    %294 = vector.broadcast %cst_138 : f32 to vector<32x64xf32>
    %295 = arith.mulf %294, %293 : vector<32x64xf32>
    %cst_139 = arith.constant -1.45315206 : f32
    %296 = vector.broadcast %cst_139 : f32 to vector<32x64xf32>
    %297 = arith.addf %295, %296 : vector<32x64xf32>
    %298 = arith.mulf %297, %293 : vector<32x64xf32>
    %cst_140 = arith.constant 1.42141378 : f32
    %299 = vector.broadcast %cst_140 : f32 to vector<32x64xf32>
    %300 = arith.addf %298, %299 : vector<32x64xf32>
    %301 = arith.mulf %300, %293 : vector<32x64xf32>
    %cst_141 = arith.constant -0.284496725 : f32
    %302 = vector.broadcast %cst_141 : f32 to vector<32x64xf32>
    %303 = arith.addf %301, %302 : vector<32x64xf32>
    %304 = arith.mulf %303, %293 : vector<32x64xf32>
    %cst_142 = arith.constant 0.254829586 : f32
    %305 = vector.broadcast %cst_142 : f32 to vector<32x64xf32>
    %306 = arith.addf %304, %305 : vector<32x64xf32>
    %307 = arith.mulf %306, %293 : vector<32x64xf32>
    %308 = arith.mulf %287, %287 : vector<32x64xf32>
    %cst_143 = arith.constant 0.000000e+00 : f32
    %309 = vector.broadcast %cst_143 : f32 to vector<32x64xf32>
    %310 = arith.subf %309, %308 : vector<32x64xf32>
    %311 = math.exp %310 : vector<32x64xf32>
    %312 = arith.mulf %307, %311 : vector<32x64xf32>
    %cst_144 = arith.constant 1.000000e+00 : f32
    %313 = vector.broadcast %cst_144 : f32 to vector<32x64xf32>
    %314 = arith.subf %313, %312 : vector<32x64xf32>
    %cst_145 = arith.constant 0.000000e+00 : f32
    %315 = vector.broadcast %cst_145 : f32 to vector<32x64xf32>
    %316 = arith.cmpf olt, %286, %315 : vector<32x64xf32>
    %cst_146 = arith.constant 0.000000e+00 : f32
    %317 = vector.broadcast %cst_146 : f32 to vector<32x64xf32>
    %318 = arith.subf %317, %314 : vector<32x64xf32>
    %319 = arith.select %316, %318, %314 : vector<32x64xi1>, vector<32x64xf32>
    %cst_147 = arith.constant 1.000000e+00 : f32
    %320 = vector.broadcast %cst_147 : f32 to vector<32x64xf32>
    %321 = arith.addf %320, %319 : vector<32x64xf32>
    %322 = arith.mulf %284, %321 : vector<32x64xf32>
    %c0_148 = arith.constant 0 : index
    %c0_149 = arith.constant 0 : index
    %323 = vector.load %arg30[%c0_148, %c0_149] : memref<64x32xf32, #tpu.memory_space<vmem>>, vector<64x32xf32>
    %cst_150 = arith.constant dense<0.000000e+00> : vector<32x32xf32>
    %324 = tpu.matmul %322, %323, %cst_150 {dimension_numbers = #tpu.dot_dimension_numbers<[1], [0], [0], [1], [0, 0, 1, 1], [], []>} : vector<32x64xf32>, vector<64x32xf32>, vector<32x32xf32> -> vector<32x32xf32>
    %c0_151 = arith.constant 0 : index
    %c0_152 = arith.constant 0 : index
    %325 = vector.load %arg29[%c0_151, %c0_152] : memref<1x32xf32, #tpu.memory_space<vmem>>, vector<1x32xf32>
    %326 = vector.broadcast %325 : vector<1x32xf32> to vector<32x32xf32>
    %327 = arith.addf %324, %326 : vector<32x32xf32>
    %328 = arith.addf %253, %327 : vector<32x32xf32>
    %c0_153 = arith.constant 0 : index
    %c0_154 = arith.constant 0 : index
    %c0_155 = arith.constant 0 : index
    %329 = vector.load %arg9[%c0_153, %c0_154, %c0_155] : memref<4x8x32xf32, #tpu.memory_space<vmem>>, vector<1x8x32xf32>
    %330 = vector.shape_cast %329 : vector<1x8x32xf32> to vector<8x32xf32>
    %cst_156 = arith.constant dense<0.000000e+00> : vector<8x32xf32>
    %331 = tpu.matmul %330, %328, %cst_156 {dimension_numbers = #tpu.dot_dimension_numbers<[1], [0], [0], [1], [0, 0, 1, 1], [], []>} : vector<8x32xf32>, vector<32x32xf32>, vector<8x32xf32> -> vector<8x32xf32>
    %c1_157 = arith.constant 1 : index
    %c0_158 = arith.constant 0 : index
    %c0_159 = arith.constant 0 : index
    %332 = vector.load %arg9[%c1_157, %c0_158, %c0_159] : memref<4x8x32xf32, #tpu.memory_space<vmem>>, vector<1x8x32xf32>
    %333 = vector.shape_cast %332 : vector<1x8x32xf32> to vector<8x32xf32>
    %cst_160 = arith.constant dense<0.000000e+00> : vector<8x32xf32>
    %334 = tpu.matmul %333, %328, %cst_160 {dimension_numbers = #tpu.dot_dimension_numbers<[1], [0], [0], [1], [0, 0, 1, 1], [], []>} : vector<8x32xf32>, vector<32x32xf32>, vector<8x32xf32> -> vector<8x32xf32>
    %c2 = arith.constant 2 : index
    %c0_161 = arith.constant 0 : index
    %c0_162 = arith.constant 0 : index
    %335 = vector.load %arg9[%c2, %c0_161, %c0_162] : memref<4x8x32xf32, #tpu.memory_space<vmem>>, vector<1x8x32xf32>
    %336 = vector.shape_cast %335 : vector<1x8x32xf32> to vector<8x32xf32>
    %cst_163 = arith.constant dense<0.000000e+00> : vector<8x32xf32>
    %337 = tpu.matmul %336, %328, %cst_163 {dimension_numbers = #tpu.dot_dimension_numbers<[1], [0], [0], [1], [0, 0, 1, 1], [], []>} : vector<8x32xf32>, vector<32x32xf32>, vector<8x32xf32> -> vector<8x32xf32>
    %c3 = arith.constant 3 : index
    %c0_164 = arith.constant 0 : index
    %c0_165 = arith.constant 0 : index
    %338 = vector.load %arg9[%c3, %c0_164, %c0_165] : memref<4x8x32xf32, #tpu.memory_space<vmem>>, vector<1x8x32xf32>
    %339 = vector.shape_cast %338 : vector<1x8x32xf32> to vector<8x32xf32>
    %cst_166 = arith.constant dense<0.000000e+00> : vector<8x32xf32>
    %340 = tpu.matmul %339, %328, %cst_166 {dimension_numbers = #tpu.dot_dimension_numbers<[1], [0], [0], [1], [0, 0, 1, 1], [], []>} : vector<8x32xf32>, vector<32x32xf32>, vector<8x32xf32> -> vector<8x32xf32>
    %341 = tpu.concatenate %331, %334, %337, %340 in 1 : vector<8x32xf32>, vector<8x32xf32>, vector<8x32xf32>, vector<8x32xf32> -> vector<8x128xf32>
    %cst_167 = arith.constant dense<0.000000e+00> : vector<8xf32>
    %342 = vector.multi_reduction <add>, %341, %cst_167 [1] : vector<8x128xf32> to vector<8xf32>
    %343 = vector.shape_cast %342 : vector<8xf32> to vector<8x1xf32>
    %cst_168 = arith.constant 1.280000e+02 : f32
    %344 = vector.broadcast %cst_168 : f32 to vector<8x1xf32>
    %345 = arith.divf %343, %344 : vector<8x1xf32>
    %346 = vector.broadcast %345 : vector<8x1xf32> to vector<8x128xf32>
    %347 = arith.subf %341, %346 : vector<8x128xf32>
    %348 = arith.mulf %347, %347 : vector<8x128xf32>
    %cst_169 = arith.constant dense<0.000000e+00> : vector<8xf32>
    %349 = vector.multi_reduction <add>, %348, %cst_169 [1] : vector<8x128xf32> to vector<8xf32>
    %350 = vector.shape_cast %349 : vector<8xf32> to vector<8x1xf32>
    %cst_170 = arith.constant 1.280000e+02 : f32
    %351 = vector.broadcast %cst_170 : f32 to vector<8x1xf32>
    %352 = arith.divf %350, %351 : vector<8x1xf32>
    %353 = vector.broadcast %345 : vector<8x1xf32> to vector<8x128xf32>
    %354 = arith.subf %341, %353 : vector<8x128xf32>
    %cst_171 = arith.constant 9.99999974E-6 : f32
    %355 = vector.broadcast %cst_171 : f32 to vector<8x1xf32>
    %356 = arith.addf %352, %355 : vector<8x1xf32>
    %357 = math.rsqrt %356 : vector<8x1xf32>
    %358 = vector.broadcast %357 : vector<8x1xf32> to vector<8x128xf32>
    %359 = arith.mulf %354, %358 : vector<8x128xf32>
    %c0_172 = arith.constant 0 : index
    %c0_173 = arith.constant 0 : index
    %360 = vector.load %arg40[%c0_172, %c0_173] : memref<1x128xf32, #tpu.memory_space<vmem>>, vector<1x128xf32>
    %361 = vector.broadcast %360 : vector<1x128xf32> to vector<8x128xf32>
    %362 = arith.mulf %359, %361 : vector<8x128xf32>
    %c0_174 = arith.constant 0 : index
    %c0_175 = arith.constant 0 : index
    %363 = vector.load %arg39[%c0_174, %c0_175] : memref<1x128xf32, #tpu.memory_space<vmem>>, vector<1x128xf32>
    %364 = vector.broadcast %363 : vector<1x128xf32> to vector<8x128xf32>
    %365 = arith.addf %362, %364 : vector<8x128xf32>
    %c0_176 = arith.constant 0 : index
    %c0_177 = arith.constant 0 : index
    %366 = vector.load %arg41[%c0_176, %c0_177] : memref<128x64xf32, #tpu.memory_space<vmem>>, vector<128x64xf32>
    %cst_178 = arith.constant dense<0.000000e+00> : vector<8x64xf32>
    %367 = tpu.matmul %365, %366, %cst_178 {dimension_numbers = #tpu.dot_dimension_numbers<[1], [0], [0], [1], [0, 0, 1, 1], [], []>} : vector<8x128xf32>, vector<128x64xf32>, vector<8x64xf32> -> vector<8x64xf32>
    %c0_179 = arith.constant 0 : index
    %c0_180 = arith.constant 0 : index
    %368 = vector.load %arg69[%c0_179, %c0_180] : memref<8x64xf32, #tpu.memory_space<vmem>>, vector<8x64xf32>
    tpu.vector_store %arg69[%c0_179, %c0_180], %367 {strides = array<i32>} : memref<8x64xf32, #tpu.memory_space<vmem>>, vector<8x64xf32>,
    %cst_181 = arith.constant dense<0.000000e+00> : vector<8xf32>
    %369 = vector.multi_reduction <add>, %367, %cst_181 [1] : vector<8x64xf32> to vector<8xf32>
    %370 = vector.shape_cast %369 : vector<8xf32> to vector<8x1xf32>
    %cst_182 = arith.constant 6.400000e+01 : f32
    %371 = vector.broadcast %cst_182 : f32 to vector<8x1xf32>
    %372 = arith.divf %370, %371 : vector<8x1xf32>
    %373 = vector.broadcast %372 : vector<8x1xf32> to vector<8x64xf32>
    %374 = arith.subf %367, %373 : vector<8x64xf32>
    %375 = arith.mulf %374, %374 : vector<8x64xf32>
    %cst_183 = arith.constant dense<0.000000e+00> : vector<8xf32>
    %376 = vector.multi_reduction <add>, %375, %cst_183 [1] : vector<8x64xf32> to vector<8xf32>
    %377 = vector.shape_cast %376 : vector<8xf32> to vector<8x1xf32>
    %cst_184 = arith.constant 6.400000e+01 : f32
    %378 = vector.broadcast %cst_184 : f32 to vector<8x1xf32>
    %379 = arith.divf %377, %378 : vector<8x1xf32>
    %380 = vector.broadcast %372 : vector<8x1xf32> to vector<8x64xf32>
    %381 = arith.subf %367, %380 : vector<8x64xf32>
    %cst_185 = arith.constant 9.99999974E-6 : f32
    %382 = vector.broadcast %cst_185 : f32 to vector<8x1xf32>
    %383 = arith.addf %379, %382 : vector<8x1xf32>
    %384 = math.rsqrt %383 : vector<8x1xf32>
    %385 = vector.broadcast %384 : vector<8x1xf32> to vector<8x64xf32>
    %386 = arith.mulf %381, %385 : vector<8x64xf32>
    %c0_186 = arith.constant 0 : index
    %c0_187 = arith.constant 0 : index
    %387 = vector.load %arg48[%c0_186, %c0_187] : memref<1x64xf32, #tpu.memory_space<vmem>>, vector<1x64xf32>
    %388 = vector.broadcast %387 : vector<1x64xf32> to vector<8x64xf32>
    %389 = arith.mulf %386, %388 : vector<8x64xf32>
    %c0_188 = arith.constant 0 : index
    %c0_189 = arith.constant 0 : index
    %390 = vector.load %arg47[%c0_188, %c0_189] : memref<1x64xf32, #tpu.memory_space<vmem>>, vector<1x64xf32>
    %391 = vector.broadcast %390 : vector<1x64xf32> to vector<8x64xf32>
    %392 = arith.addf %389, %391 : vector<8x64xf32>
    %c0_190 = arith.constant 0 : index
    %c0_191 = arith.constant 0 : index
    %393 = vector.load %arg54[%c0_190, %c0_191] : memref<64x192xf32, #tpu.memory_space<vmem>>, vector<64x192xf32>
    %cst_192 = arith.constant dense<0.000000e+00> : vector<8x192xf32>
    %394 = tpu.matmul %392, %393, %cst_192 {dimension_numbers = #tpu.dot_dimension_numbers<[1], [0], [0], [1], [0, 0, 1, 1], [], []>} : vector<8x64xf32>, vector<64x192xf32>, vector<8x192xf32> -> vector<8x192xf32>
    %c0_193 = arith.constant 0 : index
    %c0_194 = arith.constant 0 : index
    %395 = vector.load %arg53[%c0_193, %c0_194] : memref<1x192xf32, #tpu.memory_space<vmem>>, vector<1x192xf32>
    %396 = vector.broadcast %395 : vector<1x192xf32> to vector<8x192xf32>
    %397 = arith.addf %394, %396 : vector<8x192xf32>
    %398 = vector.extract_strided_slice %397 {offsets = [0, 0], sizes = [8, 16], strides = [1, 1]} : vector<8x192xf32> to vector<8x16xf32>
    %399 = vector.extract_strided_slice %397 {offsets = [0, 64], sizes = [8, 16], strides = [1, 1]} : vector<8x192xf32> to vector<8x16xf32>
    %400 = vector.extract_strided_slice %397 {offsets = [0, 128], sizes = [8, 16], strides = [1, 1]} : vector<8x192xf32> to vector<8x16xf32>
    %cst_195 = arith.constant dense<0.000000e+00> : vector<8x8xf32>
    %401 = tpu.matmul %398, %399, %cst_195 {dimension_numbers = #tpu.dot_dimension_numbers<[1], [1], [0], [0], [0, 0, 1, 0], [], []>} : vector<8x16xf32>, vector<8x16xf32>, vector<8x8xf32> -> vector<8x8xf32>
    %cst_196 = arith.constant 2.500000e-01 : f32
    %402 = vector.broadcast %cst_196 : f32 to vector<8x8xf32>
    %403 = arith.mulf %401, %402 : vector<8x8xf32>
    %c0_197 = arith.constant 0 : index
    %c0_198 = arith.constant 0 : index
    %c0_199 = arith.constant 0 : index
    %404 = vector.load %arg42[%c0_197, %c0_198, %c0_199] : memref<4x8x8xf32, #tpu.memory_space<vmem>>, vector<1x8x8xf32>
    %405 = vector.shape_cast %404 : vector<1x8x8xf32> to vector<8x8xf32>
    %406 = arith.addf %403, %405 : vector<8x8xf32>
    %cst_200 = arith.constant dense<0xFF800000> : vector<8xf32>
    %407 = vector.multi_reduction <maximumf>, %406, %cst_200 [1] : vector<8x8xf32> to vector<8xf32>
    %408 = vector.shape_cast %407 : vector<8xf32> to vector<8x1xf32>
    %409 = vector.broadcast %408 : vector<8x1xf32> to vector<8x8xf32>
    %410 = arith.subf %406, %409 : vector<8x8xf32>
    %411 = math.exp %410 : vector<8x8xf32>
    %cst_201 = arith.constant dense<0.000000e+00> : vector<8xf32>
    %412 = vector.multi_reduction <add>, %411, %cst_201 [1] : vector<8x8xf32> to vector<8xf32>
    %413 = vector.shape_cast %412 : vector<8xf32> to vector<8x1xf32>
    %414 = vector.broadcast %413 : vector<8x1xf32> to vector<8x8xf32>
    %415 = arith.divf %411, %414 : vector<8x8xf32>
    %cst_202 = arith.constant dense<0.000000e+00> : vector<8x16xf32>
    %416 = tpu.matmul %415, %400, %cst_202 {dimension_numbers = #tpu.dot_dimension_numbers<[1], [0], [0], [1], [0, 0, 1, 1], [], []>} : vector<8x8xf32>, vector<8x16xf32>, vector<8x16xf32> -> vector<8x16xf32>
    %417 = vector.extract_strided_slice %397 {offsets = [0, 16], sizes = [8, 16], strides = [1, 1]} : vector<8x192xf32> to vector<8x16xf32>
    %418 = vector.extract_strided_slice %397 {offsets = [0, 80], sizes = [8, 16], strides = [1, 1]} : vector<8x192xf32> to vector<8x16xf32>
    %419 = vector.extract_strided_slice %397 {offsets = [0, 144], sizes = [8, 16], strides = [1, 1]} : vector<8x192xf32> to vector<8x16xf32>
    %cst_203 = arith.constant dense<0.000000e+00> : vector<8x8xf32>
    %420 = tpu.matmul %417, %418, %cst_203 {dimension_numbers = #tpu.dot_dimension_numbers<[1], [1], [0], [0], [0, 0, 1, 0], [], []>} : vector<8x16xf32>, vector<8x16xf32>, vector<8x8xf32> -> vector<8x8xf32>
    %cst_204 = arith.constant 2.500000e-01 : f32
    %421 = vector.broadcast %cst_204 : f32 to vector<8x8xf32>
    %422 = arith.mulf %420, %421 : vector<8x8xf32>
    %c1_205 = arith.constant 1 : index
    %c0_206 = arith.constant 0 : index
    %c0_207 = arith.constant 0 : index
    %423 = vector.load %arg42[%c1_205, %c0_206, %c0_207] : memref<4x8x8xf32, #tpu.memory_space<vmem>>, vector<1x8x8xf32>
    %424 = vector.shape_cast %423 : vector<1x8x8xf32> to vector<8x8xf32>
    %425 = arith.addf %422, %424 : vector<8x8xf32>
    %cst_208 = arith.constant dense<0xFF800000> : vector<8xf32>
    %426 = vector.multi_reduction <maximumf>, %425, %cst_208 [1] : vector<8x8xf32> to vector<8xf32>
    %427 = vector.shape_cast %426 : vector<8xf32> to vector<8x1xf32>
    %428 = vector.broadcast %427 : vector<8x1xf32> to vector<8x8xf32>
    %429 = arith.subf %425, %428 : vector<8x8xf32>
    %430 = math.exp %429 : vector<8x8xf32>
    %cst_209 = arith.constant dense<0.000000e+00> : vector<8xf32>
    %431 = vector.multi_reduction <add>, %430, %cst_209 [1] : vector<8x8xf32> to vector<8xf32>
    %432 = vector.shape_cast %431 : vector<8xf32> to vector<8x1xf32>
    %433 = vector.broadcast %432 : vector<8x1xf32> to vector<8x8xf32>
    %434 = arith.divf %430, %433 : vector<8x8xf32>
    %cst_210 = arith.constant dense<0.000000e+00> : vector<8x16xf32>
    %435 = tpu.matmul %434, %419, %cst_210 {dimension_numbers = #tpu.dot_dimension_numbers<[1], [0], [0], [1], [0, 0, 1, 1], [], []>} : vector<8x8xf32>, vector<8x16xf32>, vector<8x16xf32> -> vector<8x16xf32>
    %436 = vector.extract_strided_slice %397 {offsets = [0, 32], sizes = [8, 16], strides = [1, 1]} : vector<8x192xf32> to vector<8x16xf32>
    %437 = vector.extract_strided_slice %397 {offsets = [0, 96], sizes = [8, 16], strides = [1, 1]} : vector<8x192xf32> to vector<8x16xf32>
    %438 = vector.extract_strided_slice %397 {offsets = [0, 160], sizes = [8, 16], strides = [1, 1]} : vector<8x192xf32> to vector<8x16xf32>
    %cst_211 = arith.constant dense<0.000000e+00> : vector<8x8xf32>
    %439 = tpu.matmul %436, %437, %cst_211 {dimension_numbers = #tpu.dot_dimension_numbers<[1], [1], [0], [0], [0, 0, 1, 0], [], []>} : vector<8x16xf32>, vector<8x16xf32>, vector<8x8xf32> -> vector<8x8xf32>
    %cst_212 = arith.constant 2.500000e-01 : f32
    %440 = vector.broadcast %cst_212 : f32 to vector<8x8xf32>
    %441 = arith.mulf %439, %440 : vector<8x8xf32>
    %c2_213 = arith.constant 2 : index
    %c0_214 = arith.constant 0 : index
    %c0_215 = arith.constant 0 : index
    %442 = vector.load %arg42[%c2_213, %c0_214, %c0_215] : memref<4x8x8xf32, #tpu.memory_space<vmem>>, vector<1x8x8xf32>
    %443 = vector.shape_cast %442 : vector<1x8x8xf32> to vector<8x8xf32>
    %444 = arith.addf %441, %443 : vector<8x8xf32>
    %cst_216 = arith.constant dense<0xFF800000> : vector<8xf32>
    %445 = vector.multi_reduction <maximumf>, %444, %cst_216 [1] : vector<8x8xf32> to vector<8xf32>
    %446 = vector.shape_cast %445 : vector<8xf32> to vector<8x1xf32>
    %447 = vector.broadcast %446 : vector<8x1xf32> to vector<8x8xf32>
    %448 = arith.subf %444, %447 : vector<8x8xf32>
    %449 = math.exp %448 : vector<8x8xf32>
    %cst_217 = arith.constant dense<0.000000e+00> : vector<8xf32>
    %450 = vector.multi_reduction <add>, %449, %cst_217 [1] : vector<8x8xf32> to vector<8xf32>
    %451 = vector.shape_cast %450 : vector<8xf32> to vector<8x1xf32>
    %452 = vector.broadcast %451 : vector<8x1xf32> to vector<8x8xf32>
    %453 = arith.divf %449, %452 : vector<8x8xf32>
    %cst_218 = arith.constant dense<0.000000e+00> : vector<8x16xf32>
    %454 = tpu.matmul %453, %438, %cst_218 {dimension_numbers = #tpu.dot_dimension_numbers<[1], [0], [0], [1], [0, 0, 1, 1], [], []>} : vector<8x8xf32>, vector<8x16xf32>, vector<8x16xf32> -> vector<8x16xf32>
    %455 = vector.extract_strided_slice %397 {offsets = [0, 48], sizes = [8, 16], strides = [1, 1]} : vector<8x192xf32> to vector<8x16xf32>
    %456 = vector.extract_strided_slice %397 {offsets = [0, 112], sizes = [8, 16], strides = [1, 1]} : vector<8x192xf32> to vector<8x16xf32>
    %457 = vector.extract_strided_slice %397 {offsets = [0, 176], sizes = [8, 16], strides = [1, 1]} : vector<8x192xf32> to vector<8x16xf32>
    %cst_219 = arith.constant dense<0.000000e+00> : vector<8x8xf32>
    %458 = tpu.matmul %455, %456, %cst_219 {dimension_numbers = #tpu.dot_dimension_numbers<[1], [1], [0], [0], [0, 0, 1, 0], [], []>} : vector<8x16xf32>, vector<8x16xf32>, vector<8x8xf32> -> vector<8x8xf32>
    %cst_220 = arith.constant 2.500000e-01 : f32
    %459 = vector.broadcast %cst_220 : f32 to vector<8x8xf32>
    %460 = arith.mulf %458, %459 : vector<8x8xf32>
    %c3_221 = arith.constant 3 : index
    %c0_222 = arith.constant 0 : index
    %c0_223 = arith.constant 0 : index
    %461 = vector.load %arg42[%c3_221, %c0_222, %c0_223] : memref<4x8x8xf32, #tpu.memory_space<vmem>>, vector<1x8x8xf32>
    %462 = vector.shape_cast %461 : vector<1x8x8xf32> to vector<8x8xf32>
    %463 = arith.addf %460, %462 : vector<8x8xf32>
    %cst_224 = arith.constant dense<0xFF800000> : vector<8xf32>
    %464 = vector.multi_reduction <maximumf>, %463, %cst_224 [1] : vector<8x8xf32> to vector<8xf32>
    %465 = vector.shape_cast %464 : vector<8xf32> to vector<8x1xf32>
    %466 = vector.broadcast %465 : vector<8x1xf32> to vector<8x8xf32>
    %467 = arith.subf %463, %466 : vector<8x8xf32>
    %468 = math.exp %467 : vector<8x8xf32>
    %cst_225 = arith.constant dense<0.000000e+00> : vector<8xf32>
    %469 = vector.multi_reduction <add>, %468, %cst_225 [1] : vector<8x8xf32> to vector<8xf32>
    %470 = vector.shape_cast %469 : vector<8xf32> to vector<8x1xf32>
    %471 = vector.broadcast %470 : vector<8x1xf32> to vector<8x8xf32>
    %472 = arith.divf %468, %471 : vector<8x8xf32>
    %cst_226 = arith.constant dense<0.000000e+00> : vector<8x16xf32>
    %473 = tpu.matmul %472, %457, %cst_226 {dimension_numbers = #tpu.dot_dimension_numbers<[1], [0], [0], [1], [0, 0, 1, 1], [], []>} : vector<8x8xf32>, vector<8x16xf32>, vector<8x16xf32> -> vector<8x16xf32>
    %474 = tpu.concatenate %416, %435, %454, %473 in 1 : vector<8x16xf32>, vector<8x16xf32>, vector<8x16xf32>, vector<8x16xf32> -> vector<8x64xf32>
    %c0_227 = arith.constant 0 : index
    %c0_228 = arith.constant 0 : index
    %475 = vector.load %arg52[%c0_227, %c0_228] : memref<64x64xf32, #tpu.memory_space<vmem>>, vector<64x64xf32>
    %cst_229 = arith.constant dense<0.000000e+00> : vector<8x64xf32>
    %476 = tpu.matmul %474, %475, %cst_229 {dimension_numbers = #tpu.dot_dimension_numbers<[1], [0], [0], [1], [0, 0, 1, 1], [], []>} : vector<8x64xf32>, vector<64x64xf32>, vector<8x64xf32> -> vector<8x64xf32>
    %c0_230 = arith.constant 0 : index
    %c0_231 = arith.constant 0 : index
    %477 = vector.load %arg51[%c0_230, %c0_231] : memref<1x64xf32, #tpu.memory_space<vmem>>, vector<1x64xf32>
    %478 = vector.broadcast %477 : vector<1x64xf32> to vector<8x64xf32>
    %479 = arith.addf %476, %478 : vector<8x64xf32>
    %480 = arith.addf %367, %479 : vector<8x64xf32>
    %cst_232 = arith.constant dense<0.000000e+00> : vector<8xf32>
    %481 = vector.multi_reduction <add>, %480, %cst_232 [1] : vector<8x64xf32> to vector<8xf32>
    %482 = vector.shape_cast %481 : vector<8xf32> to vector<8x1xf32>
    %cst_233 = arith.constant 6.400000e+01 : f32
    %483 = vector.broadcast %cst_233 : f32 to vector<8x1xf32>
    %484 = arith.divf %482, %483 : vector<8x1xf32>
    %485 = vector.broadcast %484 : vector<8x1xf32> to vector<8x64xf32>
    %486 = arith.subf %480, %485 : vector<8x64xf32>
    %487 = arith.mulf %486, %486 : vector<8x64xf32>
    %cst_234 = arith.constant dense<0.000000e+00> : vector<8xf32>
    %488 = vector.multi_reduction <add>, %487, %cst_234 [1] : vector<8x64xf32> to vector<8xf32>
    %489 = vector.shape_cast %488 : vector<8xf32> to vector<8x1xf32>
    %cst_235 = arith.constant 6.400000e+01 : f32
    %490 = vector.broadcast %cst_235 : f32 to vector<8x1xf32>
    %491 = arith.divf %489, %490 : vector<8x1xf32>
    %492 = vector.broadcast %484 : vector<8x1xf32> to vector<8x64xf32>
    %493 = arith.subf %480, %492 : vector<8x64xf32>
    %cst_236 = arith.constant 9.99999974E-6 : f32
    %494 = vector.broadcast %cst_236 : f32 to vector<8x1xf32>
    %495 = arith.addf %491, %494 : vector<8x1xf32>
    %496 = math.rsqrt %495 : vector<8x1xf32>
    %497 = vector.broadcast %496 : vector<8x1xf32> to vector<8x64xf32>
    %498 = arith.mulf %493, %497 : vector<8x64xf32>
    %c0_237 = arith.constant 0 : index
    %c0_238 = arith.constant 0 : index
    %499 = vector.load %arg50[%c0_237, %c0_238] : memref<1x64xf32, #tpu.memory_space<vmem>>, vector<1x64xf32>
    %500 = vector.broadcast %499 : vector<1x64xf32> to vector<8x64xf32>
    %501 = arith.mulf %498, %500 : vector<8x64xf32>
    %c0_239 = arith.constant 0 : index
    %c0_240 = arith.constant 0 : index
    %502 = vector.load %arg49[%c0_239, %c0_240] : memref<1x64xf32, #tpu.memory_space<vmem>>, vector<1x64xf32>
    %503 = vector.broadcast %502 : vector<1x64xf32> to vector<8x64xf32>
    %504 = arith.addf %501, %503 : vector<8x64xf32>
    %c0_241 = arith.constant 0 : index
    %c0_242 = arith.constant 0 : index
    %505 = vector.load %arg44[%c0_241, %c0_242] : memref<64x128xf32, #tpu.memory_space<vmem>>, vector<64x128xf32>
    %cst_243 = arith.constant dense<0.000000e+00> : vector<8x128xf32>
    %506 = tpu.matmul %504, %505, %cst_243 {dimension_numbers = #tpu.dot_dimension_numbers<[1], [0], [0], [1], [0, 0, 1, 1], [], []>} : vector<8x64xf32>, vector<64x128xf32>, vector<8x128xf32> -> vector<8x128xf32>
    %c0_244 = arith.constant 0 : index
    %c0_245 = arith.constant 0 : index
    %507 = vector.load %arg43[%c0_244, %c0_245] : memref<1x128xf32, #tpu.memory_space<vmem>>, vector<1x128xf32>
    %508 = vector.broadcast %507 : vector<1x128xf32> to vector<8x128xf32>
    %509 = arith.addf %506, %508 : vector<8x128xf32>
    %cst_246 = arith.constant 5.000000e-01 : f32
    %510 = vector.broadcast %cst_246 : f32 to vector<8x128xf32>
    %511 = arith.mulf %510, %509 : vector<8x128xf32>
    %cst_247 = arith.constant 0.707106769 : f32
    %512 = vector.broadcast %cst_247 : f32 to vector<8x128xf32>
    %513 = arith.mulf %509, %512 : vector<8x128xf32>
    %514 = math.absf %513 : vector<8x128xf32>
    %cst_248 = arith.constant 0.327591091 : f32
    %515 = vector.broadcast %cst_248 : f32 to vector<8x128xf32>
    %516 = arith.mulf %515, %514 : vector<8x128xf32>
    %cst_249 = arith.constant 1.000000e+00 : f32
    %517 = vector.broadcast %cst_249 : f32 to vector<8x128xf32>
    %518 = arith.addf %517, %516 : vector<8x128xf32>
    %cst_250 = arith.constant 1.000000e+00 : f32
    %519 = vector.broadcast %cst_250 : f32 to vector<8x128xf32>
    %520 = arith.divf %519, %518 : vector<8x128xf32>
    %cst_251 = arith.constant 1.06140542 : f32
    %521 = vector.broadcast %cst_251 : f32 to vector<8x128xf32>
    %522 = arith.mulf %521, %520 : vector<8x128xf32>
    %cst_252 = arith.constant -1.45315206 : f32
    %523 = vector.broadcast %cst_252 : f32 to vector<8x128xf32>
    %524 = arith.addf %522, %523 : vector<8x128xf32>
    %525 = arith.mulf %524, %520 : vector<8x128xf32>
    %cst_253 = arith.constant 1.42141378 : f32
    %526 = vector.broadcast %cst_253 : f32 to vector<8x128xf32>
    %527 = arith.addf %525, %526 : vector<8x128xf32>
    %528 = arith.mulf %527, %520 : vector<8x128xf32>
    %cst_254 = arith.constant -0.284496725 : f32
    %529 = vector.broadcast %cst_254 : f32 to vector<8x128xf32>
    %530 = arith.addf %528, %529 : vector<8x128xf32>
    %531 = arith.mulf %530, %520 : vector<8x128xf32>
    %cst_255 = arith.constant 0.254829586 : f32
    %532 = vector.broadcast %cst_255 : f32 to vector<8x128xf32>
    %533 = arith.addf %531, %532 : vector<8x128xf32>
    %534 = arith.mulf %533, %520 : vector<8x128xf32>
    %535 = arith.mulf %514, %514 : vector<8x128xf32>
    %cst_256 = arith.constant 0.000000e+00 : f32
    %536 = vector.broadcast %cst_256 : f32 to vector<8x128xf32>
    %537 = arith.subf %536, %535 : vector<8x128xf32>
    %538 = math.exp %537 : vector<8x128xf32>
    %539 = arith.mulf %534, %538 : vector<8x128xf32>
    %cst_257 = arith.constant 1.000000e+00 : f32
    %540 = vector.broadcast %cst_257 : f32 to vector<8x128xf32>
    %541 = arith.subf %540, %539 : vector<8x128xf32>
    %cst_258 = arith.constant 0.000000e+00 : f32
    %542 = vector.broadcast %cst_258 : f32 to vector<8x128xf32>
    %543 = arith.cmpf olt, %513, %542 : vector<8x128xf32>
    %cst_259 = arith.constant 0.000000e+00 : f32
    %544 = vector.broadcast %cst_259 : f32 to vector<8x128xf32>
    %545 = arith.subf %544, %541 : vector<8x128xf32>
    %546 = arith.select %543, %545, %541 : vector<8x128xi1>, vector<8x128xf32>
    %cst_260 = arith.constant 1.000000e+00 : f32
    %547 = vector.broadcast %cst_260 : f32 to vector<8x128xf32>
    %548 = arith.addf %547, %546 : vector<8x128xf32>
    %549 = arith.mulf %511, %548 : vector<8x128xf32>
    %c0_261 = arith.constant 0 : index
    %c0_262 = arith.constant 0 : index
    %550 = vector.load %arg46[%c0_261, %c0_262] : memref<128x64xf32, #tpu.memory_space<vmem>>, vector<128x64xf32>
    %cst_263 = arith.constant dense<0.000000e+00> : vector<8x64xf32>
    %551 = tpu.matmul %549, %550, %cst_263 {dimension_numbers = #tpu.dot_dimension_numbers<[1], [0], [0], [1], [0, 0, 1, 1], [], []>} : vector<8x128xf32>, vector<128x64xf32>, vector<8x64xf32> -> vector<8x64xf32>
    %c0_264 = arith.constant 0 : index
    %c0_265 = arith.constant 0 : index
    %552 = vector.load %arg45[%c0_264, %c0_265] : memref<1x64xf32, #tpu.memory_space<vmem>>, vector<1x64xf32>
    %553 = vector.broadcast %552 : vector<1x64xf32> to vector<8x64xf32>
    %554 = arith.addf %551, %553 : vector<8x64xf32>
    %555 = arith.addf %480, %554 : vector<8x64xf32>
    %cst_266 = arith.constant dense<0.000000e+00> : vector<8xf32>
    %556 = vector.multi_reduction <add>, %555, %cst_266 [1] : vector<8x64xf32> to vector<8xf32>
    %557 = vector.shape_cast %556 : vector<8xf32> to vector<8x1xf32>
    %cst_267 = arith.constant 6.400000e+01 : f32
    %558 = vector.broadcast %cst_267 : f32 to vector<8x1xf32>
    %559 = arith.divf %557, %558 : vector<8x1xf32>
    %560 = vector.broadcast %559 : vector<8x1xf32> to vector<8x64xf32>
    %561 = arith.subf %555, %560 : vector<8x64xf32>
    %562 = arith.mulf %561, %561 : vector<8x64xf32>
    %cst_268 = arith.constant dense<0.000000e+00> : vector<8xf32>
    %563 = vector.multi_reduction <add>, %562, %cst_268 [1] : vector<8x64xf32> to vector<8xf32>
    %564 = vector.shape_cast %563 : vector<8xf32> to vector<8x1xf32>
    %cst_269 = arith.constant 6.400000e+01 : f32
    %565 = vector.broadcast %cst_269 : f32 to vector<8x1xf32>
    %566 = arith.divf %564, %565 : vector<8x1xf32>
    %567 = vector.broadcast %559 : vector<8x1xf32> to vector<8x64xf32>
    %568 = arith.subf %555, %567 : vector<8x64xf32>
    %cst_270 = arith.constant 9.99999974E-6 : f32
    %569 = vector.broadcast %cst_270 : f32 to vector<8x1xf32>
    %570 = arith.addf %566, %569 : vector<8x1xf32>
    %571 = math.rsqrt %570 : vector<8x1xf32>
    %572 = vector.broadcast %571 : vector<8x1xf32> to vector<8x64xf32>
    %573 = arith.mulf %568, %572 : vector<8x64xf32>
    %c0_271 = arith.constant 0 : index
    %c0_272 = arith.constant 0 : index
    %574 = vector.load %arg61[%c0_271, %c0_272] : memref<1x64xf32, #tpu.memory_space<vmem>>, vector<1x64xf32>
    %575 = vector.broadcast %574 : vector<1x64xf32> to vector<8x64xf32>
    %576 = arith.mulf %573, %575 : vector<8x64xf32>
    %c0_273 = arith.constant 0 : index
    %c0_274 = arith.constant 0 : index
    %577 = vector.load %arg60[%c0_273, %c0_274] : memref<1x64xf32, #tpu.memory_space<vmem>>, vector<1x64xf32>
    %578 = vector.broadcast %577 : vector<1x64xf32> to vector<8x64xf32>
    %579 = arith.addf %576, %578 : vector<8x64xf32>
    %c0_275 = arith.constant 0 : index
    %c0_276 = arith.constant 0 : index
    %580 = vector.load %arg67[%c0_275, %c0_276] : memref<64x192xf32, #tpu.memory_space<vmem>>, vector<64x192xf32>
    %cst_277 = arith.constant dense<0.000000e+00> : vector<8x192xf32>
    %581 = tpu.matmul %579, %580, %cst_277 {dimension_numbers = #tpu.dot_dimension_numbers<[1], [0], [0], [1], [0, 0, 1, 1], [], []>} : vector<8x64xf32>, vector<64x192xf32>, vector<8x192xf32> -> vector<8x192xf32>
    %c0_278 = arith.constant 0 : index
    %c0_279 = arith.constant 0 : index
    %582 = vector.load %arg66[%c0_278, %c0_279] : memref<1x192xf32, #tpu.memory_space<vmem>>, vector<1x192xf32>
    %583 = vector.broadcast %582 : vector<1x192xf32> to vector<8x192xf32>
    %584 = arith.addf %581, %583 : vector<8x192xf32>
    %585 = vector.extract_strided_slice %584 {offsets = [0, 0], sizes = [8, 16], strides = [1, 1]} : vector<8x192xf32> to vector<8x16xf32>
    %586 = vector.extract_strided_slice %584 {offsets = [0, 64], sizes = [8, 16], strides = [1, 1]} : vector<8x192xf32> to vector<8x16xf32>
    %587 = vector.extract_strided_slice %584 {offsets = [0, 128], sizes = [8, 16], strides = [1, 1]} : vector<8x192xf32> to vector<8x16xf32>
    %cst_280 = arith.constant dense<0.000000e+00> : vector<8x8xf32>
    %588 = tpu.matmul %585, %586, %cst_280 {dimension_numbers = #tpu.dot_dimension_numbers<[1], [1], [0], [0], [0, 0, 1, 0], [], []>} : vector<8x16xf32>, vector<8x16xf32>, vector<8x8xf32> -> vector<8x8xf32>
    %cst_281 = arith.constant 2.500000e-01 : f32
    %589 = vector.broadcast %cst_281 : f32 to vector<8x8xf32>
    %590 = arith.mulf %588, %589 : vector<8x8xf32>
    %c0_282 = arith.constant 0 : index
    %c0_283 = arith.constant 0 : index
    %c0_284 = arith.constant 0 : index
    %591 = vector.load %arg55[%c0_282, %c0_283, %c0_284] : memref<4x8x8xf32, #tpu.memory_space<vmem>>, vector<1x8x8xf32>
    %592 = vector.shape_cast %591 : vector<1x8x8xf32> to vector<8x8xf32>
    %593 = arith.addf %590, %592 : vector<8x8xf32>
    %cst_285 = arith.constant dense<0xFF800000> : vector<8xf32>
    %594 = vector.multi_reduction <maximumf>, %593, %cst_285 [1] : vector<8x8xf32> to vector<8xf32>
    %595 = vector.shape_cast %594 : vector<8xf32> to vector<8x1xf32>
    %596 = vector.broadcast %595 : vector<8x1xf32> to vector<8x8xf32>
    %597 = arith.subf %593, %596 : vector<8x8xf32>
    %598 = math.exp %597 : vector<8x8xf32>
    %cst_286 = arith.constant dense<0.000000e+00> : vector<8xf32>
    %599 = vector.multi_reduction <add>, %598, %cst_286 [1] : vector<8x8xf32> to vector<8xf32>
    %600 = vector.shape_cast %599 : vector<8xf32> to vector<8x1xf32>
    %601 = vector.broadcast %600 : vector<8x1xf32> to vector<8x8xf32>
    %602 = arith.divf %598, %601 : vector<8x8xf32>
    %cst_287 = arith.constant dense<0.000000e+00> : vector<8x16xf32>
    %603 = tpu.matmul %602, %587, %cst_287 {dimension_numbers = #tpu.dot_dimension_numbers<[1], [0], [0], [1], [0, 0, 1, 1], [], []>} : vector<8x8xf32>, vector<8x16xf32>, vector<8x16xf32> -> vector<8x16xf32>
    %604 = vector.extract_strided_slice %584 {offsets = [0, 16], sizes = [8, 16], strides = [1, 1]} : vector<8x192xf32> to vector<8x16xf32>
    %605 = vector.extract_strided_slice %584 {offsets = [0, 80], sizes = [8, 16], strides = [1, 1]} : vector<8x192xf32> to vector<8x16xf32>
    %606 = vector.extract_strided_slice %584 {offsets = [0, 144], sizes = [8, 16], strides = [1, 1]} : vector<8x192xf32> to vector<8x16xf32>
    %cst_288 = arith.constant dense<0.000000e+00> : vector<8x8xf32>
    %607 = tpu.matmul %604, %605, %cst_288 {dimension_numbers = #tpu.dot_dimension_numbers<[1], [1], [0], [0], [0, 0, 1, 0], [], []>} : vector<8x16xf32>, vector<8x16xf32>, vector<8x8xf32> -> vector<8x8xf32>
    %cst_289 = arith.constant 2.500000e-01 : f32
    %608 = vector.broadcast %cst_289 : f32 to vector<8x8xf32>
    %609 = arith.mulf %607, %608 : vector<8x8xf32>
    %c1_290 = arith.constant 1 : index
    %c0_291 = arith.constant 0 : index
    %c0_292 = arith.constant 0 : index
    %610 = vector.load %arg55[%c1_290, %c0_291, %c0_292] : memref<4x8x8xf32, #tpu.memory_space<vmem>>, vector<1x8x8xf32>
    %611 = vector.shape_cast %610 : vector<1x8x8xf32> to vector<8x8xf32>
    %612 = arith.addf %609, %611 : vector<8x8xf32>
    %cst_293 = arith.constant dense<0xFF800000> : vector<8xf32>
    %613 = vector.multi_reduction <maximumf>, %612, %cst_293 [1] : vector<8x8xf32> to vector<8xf32>
    %614 = vector.shape_cast %613 : vector<8xf32> to vector<8x1xf32>
    %615 = vector.broadcast %614 : vector<8x1xf32> to vector<8x8xf32>
    %616 = arith.subf %612, %615 : vector<8x8xf32>
    %617 = math.exp %616 : vector<8x8xf32>
    %cst_294 = arith.constant dense<0.000000e+00> : vector<8xf32>
    %618 = vector.multi_reduction <add>, %617, %cst_294 [1] : vector<8x8xf32> to vector<8xf32>
    %619 = vector.shape_cast %618 : vector<8xf32> to vector<8x1xf32>
    %620 = vector.broadcast %619 : vector<8x1xf32> to vector<8x8xf32>
    %621 = arith.divf %617, %620 : vector<8x8xf32>
    %cst_295 = arith.constant dense<0.000000e+00> : vector<8x16xf32>
    %622 = tpu.matmul %621, %606, %cst_295 {dimension_numbers = #tpu.dot_dimension_numbers<[1], [0], [0], [1], [0, 0, 1, 1], [], []>} : vector<8x8xf32>, vector<8x16xf32>, vector<8x16xf32> -> vector<8x16xf32>
    %623 = vector.extract_strided_slice %584 {offsets = [0, 32], sizes = [8, 16], strides = [1, 1]} : vector<8x192xf32> to vector<8x16xf32>
    %624 = vector.extract_strided_slice %584 {offsets = [0, 96], sizes = [8, 16], strides = [1, 1]} : vector<8x192xf32> to vector<8x16xf32>
    %625 = vector.extract_strided_slice %584 {offsets = [0, 160], sizes = [8, 16], strides = [1, 1]} : vector<8x192xf32> to vector<8x16xf32>
    %cst_296 = arith.constant dense<0.000000e+00> : vector<8x8xf32>
    %626 = tpu.matmul %623, %624, %cst_296 {dimension_numbers = #tpu.dot_dimension_numbers<[1], [1], [0], [0], [0, 0, 1, 0], [], []>} : vector<8x16xf32>, vector<8x16xf32>, vector<8x8xf32> -> vector<8x8xf32>
    %cst_297 = arith.constant 2.500000e-01 : f32
    %627 = vector.broadcast %cst_297 : f32 to vector<8x8xf32>
    %628 = arith.mulf %626, %627 : vector<8x8xf32>
    %c2_298 = arith.constant 2 : index
    %c0_299 = arith.constant 0 : index
    %c0_300 = arith.constant 0 : index
    %629 = vector.load %arg55[%c2_298, %c0_299, %c0_300] : memref<4x8x8xf32, #tpu.memory_space<vmem>>, vector<1x8x8xf32>
    %630 = vector.shape_cast %629 : vector<1x8x8xf32> to vector<8x8xf32>
    %631 = arith.addf %628, %630 : vector<8x8xf32>
    %cst_301 = arith.constant dense<0xFF800000> : vector<8xf32>
    %632 = vector.multi_reduction <maximumf>, %631, %cst_301 [1] : vector<8x8xf32> to vector<8xf32>
    %633 = vector.shape_cast %632 : vector<8xf32> to vector<8x1xf32>
    %634 = vector.broadcast %633 : vector<8x1xf32> to vector<8x8xf32>
    %635 = arith.subf %631, %634 : vector<8x8xf32>
    %636 = math.exp %635 : vector<8x8xf32>
    %cst_302 = arith.constant dense<0.000000e+00> : vector<8xf32>
    %637 = vector.multi_reduction <add>, %636, %cst_302 [1] : vector<8x8xf32> to vector<8xf32>
    %638 = vector.shape_cast %637 : vector<8xf32> to vector<8x1xf32>
    %639 = vector.broadcast %638 : vector<8x1xf32> to vector<8x8xf32>
    %640 = arith.divf %636, %639 : vector<8x8xf32>
    %cst_303 = arith.constant dense<0.000000e+00> : vector<8x16xf32>
    %641 = tpu.matmul %640, %625, %cst_303 {dimension_numbers = #tpu.dot_dimension_numbers<[1], [0], [0], [1], [0, 0, 1, 1], [], []>} : vector<8x8xf32>, vector<8x16xf32>, vector<8x16xf32> -> vector<8x16xf32>
    %642 = vector.extract_strided_slice %584 {offsets = [0, 48], sizes = [8, 16], strides = [1, 1]} : vector<8x192xf32> to vector<8x16xf32>
    %643 = vector.extract_strided_slice %584 {offsets = [0, 112], sizes = [8, 16], strides = [1, 1]} : vector<8x192xf32> to vector<8x16xf32>
    %644 = vector.extract_strided_slice %584 {offsets = [0, 176], sizes = [8, 16], strides = [1, 1]} : vector<8x192xf32> to vector<8x16xf32>
    %cst_304 = arith.constant dense<0.000000e+00> : vector<8x8xf32>
    %645 = tpu.matmul %642, %643, %cst_304 {dimension_numbers = #tpu.dot_dimension_numbers<[1], [1], [0], [0], [0, 0, 1, 0], [], []>} : vector<8x16xf32>, vector<8x16xf32>, vector<8x8xf32> -> vector<8x8xf32>
    %cst_305 = arith.constant 2.500000e-01 : f32
    %646 = vector.broadcast %cst_305 : f32 to vector<8x8xf32>
    %647 = arith.mulf %645, %646 : vector<8x8xf32>
    %c3_306 = arith.constant 3 : index
    %c0_307 = arith.constant 0 : index
    %c0_308 = arith.constant 0 : index
    %648 = vector.load %arg55[%c3_306, %c0_307, %c0_308] : memref<4x8x8xf32, #tpu.memory_space<vmem>>, vector<1x8x8xf32>
    %649 = vector.shape_cast %648 : vector<1x8x8xf32> to vector<8x8xf32>
    %650 = arith.addf %647, %649 : vector<8x8xf32>
    %cst_309 = arith.constant dense<0xFF800000> : vector<8xf32>
    %651 = vector.multi_reduction <maximumf>, %650, %cst_309 [1] : vector<8x8xf32> to vector<8xf32>
    %652 = vector.shape_cast %651 : vector<8xf32> to vector<8x1xf32>
    %653 = vector.broadcast %652 : vector<8x1xf32> to vector<8x8xf32>
    %654 = arith.subf %650, %653 : vector<8x8xf32>
    %655 = math.exp %654 : vector<8x8xf32>
    %cst_310 = arith.constant dense<0.000000e+00> : vector<8xf32>
    %656 = vector.multi_reduction <add>, %655, %cst_310 [1] : vector<8x8xf32> to vector<8xf32>
    %657 = vector.shape_cast %656 : vector<8xf32> to vector<8x1xf32>
    %658 = vector.broadcast %657 : vector<8x1xf32> to vector<8x8xf32>
    %659 = arith.divf %655, %658 : vector<8x8xf32>
    %cst_311 = arith.constant dense<0.000000e+00> : vector<8x16xf32>
    %660 = tpu.matmul %659, %644, %cst_311 {dimension_numbers = #tpu.dot_dimension_numbers<[1], [0], [0], [1], [0, 0, 1, 1], [], []>} : vector<8x8xf32>, vector<8x16xf32>, vector<8x16xf32> -> vector<8x16xf32>
    %661 = tpu.concatenate %603, %622, %641, %660 in 1 : vector<8x16xf32>, vector<8x16xf32>, vector<8x16xf32>, vector<8x16xf32> -> vector<8x64xf32>
    %c0_312 = arith.constant 0 : index
    %c0_313 = arith.constant 0 : index
    %662 = vector.load %arg65[%c0_312, %c0_313] : memref<64x64xf32, #tpu.memory_space<vmem>>, vector<64x64xf32>
    %cst_314 = arith.constant dense<0.000000e+00> : vector<8x64xf32>
    %663 = tpu.matmul %661, %662, %cst_314 {dimension_numbers = #tpu.dot_dimension_numbers<[1], [0], [0], [1], [0, 0, 1, 1], [], []>} : vector<8x64xf32>, vector<64x64xf32>, vector<8x64xf32> -> vector<8x64xf32>
    %c0_315 = arith.constant 0 : index
    %c0_316 = arith.constant 0 : index
    %664 = vector.load %arg64[%c0_315, %c0_316] : memref<1x64xf32, #tpu.memory_space<vmem>>, vector<1x64xf32>
    %665 = vector.broadcast %664 : vector<1x64xf32> to vector<8x64xf32>
    %666 = arith.addf %663, %665 : vector<8x64xf32>
    %667 = arith.addf %555, %666 : vector<8x64xf32>
    %cst_317 = arith.constant dense<0.000000e+00> : vector<8xf32>
    %668 = vector.multi_reduction <add>, %667, %cst_317 [1] : vector<8x64xf32> to vector<8xf32>
    %669 = vector.shape_cast %668 : vector<8xf32> to vector<8x1xf32>
    %cst_318 = arith.constant 6.400000e+01 : f32
    %670 = vector.broadcast %cst_318 : f32 to vector<8x1xf32>
    %671 = arith.divf %669, %670 : vector<8x1xf32>
    %672 = vector.broadcast %671 : vector<8x1xf32> to vector<8x64xf32>
    %673 = arith.subf %667, %672 : vector<8x64xf32>
    %674 = arith.mulf %673, %673 : vector<8x64xf32>
    %cst_319 = arith.constant dense<0.000000e+00> : vector<8xf32>
    %675 = vector.multi_reduction <add>, %674, %cst_319 [1] : vector<8x64xf32> to vector<8xf32>
    %676 = vector.shape_cast %675 : vector<8xf32> to vector<8x1xf32>
    %cst_320 = arith.constant 6.400000e+01 : f32
    %677 = vector.broadcast %cst_320 : f32 to vector<8x1xf32>
    %678 = arith.divf %676, %677 : vector<8x1xf32>
    %679 = vector.broadcast %671 : vector<8x1xf32> to vector<8x64xf32>
    %680 = arith.subf %667, %679 : vector<8x64xf32>
    %cst_321 = arith.constant 9.99999974E-6 : f32
    %681 = vector.broadcast %cst_321 : f32 to vector<8x1xf32>
    %682 = arith.addf %678, %681 : vector<8x1xf32>
    %683 = math.rsqrt %682 : vector<8x1xf32>
    %684 = vector.broadcast %683 : vector<8x1xf32> to vector<8x64xf32>
    %685 = arith.mulf %680, %684 : vector<8x64xf32>
    %c0_322 = arith.constant 0 : index
    %c0_323 = arith.constant 0 : index
    %686 = vector.load %arg63[%c0_322, %c0_323] : memref<1x64xf32, #tpu.memory_space<vmem>>, vector<1x64xf32>
    %687 = vector.broadcast %686 : vector<1x64xf32> to vector<8x64xf32>
    %688 = arith.mulf %685, %687 : vector<8x64xf32>
    %c0_324 = arith.constant 0 : index
    %c0_325 = arith.constant 0 : index
    %689 = vector.load %arg62[%c0_324, %c0_325] : memref<1x64xf32, #tpu.memory_space<vmem>>, vector<1x64xf32>
    %690 = vector.broadcast %689 : vector<1x64xf32> to vector<8x64xf32>
    %691 = arith.addf %688, %690 : vector<8x64xf32>
    %c0_326 = arith.constant 0 : index
    %c0_327 = arith.constant 0 : index
    %692 = vector.load %arg57[%c0_326, %c0_327] : memref<64x128xf32, #tpu.memory_space<vmem>>, vector<64x128xf32>
    %cst_328 = arith.constant dense<0.000000e+00> : vector<8x128xf32>
    %693 = tpu.matmul %691, %692, %cst_328 {dimension_numbers = #tpu.dot_dimension_numbers<[1], [0], [0], [1], [0, 0, 1, 1], [], []>} : vector<8x64xf32>, vector<64x128xf32>, vector<8x128xf32> -> vector<8x128xf32>
    %c0_329 = arith.constant 0 : index
    %c0_330 = arith.constant 0 : index
    %694 = vector.load %arg56[%c0_329, %c0_330] : memref<1x128xf32, #tpu.memory_space<vmem>>, vector<1x128xf32>
    %695 = vector.broadcast %694 : vector<1x128xf32> to vector<8x128xf32>
    %696 = arith.addf %693, %695 : vector<8x128xf32>
    %cst_331 = arith.constant 5.000000e-01 : f32
    %697 = vector.broadcast %cst_331 : f32 to vector<8x128xf32>
    %698 = arith.mulf %697, %696 : vector<8x128xf32>
    %cst_332 = arith.constant 0.707106769 : f32
    %699 = vector.broadcast %cst_332 : f32 to vector<8x128xf32>
    %700 = arith.mulf %696, %699 : vector<8x128xf32>
    %701 = math.absf %700 : vector<8x128xf32>
    %cst_333 = arith.constant 0.327591091 : f32
    %702 = vector.broadcast %cst_333 : f32 to vector<8x128xf32>
    %703 = arith.mulf %702, %701 : vector<8x128xf32>
    %cst_334 = arith.constant 1.000000e+00 : f32
    %704 = vector.broadcast %cst_334 : f32 to vector<8x128xf32>
    %705 = arith.addf %704, %703 : vector<8x128xf32>
    %cst_335 = arith.constant 1.000000e+00 : f32
    %706 = vector.broadcast %cst_335 : f32 to vector<8x128xf32>
    %707 = arith.divf %706, %705 : vector<8x128xf32>
    %cst_336 = arith.constant 1.06140542 : f32
    %708 = vector.broadcast %cst_336 : f32 to vector<8x128xf32>
    %709 = arith.mulf %708, %707 : vector<8x128xf32>
    %cst_337 = arith.constant -1.45315206 : f32
    %710 = vector.broadcast %cst_337 : f32 to vector<8x128xf32>
    %711 = arith.addf %709, %710 : vector<8x128xf32>
    %712 = arith.mulf %711, %707 : vector<8x128xf32>
    %cst_338 = arith.constant 1.42141378 : f32
    %713 = vector.broadcast %cst_338 : f32 to vector<8x128xf32>
    %714 = arith.addf %712, %713 : vector<8x128xf32>
    %715 = arith.mulf %714, %707 : vector<8x128xf32>
    %cst_339 = arith.constant -0.284496725 : f32
    %716 = vector.broadcast %cst_339 : f32 to vector<8x128xf32>
    %717 = arith.addf %715, %716 : vector<8x128xf32>
    %718 = arith.mulf %717, %707 : vector<8x128xf32>
    %cst_340 = arith.constant 0.254829586 : f32
    %719 = vector.broadcast %cst_340 : f32 to vector<8x128xf32>
    %720 = arith.addf %718, %719 : vector<8x128xf32>
    %721 = arith.mulf %720, %707 : vector<8x128xf32>
    %722 = arith.mulf %701, %701 : vector<8x128xf32>
    %cst_341 = arith.constant 0.000000e+00 : f32
    %723 = vector.broadcast %cst_341 : f32 to vector<8x128xf32>
    %724 = arith.subf %723, %722 : vector<8x128xf32>
    %725 = math.exp %724 : vector<8x128xf32>
    %726 = arith.mulf %721, %725 : vector<8x128xf32>
    %cst_342 = arith.constant 1.000000e+00 : f32
    %727 = vector.broadcast %cst_342 : f32 to vector<8x128xf32>
    %728 = arith.subf %727, %726 : vector<8x128xf32>
    %cst_343 = arith.constant 0.000000e+00 : f32
    %729 = vector.broadcast %cst_343 : f32 to vector<8x128xf32>
    %730 = arith.cmpf olt, %700, %729 : vector<8x128xf32>
    %cst_344 = arith.constant 0.000000e+00 : f32
    %731 = vector.broadcast %cst_344 : f32 to vector<8x128xf32>
    %732 = arith.subf %731, %728 : vector<8x128xf32>
    %733 = arith.select %730, %732, %728 : vector<8x128xi1>, vector<8x128xf32>
    %cst_345 = arith.constant 1.000000e+00 : f32
    %734 = vector.broadcast %cst_345 : f32 to vector<8x128xf32>
    %735 = arith.addf %734, %733 : vector<8x128xf32>
    %736 = arith.mulf %698, %735 : vector<8x128xf32>
    %c0_346 = arith.constant 0 : index
    %c0_347 = arith.constant 0 : index
    %737 = vector.load %arg59[%c0_346, %c0_347] : memref<128x64xf32, #tpu.memory_space<vmem>>, vector<128x64xf32>
    %cst_348 = arith.constant dense<0.000000e+00> : vector<8x64xf32>
    %738 = tpu.matmul %736, %737, %cst_348 {dimension_numbers = #tpu.dot_dimension_numbers<[1], [0], [0], [1], [0, 0, 1, 1], [], []>} : vector<8x128xf32>, vector<128x64xf32>, vector<8x64xf32> -> vector<8x64xf32>
    %c0_349 = arith.constant 0 : index
    %c0_350 = arith.constant 0 : index
    %739 = vector.load %arg58[%c0_349, %c0_350] : memref<1x64xf32, #tpu.memory_space<vmem>>, vector<1x64xf32>
    %740 = vector.broadcast %739 : vector<1x64xf32> to vector<8x64xf32>
    %741 = arith.addf %738, %740 : vector<8x64xf32>
    %742 = arith.addf %667, %741 : vector<8x64xf32>
    %c0_351 = arith.constant 0 : index
    %c0_352 = arith.constant 0 : index
    %743 = vector.load %arg70[%c0_351, %c0_352] : memref<8x64xf32, #tpu.memory_space<vmem>>, vector<8x64xf32>
    tpu.vector_store %arg70[%c0_351, %c0_352], %742 {strides = array<i32>} : memref<8x64xf32, #tpu.memory_space<vmem>>, vector<8x64xf32>,
    %cst_353 = arith.constant dense<0.000000e+00> : vector<8xf32>
    %744 = vector.multi_reduction <add>, %742, %cst_353 [1] : vector<8x64xf32> to vector<8xf32>
    %745 = vector.shape_cast %744 : vector<8xf32> to vector<8x1xf32>
    %cst_354 = arith.constant 6.400000e+01 : f32
    %746 = vector.broadcast %cst_354 : f32 to vector<8x1xf32>
    %747 = arith.divf %745, %746 : vector<8x1xf32>
    %748 = vector.broadcast %747 : vector<8x1xf32> to vector<8x64xf32>
    %749 = arith.subf %742, %748 : vector<8x64xf32>
    %750 = arith.mulf %749, %749 : vector<8x64xf32>
    %cst_355 = arith.constant dense<0.000000e+00> : vector<8xf32>
    %751 = vector.multi_reduction <add>, %750, %cst_355 [1] : vector<8x64xf32> to vector<8xf32>
    %752 = vector.shape_cast %751 : vector<8xf32> to vector<8x1xf32>
    %cst_356 = arith.constant 6.400000e+01 : f32
    %753 = vector.broadcast %cst_356 : f32 to vector<8x1xf32>
    %754 = arith.divf %752, %753 : vector<8x1xf32>
    %755 = vector.broadcast %747 : vector<8x1xf32> to vector<8x64xf32>
    %756 = arith.subf %742, %755 : vector<8x64xf32>
    %cst_357 = arith.constant 9.99999974E-6 : f32
    %757 = vector.broadcast %cst_357 : f32 to vector<8x1xf32>
    %758 = arith.addf %754, %757 : vector<8x1xf32>
    %759 = math.rsqrt %758 : vector<8x1xf32>
    %760 = vector.broadcast %759 : vector<8x1xf32> to vector<8x64xf32>
    %761 = arith.mulf %756, %760 : vector<8x64xf32>
    %c0_358 = arith.constant 0 : index
    %c0_359 = arith.constant 0 : index
    %762 = vector.load %arg8[%c0_358, %c0_359] : memref<1x64xf32, #tpu.memory_space<vmem>>, vector<1x64xf32>
    %763 = vector.broadcast %762 : vector<1x64xf32> to vector<8x64xf32>
    %764 = arith.mulf %761, %763 : vector<8x64xf32>
    %c0_360 = arith.constant 0 : index
    %c0_361 = arith.constant 0 : index
    %765 = vector.load %arg7[%c0_360, %c0_361] : memref<1x64xf32, #tpu.memory_space<vmem>>, vector<1x64xf32>
    %766 = vector.broadcast %765 : vector<1x64xf32> to vector<8x64xf32>
    %767 = arith.addf %764, %766 : vector<8x64xf32>
    %c0_362 = arith.constant 0 : index
    %c0_363 = arith.constant 0 : index
    %768 = vector.load %arg71[%c0_362, %c0_363] : memref<8x64xf32, #tpu.memory_space<vmem>>, vector<8x64xf32>
    tpu.vector_store %arg71[%c0_362, %c0_363], %767 {strides = array<i32>} : memref<8x64xf32, #tpu.memory_space<vmem>>, vector<8x64xf32>,
    %c0_364 = arith.constant 0 : index
    %c0_365 = arith.constant 0 : index
    %769 = vector.load %arg12[%c0_364, %c0_365] : memref<2x8xf32, #tpu.memory_space<vmem>>, vector<2x8xf32>
    %cst_366 = arith.constant dense<0.000000e+00> : vector<2x64xf32>
    %770 = tpu.matmul %769, %767, %cst_366 {dimension_numbers = #tpu.dot_dimension_numbers<[1], [0], [0], [1], [0, 0, 1, 1], [], []>} : vector<2x8xf32>, vector<8x64xf32>, vector<2x64xf32> -> vector<2x64xf32>
    %c0_367 = arith.constant 0 : index
    %c0_368 = arith.constant 0 : index
    %771 = vector.load %arg72[%c0_367, %c0_368] : memref<2x64xf32, #tpu.memory_space<vmem>>, vector<2x64xf32>
    tpu.vector_store %arg72[%c0_367, %c0_368], %770 {strides = array<i32>} : memref<2x64xf32, #tpu.memory_space<vmem>>, vector<2x64xf32>,
    %c0_369 = arith.constant 0 : index
    %c0_370 = arith.constant 0 : index
    %c0_371 = arith.constant 0 : index
    %772 = vector.load %arg3[%c0_369, %c0_370, %c0_371] : memref<4x2x8xf32, #tpu.memory_space<vmem>>, vector<1x2x8xf32>
    %773 = vector.shape_cast %772 : vector<1x2x8xf32> to vector<2x8xf32>
    %cst_372 = arith.constant dense<0.000000e+00> : vector<2x64xf32>
    %774 = tpu.matmul %773, %742, %cst_372 {dimension_numbers = #tpu.dot_dimension_numbers<[1], [0], [0], [1], [0, 0, 1, 1], [], []>} : vector<2x8xf32>, vector<8x64xf32>, vector<2x64xf32> -> vector<2x64xf32>
    %c1_373 = arith.constant 1 : index
    %c0_374 = arith.constant 0 : index
    %c0_375 = arith.constant 0 : index
    %775 = vector.load %arg3[%c1_373, %c0_374, %c0_375] : memref<4x2x8xf32, #tpu.memory_space<vmem>>, vector<1x2x8xf32>
    %776 = vector.shape_cast %775 : vector<1x2x8xf32> to vector<2x8xf32>
    %cst_376 = arith.constant dense<0.000000e+00> : vector<2x64xf32>
    %777 = tpu.matmul %776, %742, %cst_376 {dimension_numbers = #tpu.dot_dimension_numbers<[1], [0], [0], [1], [0, 0, 1, 1], [], []>} : vector<2x8xf32>, vector<8x64xf32>, vector<2x64xf32> -> vector<2x64xf32>
    %c2_377 = arith.constant 2 : index
    %c0_378 = arith.constant 0 : index
    %c0_379 = arith.constant 0 : index
    %778 = vector.load %arg3[%c2_377, %c0_378, %c0_379] : memref<4x2x8xf32, #tpu.memory_space<vmem>>, vector<1x2x8xf32>
    %779 = vector.shape_cast %778 : vector<1x2x8xf32> to vector<2x8xf32>
    %cst_380 = arith.constant dense<0.000000e+00> : vector<2x64xf32>
    %780 = tpu.matmul %779, %742, %cst_380 {dimension_numbers = #tpu.dot_dimension_numbers<[1], [0], [0], [1], [0, 0, 1, 1], [], []>} : vector<2x8xf32>, vector<8x64xf32>, vector<2x64xf32> -> vector<2x64xf32>
    %c3_381 = arith.constant 3 : index
    %c0_382 = arith.constant 0 : index
    %c0_383 = arith.constant 0 : index
    %781 = vector.load %arg3[%c3_381, %c0_382, %c0_383] : memref<4x2x8xf32, #tpu.memory_space<vmem>>, vector<1x2x8xf32>
    %782 = vector.shape_cast %781 : vector<1x2x8xf32> to vector<2x8xf32>
    %cst_384 = arith.constant dense<0.000000e+00> : vector<2x64xf32>
    %783 = tpu.matmul %782, %742, %cst_384 {dimension_numbers = #tpu.dot_dimension_numbers<[1], [0], [0], [1], [0, 0, 1, 1], [], []>} : vector<2x8xf32>, vector<8x64xf32>, vector<2x64xf32> -> vector<2x64xf32>
    %784 = tpu.concatenate %774, %777, %780, %783 in 1 : vector<2x64xf32>, vector<2x64xf32>, vector<2x64xf32>, vector<2x64xf32> -> vector<2x256xf32>
    %cst_385 = arith.constant dense<0.000000e+00> : vector<2xf32>
    %785 = vector.multi_reduction <add>, %784, %cst_385 [1] : vector<2x256xf32> to vector<2xf32>
    %786 = vector.shape_cast %785 : vector<2xf32> to vector<2x1xf32>
    %cst_386 = arith.constant 2.560000e+02 : f32
    %787 = vector.broadcast %cst_386 : f32 to vector<2x1xf32>
    %788 = arith.divf %786, %787 : vector<2x1xf32>
    %789 = vector.broadcast %788 : vector<2x1xf32> to vector<2x256xf32>
    %790 = arith.subf %784, %789 : vector<2x256xf32>
    %791 = arith.mulf %790, %790 : vector<2x256xf32>
    %cst_387 = arith.constant dense<0.000000e+00> : vector<2xf32>
    %792 = vector.multi_reduction <add>, %791, %cst_387 [1] : vector<2x256xf32> to vector<2xf32>
    %793 = vector.shape_cast %792 : vector<2xf32> to vector<2x1xf32>
    %cst_388 = arith.constant 2.560000e+02 : f32
    %794 = vector.broadcast %cst_388 : f32 to vector<2x1xf32>
    %795 = arith.divf %793, %794 : vector<2x1xf32>
    %796 = vector.broadcast %788 : vector<2x1xf32> to vector<2x256xf32>
    %797 = arith.subf %784, %796 : vector<2x256xf32>
    %cst_389 = arith.constant 9.99999974E-6 : f32
    %798 = vector.broadcast %cst_389 : f32 to vector<2x1xf32>
    %799 = arith.addf %795, %798 : vector<2x1xf32>
    %800 = math.rsqrt %799 : vector<2x1xf32>
    %801 = vector.broadcast %800 : vector<2x1xf32> to vector<2x256xf32>
    %802 = arith.mulf %797, %801 : vector<2x256xf32>
    %c0_390 = arith.constant 0 : index
    %c0_391 = arith.constant 0 : index
    %803 = vector.load %arg2[%c0_390, %c0_391] : memref<1x256xf32, #tpu.memory_space<vmem>>, vector<1x256xf32>
    %804 = vector.broadcast %803 : vector<1x256xf32> to vector<2x256xf32>
    %805 = arith.mulf %802, %804 : vector<2x256xf32>
    %c0_392 = arith.constant 0 : index
    %c0_393 = arith.constant 0 : index
    %806 = vector.load %arg1[%c0_392, %c0_393] : memref<1x256xf32, #tpu.memory_space<vmem>>, vector<1x256xf32>
    %807 = vector.broadcast %806 : vector<1x256xf32> to vector<2x256xf32>
    %808 = arith.addf %805, %807 : vector<2x256xf32>
    %c0_394 = arith.constant 0 : index
    %c0_395 = arith.constant 0 : index
    %809 = vector.load %arg4[%c0_394, %c0_395] : memref<256x128xf32, #tpu.memory_space<vmem>>, vector<256x128xf32>
    %cst_396 = arith.constant dense<0.000000e+00> : vector<2x128xf32>
    %810 = tpu.matmul %808, %809, %cst_396 {dimension_numbers = #tpu.dot_dimension_numbers<[1], [0], [0], [1], [0, 0, 1, 1], [], []>} : vector<2x256xf32>, vector<256x128xf32>, vector<2x128xf32> -> vector<2x128xf32>
    %c0_397 = arith.constant 0 : index
    %c0_398 = arith.constant 0 : index
    %811 = vector.load %arg73[%c0_397, %c0_398] : memref<2x128xf32, #tpu.memory_space<vmem>>, vector<2x128xf32>
    tpu.vector_store %arg73[%c0_397, %c0_398], %810 {strides = array<i32>} : memref<2x128xf32, #tpu.memory_space<vmem>>, vector<2x128xf32>,
    return
  }
}

</mosaic_0001>

<llo_original>
// kernel: swin_forward.1
$region0: #{swin_forward.1}
  #allocation0 [shape = 'u32[]', space=smem, size = 0x4, offset = 0x4, fixed_abs, tag = 'smem constant byte address 0x4 - core index']
  #allocation1 [shape = 'u32[72,128]{1,0:T(1,128)}', space=vmem, size = 0x9000, scoped, tag = 'internal scratch']
  %s0 = inlined_call_operand.smem [shape: u32[74], index: -1, kind: input, shape index: {}]
  %s1 = sld [smem:[%s0]]
  %s2 = scalar_lea.smem %s0, 1
  %s3 = sld [smem:[%s2]]
  %s4 = scalar_lea.smem %s0, 2
  %s5 = sld [smem:[%s4]]
  %s6 = scalar_lea.smem %s0, 3
  %s7 = sld [smem:[%s6]]
  %s8 = scalar_lea.smem %s0, 4
  %s9 = sld [smem:[%s8]]
  %s10 = scalar_lea.smem %s0, 5
  %s11 = sld [smem:[%s10]]
  %s12 = scalar_lea.smem %s0, 6
  %s13 = sld [smem:[%s12]]
  %s14 = scalar_lea.smem %s0, 7
  %s15 = sld [smem:[%s14]]
  %s16 = scalar_lea.smem %s0, 8
  %s17 = sld [smem:[%s16]]
  %s18 = scalar_lea.smem %s0, 9
  %s19 = sld [smem:[%s18]]
  %s20 = scalar_lea.smem %s0, 10
  %s21 = sld [smem:[%s20]]
  %s22 = scalar_lea.smem %s0, 11
  %s23 = sld [smem:[%s22]]
  %s24 = scalar_lea.smem %s0, 12
  %s25 = sld [smem:[%s24]]
  %s26 = scalar_lea.smem %s0, 13
  %s27 = sld [smem:[%s26]]
  %s28 = scalar_lea.smem %s0, 14
  %s29 = sld [smem:[%s28]]
  %s30 = scalar_lea.smem %s0, 15
  %s31 = sld [smem:[%s30]]
  %s32 = scalar_lea.smem %s0, 16
  %s33 = sld [smem:[%s32]]
  %s34 = scalar_lea.smem %s0, 17
  %s35 = sld [smem:[%s34]]
  %s36 = scalar_lea.smem %s0, 18
  %s37 = sld [smem:[%s36]]
  %s38 = scalar_lea.smem %s0, 19
  %s39 = sld [smem:[%s38]]
  %s40 = scalar_lea.smem %s0, 20
  %s41 = sld [smem:[%s40]]
  %s42 = scalar_lea.smem %s0, 21
  %s43 = sld [smem:[%s42]]
  %s44 = scalar_lea.smem %s0, 22
  %s45 = sld [smem:[%s44]]
  %s46 = scalar_lea.smem %s0, 23
  %s47 = sld [smem:[%s46]]
  %s48 = scalar_lea.smem %s0, 24
  %s49 = sld [smem:[%s48]]
  %s50 = scalar_lea.smem %s0, 25
  %s51 = sld [smem:[%s50]]
  %s52 = scalar_lea.smem %s0, 26
  %s53 = sld [smem:[%s52]]
  %s54 = scalar_lea.smem %s0, 27
  %s55 = sld [smem:[%s54]]
  %s56 = scalar_lea.smem %s0, 28
  %s57 = sld [smem:[%s56]]
  %s58 = scalar_lea.smem %s0, 29
  %s59 = sld [smem:[%s58]]
  %s60 = scalar_lea.smem %s0, 30
  %s61 = sld [smem:[%s60]]
  %s62 = scalar_lea.smem %s0, 31
  %s63 = sld [smem:[%s62]]
  %s64 = scalar_lea.smem %s0, 32
  %s65 = sld [smem:[%s64]]
  %s66 = scalar_lea.smem %s0, 33
  %s67 = sld [smem:[%s66]]
  %s68 = scalar_lea.smem %s0, 34
  %s69 = sld [smem:[%s68]]
  %s70 = scalar_lea.smem %s0, 35
  %s71 = sld [smem:[%s70]]
  %s72 = scalar_lea.smem %s0, 36
  %s73 = sld [smem:[%s72]]
  %s74 = scalar_lea.smem %s0, 37
  %s75 = sld [smem:[%s74]]
  %s76 = scalar_lea.smem %s0, 38
  %s77 = sld [smem:[%s76]]
  %s78 = scalar_lea.smem %s0, 39
  %s79 = sld [smem:[%s78]]
  %s80 = scalar_lea.smem %s0, 40
  %s81 = sld [smem:[%s80]]
  %s82 = scalar_lea.smem %s0, 41
  %s83 = sld [smem:[%s82]]
  %s84 = scalar_lea.smem %s0, 42
  %s85 = sld [smem:[%s84]]
  %s86 = scalar_lea.smem %s0, 43
  %s87 = sld [smem:[%s86]]
  %s88 = scalar_lea.smem %s0, 44
  %s89 = sld [smem:[%s88]]
  %s90 = scalar_lea.smem %s0, 45
  %s91 = sld [smem:[%s90]]
  %s92 = scalar_lea.smem %s0, 46
  %s93 = sld [smem:[%s92]]
  %s94 = scalar_lea.smem %s0, 47
  %s95 = sld [smem:[%s94]]
  %s96 = scalar_lea.smem %s0, 48
  %s97 = sld [smem:[%s96]]
  %s98 = scalar_lea.smem %s0, 49
  %s99 = sld [smem:[%s98]]
  %s100 = scalar_lea.smem %s0, 50
  %s101 = sld [smem:[%s100]]
  %s102 = scalar_lea.smem %s0, 51
  %s103 = sld [smem:[%s102]]
  %s104 = scalar_lea.smem %s0, 52
  %s105 = sld [smem:[%s104]]
  %s106 = scalar_lea.smem %s0, 53
  %s107 = sld [smem:[%s106]]
  %s108 = scalar_lea.smem %s0, 54
  %s109 = sld [smem:[%s108]]
  %s110 = scalar_lea.smem %s0, 55
  %s111 = sld [smem:[%s110]]
  %s112 = scalar_lea.smem %s0, 56
  %s113 = sld [smem:[%s112]]
  %s114 = scalar_lea.smem %s0, 57
  %s115 = sld [smem:[%s114]]
  %s116 = scalar_lea.smem %s0, 58
  %s117 = sld [smem:[%s116]]
  %s118 = scalar_lea.smem %s0, 59
  %s119 = sld [smem:[%s118]]
  %s120 = scalar_lea.smem %s0, 60
  %s121 = sld [smem:[%s120]]
  %s122 = scalar_lea.smem %s0, 61
  %s123 = sld [smem:[%s122]]
  %s124 = scalar_lea.smem %s0, 62
  %s125 = sld [smem:[%s124]]
  %s126 = scalar_lea.smem %s0, 63
  %s127 = sld [smem:[%s126]]
  %s128 = scalar_lea.smem %s0, 64
  %s129 = sld [smem:[%s128]]
  %s130 = scalar_lea.smem %s0, 65
  %s131 = sld [smem:[%s130]]
  %s132 = scalar_lea.smem %s0, 66
  %s133 = sld [smem:[%s132]]
  %s134 = scalar_lea.smem %s0, 67
  %s135 = sld [smem:[%s134]]
  %s136 = scalar_lea.smem %s0, 68
  %s137 = sld [smem:[%s136]]
  %s138 = scalar_lea.smem %s0, 69
  %s139 = sld [smem:[%s138]]
  %s140 = scalar_lea.smem %s0, 70
  %s141 = sld [smem:[%s140]]
  %s142 = scalar_lea.smem %s0, 71
  %s143 = sld [smem:[%s142]]
  %s144 = scalar_lea.smem %s0, 72
  %s145 = sld [smem:[%s144]]
  %s146 = scalar_lea.smem %s0, 73
  %s147 = sld [smem:[%s146]]
  %148 = xla_tuple %s137, %s139, %s141, %s143, %s145, %s147
  %s149 = sld [smem:[#allocation0]]
  $region430: #{swin_forward.1} parent=0
    _
  %s151 = ssub.s32 1, %s149
  %s152 = scalar_select 0, %s151, %s149
  $region1: #{swin_forward.1} parent=0
    #allocation2 [shape = 'u8[512]{0}', space=vmem, size = 0x400, scoped, tag = 'input window, operand 21, single buffered']
    #allocation3 [shape = 's32[1]{0}', space=sflag, size = 0x4, scoped, tag = 'scoped memory for swin_forward.1']
    #allocation4 [shape = 's32[1]{0}', space=sflag, size = 0x4, scoped, tag = 'scoped memory for swin_forward.1']
    #allocation5 [shape = 'u8[512]{0}', space=vmem, size = 0x400, scoped, tag = 'input window, operand 22, single buffered']
    #allocation6 [shape = 's32[1]{0}', space=sflag, size = 0x4, scoped, tag = 'scoped memory for swin_forward.1']
    #allocation7 [shape = 'u8[512]{0}', space=vmem, size = 0x400, scoped, tag = 'input window, operand 24, single buffered']
    #allocation8 [shape = 'u8[512]{0}', space=vmem, size = 0x400, scoped, tag = 'input window, operand 27, single buffered']
    #allocation9 [shape = 's32[1]{0}', space=sflag, size = 0x4, scoped, tag = 'scoped memory for swin_forward.1']
    #allocation10 [shape = 'u8[512]{0}', space=vmem, size = 0x400, scoped, tag = 'input window, operand 29, single buffered']
    #allocation11 [shape = 'u8[512]{0}', space=vmem, size = 0x400, scoped, tag = 'input window, operand 31, single buffered']
    #allocation12 [shape = 's32[1]{0}', space=sflag, size = 0x4, scoped, tag = 'scoped memory for swin_forward.1']
    #allocation13 [shape = 'u8[512]{0}', space=vmem, size = 0x400, scoped, tag = 'input window, operand 32, single buffered']
    #allocation14 [shape = 'u8[512]{0}', space=vmem, size = 0x400, scoped, tag = 'input window, operand 33, single buffered']
    #allocation15 [shape = 's32[1]{0}', space=sflag, size = 0x4, scoped, tag = 'scoped memory for swin_forward.1']
    #allocation16 [shape = 'u8[512]{0}', space=vmem, size = 0x400, scoped, tag = 'input window, operand 34, single buffered']
    #allocation17 [shape = 'u8[512]{0}', space=vmem, size = 0x400, scoped, tag = 'input window, operand 35, single buffered']
    #allocation18 [shape = 's32[1]{0}', space=sflag, size = 0x4, scoped, tag = 'scoped memory for swin_forward.1']
    #allocation19 [shape = 'u8[512]{0}', space=vmem, size = 0x400, scoped, tag = 'input window, operand 37, single buffered']
    #allocation20 [shape = 'u8[512]{0}', space=vmem, size = 0x400, scoped, tag = 'input window, operand 39, single buffered']
    #allocation21 [shape = 's32[1]{0}', space=sflag, size = 0x4, scoped, tag = 'scoped memory for swin_forward.1']
    #allocation22 [shape = 'u8[512]{0}', space=vmem, size = 0x400, scoped, tag = 'input window, operand 40, single buffered']
    #allocation23 [shape = 'u8[512]{0}', space=vmem, size = 0x400, scoped, tag = 'input window, operand 43, single buffered']
    #allocation24 [shape = 's32[1]{0}', space=sflag, size = 0x4, scoped, tag = 'scoped memory for swin_forward.1']
    #allocation25 [shape = 'u8[512]{0}', space=vmem, size = 0x400, scoped, tag = 'input window, operand 45, single buffered']
    #allocation26 [shape = 'u8[512]{0}', space=vmem, size = 0x400, scoped, tag = 'input window, operand 47, single buffered']
    #allocation27 [shape = 's32[1]{0}', space=sflag, size = 0x4, scoped, tag = 'scoped memory for swin_forward.1']
    #allocation28 [shape = 'u8[512]{0}', space=vmem, size = 0x400, scoped, tag = 'input window, operand 48, single buffered']
    #allocation29 [shape = 'u8[512]{0}', space=vmem, size = 0x400, scoped, tag = 'input window, operand 49, single buffered']
    #allocation30 [shape = 's32[1]{0}', space=sflag, size = 0x4, scoped, tag = 'scoped memory for swin_forward.1']
    #allocation31 [shape = 'u8[512]{0}', space=vmem, size = 0x400, scoped, tag = 'input window, operand 50, single buffered']
    #allocation32 [shape = 'u8[512]{0}', space=vmem, size = 0x400, scoped, tag = 'input window, operand 51, single buffered']
    #allocation33 [shape = 's32[1]{0}', space=sflag, size = 0x4, scoped, tag = 'scoped memory for swin_forward.1']
    #allocation34 [shape = 'u8[512]{0}', space=vmem, size = 0x400, scoped, tag = 'input window, operand 56, single buffered']
    #allocation35 [shape = 'u8[512]{0}', space=vmem, size = 0x400, scoped, tag = 'input window, operand 58, single buffered']
    #allocation36 [shape = 's32[1]{0}', space=sflag, size = 0x4, scoped, tag = 'scoped memory for swin_forward.1']
    #allocation37 [shape = 'u8[512]{0}', space=vmem, size = 0x400, scoped, tag = 'input window, operand 60, single buffered']
    #allocation38 [shape = 'u8[512]{0}', space=vmem, size = 0x400, scoped, tag = 'input window, operand 61, single buffered']
    #allocation39 [shape = 's32[1]{0}', space=sflag, size = 0x4, scoped, tag = 'scoped memory for swin_forward.1']
    #allocation40 [shape = 'u8[512]{0}', space=vmem, size = 0x400, scoped, tag = 'input window, operand 62, single buffered']
    #allocation41 [shape = 'u8[512]{0}', space=vmem, size = 0x400, scoped, tag = 'input window, operand 63, single buffered']
    #allocation42 [shape = 's32[1]{0}', space=sflag, size = 0x4, scoped, tag = 'scoped memory for swin_forward.1']
    #allocation43 [shape = 'u8[512]{0}', space=vmem, size = 0x400, scoped, tag = 'input window, operand 64, single buffered']
    #allocation44 [shape = 'u8[16384]{0}', space=vmem, size = 0x4000, scoped, tag = 'output window, operand 0, single buffered']
    #allocation45 [shape = 'u8[4096]{0}', space=vmem, size = 0x1000, scoped, tag = 'output window, operand 1, single buffered']
    #allocation46 [shape = 's32[1]{0}', space=sflag, size = 0x4, scoped, tag = 'scoped memory for swin_forward.1']
    #allocation47 [shape = 'u8[4096]{0}', space=vmem, size = 0x1000, scoped, tag = 'output window, operand 2, single buffered']
    #allocation48 [shape = 'u8[4096]{0}', space=vmem, size = 0x1000, scoped, tag = 'output window, operand 3, single buffered']
    #allocation49 [shape = 's32[1]{0}', space=sflag, size = 0x4, scoped, tag = 'scoped memory for swin_forward.1']
    #allocation50 [shape = 'u8[1024]{0}', space=vmem, size = 0x400, scoped, tag = 'output window, operand 4, single buffered']
    #allocation51 [shape = 'u8[1024]{0}', space=vmem, size = 0x400, scoped, tag = 'output window, operand 5, single buffered']
    #allocation52 [shape = 's32[1]{0}', space=sflag, size = 0x4, scoped, tag = 'scoped memory for swin_forward.1']
    %153 = vsyncpa [#allocation3], 0
    %154 = vsyncpa [#allocation6], 0
    %155 = vsyncpa [#allocation9], 0
    %156 = vsyncpa [#allocation12], 0
    %157 = vsyncpa [#allocation15], 0
    %158 = vsyncpa [#allocation18], 0
    %159 = vsyncpa [#allocation21], 0
    %160 = vsyncpa [#allocation24], 0
    %161 = vsyncpa [#allocation27], 0
    %162 = vsyncpa [#allocation30], 0
    %163 = vsyncpa [#allocation33], 0
    %164 = vsyncpa [#allocation36], 0
    %165 = vsyncpa [#allocation39], 0
    %166 = vsyncpa [#allocation42], 0
    %167 = vsyncpa [#allocation4], 0
    %168 = vsyncpa [#allocation46], 0
    %169 = vsyncpa [#allocation49], 0
    %170 = vsyncpa [#allocation52], 0
    // Predicated region
    $region2: #{swin_forward.1} parent=1 // pred_check
      _
    $region3: #{swin_forward.1} parent=1 // pred_check_branch
      %172 = sbr.rel (0) target = $region5
    $region4: #{swin_forward.1} parent=1 // pred_region
      _
    $region5: #{swin_forward.1} parent=1 // pred_fallthru
      _
    // Predicated region
    $region6: #{swin_forward.1} parent=1 // pred_check
      _
    $region7: #{swin_forward.1} parent=1 // pred_check_branch
      %174 = sbr.rel (0) target = $region9
    $region8: #{swin_forward.1} parent=1 // pred_region
      _
    $region9: #{swin_forward.1} parent=1 // pred_fallthru
      _
    // Predicated region
    $region10: #{swin_forward.1} parent=1 // pred_check
      _
    $region11: #{swin_forward.1} parent=1 // pred_check_branch
      %176 = sbr.rel (0) target = $region13
    $region12: #{swin_forward.1} parent=1 // pred_region
      _
    $region13: #{swin_forward.1} parent=1 // pred_fallthru
      _
    // Predicated region
    $region14: #{swin_forward.1} parent=1 // pred_check
      _
    $region15: #{swin_forward.1} parent=1 // pred_check_branch
      %178 = sbr.rel (0) target = $region17
    $region16: #{swin_forward.1} parent=1 // pred_region
      _
    $region17: #{swin_forward.1} parent=1 // pred_fallthru
      _
    // Predicated region
    $region18: #{swin_forward.1} parent=1 // pred_check
      _
    $region19: #{swin_forward.1} parent=1 // pred_check_branch
      %180 = sbr.rel (0) target = $region21
    $region20: #{swin_forward.1} parent=1 // pred_region
      _
    $region21: #{swin_forward.1} parent=1 // pred_fallthru
      _
    // Predicated region
    $region22: #{swin_forward.1} parent=1 // pred_check
      _
    $region23: #{swin_forward.1} parent=1 // pred_check_branch
      %182 = sbr.rel (0) target = $region25
    $region24: #{swin_forward.1} parent=1 // pred_region
      _
    $region25: #{swin_forward.1} parent=1 // pred_fallthru
      _
    // Predicated region
    $region26: #{swin_forward.1} parent=1 // pred_check
      _
    $region27: #{swin_forward.1} parent=1 // pred_check_branch
      %184 = sbr.rel (0) target = $region29
    $region28: #{swin_forward.1} parent=1 // pred_region
      _
    $region29: #{swin_forward.1} parent=1 // pred_fallthru
      _
    // Predicated region
    $region30: #{swin_forward.1} parent=1 // pred_check
      _
    $region31: #{swin_forward.1} parent=1 // pred_check_branch
      %186 = sbr.rel (0) target = $region33
    $region32: #{swin_forward.1} parent=1 // pred_region
      _
    $region33: #{swin_forward.1} parent=1 // pred_fallthru
      _
    // Predicated region
    $region34: #{swin_forward.1} parent=1 // pred_check
      _
    $region35: #{swin_forward.1} parent=1 // pred_check_branch
      %188 = sbr.rel (0) target = $region37
    $region36: #{swin_forward.1} parent=1 // pred_region
      _
    $region37: #{swin_forward.1} parent=1 // pred_fallthru
      _
    // Predicated region
    $region38: #{swin_forward.1} parent=1 // pred_check
      _
    $region39: #{swin_forward.1} parent=1 // pred_check_branch
      %190 = sbr.rel (0) target = $region41
    $region40: #{swin_forward.1} parent=1 // pred_region
      _
    $region41: #{swin_forward.1} parent=1 // pred_fallthru
      _
    // Predicated region
    $region42: #{swin_forward.1} parent=1 // pred_check
      _
    $region43: #{swin_forward.1} parent=1 // pred_check_branch
      %192 = sbr.rel (0) target = $region45
    $region44: #{swin_forward.1} parent=1 // pred_region
      _
    $region45: #{swin_forward.1} parent=1 // pred_fallthru
      _
    // Predicated region
    $region46: #{swin_forward.1} parent=1 // pred_check
      _
    $region47: #{swin_forward.1} parent=1 // pred_check_branch
      %194 = sbr.rel (0) target = $region49
    $region48: #{swin_forward.1} parent=1 // pred_region
      _
    $region49: #{swin_forward.1} parent=1 // pred_fallthru
      _
    // Predicated region
    $region50: #{swin_forward.1} parent=1 // pred_check
      _
    $region51: #{swin_forward.1} parent=1 // pred_check_branch
      %196 = sbr.rel (0) target = $region53
    $region52: #{swin_forward.1} parent=1 // pred_region
      _
    $region53: #{swin_forward.1} parent=1 // pred_fallthru
      _
    // Predicated region
    $region54: #{swin_forward.1} parent=1 // pred_check
      _
    $region55: #{swin_forward.1} parent=1 // pred_check_branch
      %198 = sbr.rel (0) target = $region57
    $region56: #{swin_forward.1} parent=1 // pred_region
      _
    $region57: #{swin_forward.1} parent=1 // pred_fallthru
      _
    // Predicated region
    $region58: #{swin_forward.1} parent=1 // pred_check
      _
    $region59: #{swin_forward.1} parent=1 // pred_check_branch
      %200 = sbr.rel (0) target = $region61
    $region60: #{swin_forward.1} parent=1 // pred_region
      _
    $region61: #{swin_forward.1} parent=1 // pred_fallthru
      _
    // Predicated region
    $region62: #{swin_forward.1} parent=1 // pred_check
      _
    $region63: #{swin_forward.1} parent=1 // pred_check_branch
      %202 = sbr.rel (0) target = $region65
    $region64: #{swin_forward.1} parent=1 // pred_region
      _
    $region65: #{swin_forward.1} parent=1 // pred_fallthru
      _
    // Predicated region
    $region66: #{swin_forward.1} parent=1 // pred_check
      _
    $region67: #{swin_forward.1} parent=1 // pred_check_branch
      %204 = sbr.rel (0) target = $region69
    $region68: #{swin_forward.1} parent=1 // pred_region
      _
    $region69: #{swin_forward.1} parent=1 // pred_fallthru
      _
    // Predicated region
    $region70: #{swin_forward.1} parent=1 // pred_check
      _
    $region71: #{swin_forward.1} parent=1 // pred_check_branch
      %206 = sbr.rel (0) target = $region73
    $region72: #{swin_forward.1} parent=1 // pred_region
      _
    $region73: #{swin_forward.1} parent=1 // pred_fallthru
      _
    // Predicated region
    $region74: #{swin_forward.1} parent=1 // pred_check
      _
    $region75: #{swin_forward.1} parent=1 // pred_check_branch
      %208 = sbr.rel (0) target = $region77
    $region76: #{swin_forward.1} parent=1 // pred_region
      _
    $region77: #{swin_forward.1} parent=1 // pred_fallthru
      _
    // Predicated region
    $region78: #{swin_forward.1} parent=1 // pred_check
      _
    $region79: #{swin_forward.1} parent=1 // pred_check_branch
      %210 = sbr.rel (0) target = $region81
    $region80: #{swin_forward.1} parent=1 // pred_region
      _
    $region81: #{swin_forward.1} parent=1 // pred_fallthru
      _
    // Predicated region
    $region82: #{swin_forward.1} parent=1 // pred_check
      _
    $region83: #{swin_forward.1} parent=1 // pred_check_branch
      %212 = sbr.rel (0) target = $region85
    $region84: #{swin_forward.1} parent=1 // pred_region
      _
    $region85: #{swin_forward.1} parent=1 // pred_fallthru
      _
    // Predicated region
    $region86: #{swin_forward.1} parent=1 // pred_check
      _
    $region87: #{swin_forward.1} parent=1 // pred_check_branch
      %214 = sbr.rel (0) target = $region89
    $region88: #{swin_forward.1} parent=1 // pred_region
      %216 = vsyncadd [#allocation3], 0
      %s218 = sshll.u32 %s43, 4
      %s219 = int_to_ptr.hbm [resolvable:$true] %s218
      %s220 = sshll.u32 [#allocation2], 4
      %s221 = int_to_ptr.vmem [resolvable:$true] %s220
      %223 = dma.hbm_to_vmem [thread:$0]  %s219, 16, %s221, [#allocation3]
    $region89: #{swin_forward.1} parent=1 // pred_fallthru
      _
    // Predicated region
    $region90: #{swin_forward.1} parent=1 // pred_check
      _
    $region91: #{swin_forward.1} parent=1 // pred_check_branch
      %225 = sbr.rel (0) target = $region93
    $region92: #{swin_forward.1} parent=1 // pred_region
      %227 = vsyncadd [#allocation6], 0
      %s229 = sshll.u32 %s45, 4
      %s230 = int_to_ptr.hbm [resolvable:$true] %s229
      %s231 = sshll.u32 [#allocation5], 4
      %s232 = int_to_ptr.vmem [resolvable:$true] %s231
      %234 = dma.hbm_to_vmem [thread:$0]  %s230, 16, %s232, [#allocation6]
    $region93: #{swin_forward.1} parent=1 // pred_fallthru
      _
    // Predicated region
    $region94: #{swin_forward.1} parent=1 // pred_check
      _
    $region95: #{swin_forward.1} parent=1 // pred_check_branch
      %236 = sbr.rel (0) target = $region97
    $region96: #{swin_forward.1} parent=1 // pred_region
      _
    $region97: #{swin_forward.1} parent=1 // pred_fallthru
      _
    // Predicated region
    $region98: #{swin_forward.1} parent=1 // pred_check
      _
    $region99: #{swin_forward.1} parent=1 // pred_check_branch
      %238 = sbr.rel (0) target = $region101
    $region100: #{swin_forward.1} parent=1 // pred_region
      %240 = vsyncadd [#allocation6], 0
      %s242 = sshll.u32 %s49, 4
      %s243 = int_to_ptr.hbm [resolvable:$true] %s242
      %s244 = sshll.u32 [#allocation7], 4
      %s245 = int_to_ptr.vmem [resolvable:$true] %s244
      %247 = dma.hbm_to_vmem [thread:$0]  %s243, 16, %s245, [#allocation6]
    $region101: #{swin_forward.1} parent=1 // pred_fallthru
      _
    // Predicated region
    $region102: #{swin_forward.1} parent=1 // pred_check
      _
    $region103: #{swin_forward.1} parent=1 // pred_check_branch
      %249 = sbr.rel (0) target = $region105
    $region104: #{swin_forward.1} parent=1 // pred_region
      _
    $region105: #{swin_forward.1} parent=1 // pred_fallthru
      _
    // Predicated region
    $region106: #{swin_forward.1} parent=1 // pred_check
      _
    $region107: #{swin_forward.1} parent=1 // pred_check_branch
      %251 = sbr.rel (0) target = $region109
    $region108: #{swin_forward.1} parent=1 // pred_region
      _
    $region109: #{swin_forward.1} parent=1 // pred_fallthru
      _
    // Predicated region
    $region110: #{swin_forward.1} parent=1 // pred_check
      _
    $region111: #{swin_forward.1} parent=1 // pred_check_branch
      %253 = sbr.rel (0) target = $region113
    $region112: #{swin_forward.1} parent=1 // pred_region
      %255 = vsyncadd [#allocation9], 0
      %s257 = sshll.u32 %s55, 4
      %s258 = int_to_ptr.hbm [resolvable:$true] %s257
      %s259 = sshll.u32 [#allocation8], 4
      %s260 = int_to_ptr.vmem [resolvable:$true] %s259
      %262 = dma.hbm_to_vmem [thread:$0]  %s258, 16, %s260, [#allocation9]
    $region113: #{swin_forward.1} parent=1 // pred_fallthru
      _
    // Predicated region
    $region114: #{swin_forward.1} parent=1 // pred_check
      _
    $region115: #{swin_forward.1} parent=1 // pred_check_branch
      %264 = sbr.rel (0) target = $region117
    $region116: #{swin_forward.1} parent=1 // pred_region
      _
    $region117: #{swin_forward.1} parent=1 // pred_fallthru
      _
    // Predicated region
    $region118: #{swin_forward.1} parent=1 // pred_check
      _
    $region119: #{swin_forward.1} parent=1 // pred_check_branch
      %266 = sbr.rel (0) target = $region121
    $region120: #{swin_forward.1} parent=1 // pred_region
      %268 = vsyncadd [#allocation9], 0
      %s270 = sshll.u32 %s59, 4
      %s271 = int_to_ptr.hbm [resolvable:$true] %s270
      %s272 = sshll.u32 [#allocation10], 4
      %s273 = int_to_ptr.vmem [resolvable:$true] %s272
      %275 = dma.hbm_to_vmem [thread:$0]  %s271, 16, %s273, [#allocation9]
    $region121: #{swin_forward.1} parent=1 // pred_fallthru
      _
    // Predicated region
    $region122: #{swin_forward.1} parent=1 // pred_check
      _
    $region123: #{swin_forward.1} parent=1 // pred_check_branch
      %277 = sbr.rel (0) target = $region125
    $region124: #{swin_forward.1} parent=1 // pred_region
      _
    $region125: #{swin_forward.1} parent=1 // pred_fallthru
      _
    // Predicated region
    $region126: #{swin_forward.1} parent=1 // pred_check
      _
    $region127: #{swin_forward.1} parent=1 // pred_check_branch
      %279 = sbr.rel (0) target = $region129
    $region128: #{swin_forward.1} parent=1 // pred_region
      %281 = vsyncadd [#allocation12], 0
      %s283 = sshll.u32 %s63, 4
      %s284 = int_to_ptr.hbm [resolvable:$true] %s283
      %s285 = sshll.u32 [#allocation11], 4
      %s286 = int_to_ptr.vmem [resolvable:$true] %s285
      %288 = dma.hbm_to_vmem [thread:$0]  %s284, 16, %s286, [#allocation12]
    $region129: #{swin_forward.1} parent=1 // pred_fallthru
      _
    // Predicated region
    $region130: #{swin_forward.1} parent=1 // pred_check
      _
    $region131: #{swin_forward.1} parent=1 // pred_check_branch
      %290 = sbr.rel (0) target = $region133
    $region132: #{swin_forward.1} parent=1 // pred_region
      %292 = vsyncadd [#allocation12], 0
      %s294 = sshll.u32 %s65, 4
      %s295 = int_to_ptr.hbm [resolvable:$true] %s294
      %s296 = sshll.u32 [#allocation13], 4
      %s297 = int_to_ptr.vmem [resolvable:$true] %s296
      %299 = dma.hbm_to_vmem [thread:$0]  %s295, 16, %s297, [#allocation12]
    $region133: #{swin_forward.1} parent=1 // pred_fallthru
      _
    // Predicated region
    $region134: #{swin_forward.1} parent=1 // pred_check
      _
    $region135: #{swin_forward.1} parent=1 // pred_check_branch
      %301 = sbr.rel (0) target = $region137
    $region136: #{swin_forward.1} parent=1 // pred_region
      %303 = vsyncadd [#allocation15], 0
      %s305 = sshll.u32 %s67, 4
      %s306 = int_to_ptr.hbm [resolvable:$true] %s305
      %s307 = sshll.u32 [#allocation14], 4
      %s308 = int_to_ptr.vmem [resolvable:$true] %s307
      %310 = dma.hbm_to_vmem [thread:$0]  %s306, 16, %s308, [#allocation15]
    $region137: #{swin_forward.1} parent=1 // pred_fallthru
      _
    // Predicated region
    $region138: #{swin_forward.1} parent=1 // pred_check
      _
    $region139: #{swin_forward.1} parent=1 // pred_check_branch
      %312 = sbr.rel (0) target = $region141
    $region140: #{swin_forward.1} parent=1 // pred_region
      %314 = vsyncadd [#allocation15], 0
      %s316 = sshll.u32 %s69, 4
      %s317 = int_to_ptr.hbm [resolvable:$true] %s316
      %s318 = sshll.u32 [#allocation16], 4
      %s319 = int_to_ptr.vmem [resolvable:$true] %s318
      %321 = dma.hbm_to_vmem [thread:$0]  %s317, 16, %s319, [#allocation15]
    $region141: #{swin_forward.1} parent=1 // pred_fallthru
      _
    // Predicated region
    $region142: #{swin_forward.1} parent=1 // pred_check
      _
    $region143: #{swin_forward.1} parent=1 // pred_check_branch
      %323 = sbr.rel (0) target = $region145
    $region144: #{swin_forward.1} parent=1 // pred_region
      %325 = vsyncadd [#allocation18], 0
      %s327 = sshll.u32 %s71, 4
      %s328 = int_to_ptr.hbm [resolvable:$true] %s327
      %s329 = sshll.u32 [#allocation17], 4
      %s330 = int_to_ptr.vmem [resolvable:$true] %s329
      %332 = dma.hbm_to_vmem [thread:$0]  %s328, 16, %s330, [#allocation18]
    $region145: #{swin_forward.1} parent=1 // pred_fallthru
      _
    // Predicated region
    $region146: #{swin_forward.1} parent=1 // pred_check
      _
    $region147: #{swin_forward.1} parent=1 // pred_check_branch
      %334 = sbr.rel (0) target = $region149
    $region148: #{swin_forward.1} parent=1 // pred_region
      _
    $region149: #{swin_forward.1} parent=1 // pred_fallthru
      _
    // Predicated region
    $region150: #{swin_forward.1} parent=1 // pred_check
      _
    $region151: #{swin_forward.1} parent=1 // pred_check_branch
      %336 = sbr.rel (0) target = $region153
    $region152: #{swin_forward.1} parent=1 // pred_region
      %338 = vsyncadd [#allocation18], 0
      %s340 = sshll.u32 %s75, 4
      %s341 = int_to_ptr.hbm [resolvable:$true] %s340
      %s342 = sshll.u32 [#allocation19], 4
      %s343 = int_to_ptr.vmem [resolvable:$true] %s342
      %345 = dma.hbm_to_vmem [thread:$0]  %s341, 16, %s343, [#allocation18]
    $region153: #{swin_forward.1} parent=1 // pred_fallthru
      _
    // Predicated region
    $region154: #{swin_forward.1} parent=1 // pred_check
      _
    $region155: #{swin_forward.1} parent=1 // pred_check_branch
      %347 = sbr.rel (0) target = $region157
    $region156: #{swin_forward.1} parent=1 // pred_region
      _
    $region157: #{swin_forward.1} parent=1 // pred_fallthru
      _
    // Predicated region
    $region158: #{swin_forward.1} parent=1 // pred_check
      _
    $region159: #{swin_forward.1} parent=1 // pred_check_branch
      %349 = sbr.rel (0) target = $region161
    $region160: #{swin_forward.1} parent=1 // pred_region
      %351 = vsyncadd [#allocation21], 0
      %s353 = sshll.u32 %s79, 4
      %s354 = int_to_ptr.hbm [resolvable:$true] %s353
      %s355 = sshll.u32 [#allocation20], 4
      %s356 = int_to_ptr.vmem [resolvable:$true] %s355
      %358 = dma.hbm_to_vmem [thread:$0]  %s354, 16, %s356, [#allocation21]
    $region161: #{swin_forward.1} parent=1 // pred_fallthru
      _
    // Predicated region
    $region162: #{swin_forward.1} parent=1 // pred_check
      _
    $region163: #{swin_forward.1} parent=1 // pred_check_branch
      %360 = sbr.rel (0) target = $region165
    $region164: #{swin_forward.1} parent=1 // pred_region
      %362 = vsyncadd [#allocation21], 0
      %s364 = sshll.u32 %s81, 4
      %s365 = int_to_ptr.hbm [resolvable:$true] %s364
      %s366 = sshll.u32 [#allocation22], 4
      %s367 = int_to_ptr.vmem [resolvable:$true] %s366
      %369 = dma.hbm_to_vmem [thread:$0]  %s365, 16, %s367, [#allocation21]
    $region165: #{swin_forward.1} parent=1 // pred_fallthru
      _
    // Predicated region
    $region166: #{swin_forward.1} parent=1 // pred_check
      _
    $region167: #{swin_forward.1} parent=1 // pred_check_branch
      %371 = sbr.rel (0) target = $region169
    $region168: #{swin_forward.1} parent=1 // pred_region
      _
    $region169: #{swin_forward.1} parent=1 // pred_fallthru
      _
    // Predicated region
    $region170: #{swin_forward.1} parent=1 // pred_check
      _
    $region171: #{swin_forward.1} parent=1 // pred_check_branch
      %373 = sbr.rel (0) target = $region173
    $region172: #{swin_forward.1} parent=1 // pred_region
      _
    $region173: #{swin_forward.1} parent=1 // pred_fallthru
      _
    // Predicated region
    $region174: #{swin_forward.1} parent=1 // pred_check
      _
    $region175: #{swin_forward.1} parent=1 // pred_check_branch
      %375 = sbr.rel (0) target = $region177
    $region176: #{swin_forward.1} parent=1 // pred_region
      %377 = vsyncadd [#allocation24], 0
      %s379 = sshll.u32 %s87, 4
      %s380 = int_to_ptr.hbm [resolvable:$true] %s379
      %s381 = sshll.u32 [#allocation23], 4
      %s382 = int_to_ptr.vmem [resolvable:$true] %s381
      %384 = dma.hbm_to_vmem [thread:$0]  %s380, 16, %s382, [#allocation24]
    $region177: #{swin_forward.1} parent=1 // pred_fallthru
      _
    // Predicated region
    $region178: #{swin_forward.1} parent=1 // pred_check
      _
    $region179: #{swin_forward.1} parent=1 // pred_check_branch
      %386 = sbr.rel (0) target = $region181
    $region180: #{swin_forward.1} parent=1 // pred_region
      _
    $region181: #{swin_forward.1} parent=1 // pred_fallthru
      _
    // Predicated region
    $region182: #{swin_forward.1} parent=1 // pred_check
      _
    $region183: #{swin_forward.1} parent=1 // pred_check_branch
      %388 = sbr.rel (0) target = $region185
    $region184: #{swin_forward.1} parent=1 // pred_region
      %390 = vsyncadd [#allocation24], 0
      %s392 = sshll.u32 %s91, 4
      %s393 = int_to_ptr.hbm [resolvable:$true] %s392
      %s394 = sshll.u32 [#allocation25], 4
      %s395 = int_to_ptr.vmem [resolvable:$true] %s394
      %397 = dma.hbm_to_vmem [thread:$0]  %s393, 16, %s395, [#allocation24]
    $region185: #{swin_forward.1} parent=1 // pred_fallthru
      _
    // Predicated region
    $region186: #{swin_forward.1} parent=1 // pred_check
      _
    $region187: #{swin_forward.1} parent=1 // pred_check_branch
      %399 = sbr.rel (0) target = $region189
    $region188: #{swin_forward.1} parent=1 // pred_region
      _
    $region189: #{swin_forward.1} parent=1 // pred_fallthru
      _
    // Predicated region
    $region190: #{swin_forward.1} parent=1 // pred_check
      _
    $region191: #{swin_forward.1} parent=1 // pred_check_branch
      %401 = sbr.rel (0) target = $region193
    $region192: #{swin_forward.1} parent=1 // pred_region
      %403 = vsyncadd [#allocation27], 0
      %s405 = sshll.u32 %s95, 4
      %s406 = int_to_ptr.hbm [resolvable:$true] %s405
      %s407 = sshll.u32 [#allocation26], 4
      %s408 = int_to_ptr.vmem [resolvable:$true] %s407
      %410 = dma.hbm_to_vmem [thread:$0]  %s406, 16, %s408, [#allocation27]
    $region193: #{swin_forward.1} parent=1 // pred_fallthru
      _
    // Predicated region
    $region194: #{swin_forward.1} parent=1 // pred_check
      _
    $region195: #{swin_forward.1} parent=1 // pred_check_branch
      %412 = sbr.rel (0) target = $region197
    $region196: #{swin_forward.1} parent=1 // pred_region
      %414 = vsyncadd [#allocation27], 0
      %s416 = sshll.u32 %s97, 4
      %s417 = int_to_ptr.hbm [resolvable:$true] %s416
      %s418 = sshll.u32 [#allocation28], 4
      %s419 = int_to_ptr.vmem [resolvable:$true] %s418
      %421 = dma.hbm_to_vmem [thread:$0]  %s417, 16, %s419, [#allocation27]
    $region197: #{swin_forward.1} parent=1 // pred_fallthru
      _
    // Predicated region
    $region198: #{swin_forward.1} parent=1 // pred_check
      _
    $region199: #{swin_forward.1} parent=1 // pred_check_branch
      %423 = sbr.rel (0) target = $region201
    $region200: #{swin_forward.1} parent=1 // pred_region
      %425 = vsyncadd [#allocation30], 0
      %s427 = sshll.u32 %s99, 4
      %s428 = int_to_ptr.hbm [resolvable:$true] %s427
      %s429 = sshll.u32 [#allocation29], 4
      %s430 = int_to_ptr.vmem [resolvable:$true] %s429
      %432 = dma.hbm_to_vmem [thread:$0]  %s428, 16, %s430, [#allocation30]
    $region201: #{swin_forward.1} parent=1 // pred_fallthru
      _
    // Predicated region
    $region202: #{swin_forward.1} parent=1 // pred_check
      _
    $region203: #{swin_forward.1} parent=1 // pred_check_branch
      %434 = sbr.rel (0) target = $region205
    $region204: #{swin_forward.1} parent=1 // pred_region
      %436 = vsyncadd [#allocation30], 0
      %s438 = sshll.u32 %s101, 4
      %s439 = int_to_ptr.hbm [resolvable:$true] %s438
      %s440 = sshll.u32 [#allocation31], 4
      %s441 = int_to_ptr.vmem [resolvable:$true] %s440
      %443 = dma.hbm_to_vmem [thread:$0]  %s439, 16, %s441, [#allocation30]
    $region205: #{swin_forward.1} parent=1 // pred_fallthru
      _
    // Predicated region
    $region206: #{swin_forward.1} parent=1 // pred_check
      _
    $region207: #{swin_forward.1} parent=1 // pred_check_branch
      %445 = sbr.rel (0) target = $region209
    $region208: #{swin_forward.1} parent=1 // pred_region
      %447 = vsyncadd [#allocation33], 0
      %s449 = sshll.u32 %s103, 4
      %s450 = int_to_ptr.hbm [resolvable:$true] %s449
      %s451 = sshll.u32 [#allocation32], 4
      %s452 = int_to_ptr.vmem [resolvable:$true] %s451
      %454 = dma.hbm_to_vmem [thread:$0]  %s450, 16, %s452, [#allocation33]
    $region209: #{swin_forward.1} parent=1 // pred_fallthru
      _
    // Predicated region
    $region210: #{swin_forward.1} parent=1 // pred_check
      _
    $region211: #{swin_forward.1} parent=1 // pred_check_branch
      %456 = sbr.rel (0) target = $region213
    $region212: #{swin_forward.1} parent=1 // pred_region
      _
    $region213: #{swin_forward.1} parent=1 // pred_fallthru
      _
    // Predicated region
    $region214: #{swin_forward.1} parent=1 // pred_check
      _
    $region215: #{swin_forward.1} parent=1 // pred_check_branch
      %458 = sbr.rel (0) target = $region217
    $region216: #{swin_forward.1} parent=1 // pred_region
      _
    $region217: #{swin_forward.1} parent=1 // pred_fallthru
      _
    // Predicated region
    $region218: #{swin_forward.1} parent=1 // pred_check
      _
    $region219: #{swin_forward.1} parent=1 // pred_check_branch
      %460 = sbr.rel (0) target = $region221
    $region220: #{swin_forward.1} parent=1 // pred_region
      _
    $region221: #{swin_forward.1} parent=1 // pred_fallthru
      _
    // Predicated region
    $region222: #{swin_forward.1} parent=1 // pred_check
      _
    $region223: #{swin_forward.1} parent=1 // pred_check_branch
      %462 = sbr.rel (0) target = $region225
    $region224: #{swin_forward.1} parent=1 // pred_region
      _
    $region225: #{swin_forward.1} parent=1 // pred_fallthru
      _
    // Predicated region
    $region226: #{swin_forward.1} parent=1 // pred_check
      _
    $region227: #{swin_forward.1} parent=1 // pred_check_branch
      %464 = sbr.rel (0) target = $region229
    $region228: #{swin_forward.1} parent=1 // pred_region
      %466 = vsyncadd [#allocation33], 0
      %s468 = sshll.u32 %s113, 4
      %s469 = int_to_ptr.hbm [resolvable:$true] %s468
      %s470 = sshll.u32 [#allocation34], 4
      %s471 = int_to_ptr.vmem [resolvable:$true] %s470
      %473 = dma.hbm_to_vmem [thread:$0]  %s469, 16, %s471, [#allocation33]
    $region229: #{swin_forward.1} parent=1 // pred_fallthru
      _
    // Predicated region
    $region230: #{swin_forward.1} parent=1 // pred_check
      _
    $region231: #{swin_forward.1} parent=1 // pred_check_branch
      %475 = sbr.rel (0) target = $region233
    $region232: #{swin_forward.1} parent=1 // pred_region
      _
    $region233: #{swin_forward.1} parent=1 // pred_fallthru
      _
    // Predicated region
    $region234: #{swin_forward.1} parent=1 // pred_check
      _
    $region235: #{swin_forward.1} parent=1 // pred_check_branch
      %477 = sbr.rel (0) target = $region237
    $region236: #{swin_forward.1} parent=1 // pred_region
      %479 = vsyncadd [#allocation36], 0
      %s481 = sshll.u32 %s117, 4
      %s482 = int_to_ptr.hbm [resolvable:$true] %s481
      %s483 = sshll.u32 [#allocation35], 4
      %s484 = int_to_ptr.vmem [resolvable:$true] %s483
      %486 = dma.hbm_to_vmem [thread:$0]  %s482, 16, %s484, [#allocation36]
    $region237: #{swin_forward.1} parent=1 // pred_fallthru
      _
    // Predicated region
    $region238: #{swin_forward.1} parent=1 // pred_check
      _
    $region239: #{swin_forward.1} parent=1 // pred_check_branch
      %488 = sbr.rel (0) target = $region241
    $region240: #{swin_forward.1} parent=1 // pred_region
      _
    $region241: #{swin_forward.1} parent=1 // pred_fallthru
      _
    // Predicated region
    $region242: #{swin_forward.1} parent=1 // pred_check
      _
    $region243: #{swin_forward.1} parent=1 // pred_check_branch
      %490 = sbr.rel (0) target = $region245
    $region244: #{swin_forward.1} parent=1 // pred_region
      %492 = vsyncadd [#allocation36], 0
      %s494 = sshll.u32 %s121, 4
      %s495 = int_to_ptr.hbm [resolvable:$true] %s494
      %s496 = sshll.u32 [#allocation37], 4
      %s497 = int_to_ptr.vmem [resolvable:$true] %s496
      %499 = dma.hbm_to_vmem [thread:$0]  %s495, 16, %s497, [#allocation36]
    $region245: #{swin_forward.1} parent=1 // pred_fallthru
      _
    // Predicated region
    $region246: #{swin_forward.1} parent=1 // pred_check
      _
    $region247: #{swin_forward.1} parent=1 // pred_check_branch
      %501 = sbr.rel (0) target = $region249
    $region248: #{swin_forward.1} parent=1 // pred_region
      %503 = vsyncadd [#allocation39], 0
      %s505 = sshll.u32 %s123, 4
      %s506 = int_to_ptr.hbm [resolvable:$true] %s505
      %s507 = sshll.u32 [#allocation38], 4
      %s508 = int_to_ptr.vmem [resolvable:$true] %s507
      %510 = dma.hbm_to_vmem [thread:$0]  %s506, 16, %s508, [#allocation39]
    $region249: #{swin_forward.1} parent=1 // pred_fallthru
      _
    // Predicated region
    $region250: #{swin_forward.1} parent=1 // pred_check
      _
    $region251: #{swin_forward.1} parent=1 // pred_check_branch
      %512 = sbr.rel (0) target = $region253
    $region252: #{swin_forward.1} parent=1 // pred_region
      %514 = vsyncadd [#allocation39], 0
      %s516 = sshll.u32 %s125, 4
      %s517 = int_to_ptr.hbm [resolvable:$true] %s516
      %s518 = sshll.u32 [#allocation40], 4
      %s519 = int_to_ptr.vmem [resolvable:$true] %s518
      %521 = dma.hbm_to_vmem [thread:$0]  %s517, 16, %s519, [#allocation39]
    $region253: #{swin_forward.1} parent=1 // pred_fallthru
      _
    // Predicated region
    $region254: #{swin_forward.1} parent=1 // pred_check
      _
    $region255: #{swin_forward.1} parent=1 // pred_check_branch
      %523 = sbr.rel (0) target = $region257
    $region256: #{swin_forward.1} parent=1 // pred_region
      %525 = vsyncadd [#allocation42], 0
      %s527 = sshll.u32 %s127, 4
      %s528 = int_to_ptr.hbm [resolvable:$true] %s527
      %s529 = sshll.u32 [#allocation41], 4
      %s530 = int_to_ptr.vmem [resolvable:$true] %s529
      %532 = dma.hbm_to_vmem [thread:$0]  %s528, 16, %s530, [#allocation42]
    $region257: #{swin_forward.1} parent=1 // pred_fallthru
      _
    // Predicated region
    $region258: #{swin_forward.1} parent=1 // pred_check
      _
    $region259: #{swin_forward.1} parent=1 // pred_check_branch
      %534 = sbr.rel (0) target = $region261
    $region260: #{swin_forward.1} parent=1 // pred_region
      %536 = vsyncadd [#allocation42], 0
      %s538 = sshll.u32 %s129, 4
      %s539 = int_to_ptr.hbm [resolvable:$true] %s538
      %s540 = sshll.u32 [#allocation43], 4
      %s541 = int_to_ptr.vmem [resolvable:$true] %s540
      %543 = dma.hbm_to_vmem [thread:$0]  %s539, 16, %s541, [#allocation42]
    $region261: #{swin_forward.1} parent=1 // pred_fallthru
      _
    // Predicated region
    $region262: #{swin_forward.1} parent=1 // pred_check
      _
    $region263: #{swin_forward.1} parent=1 // pred_check_branch
      %545 = sbr.rel (0) target = $region265
    $region264: #{swin_forward.1} parent=1 // pred_region
      _
    $region265: #{swin_forward.1} parent=1 // pred_fallthru
      _
    // Predicated region
    $region266: #{swin_forward.1} parent=1 // pred_check
      _
    $region267: #{swin_forward.1} parent=1 // pred_check_branch
      %547 = sbr.rel (0) target = $region269
    $region268: #{swin_forward.1} parent=1 // pred_region
      _
    $region269: #{swin_forward.1} parent=1 // pred_fallthru
      _
    // Predicated region
    $region270: #{swin_forward.1} parent=1 // pred_check
      _
    $region271: #{swin_forward.1} parent=1 // pred_check_branch
      %549 = sbr.rel (0) target = $region273
    $region272: #{swin_forward.1} parent=1 // pred_region
      _
    $region273: #{swin_forward.1} parent=1 // pred_fallthru
      _
    // Predicated region
    $region274: #{swin_forward.1} parent=1 // pred_check
      _
    $region275: #{swin_forward.1} parent=1 // pred_check_branch
      %551 = sbr.rel (0) target = $region277
    $region276: #{swin_forward.1} parent=1 // pred_region
      %553 = dma.done [#allocation3], 16
    $region277: #{swin_forward.1} parent=1 // pred_fallthru
      _
    // Predicated region
    $region278: #{swin_forward.1} parent=1 // pred_check
      _
    $region279: #{swin_forward.1} parent=1 // pred_check_branch
      %555 = sbr.rel (0) target = $region281
    $region280: #{swin_forward.1} parent=1 // pred_region
      %557 = dma.done [#allocation6], 16
    $region281: #{swin_forward.1} parent=1 // pred_fallthru
      _
    // Predicated region
    $region282: #{swin_forward.1} parent=1 // pred_check
      _
    $region283: #{swin_forward.1} parent=1 // pred_check_branch
      %559 = sbr.rel (0) target = $region285
    $region284: #{swin_forward.1} parent=1 // pred_region
      %561 = dma.done [#allocation6], 16
    $region285: #{swin_forward.1} parent=1 // pred_fallthru
      _
    // Predicated region
    $region286: #{swin_forward.1} parent=1 // pred_check
      _
    $region287: #{swin_forward.1} parent=1 // pred_check_branch
      %563 = sbr.rel (0) target = $region289
    $region288: #{swin_forward.1} parent=1 // pred_region
      %565 = dma.done [#allocation9], 16
    $region289: #{swin_forward.1} parent=1 // pred_fallthru
      _
    // Predicated region
    $region290: #{swin_forward.1} parent=1 // pred_check
      _
    $region291: #{swin_forward.1} parent=1 // pred_check_branch
      %567 = sbr.rel (0) target = $region293
    $region292: #{swin_forward.1} parent=1 // pred_region
      %569 = dma.done [#allocation9], 16
    $region293: #{swin_forward.1} parent=1 // pred_fallthru
      _
    // Predicated region
    $region294: #{swin_forward.1} parent=1 // pred_check
      _
    $region295: #{swin_forward.1} parent=1 // pred_check_branch
      %571 = sbr.rel (0) target = $region297
    $region296: #{swin_forward.1} parent=1 // pred_region
      %573 = dma.done [#allocation12], 16
    $region297: #{swin_forward.1} parent=1 // pred_fallthru
      _
    // Predicated region
    $region298: #{swin_forward.1} parent=1 // pred_check
      _
    $region299: #{swin_forward.1} parent=1 // pred_check_branch
      %575 = sbr.rel (0) target = $region301
    $region300: #{swin_forward.1} parent=1 // pred_region
      %577 = dma.done [#allocation12], 16
    $region301: #{swin_forward.1} parent=1 // pred_fallthru
      _
    // Predicated region
    $region302: #{swin_forward.1} parent=1 // pred_check
      _
    $region303: #{swin_forward.1} parent=1 // pred_check_branch
      %579 = sbr.rel (0) target = $region305
    $region304: #{swin_forward.1} parent=1 // pred_region
      %581 = dma.done [#allocation15], 16
    $region305: #{swin_forward.1} parent=1 // pred_fallthru
      _
    // Predicated region
    $region306: #{swin_forward.1} parent=1 // pred_check
      _
    $region307: #{swin_forward.1} parent=1 // pred_check_branch
      %583 = sbr.rel (0) target = $region309
    $region308: #{swin_forward.1} parent=1 // pred_region
      %585 = dma.done [#allocation15], 16
    $region309: #{swin_forward.1} parent=1 // pred_fallthru
      _
    // Predicated region
    $region310: #{swin_forward.1} parent=1 // pred_check
      _
    $region311: #{swin_forward.1} parent=1 // pred_check_branch
      %587 = sbr.rel (0) target = $region313
    $region312: #{swin_forward.1} parent=1 // pred_region
      %589 = dma.done [#allocation18], 16
    $region313: #{swin_forward.1} parent=1 // pred_fallthru
      _
    // Predicated region
    $region314: #{swin_forward.1} parent=1 // pred_check
      _
    $region315: #{swin_forward.1} parent=1 // pred_check_branch
      %591 = sbr.rel (0) target = $region317
    $region316: #{swin_forward.1} parent=1 // pred_region
      %593 = dma.done [#allocation18], 16
    $region317: #{swin_forward.1} parent=1 // pred_fallthru
      _
    // Predicated region
    $region318: #{swin_forward.1} parent=1 // pred_check
      _
    $region319: #{swin_forward.1} parent=1 // pred_check_branch
      %595 = sbr.rel (0) target = $region321
    $region320: #{swin_forward.1} parent=1 // pred_region
      %597 = dma.done [#allocation21], 16
    $region321: #{swin_forward.1} parent=1 // pred_fallthru
      _
    // Predicated region
    $region322: #{swin_forward.1} parent=1 // pred_check
      _
    $region323: #{swin_forward.1} parent=1 // pred_check_branch
      %599 = sbr.rel (0) target = $region325
    $region324: #{swin_forward.1} parent=1 // pred_region
      %601 = dma.done [#allocation21], 16
    $region325: #{swin_forward.1} parent=1 // pred_fallthru
      _
    // Predicated region
    $region326: #{swin_forward.1} parent=1 // pred_check
      _
    $region327: #{swin_forward.1} parent=1 // pred_check_branch
      %603 = sbr.rel (0) target = $region329
    $region328: #{swin_forward.1} parent=1 // pred_region
      %605 = dma.done [#allocation24], 16
    $region329: #{swin_forward.1} parent=1 // pred_fallthru
      _
    // Predicated region
    $region330: #{swin_forward.1} parent=1 // pred_check
      _
    $region331: #{swin_forward.1} parent=1 // pred_check_branch
      %607 = sbr.rel (0) target = $region333
    $region332: #{swin_forward.1} parent=1 // pred_region
      %609 = dma.done [#allocation24], 16
    $region333: #{swin_forward.1} parent=1 // pred_fallthru
      _
    // Predicated region
    $region334: #{swin_forward.1} parent=1 // pred_check
      _
    $region335: #{swin_forward.1} parent=1 // pred_check_branch
      %611 = sbr.rel (0) target = $region337
    $region336: #{swin_forward.1} parent=1 // pred_region
      %613 = dma.done [#allocation27], 16
    $region337: #{swin_forward.1} parent=1 // pred_fallthru
      _
    // Predicated region
    $region338: #{swin_forward.1} parent=1 // pred_check
      _
    $region339: #{swin_forward.1} parent=1 // pred_check_branch
      %615 = sbr.rel (0) target = $region341
    $region340: #{swin_forward.1} parent=1 // pred_region
      %617 = dma.done [#allocation27], 16
    $region341: #{swin_forward.1} parent=1 // pred_fallthru
      _
    // Predicated region
    $region342: #{swin_forward.1} parent=1 // pred_check
      _
    $region343: #{swin_forward.1} parent=1 // pred_check_branch
      %619 = sbr.rel (0) target = $region345
    $region344: #{swin_forward.1} parent=1 // pred_region
      %621 = dma.done [#allocation30], 16
    $region345: #{swin_forward.1} parent=1 // pred_fallthru
      _
    // Predicated region
    $region346: #{swin_forward.1} parent=1 // pred_check
      _
    $region347: #{swin_forward.1} parent=1 // pred_check_branch
      %623 = sbr.rel (0) target = $region349
    $region348: #{swin_forward.1} parent=1 // pred_region
      %625 = dma.done [#allocation30], 16
    $region349: #{swin_forward.1} parent=1 // pred_fallthru
      _
    // Predicated region
    $region350: #{swin_forward.1} parent=1 // pred_check
      _
    $region351: #{swin_forward.1} parent=1 // pred_check_branch
      %627 = sbr.rel (0) target = $region353
    $region352: #{swin_forward.1} parent=1 // pred_region
      %629 = dma.done [#allocation33], 16
    $region353: #{swin_forward.1} parent=1 // pred_fallthru
      _
    // Predicated region
    $region354: #{swin_forward.1} parent=1 // pred_check
      _
    $region355: #{swin_forward.1} parent=1 // pred_check_branch
      %631 = sbr.rel (0) target = $region357
    $region356: #{swin_forward.1} parent=1 // pred_region
      %633 = dma.done [#allocation33], 16
    $region357: #{swin_forward.1} parent=1 // pred_fallthru
      _
    // Predicated region
    $region358: #{swin_forward.1} parent=1 // pred_check
      _
    $region359: #{swin_forward.1} parent=1 // pred_check_branch
      %635 = sbr.rel (0) target = $region361
    $region360: #{swin_forward.1} parent=1 // pred_region
      %637 = dma.done [#allocation36], 16
    $region361: #{swin_forward.1} parent=1 // pred_fallthru
      _
    // Predicated region
    $region362: #{swin_forward.1} parent=1 // pred_check
      _
    $region363: #{swin_forward.1} parent=1 // pred_check_branch
      %639 = sbr.rel (0) target = $region365
    $region364: #{swin_forward.1} parent=1 // pred_region
      %641 = dma.done [#allocation36], 16
    $region365: #{swin_forward.1} parent=1 // pred_fallthru
      _
    // Predicated region
    $region366: #{swin_forward.1} parent=1 // pred_check
      _
    $region367: #{swin_forward.1} parent=1 // pred_check_branch
      %643 = sbr.rel (0) target = $region369
    $region368: #{swin_forward.1} parent=1 // pred_region
      %645 = dma.done [#allocation39], 16
    $region369: #{swin_forward.1} parent=1 // pred_fallthru
      _
    // Predicated region
    $region370: #{swin_forward.1} parent=1 // pred_check
      _
    $region371: #{swin_forward.1} parent=1 // pred_check_branch
      %647 = sbr.rel (0) target = $region373
    $region372: #{swin_forward.1} parent=1 // pred_region
      %649 = dma.done [#allocation39], 16
    $region373: #{swin_forward.1} parent=1 // pred_fallthru
      _
    // Predicated region
    $region374: #{swin_forward.1} parent=1 // pred_check
      _
    $region375: #{swin_forward.1} parent=1 // pred_check_branch
      %651 = sbr.rel (0) target = $region377
    $region376: #{swin_forward.1} parent=1 // pred_region
      %653 = dma.done [#allocation42], 16
    $region377: #{swin_forward.1} parent=1 // pred_fallthru
      _
    // Predicated region
    $region378: #{swin_forward.1} parent=1 // pred_check
      _
    $region379: #{swin_forward.1} parent=1 // pred_check_branch
      %655 = sbr.rel (0) target = $region381
    $region380: #{swin_forward.1} parent=1 // pred_region
      %657 = dma.done [#allocation42], 16
    $region381: #{swin_forward.1} parent=1 // pred_fallthru
      _
    %v658 = vld [vmem:[%s1] sm:$0xff]
    %v659 = vld [vmem:[%s1 + $0x8] sm:$0xff]
    %v660 = vld [vmem:[%s1 + $0x10] sm:$0xff]
    %v661 = vld [vmem:[%s1 + $0x18] sm:$0xff]
    %v662 = vld [vmem:[%s23] sm:$0xff]
    %v663 = vld [vmem:[%s23 + $0x8] sm:$0xff]
    %v664 = vld [vmem:[%s23 + $0x10] sm:$0xff]
    %v665 = vld [vmem:[%s23 + $0x18] sm:$0xff]
    %v666 = vld [vmem:[%s23 + $0x20] sm:$0xff]
    %v667 = vld [vmem:[%s23 + $0x28] sm:$0xff]
    %v668 = vld [vmem:[%s21] sm:$0x1]
    %v670 = vperm.slane %v668, 0
    %vm672 = vcmask 392192
    %v674 = vsel %vm672, %v658, 0
    %v677 = vsel %vm672, %v659, 0
    %v680 = vsel %vm672, %v660, 0
    %v683 = vsel %vm672, %v661, 0
    %685 = vmatpush.msra.mxu0 0.0
    %686 = vmatpush.msra.mxu0 0.0
    %687 = vmatpush.msra.mxu0 0.0
    %688 = vmatpush.msra.mxu0 0.0
    %689 = vmatpush.msra.mxu0 0.0
    %690 = vmatpush.msra.mxu0 0.0
    %691 = vmatpush.msra.mxu0 0.0
    %692 = vmatpush.msra.mxu0 0.0
    %693 = vmatpush.msra.mxu0 0.0
    %694 = vmatpush.msra.mxu0 0.0
    %695 = vmatpush.msra.mxu0 %v667
    %696 = vmatpush.msra.mxu0 %v666
    %697 = vmatpush.msra.mxu0 %v665
    %698 = vmatpush.msra.mxu0 %v664
    %699 = vmatpush.msra.mxu0 %v663
    %700 = vmatpush.msra.mxu0 %v662
    %701 = vmatmul.f32.gmra.mxu0 %v674
    %v702 = vpop.f32.mrf.mxu0
    %v703 = vadd.f32 %v670, %v702
    %704 = vmatmul.f32.gmra.mxu0 %v677
    %v705 = vpop.f32.mrf.mxu0
    %v706 = vadd.f32 %v670, %v705
    %707 = vmatmul.f32.gmra.mxu0 %v680
    %v708 = vpop.f32.mrf.mxu0
    %v709 = vadd.f32 %v670, %v708
    %710 = vmatmul.f32.gmra.mxu0 %v683
    %v711 = vpop.f32.mrf.mxu0
    %v712 = vadd.f32 %v670, %v711
    %713 = vdwg.mxu0
    %vm714 = vcmask 261120
    %v715 = vsel %vm714, %v703, 0.0
    %716 = vadd.xlane.f32.xlu0 %v715
    %v717 = vpop.xlane.xlu0 %716
    %v718 = vsel %vm714, %v706, 0.0
    %719 = vadd.xlane.f32.xlu0 %v718
    %v720 = vpop.xlane.xlu0 %719
    %v721 = vsel %vm714, %v709, 0.0
    %722 = vadd.xlane.f32.xlu0 %v721
    %v723 = vpop.xlane.xlu0 %722
    %v724 = vsel %vm714, %v712, 0.0
    %725 = vadd.xlane.f32.xlu0 %v724
    %v726 = vpop.xlane.xlu0 %725
    %v727 = vrcp.pop 32.0
    %v728 = vmul.f32 32.0, %v727
    %v729 = vsub.f32 1.0, %v728
    %v730 = vmul.f32 %v727, %v729
    %v731 = vadd.f32 %v727, %v730
    %vm732 = vweird.f32 %v727
    %v733 = vsel %vm732, %v727, %v731
    %v734 = vmul.f32 %v717, %v733
    %v735 = vmul.f32 %v720, %v733
    %v736 = vmul.f32 %v723, %v733
    %v737 = vmul.f32 %v726, %v733
    %v738 = vsub.f32 %v703, %v734
    %v739 = vsub.f32 %v706, %v735
    %v740 = vsub.f32 %v709, %v736
    %v741 = vsub.f32 %v712, %v737
    %v742 = vmul.f32 %v738, %v738
    %v743 = vmul.f32 %v739, %v739
    %v744 = vmul.f32 %v740, %v740
    %v745 = vmul.f32 %v741, %v741
    %v746 = vsel %vm714, %v742, 0.0
    %747 = vadd.xlane.f32.xlu0 %v746
    %v748 = vpop.xlane.xlu0 %747
    %v749 = vsel %vm714, %v743, 0.0
    %750 = vadd.xlane.f32.xlu0 %v749
    %v751 = vpop.xlane.xlu0 %750
    %v752 = vsel %vm714, %v744, 0.0
    %753 = vadd.xlane.f32.xlu0 %v752
    %v754 = vpop.xlane.xlu0 %753
    %v755 = vsel %vm714, %v745, 0.0
    %756 = vadd.xlane.f32.xlu0 %v755
    %v757 = vpop.xlane.xlu0 %756
    %v758 = vmul.f32 %v748, %v733
    %v759 = vmul.f32 %v751, %v733
    %v760 = vmul.f32 %v754, %v733
    %v761 = vmul.f32 %v757, %v733
    %v762 = vadd.f32 %v758, 1e-05
    %v763 = vadd.f32 %v759, 1e-05
    %v764 = vadd.f32 %v760, 1e-05
    %v765 = vadd.f32 %v761, 1e-05
    %v766 = vrsqrt.pop %v762
    %v767 = vmul.f32 %v766, %v762
    %v768 = vmul.f32 %v767, %v766
    %v769 = vmul.f32 0.5, %v768
    %v770 = vsub.f32 1.5, %v769
    %v771 = vmul.f32 %v766, %v770
    %vm772 = vweird.f32 %v762
    %vm773 = vweird.f32 %v766
    %vm774 = vmor %vm772, %vm773
    %v775 = vsel %vm774, %v766, %v771
    %v776 = vrsqrt.pop %v763
    %v777 = vmul.f32 %v776, %v763
    %v778 = vmul.f32 %v777, %v776
    %v779 = vmul.f32 0.5, %v778
    %v780 = vsub.f32 1.5, %v779
    %v781 = vmul.f32 %v776, %v780
    %vm782 = vweird.f32 %v763
    %vm783 = vweird.f32 %v776
    %vm784 = vmor %vm782, %vm783
    %v785 = vsel %vm784, %v776, %v781
    %v786 = vrsqrt.pop %v764
    %v787 = vmul.f32 %v786, %v764
    %v788 = vmul.f32 %v787, %v786
    %v789 = vmul.f32 0.5, %v788
    %v790 = vsub.f32 1.5, %v789
    %v791 = vmul.f32 %v786, %v790
    %vm792 = vweird.f32 %v764
    %vm793 = vweird.f32 %v786
    %vm794 = vmor %vm792, %vm793
    %v795 = vsel %vm794, %v786, %v791
    %v796 = vrsqrt.pop %v765
    %v797 = vmul.f32 %v796, %v765
    %v798 = vmul.f32 %v797, %v796
    %v799 = vmul.f32 0.5, %v798
    %v800 = vsub.f32 1.5, %v799
    %v801 = vmul.f32 %v796, %v800
    %vm802 = vweird.f32 %v765
    %vm803 = vweird.f32 %v796
    %vm804 = vmor %vm802, %vm803
    %v805 = vsel %vm804, %v796, %v801
    %v806 = vmul.f32 %v738, %v775
    %v807 = vmul.f32 %v739, %v785
    %v808 = vmul.f32 %v740, %v795
    %v809 = vmul.f32 %v741, %v805
    %v810 = vld [vmem:[%s13] sm:$0x1]
    %v812 = vperm.slane %v810, 0
    %v814 = vmul.f32 %v806, %v812
    %v815 = vmul.f32 %v807, %v812
    %v816 = vmul.f32 %v808, %v812
    %v817 = vmul.f32 %v809, %v812
    %v818 = vld [vmem:[%s11] sm:$0x1]
    %v820 = vperm.slane %v818, 0
    %v822 = vadd.f32 %v814, %v820
    %v823 = vadd.f32 %v815, %v820
    %v824 = vadd.f32 %v816, %v820
    %v825 = vadd.f32 %v817, %v820
    %826 = vst.msk [vmem:[#allocation44] sm:$0xff] %vm714, %v822
    %827 = vst.msk [vmem:[#allocation44 + $0x8] sm:$0xff] %vm714, %v823
    %828 = vst.msk [vmem:[#allocation44 + $0x10] sm:$0xff] %vm714, %v824
    %829 = vst.msk [vmem:[#allocation44 + $0x18] sm:$0xff] %vm714, %v825
    %v830 = vsel %vm714, %v822, 0.0
    %831 = vadd.xlane.f32.xlu0 %v830
    %v832 = vpop.xlane.xlu0 %831
    %v833 = vsel %vm714, %v823, 0.0
    %834 = vadd.xlane.f32.xlu0 %v833
    %v835 = vpop.xlane.xlu0 %834
    %v836 = vsel %vm714, %v824, 0.0
    %837 = vadd.xlane.f32.xlu0 %v836
    %v838 = vpop.xlane.xlu0 %837
    %v839 = vsel %vm714, %v825, 0.0
    %840 = vadd.xlane.f32.xlu0 %v839
    %v841 = vpop.xlane.xlu0 %840
    %v842 = vmul.f32 %v832, %v733
    %v843 = vmul.f32 %v835, %v733
    %v844 = vmul.f32 %v838, %v733
    %v845 = vmul.f32 %v841, %v733
    %v846 = vsub.f32 %v822, %v842
    %v847 = vsub.f32 %v823, %v843
    %v848 = vsub.f32 %v824, %v844
    %v849 = vsub.f32 %v825, %v845
    %v850 = vmul.f32 %v846, %v846
    %v851 = vmul.f32 %v847, %v847
    %v852 = vmul.f32 %v848, %v848
    %v853 = vmul.f32 %v849, %v849
    %v854 = vsel %vm714, %v850, 0.0
    %855 = vadd.xlane.f32.xlu0 %v854
    %v856 = vpop.xlane.xlu0 %855
    %v857 = vsel %vm714, %v851, 0.0
    %858 = vadd.xlane.f32.xlu0 %v857
    %v859 = vpop.xlane.xlu0 %858
    %v860 = vsel %vm714, %v852, 0.0
    %861 = vadd.xlane.f32.xlu0 %v860
    %v862 = vpop.xlane.xlu0 %861
    %v863 = vsel %vm714, %v853, 0.0
    %864 = vadd.xlane.f32.xlu0 %v863
    %v865 = vpop.xlane.xlu0 %864
    %v866 = vmul.f32 %v856, %v733
    %v867 = vmul.f32 %v859, %v733
    %v868 = vmul.f32 %v862, %v733
    %v869 = vmul.f32 %v865, %v733
    %v870 = vadd.f32 %v866, 1e-05
    %v871 = vadd.f32 %v867, 1e-05
    %v872 = vadd.f32 %v868, 1e-05
    %v873 = vadd.f32 %v869, 1e-05
    %v874 = vrsqrt.pop %v870
    %v875 = vmul.f32 %v874, %v870
    %v876 = vmul.f32 %v875, %v874
    %v877 = vmul.f32 0.5, %v876
    %v878 = vsub.f32 1.5, %v877
    %v879 = vmul.f32 %v874, %v878
    %vm880 = vweird.f32 %v870
    %vm881 = vweird.f32 %v874
    %vm882 = vmor %vm880, %vm881
    %v883 = vsel %vm882, %v874, %v879
    %v884 = vrsqrt.pop %v871
    %v885 = vmul.f32 %v884, %v871
    %v886 = vmul.f32 %v885, %v884
    %v887 = vmul.f32 0.5, %v886
    %v888 = vsub.f32 1.5, %v887
    %v889 = vmul.f32 %v884, %v888
    %vm890 = vweird.f32 %v871
    %vm891 = vweird.f32 %v884
    %vm892 = vmor %vm890, %vm891
    %v893 = vsel %vm892, %v884, %v889
    %v894 = vrsqrt.pop %v872
    %v895 = vmul.f32 %v894, %v872
    %v896 = vmul.f32 %v895, %v894
    %v897 = vmul.f32 0.5, %v896
    %v898 = vsub.f32 1.5, %v897
    %v899 = vmul.f32 %v894, %v898
    %vm900 = vweird.f32 %v872
    %vm901 = vweird.f32 %v894
    %vm902 = vmor %vm900, %vm901
    %v903 = vsel %vm902, %v894, %v899
    %v904 = vrsqrt.pop %v873
    %v905 = vmul.f32 %v904, %v873
    %v906 = vmul.f32 %v905, %v904
    %v907 = vmul.f32 0.5, %v906
    %v908 = vsub.f32 1.5, %v907
    %v909 = vmul.f32 %v904, %v908
    %vm910 = vweird.f32 %v873
    %vm911 = vweird.f32 %v904
    %vm912 = vmor %vm910, %vm911
    %v913 = vsel %vm912, %v904, %v909
    %v914 = vmul.f32 %v846, %v883
    %v915 = vmul.f32 %v847, %v893
    %v916 = vmul.f32 %v848, %v903
    %v917 = vmul.f32 %v849, %v913
    %v918 = vld [vmem:[%s39] sm:$0x1]
    %v920 = vperm.slane %v918, 0
    %v922 = vmul.f32 %v914, %v920
    %v923 = vmul.f32 %v915, %v920
    %v924 = vmul.f32 %v916, %v920
    %v925 = vmul.f32 %v917, %v920
    %v926 = vld [vmem:[%s37] sm:$0x1]
    %v928 = vperm.slane %v926, 0
    %v930 = vadd.f32 %v922, %v928
    %v931 = vadd.f32 %v923, %v928
    %v932 = vadd.f32 %v924, %v928
    %v933 = vadd.f32 %v925, %v928
    %v934 = vld [vmem:[%s51] sm:$0xff]
    %v935 = vld [vmem:[%s51 + $0x8] sm:$0xff]
    %v936 = vld [vmem:[%s51 + $0x10] sm:$0xff]
    %v937 = vld [vmem:[%s51 + $0x18] sm:$0xff]
    %v938 = vld [vmem:[#allocation7] sm:$0x1]
    %v940 = vperm.slane %v938, 0
    %v943 = vsel %vm714, %v930, 0
    %v946 = vsel %vm714, %v931, 0
    %v949 = vsel %vm714, %v932, 0
    %v952 = vsel %vm714, %v933, 0
    %954 = vmatpush.msra.mxu0 0.0
    %955 = vmatpush.msra.mxu0 0.0
    %956 = vmatpush.msra.mxu0 0.0
    %957 = vmatpush.msra.mxu0 0.0
    %958 = vmatpush.msra.mxu0 0.0
    %959 = vmatpush.msra.mxu0 0.0
    %960 = vmatpush.msra.mxu0 0.0
    %961 = vmatpush.msra.mxu0 0.0
    %962 = vmatpush.msra.mxu0 0.0
    %963 = vmatpush.msra.mxu0 0.0
    %964 = vmatpush.msra.mxu0 0.0
    %965 = vmatpush.msra.mxu0 0.0
    %966 = vmatpush.msra.mxu0 %v937
    %967 = vmatpush.msra.mxu0 %v936
    %968 = vmatpush.msra.mxu0 %v935
    %969 = vmatpush.msra.mxu0 %v934
    %970 = vmatmul.f32.gmra.mxu0 %v943
    %v971 = vpop.f32.mrf.mxu0
    %v972 = vadd.f32 %v940, %v971
    %973 = vmatmul.f32.gmra.mxu0 %v946
    %v974 = vpop.f32.mrf.mxu0
    %v975 = vadd.f32 %v940, %v974
    %976 = vmatmul.f32.gmra.mxu0 %v949
    %v977 = vpop.f32.mrf.mxu0
    %v978 = vadd.f32 %v940, %v977
    %979 = vmatmul.f32.gmra.mxu0 %v952
    %v980 = vpop.f32.mrf.mxu0
    %v981 = vadd.f32 %v940, %v980
    %982 = vdwg.mxu0
    %987 = vrot.lane.b32.xlu0 %v972, 96
    %v988 = vpop.permute.xlu0 %987
    %989 = vrot.lane.b32.xlu0 %v975, 96
    %v990 = vpop.permute.xlu0 %989
    %991 = vrot.lane.b32.xlu0 %v978, 96
    %v992 = vpop.permute.xlu0 %991
    %993 = vrot.lane.b32.xlu0 %v981, 96
    %v994 = vpop.permute.xlu0 %993
    %vm995 = vcmask 130048
    %v996 = vsel %vm995, %v972, 0
    %v998 = vsel %vm995, %v975, 0
    %v1000 = vsel %vm995, %v978, 0
    %v1002 = vsel %vm995, %v981, 0
    %v1004 = vsel %vm995, %v988, 0
    %v1006 = vsel %vm995, %v990, 0
    %v1008 = vsel %vm995, %v992, 0
    %v1010 = vsel %vm995, %v994, 0
    %1012 = vmatpush.xpose.msra.mxu0 0.0
    %1013 = vmatpush.xpose.msra.mxu0 0.0
    %1014 = vmatpush.xpose.msra.mxu0 0.0
    %1015 = vmatpush.xpose.msra.mxu0 0.0
    %1016 = vmatpush.xpose.msra.mxu0 0.0
    %1017 = vmatpush.xpose.msra.mxu0 0.0
    %1018 = vmatpush.xpose.msra.mxu0 0.0
    %1019 = vmatpush.xpose.msra.mxu0 0.0
    %1020 = vmatpush.xpose.msra.mxu0 0.0
    %1021 = vmatpush.xpose.msra.mxu0 0.0
    %1022 = vmatpush.xpose.msra.mxu0 0.0
    %1023 = vmatpush.xpose.msra.mxu0 0.0
    %1024 = vmatpush.xpose.msra.mxu0 %v1010
    %1025 = vmatpush.xpose.msra.mxu0 %v1008
    %1026 = vmatpush.xpose.msra.mxu0 %v1006
    %1027 = vmatpush.xpose.msra.mxu0 %v1004
    %1028 = vmatmul.f32.gmra.mxu0 %v996
    %v1029 = vpop.f32.mrf.mxu0
    %v1030 = vadd.f32 0.0, %v1029
    %1031 = vmatmul.f32.gmra.mxu0 %v998
    %v1032 = vpop.f32.mrf.mxu0
    %v1033 = vadd.f32 0.0, %v1032
    %1034 = vmatmul.f32.gmra.mxu0 %v1000
    %v1035 = vpop.f32.mrf.mxu0
    %v1036 = vadd.f32 0.0, %v1035
    %1037 = vmatmul.f32.gmra.mxu0 %v1002
    %v1038 = vpop.f32.mrf.mxu0
    %v1039 = vadd.f32 0.0, %v1038
    %1040 = vdwg.mxu0
    %v1041 = vmul.f32 %v1030, 0.25
    %v1042 = vmul.f32 %v1033, 0.25
    %v1043 = vmul.f32 %v1036, 0.25
    %v1044 = vmul.f32 %v1039, 0.25
    %v1045 = vld [vmem:[%s27] sm:$0xff]
    %v1046 = vld [vmem:[%s27 + $0x8] sm:$0xff]
    %v1047 = vld [vmem:[%s27 + $0x10] sm:$0xff]
    %v1048 = vld [vmem:[%s27 + $0x18] sm:$0xff]
    %v1049 = vadd.f32 %v1041, %v1045
    %v1050 = vadd.f32 %v1042, %v1046
    %v1051 = vadd.f32 %v1043, %v1047
    %v1052 = vadd.f32 %v1044, %v1048
    %v1053 = vsel %vm714, %v1049, -inf
    %1054 = vmax.xlane.f32.xlu0 %v1053
    %v1055 = vpop.xlane.xlu0 %1054
    %v1056 = vsel %vm714, %v1050, -inf
    %1057 = vmax.xlane.f32.xlu0 %v1056
    %v1058 = vpop.xlane.xlu0 %1057
    %v1059 = vsel %vm714, %v1051, -inf
    %1060 = vmax.xlane.f32.xlu0 %v1059
    %v1061 = vpop.xlane.xlu0 %1060
    %v1062 = vsel %vm714, %v1052, -inf
    %1063 = vmax.xlane.f32.xlu0 %v1062
    %v1064 = vpop.xlane.xlu0 %1063
    %v1065 = vsub.f32 %v1049, %v1055
    %v1066 = vsub.f32 %v1050, %v1058
    %v1067 = vsub.f32 %v1051, %v1061
    %v1068 = vsub.f32 %v1052, %v1064
    %v1069 = vmul.f32 %v1065, 1.442695
    %v1070 = vpow.pop %v1069
    %v1071 = vmul.f32 %v1066, 1.442695
    %v1072 = vpow.pop %v1071
    %v1073 = vmul.f32 %v1067, 1.442695
    %v1074 = vpow.pop %v1073
    %v1075 = vmul.f32 %v1068, 1.442695
    %v1076 = vpow.pop %v1075
    %v1077 = vsel %vm714, %v1070, 0.0
    %1078 = vadd.xlane.f32.xlu0 %v1077
    %v1079 = vpop.xlane.xlu0 %1078
    %v1080 = vsel %vm714, %v1072, 0.0
    %1081 = vadd.xlane.f32.xlu0 %v1080
    %v1082 = vpop.xlane.xlu0 %1081
    %v1083 = vsel %vm714, %v1074, 0.0
    %1084 = vadd.xlane.f32.xlu0 %v1083
    %v1085 = vpop.xlane.xlu0 %1084
    %v1086 = vsel %vm714, %v1076, 0.0
    %1087 = vadd.xlane.f32.xlu0 %v1086
    %v1088 = vpop.xlane.xlu0 %1087
    %v1089 = vrcp.pop %v1079
    %v1090 = vmul.f32 %v1079, %v1089
    %v1091 = vsub.f32 1.0, %v1090
    %v1092 = vmul.f32 %v1089, %v1091
    %v1093 = vadd.f32 %v1089, %v1092
    %vm1094 = vweird.f32 %v1079
    %vm1095 = vweird.f32 %v1089
    %vm1096 = vmor %vm1094, %vm1095
    %v1097 = vsel %vm1096, %v1089, %v1093
    %v1098 = vand.u32 2147483647, %v1079
    %vm1099 = vcmp.eq.f32.partialorder %v1098, 8.507059e+37
    %v1100 = vand.u32 %v1079, 2147483648
    %v1101 = vor.u32 1.1754944e-38, %v1100
    %v1102 = vsel %vm1099, %v1101, %v1097
    %v1103 = vmul.f32 %v1070, %v1102
    %v1104 = vrcp.pop %v1082
    %v1105 = vmul.f32 %v1082, %v1104
    %v1106 = vsub.f32 1.0, %v1105
    %v1107 = vmul.f32 %v1104, %v1106
    %v1108 = vadd.f32 %v1104, %v1107
    %vm1109 = vweird.f32 %v1082
    %vm1110 = vweird.f32 %v1104
    %vm1111 = vmor %vm1109, %vm1110
    %v1112 = vsel %vm1111, %v1104, %v1108
    %v1113 = vand.u32 2147483647, %v1082
    %vm1114 = vcmp.eq.f32.partialorder %v1113, 8.507059e+37
    %v1115 = vand.u32 %v1082, 2147483648
    %v1116 = vor.u32 1.1754944e-38, %v1115
    %v1117 = vsel %vm1114, %v1116, %v1112
    %v1118 = vmul.f32 %v1072, %v1117
    %v1119 = vrcp.pop %v1085
    %v1120 = vmul.f32 %v1085, %v1119
    %v1121 = vsub.f32 1.0, %v1120
    %v1122 = vmul.f32 %v1119, %v1121
    %v1123 = vadd.f32 %v1119, %v1122
    %vm1124 = vweird.f32 %v1085
    %vm1125 = vweird.f32 %v1119
    %vm1126 = vmor %vm1124, %vm1125
    %v1127 = vsel %vm1126, %v1119, %v1123
    %v1128 = vand.u32 2147483647, %v1085
    %vm1129 = vcmp.eq.f32.partialorder %v1128, 8.507059e+37
    %v1130 = vand.u32 %v1085, 2147483648
    %v1131 = vor.u32 1.1754944e-38, %v1130
    %v1132 = vsel %vm1129, %v1131, %v1127
    %v1133 = vmul.f32 %v1074, %v1132
    %v1134 = vrcp.pop %v1088
    %v1135 = vmul.f32 %v1088, %v1134
    %v1136 = vsub.f32 1.0, %v1135
    %v1137 = vmul.f32 %v1134, %v1136
    %v1138 = vadd.f32 %v1134, %v1137
    %vm1139 = vweird.f32 %v1088
    %vm1140 = vweird.f32 %v1134
    %vm1141 = vmor %vm1139, %vm1140
    %v1142 = vsel %vm1141, %v1134, %v1138
    %v1143 = vand.u32 2147483647, %v1088
    %vm1144 = vcmp.eq.f32.partialorder %v1143, 8.507059e+37
    %v1145 = vand.u32 %v1088, 2147483648
    %v1146 = vor.u32 1.1754944e-38, %v1145
    %v1147 = vsel %vm1144, %v1146, %v1142
    %v1148 = vmul.f32 %v1076, %v1147
    %1149 = vrot.lane.b32.xlu0 %v972, 64
    %v1150 = vpop.permute.xlu0 %1149
    %1151 = vrot.lane.b32.xlu0 %v975, 64
    %v1152 = vpop.permute.xlu0 %1151
    %1153 = vrot.lane.b32.xlu0 %v978, 64
    %v1154 = vpop.permute.xlu0 %1153
    %1155 = vrot.lane.b32.xlu0 %v981, 64
    %v1156 = vpop.permute.xlu0 %1155
    %v1162 = vsel %vm714, %v1103, 0
    %v1165 = vsel %vm714, %v1118, 0
    %v1168 = vsel %vm714, %v1133, 0
    %v1171 = vsel %vm714, %v1148, 0
    %1173 = vmatpush.msra.mxu0 0.0
    %1174 = vmatpush.msra.mxu0 0.0
    %1175 = vmatpush.msra.mxu0 0.0
    %1176 = vmatpush.msra.mxu0 0.0
    %1177 = vmatpush.msra.mxu0 0.0
    %1178 = vmatpush.msra.mxu0 0.0
    %1179 = vmatpush.msra.mxu0 0.0
    %1180 = vmatpush.msra.mxu0 0.0
    %1181 = vmatpush.msra.mxu0 0.0
    %1182 = vmatpush.msra.mxu0 0.0
    %1183 = vmatpush.msra.mxu0 0.0
    %1184 = vmatpush.msra.mxu0 0.0
    %1185 = vmatpush.msra.mxu0 %v1156
    %1186 = vmatpush.msra.mxu0 %v1154
    %1187 = vmatpush.msra.mxu0 %v1152
    %1188 = vmatpush.msra.mxu0 %v1150
    %1189 = vmatmul.f32.gmra.mxu0 %v1162
    %v1190 = vpop.f32.mrf.mxu0
    %v1191 = vadd.f32 0.0, %v1190
    %1192 = vmatmul.f32.gmra.mxu0 %v1165
    %v1193 = vpop.f32.mrf.mxu0
    %v1194 = vadd.f32 0.0, %v1193
    %1195 = vmatmul.f32.gmra.mxu0 %v1168
    %v1196 = vpop.f32.mrf.mxu0
    %v1197 = vadd.f32 0.0, %v1196
    %1198 = vmatmul.f32.gmra.mxu0 %v1171
    %v1199 = vpop.f32.mrf.mxu0
    %v1200 = vadd.f32 0.0, %v1199
    %1201 = vdwg.mxu0
    %1202 = vrot.lane.b32.xlu0 %v972, 112
    %v1203 = vpop.permute.xlu0 %1202
    %1204 = vrot.lane.b32.xlu0 %v975, 112
    %v1205 = vpop.permute.xlu0 %1204
    %1206 = vrot.lane.b32.xlu0 %v978, 112
    %v1207 = vpop.permute.xlu0 %1206
    %1208 = vrot.lane.b32.xlu0 %v981, 112
    %v1209 = vpop.permute.xlu0 %1208
    %1210 = vrot.lane.b32.xlu0 %v972, 80
    %v1211 = vpop.permute.xlu0 %1210
    %1212 = vrot.lane.b32.xlu0 %v975, 80
    %v1213 = vpop.permute.xlu0 %1212
    %1214 = vrot.lane.b32.xlu0 %v978, 80
    %v1215 = vpop.permute.xlu0 %1214
    %1216 = vrot.lane.b32.xlu0 %v981, 80
    %v1217 = vpop.permute.xlu0 %1216
    %v1218 = vsel %vm995, %v1203, 0
    %v1220 = vsel %vm995, %v1205, 0
    %v1222 = vsel %vm995, %v1207, 0
    %v1224 = vsel %vm995, %v1209, 0
    %v1226 = vsel %vm995, %v1211, 0
    %v1228 = vsel %vm995, %v1213, 0
    %v1230 = vsel %vm995, %v1215, 0
    %v1232 = vsel %vm995, %v1217, 0
    %1234 = vmatpush.xpose.msra.mxu0 0.0
    %1235 = vmatpush.xpose.msra.mxu0 0.0
    %1236 = vmatpush.xpose.msra.mxu0 0.0
    %1237 = vmatpush.xpose.msra.mxu0 0.0
    %1238 = vmatpush.xpose.msra.mxu0 0.0
    %1239 = vmatpush.xpose.msra.mxu0 0.0
    %1240 = vmatpush.xpose.msra.mxu0 0.0
    %1241 = vmatpush.xpose.msra.mxu0 0.0
    %1242 = vmatpush.xpose.msra.mxu0 0.0
    %1243 = vmatpush.xpose.msra.mxu0 0.0
    %1244 = vmatpush.xpose.msra.mxu0 0.0
    %1245 = vmatpush.xpose.msra.mxu0 0.0
    %1246 = vmatpush.xpose.msra.mxu0 %v1232
    %1247 = vmatpush.xpose.msra.mxu0 %v1230
    %1248 = vmatpush.xpose.msra.mxu0 %v1228
    %1249 = vmatpush.xpose.msra.mxu0 %v1226
    %1250 = vmatmul.f32.gmra.mxu0 %v1218
    %v1251 = vpop.f32.mrf.mxu0
    %v1252 = vadd.f32 0.0, %v1251
    %1253 = vmatmul.f32.gmra.mxu0 %v1220
    %v1254 = vpop.f32.mrf.mxu0
    %v1255 = vadd.f32 0.0, %v1254
    %1256 = vmatmul.f32.gmra.mxu0 %v1222
    %v1257 = vpop.f32.mrf.mxu0
    %v1258 = vadd.f32 0.0, %v1257
    %1259 = vmatmul.f32.gmra.mxu0 %v1224
    %v1260 = vpop.f32.mrf.mxu0
    %v1261 = vadd.f32 0.0, %v1260
    %1262 = vdwg.mxu0
    %v1263 = vmul.f32 %v1252, 0.25
    %v1264 = vmul.f32 %v1255, 0.25
    %v1265 = vmul.f32 %v1258, 0.25
    %v1266 = vmul.f32 %v1261, 0.25
    %s1267 = scalar_lea.vmem %s27, 32
    %v1268 = vld [vmem:[%s1267] sm:$0xff]
    %v1269 = vld [vmem:[%s1267 + $0x8] sm:$0xff]
    %v1270 = vld [vmem:[%s1267 + $0x10] sm:$0xff]
    %v1271 = vld [vmem:[%s1267 + $0x18] sm:$0xff]
    %v1272 = vadd.f32 %v1263, %v1268
    %v1273 = vadd.f32 %v1264, %v1269
    %v1274 = vadd.f32 %v1265, %v1270
    %v1275 = vadd.f32 %v1266, %v1271
    %v1276 = vsel %vm714, %v1272, -inf
    %1277 = vmax.xlane.f32.xlu0 %v1276
    %v1278 = vpop.xlane.xlu0 %1277
    %v1279 = vsel %vm714, %v1273, -inf
    %1280 = vmax.xlane.f32.xlu0 %v1279
    %v1281 = vpop.xlane.xlu0 %1280
    %v1282 = vsel %vm714, %v1274, -inf
    %1283 = vmax.xlane.f32.xlu0 %v1282
    %v1284 = vpop.xlane.xlu0 %1283
    %v1285 = vsel %vm714, %v1275, -inf
    %1286 = vmax.xlane.f32.xlu0 %v1285
    %v1287 = vpop.xlane.xlu0 %1286
    %v1288 = vsub.f32 %v1272, %v1278
    %v1289 = vsub.f32 %v1273, %v1281
    %v1290 = vsub.f32 %v1274, %v1284
    %v1291 = vsub.f32 %v1275, %v1287
    %v1292 = vmul.f32 %v1288, 1.442695
    %v1293 = vpow.pop %v1292
    %v1294 = vmul.f32 %v1289, 1.442695
    %v1295 = vpow.pop %v1294
    %v1296 = vmul.f32 %v1290, 1.442695
    %v1297 = vpow.pop %v1296
    %v1298 = vmul.f32 %v1291, 1.442695
    %v1299 = vpow.pop %v1298
    %v1300 = vsel %vm714, %v1293, 0.0
    %1301 = vadd.xlane.f32.xlu0 %v1300
    %v1302 = vpop.xlane.xlu0 %1301
    %v1303 = vsel %vm714, %v1295, 0.0
    %1304 = vadd.xlane.f32.xlu0 %v1303
    %v1305 = vpop.xlane.xlu0 %1304
    %v1306 = vsel %vm714, %v1297, 0.0
    %1307 = vadd.xlane.f32.xlu0 %v1306
    %v1308 = vpop.xlane.xlu0 %1307
    %v1309 = vsel %vm714, %v1299, 0.0
    %1310 = vadd.xlane.f32.xlu0 %v1309
    %v1311 = vpop.xlane.xlu0 %1310
    %v1312 = vrcp.pop %v1302
    %v1313 = vmul.f32 %v1302, %v1312
    %v1314 = vsub.f32 1.0, %v1313
    %v1315 = vmul.f32 %v1312, %v1314
    %v1316 = vadd.f32 %v1312, %v1315
    %vm1317 = vweird.f32 %v1302
    %vm1318 = vweird.f32 %v1312
    %vm1319 = vmor %vm1317, %vm1318
    %v1320 = vsel %vm1319, %v1312, %v1316
    %v1321 = vand.u32 2147483647, %v1302
    %vm1322 = vcmp.eq.f32.partialorder %v1321, 8.507059e+37
    %v1323 = vand.u32 %v1302, 2147483648
    %v1324 = vor.u32 1.1754944e-38, %v1323
    %v1325 = vsel %vm1322, %v1324, %v1320
    %v1326 = vmul.f32 %v1293, %v1325
    %v1327 = vrcp.pop %v1305
    %v1328 = vmul.f32 %v1305, %v1327
    %v1329 = vsub.f32 1.0, %v1328
    %v1330 = vmul.f32 %v1327, %v1329
    %v1331 = vadd.f32 %v1327, %v1330
    %vm1332 = vweird.f32 %v1305
    %vm1333 = vweird.f32 %v1327
    %vm1334 = vmor %vm1332, %vm1333
    %v1335 = vsel %vm1334, %v1327, %v1331
    %v1336 = vand.u32 2147483647, %v1305
    %vm1337 = vcmp.eq.f32.partialorder %v1336, 8.507059e+37
    %v1338 = vand.u32 %v1305, 2147483648
    %v1339 = vor.u32 1.1754944e-38, %v1338
    %v1340 = vsel %vm1337, %v1339, %v1335
    %v1341 = vmul.f32 %v1295, %v1340
    %v1342 = vrcp.pop %v1308
    %v1343 = vmul.f32 %v1308, %v1342
    %v1344 = vsub.f32 1.0, %v1343
    %v1345 = vmul.f32 %v1342, %v1344
    %v1346 = vadd.f32 %v1342, %v1345
    %vm1347 = vweird.f32 %v1308
    %vm1348 = vweird.f32 %v1342
    %vm1349 = vmor %vm1347, %vm1348
    %v1350 = vsel %vm1349, %v1342, %v1346
    %v1351 = vand.u32 2147483647, %v1308
    %vm1352 = vcmp.eq.f32.partialorder %v1351, 8.507059e+37
    %v1353 = vand.u32 %v1308, 2147483648
    %v1354 = vor.u32 1.1754944e-38, %v1353
    %v1355 = vsel %vm1352, %v1354, %v1350
    %v1356 = vmul.f32 %v1297, %v1355
    %v1357 = vrcp.pop %v1311
    %v1358 = vmul.f32 %v1311, %v1357
    %v1359 = vsub.f32 1.0, %v1358
    %v1360 = vmul.f32 %v1357, %v1359
    %v1361 = vadd.f32 %v1357, %v1360
    %vm1362 = vweird.f32 %v1311
    %vm1363 = vweird.f32 %v1357
    %vm1364 = vmor %vm1362, %vm1363
    %v1365 = vsel %vm1364, %v1357, %v1361
    %v1366 = vand.u32 2147483647, %v1311
    %vm1367 = vcmp.eq.f32.partialorder %v1366, 8.507059e+37
    %v1368 = vand.u32 %v1311, 2147483648
    %v1369 = vor.u32 1.1754944e-38, %v1368
    %v1370 = vsel %vm1367, %v1369, %v1365
    %v1371 = vmul.f32 %v1299, %v1370
    %1372 = vrot.lane.b32.xlu0 %v972, 48
    %v1373 = vpop.permute.xlu0 %1372
    %1374 = vrot.lane.b32.xlu0 %v975, 48
    %v1375 = vpop.permute.xlu0 %1374
    %1376 = vrot.lane.b32.xlu0 %v978, 48
    %v1377 = vpop.permute.xlu0 %1376
    %1378 = vrot.lane.b32.xlu0 %v981, 48
    %v1379 = vpop.permute.xlu0 %1378
    %v1385 = vsel %vm714, %v1326, 0
    %v1388 = vsel %vm714, %v1341, 0
    %v1391 = vsel %vm714, %v1356, 0
    %v1394 = vsel %vm714, %v1371, 0
    %1396 = vmatpush.msra.mxu0 0.0
    %1397 = vmatpush.msra.mxu0 0.0
    %1398 = vmatpush.msra.mxu0 0.0
    %1399 = vmatpush.msra.mxu0 0.0
    %1400 = vmatpush.msra.mxu0 0.0
    %1401 = vmatpush.msra.mxu0 0.0
    %1402 = vmatpush.msra.mxu0 0.0
    %1403 = vmatpush.msra.mxu0 0.0
    %1404 = vmatpush.msra.mxu0 0.0
    %1405 = vmatpush.msra.mxu0 0.0
    %1406 = vmatpush.msra.mxu0 0.0
    %1407 = vmatpush.msra.mxu0 0.0
    %1408 = vmatpush.msra.mxu0 %v1379
    %1409 = vmatpush.msra.mxu0 %v1377
    %1410 = vmatpush.msra.mxu0 %v1375
    %1411 = vmatpush.msra.mxu0 %v1373
    %1412 = vmatmul.f32.gmra.mxu0 %v1385
    %v1413 = vpop.f32.mrf.mxu0
    %v1414 = vadd.f32 0.0, %v1413
    %1415 = vmatmul.f32.gmra.mxu0 %v1388
    %v1416 = vpop.f32.mrf.mxu0
    %v1417 = vadd.f32 0.0, %v1416
    %1418 = vmatmul.f32.gmra.mxu0 %v1391
    %v1419 = vpop.f32.mrf.mxu0
    %v1420 = vadd.f32 0.0, %v1419
    %1421 = vmatmul.f32.gmra.mxu0 %v1394
    %v1422 = vpop.f32.mrf.mxu0
    %v1423 = vadd.f32 0.0, %v1422
    %1424 = vdwg.mxu0
    %1429 = vrot.lane.b32.xlu0 %v1414, 16
    %v1430 = vpop.permute.xlu0 %1429
    %1431 = vrot.lane.b32.xlu0 %v1417, 16
    %v1432 = vpop.permute.xlu0 %1431
    %1433 = vrot.lane.b32.xlu0 %v1420, 16
    %v1434 = vpop.permute.xlu0 %1433
    %1435 = vrot.lane.b32.xlu0 %v1423, 16
    %v1436 = vpop.permute.xlu0 %1435
    %v1441 = vsel %vm995, %v1191, %v1430
    %v1442 = vsel %vm995, %v1194, %v1432
    %v1443 = vsel %vm995, %v1197, %v1434
    %v1444 = vsel %vm995, %v1200, %v1436
    %v1445 = vld [vmem:[%s47] sm:$0xff]
    %v1446 = vld [vmem:[%s47 + $0x8] sm:$0xff]
    %v1447 = vld [vmem:[%s47 + $0x10] sm:$0xff]
    %v1448 = vld [vmem:[%s47 + $0x18] sm:$0xff]
    %v1449 = vld [vmem:[#allocation5] sm:$0x1]
    %v1451 = vperm.slane %v1449, 0
    %v1454 = vsel %vm714, %v1441, 0
    %v1457 = vsel %vm714, %v1442, 0
    %v1460 = vsel %vm714, %v1443, 0
    %v1463 = vsel %vm714, %v1444, 0
    %1465 = vmatpush.msra.mxu0 0.0
    %1466 = vmatpush.msra.mxu0 0.0
    %1467 = vmatpush.msra.mxu0 0.0
    %1468 = vmatpush.msra.mxu0 0.0
    %1469 = vmatpush.msra.mxu0 0.0
    %1470 = vmatpush.msra.mxu0 0.0
    %1471 = vmatpush.msra.mxu0 0.0
    %1472 = vmatpush.msra.mxu0 0.0
    %1473 = vmatpush.msra.mxu0 0.0
    %1474 = vmatpush.msra.mxu0 0.0
    %1475 = vmatpush.msra.mxu0 0.0
    %1476 = vmatpush.msra.mxu0 0.0
    %1477 = vmatpush.msra.mxu0 %v1448
    %1478 = vmatpush.msra.mxu0 %v1447
    %1479 = vmatpush.msra.mxu0 %v1446
    %1480 = vmatpush.msra.mxu0 %v1445
    %1481 = vmatmul.f32.gmra.mxu0 %v1454
    %v1482 = vpop.f32.mrf.mxu0
    %v1483 = vadd.f32 %v1451, %v1482
    %1484 = vmatmul.f32.gmra.mxu0 %v1457
    %v1485 = vpop.f32.mrf.mxu0
    %v1486 = vadd.f32 %v1451, %v1485
    %1487 = vmatmul.f32.gmra.mxu0 %v1460
    %v1488 = vpop.f32.mrf.mxu0
    %v1489 = vadd.f32 %v1451, %v1488
    %1490 = vmatmul.f32.gmra.mxu0 %v1463
    %v1491 = vpop.f32.mrf.mxu0
    %v1492 = vadd.f32 %v1451, %v1491
    %1493 = vdwg.mxu0
    %v1494 = vadd.f32 %v822, %v1483
    %v1495 = vadd.f32 %v823, %v1486
    %v1496 = vadd.f32 %v824, %v1489
    %v1497 = vadd.f32 %v825, %v1492
    %v1498 = vsel %vm714, %v1494, 0.0
    %1499 = vadd.xlane.f32.xlu0 %v1498
    %v1500 = vpop.xlane.xlu0 %1499
    %v1501 = vsel %vm714, %v1495, 0.0
    %1502 = vadd.xlane.f32.xlu0 %v1501
    %v1503 = vpop.xlane.xlu0 %1502
    %v1504 = vsel %vm714, %v1496, 0.0
    %1505 = vadd.xlane.f32.xlu0 %v1504
    %v1506 = vpop.xlane.xlu0 %1505
    %v1507 = vsel %vm714, %v1497, 0.0
    %1508 = vadd.xlane.f32.xlu0 %v1507
    %v1509 = vpop.xlane.xlu0 %1508
    %v1510 = vmul.f32 %v1500, %v733
    %v1511 = vmul.f32 %v1503, %v733
    %v1512 = vmul.f32 %v1506, %v733
    %v1513 = vmul.f32 %v1509, %v733
    %v1514 = vsub.f32 %v1494, %v1510
    %v1515 = vsub.f32 %v1495, %v1511
    %v1516 = vsub.f32 %v1496, %v1512
    %v1517 = vsub.f32 %v1497, %v1513
    %v1518 = vmul.f32 %v1514, %v1514
    %v1519 = vmul.f32 %v1515, %v1515
    %v1520 = vmul.f32 %v1516, %v1516
    %v1521 = vmul.f32 %v1517, %v1517
    %v1522 = vsel %vm714, %v1518, 0.0
    %1523 = vadd.xlane.f32.xlu0 %v1522
    %v1524 = vpop.xlane.xlu0 %1523
    %v1525 = vsel %vm714, %v1519, 0.0
    %1526 = vadd.xlane.f32.xlu0 %v1525
    %v1527 = vpop.xlane.xlu0 %1526
    %v1528 = vsel %vm714, %v1520, 0.0
    %1529 = vadd.xlane.f32.xlu0 %v1528
    %v1530 = vpop.xlane.xlu0 %1529
    %v1531 = vsel %vm714, %v1521, 0.0
    %1532 = vadd.xlane.f32.xlu0 %v1531
    %v1533 = vpop.xlane.xlu0 %1532
    %v1534 = vmul.f32 %v1524, %v733
    %v1535 = vmul.f32 %v1527, %v733
    %v1536 = vmul.f32 %v1530, %v733
    %v1537 = vmul.f32 %v1533, %v733
    %v1538 = vadd.f32 %v1534, 1e-05
    %v1539 = vadd.f32 %v1535, 1e-05
    %v1540 = vadd.f32 %v1536, 1e-05
    %v1541 = vadd.f32 %v1537, 1e-05
    %v1542 = vrsqrt.pop %v1538
    %v1543 = vmul.f32 %v1542, %v1538
    %v1544 = vmul.f32 %v1543, %v1542
    %v1545 = vmul.f32 0.5, %v1544
    %v1546 = vsub.f32 1.5, %v1545
    %v1547 = vmul.f32 %v1542, %v1546
    %vm1548 = vweird.f32 %v1538
    %vm1549 = vweird.f32 %v1542
    %vm1550 = vmor %vm1548, %vm1549
    %v1551 = vsel %vm1550, %v1542, %v1547
    %v1552 = vrsqrt.pop %v1539
    %v1553 = vmul.f32 %v1552, %v1539
    %v1554 = vmul.f32 %v1553, %v1552
    %v1555 = vmul.f32 0.5, %v1554
    %v1556 = vsub.f32 1.5, %v1555
    %v1557 = vmul.f32 %v1552, %v1556
    %vm1558 = vweird.f32 %v1539
    %vm1559 = vweird.f32 %v1552
    %vm1560 = vmor %vm1558, %vm1559
    %v1561 = vsel %vm1560, %v1552, %v1557
    %v1562 = vrsqrt.pop %v1540
    %v1563 = vmul.f32 %v1562, %v1540
    %v1564 = vmul.f32 %v1563, %v1562
    %v1565 = vmul.f32 0.5, %v1564
    %v1566 = vsub.f32 1.5, %v1565
    %v1567 = vmul.f32 %v1562, %v1566
    %vm1568 = vweird.f32 %v1540
    %vm1569 = vweird.f32 %v1562
    %vm1570 = vmor %vm1568, %vm1569
    %v1571 = vsel %vm1570, %v1562, %v1567
    %v1572 = vrsqrt.pop %v1541
    %v1573 = vmul.f32 %v1572, %v1541
    %v1574 = vmul.f32 %v1573, %v1572
    %v1575 = vmul.f32 0.5, %v1574
    %v1576 = vsub.f32 1.5, %v1575
    %v1577 = vmul.f32 %v1572, %v1576
    %vm1578 = vweird.f32 %v1541
    %vm1579 = vweird.f32 %v1572
    %vm1580 = vmor %vm1578, %vm1579
    %v1581 = vsel %vm1580, %v1572, %v1577
    %v1582 = vmul.f32 %v1514, %v1551
    %v1583 = vmul.f32 %v1515, %v1561
    %v1584 = vmul.f32 %v1516, %v1571
    %v1585 = vmul.f32 %v1517, %v1581
    %v1586 = vld [vmem:[#allocation2] sm:$0x1]
    %v1588 = vperm.slane %v1586, 0
    %v1590 = vmul.f32 %v1582, %v1588
    %v1591 = vmul.f32 %v1583, %v1588
    %v1592 = vmul.f32 %v1584, %v1588
    %v1593 = vmul.f32 %v1585, %v1588
    %v1594 = vld [vmem:[%s41] sm:$0x1]
    %v1596 = vperm.slane %v1594, 0
    %v1598 = vadd.f32 %v1590, %v1596
    %v1599 = vadd.f32 %v1591, %v1596
    %v1600 = vadd.f32 %v1592, %v1596
    %v1601 = vadd.f32 %v1593, %v1596
    %v1602 = vld [vmem:[%s31] sm:$0xff]
    %v1603 = vld [vmem:[%s31 + $0x8] sm:$0xff]
    %v1604 = vld [vmem:[%s31 + $0x10] sm:$0xff]
    %v1605 = vld [vmem:[%s31 + $0x18] sm:$0xff]
    %v1606 = vld [vmem:[%s29] sm:$0x1]
    %v1608 = vperm.slane %v1606, 0
    %v1611 = vsel %vm714, %v1598, 0
    %v1614 = vsel %vm714, %v1599, 0
    %v1617 = vsel %vm714, %v1600, 0
    %v1620 = vsel %vm714, %v1601, 0
    %1622 = vmatpush.msra.mxu0 0.0
    %1623 = vmatpush.msra.mxu0 0.0
    %1624 = vmatpush.msra.mxu0 0.0
    %1625 = vmatpush.msra.mxu0 0.0
    %1626 = vmatpush.msra.mxu0 0.0
    %1627 = vmatpush.msra.mxu0 0.0
    %1628 = vmatpush.msra.mxu0 0.0
    %1629 = vmatpush.msra.mxu0 0.0
    %1630 = vmatpush.msra.mxu0 0.0
    %1631 = vmatpush.msra.mxu0 0.0
    %1632 = vmatpush.msra.mxu0 0.0
    %1633 = vmatpush.msra.mxu0 0.0
    %1634 = vmatpush.msra.mxu0 %v1605
    %1635 = vmatpush.msra.mxu0 %v1604
    %1636 = vmatpush.msra.mxu0 %v1603
    %1637 = vmatpush.msra.mxu0 %v1602
    %1638 = vmatmul.f32.gmra.mxu0 %v1611
    %v1639 = vpop.f32.mrf.mxu0
    %v1640 = vadd.f32 %v1608, %v1639
    %1641 = vmatmul.f32.gmra.mxu0 %v1614
    %v1642 = vpop.f32.mrf.mxu0
    %v1643 = vadd.f32 %v1608, %v1642
    %1644 = vmatmul.f32.gmra.mxu0 %v1617
    %v1645 = vpop.f32.mrf.mxu0
    %v1646 = vadd.f32 %v1608, %v1645
    %1647 = vmatmul.f32.gmra.mxu0 %v1620
    %v1648 = vpop.f32.mrf.mxu0
    %v1649 = vadd.f32 %v1608, %v1648
    %1650 = vdwg.mxu0
    %v1651 = vmul.f32 %v1640, 0.5
    %v1652 = vmul.f32 %v1643, 0.5
    %v1653 = vmul.f32 %v1646, 0.5
    %v1654 = vmul.f32 %v1649, 0.5
    %v1655 = vmul.f32 %v1640, 0.70710677
    %v1656 = vmul.f32 %v1643, 0.70710677
    %v1657 = vmul.f32 %v1646, 0.70710677
    %v1658 = vmul.f32 %v1649, 0.70710677
    %v1659 = vand.u32 2147483647, %v1655
    %v1660 = vand.u32 2147483647, %v1656
    %v1661 = vand.u32 2147483647, %v1657
    %v1662 = vand.u32 2147483647, %v1658
    %v1663 = vmul.f32 %v1659, 0.3275911
    %v1664 = vmul.f32 %v1660, 0.3275911
    %v1665 = vmul.f32 %v1661, 0.3275911
    %v1666 = vmul.f32 %v1662, 0.3275911
    %v1667 = vadd.f32 %v1663, 1.0
    %v1668 = vadd.f32 %v1664, 1.0
    %v1669 = vadd.f32 %v1665, 1.0
    %v1670 = vadd.f32 %v1666, 1.0
    %v1671 = vrcp.pop %v1667
    %v1672 = vmul.f32 %v1667, %v1671
    %v1673 = vsub.f32 1.0, %v1672
    %v1674 = vmul.f32 %v1671, %v1673
    %v1675 = vadd.f32 %v1671, %v1674
    %vm1676 = vweird.f32 %v1667
    %vm1677 = vweird.f32 %v1671
    %vm1678 = vmor %vm1676, %vm1677
    %v1679 = vsel %vm1678, %v1671, %v1675
    %v1680 = vand.u32 2147483647, %v1667
    %vm1681 = vcmp.eq.f32.partialorder %v1680, 8.507059e+37
    %v1682 = vand.u32 %v1667, 2147483648
    %v1683 = vor.u32 1.1754944e-38, %v1682
    %v1684 = vsel %vm1681, %v1683, %v1679
    %v1685 = vmul.f32 1.0, %v1684
    %v1686 = vrcp.pop %v1668
    %v1687 = vmul.f32 %v1668, %v1686
    %v1688 = vsub.f32 1.0, %v1687
    %v1689 = vmul.f32 %v1686, %v1688
    %v1690 = vadd.f32 %v1686, %v1689
    %vm1691 = vweird.f32 %v1668
    %vm1692 = vweird.f32 %v1686
    %vm1693 = vmor %vm1691, %vm1692
    %v1694 = vsel %vm1693, %v1686, %v1690
    %v1695 = vand.u32 2147483647, %v1668
    %vm1696 = vcmp.eq.f32.partialorder %v1695, 8.507059e+37
    %v1697 = vand.u32 %v1668, 2147483648
    %v1698 = vor.u32 1.1754944e-38, %v1697
    %v1699 = vsel %vm1696, %v1698, %v1694
    %v1700 = vmul.f32 1.0, %v1699
    %v1701 = vrcp.pop %v1669
    %v1702 = vmul.f32 %v1669, %v1701
    %v1703 = vsub.f32 1.0, %v1702
    %v1704 = vmul.f32 %v1701, %v1703
    %v1705 = vadd.f32 %v1701, %v1704
    %vm1706 = vweird.f32 %v1669
    %vm1707 = vweird.f32 %v1701
    %vm1708 = vmor %vm1706, %vm1707
    %v1709 = vsel %vm1708, %v1701, %v1705
    %v1710 = vand.u32 2147483647, %v1669
    %vm1711 = vcmp.eq.f32.partialorder %v1710, 8.507059e+37
    %v1712 = vand.u32 %v1669, 2147483648
    %v1713 = vor.u32 1.1754944e-38, %v1712
    %v1714 = vsel %vm1711, %v1713, %v1709
    %v1715 = vmul.f32 1.0, %v1714
    %v1716 = vrcp.pop %v1670
    %v1717 = vmul.f32 %v1670, %v1716
    %v1718 = vsub.f32 1.0, %v1717
    %v1719 = vmul.f32 %v1716, %v1718
    %v1720 = vadd.f32 %v1716, %v1719
    %vm1721 = vweird.f32 %v1670
    %vm1722 = vweird.f32 %v1716
    %vm1723 = vmor %vm1721, %vm1722
    %v1724 = vsel %vm1723, %v1716, %v1720
    %v1725 = vand.u32 2147483647, %v1670
    %vm1726 = vcmp.eq.f32.partialorder %v1725, 8.507059e+37
    %v1727 = vand.u32 %v1670, 2147483648
    %v1728 = vor.u32 1.1754944e-38, %v1727
    %v1729 = vsel %vm1726, %v1728, %v1724
    %v1730 = vmul.f32 1.0, %v1729
    %v1731 = vmul.f32 %v1685, 1.0614054
    %v1732 = vmul.f32 %v1700, 1.0614054
    %v1733 = vmul.f32 %v1715, 1.0614054
    %v1734 = vmul.f32 %v1730, 1.0614054
    %v1735 = vadd.f32 %v1731, -1.4531521
    %v1736 = vadd.f32 %v1732, -1.4531521
    %v1737 = vadd.f32 %v1733, -1.4531521
    %v1738 = vadd.f32 %v1734, -1.4531521
    %v1739 = vmul.f32 %v1735, %v1685
    %v1740 = vmul.f32 %v1736, %v1700
    %v1741 = vmul.f32 %v1737, %v1715
    %v1742 = vmul.f32 %v1738, %v1730
    %v1743 = vadd.f32 %v1739, 1.4214138
    %v1744 = vadd.f32 %v1740, 1.4214138
    %v1745 = vadd.f32 %v1741, 1.4214138
    %v1746 = vadd.f32 %v1742, 1.4214138
    %v1747 = vmul.f32 %v1743, %v1685
    %v1748 = vmul.f32 %v1744, %v1700
    %v1749 = vmul.f32 %v1745, %v1715
    %v1750 = vmul.f32 %v1746, %v1730
    %v1751 = vadd.f32 %v1747, -0.28449672
    %v1752 = vadd.f32 %v1748, -0.28449672
    %v1753 = vadd.f32 %v1749, -0.28449672
    %v1754 = vadd.f32 %v1750, -0.28449672
    %v1755 = vmul.f32 %v1751, %v1685
    %v1756 = vmul.f32 %v1752, %v1700
    %v1757 = vmul.f32 %v1753, %v1715
    %v1758 = vmul.f32 %v1754, %v1730
    %v1759 = vadd.f32 %v1755, 0.2548296
    %v1760 = vadd.f32 %v1756, 0.2548296
    %v1761 = vadd.f32 %v1757, 0.2548296
    %v1762 = vadd.f32 %v1758, 0.2548296
    %v1763 = vmul.f32 %v1759, %v1685
    %v1764 = vmul.f32 %v1760, %v1700
    %v1765 = vmul.f32 %v1761, %v1715
    %v1766 = vmul.f32 %v1762, %v1730
    %v1767 = vmul.f32 %v1659, %v1659
    %v1768 = vmul.f32 %v1660, %v1660
    %v1769 = vmul.f32 %v1661, %v1661
    %v1770 = vmul.f32 %v1662, %v1662
    %v1771 = vsub.f32 0.0, %v1767
    %v1772 = vsub.f32 0.0, %v1768
    %v1773 = vsub.f32 0.0, %v1769
    %v1774 = vsub.f32 0.0, %v1770
    %v1775 = vmul.f32 %v1771, 1.442695
    %v1776 = vpow.pop %v1775
    %v1777 = vmul.f32 %v1772, 1.442695
    %v1778 = vpow.pop %v1777
    %v1779 = vmul.f32 %v1773, 1.442695
    %v1780 = vpow.pop %v1779
    %v1781 = vmul.f32 %v1774, 1.442695
    %v1782 = vpow.pop %v1781
    %v1783 = vmul.f32 %v1763, %v1776
    %v1784 = vmul.f32 %v1764, %v1778
    %v1785 = vmul.f32 %v1765, %v1780
    %v1786 = vmul.f32 %v1766, %v1782
    %v1787 = vsub.f32 1.0, %v1783
    %v1788 = vsub.f32 1.0, %v1784
    %v1789 = vsub.f32 1.0, %v1785
    %v1790 = vsub.f32 1.0, %v1786
    %vm1791 = vcmp.lt.f32.partialorder %v1655, 0.0
    %vm1792 = vcmp.lt.f32.partialorder %v1656, 0.0
    %vm1793 = vcmp.lt.f32.partialorder %v1657, 0.0
    %vm1794 = vcmp.lt.f32.partialorder %v1658, 0.0
    %v1795 = vsub.f32 0.0, %v1787
    %v1796 = vsub.f32 0.0, %v1788
    %v1797 = vsub.f32 0.0, %v1789
    %v1798 = vsub.f32 0.0, %v1790
    %v1799 = vsel %vm1791, %v1795, %v1787
    %v1800 = vsel %vm1792, %v1796, %v1788
    %v1801 = vsel %vm1793, %v1797, %v1789
    %v1802 = vsel %vm1794, %v1798, %v1790
    %v1803 = vadd.f32 %v1799, 1.0
    %v1804 = vadd.f32 %v1800, 1.0
    %v1805 = vadd.f32 %v1801, 1.0
    %v1806 = vadd.f32 %v1802, 1.0
    %v1807 = vmul.f32 %v1651, %v1803
    %v1808 = vmul.f32 %v1652, %v1804
    %v1809 = vmul.f32 %v1653, %v1805
    %v1810 = vmul.f32 %v1654, %v1806
    %v1811 = vld [vmem:[%s35] sm:$0xff]
    %v1812 = vld [vmem:[%s35 + $0x8] sm:$0xff]
    %v1813 = vld [vmem:[%s35 + $0x10] sm:$0xff]
    %v1814 = vld [vmem:[%s35 + $0x18] sm:$0xff]
    %v1815 = vld [vmem:[%s35 + $0x20] sm:$0xff]
    %v1816 = vld [vmem:[%s35 + $0x28] sm:$0xff]
    %v1817 = vld [vmem:[%s35 + $0x30] sm:$0xff]
    %v1818 = vld [vmem:[%s35 + $0x38] sm:$0xff]
    %v1819 = vld [vmem:[%s33] sm:$0x1]
    %v1821 = vperm.slane %v1819, 0
    %vm1823 = vcmask 523264
    %v1825 = vsel %vm1823, %v1807, 0
    %v1828 = vsel %vm1823, %v1808, 0
    %v1831 = vsel %vm1823, %v1809, 0
    %v1834 = vsel %vm1823, %v1810, 0
    %1836 = vmatpush.msra.mxu0 0.0
    %1837 = vmatpush.msra.mxu0 0.0
    %1838 = vmatpush.msra.mxu0 0.0
    %1839 = vmatpush.msra.mxu0 0.0
    %1840 = vmatpush.msra.mxu0 0.0
    %1841 = vmatpush.msra.mxu0 0.0
    %1842 = vmatpush.msra.mxu0 0.0
    %1843 = vmatpush.msra.mxu0 0.0
    %1844 = vmatpush.msra.mxu0 %v1818
    %1845 = vmatpush.msra.mxu0 %v1817
    %1846 = vmatpush.msra.mxu0 %v1816
    %1847 = vmatpush.msra.mxu0 %v1815
    %1848 = vmatpush.msra.mxu0 %v1814
    %1849 = vmatpush.msra.mxu0 %v1813
    %1850 = vmatpush.msra.mxu0 %v1812
    %1851 = vmatpush.msra.mxu0 %v1811
    %1852 = vmatmul.f32.gmra.mxu0 %v1825
    %v1853 = vpop.f32.mrf.mxu0
    %v1854 = vadd.f32 %v1821, %v1853
    %1855 = vmatmul.f32.gmra.mxu0 %v1828
    %v1856 = vpop.f32.mrf.mxu0
    %v1857 = vadd.f32 %v1821, %v1856
    %1858 = vmatmul.f32.gmra.mxu0 %v1831
    %v1859 = vpop.f32.mrf.mxu0
    %v1860 = vadd.f32 %v1821, %v1859
    %1861 = vmatmul.f32.gmra.mxu0 %v1834
    %v1862 = vpop.f32.mrf.mxu0
    %v1863 = vadd.f32 %v1821, %v1862
    %1864 = vdwg.mxu0
    %v1865 = vadd.f32 %v1494, %v1854
    %v1866 = vadd.f32 %v1495, %v1857
    %v1867 = vadd.f32 %v1496, %v1860
    %v1868 = vadd.f32 %v1497, %v1863
    %v1869 = vsel %vm714, %v1865, 0.0
    %1870 = vadd.xlane.f32.xlu0 %v1869
    %v1871 = vpop.xlane.xlu0 %1870
    %v1872 = vsel %vm714, %v1866, 0.0
    %1873 = vadd.xlane.f32.xlu0 %v1872
    %v1874 = vpop.xlane.xlu0 %1873
    %v1875 = vsel %vm714, %v1867, 0.0
    %1876 = vadd.xlane.f32.xlu0 %v1875
    %v1877 = vpop.xlane.xlu0 %1876
    %v1878 = vsel %vm714, %v1868, 0.0
    %1879 = vadd.xlane.f32.xlu0 %v1878
    %v1880 = vpop.xlane.xlu0 %1879
    %v1881 = vmul.f32 %v1871, %v733
    %v1882 = vmul.f32 %v1874, %v733
    %v1883 = vmul.f32 %v1877, %v733
    %v1884 = vmul.f32 %v1880, %v733
    %v1885 = vsub.f32 %v1865, %v1881
    %v1886 = vsub.f32 %v1866, %v1882
    %v1887 = vsub.f32 %v1867, %v1883
    %v1888 = vsub.f32 %v1868, %v1884
    %v1889 = vmul.f32 %v1885, %v1885
    %v1890 = vmul.f32 %v1886, %v1886
    %v1891 = vmul.f32 %v1887, %v1887
    %v1892 = vmul.f32 %v1888, %v1888
    %v1893 = vsel %vm714, %v1889, 0.0
    %1894 = vadd.xlane.f32.xlu0 %v1893
    %v1895 = vpop.xlane.xlu0 %1894
    %v1896 = vsel %vm714, %v1890, 0.0
    %1897 = vadd.xlane.f32.xlu0 %v1896
    %v1898 = vpop.xlane.xlu0 %1897
    %v1899 = vsel %vm714, %v1891, 0.0
    %1900 = vadd.xlane.f32.xlu0 %v1899
    %v1901 = vpop.xlane.xlu0 %1900
    %v1902 = vsel %vm714, %v1892, 0.0
    %1903 = vadd.xlane.f32.xlu0 %v1902
    %v1904 = vpop.xlane.xlu0 %1903
    %v1905 = vmul.f32 %v1895, %v733
    %v1906 = vmul.f32 %v1898, %v733
    %v1907 = vmul.f32 %v1901, %v733
    %v1908 = vmul.f32 %v1904, %v733
    %v1909 = vadd.f32 %v1905, 1e-05
    %v1910 = vadd.f32 %v1906, 1e-05
    %v1911 = vadd.f32 %v1907, 1e-05
    %v1912 = vadd.f32 %v1908, 1e-05
    %v1913 = vrsqrt.pop %v1909
    %v1914 = vmul.f32 %v1913, %v1909
    %v1915 = vmul.f32 %v1914, %v1913
    %v1916 = vmul.f32 0.5, %v1915
    %v1917 = vsub.f32 1.5, %v1916
    %v1918 = vmul.f32 %v1913, %v1917
    %vm1919 = vweird.f32 %v1909
    %vm1920 = vweird.f32 %v1913
    %vm1921 = vmor %vm1919, %vm1920
    %v1922 = vsel %vm1921, %v1913, %v1918
    %v1923 = vrsqrt.pop %v1910
    %v1924 = vmul.f32 %v1923, %v1910
    %v1925 = vmul.f32 %v1924, %v1923
    %v1926 = vmul.f32 0.5, %v1925
    %v1927 = vsub.f32 1.5, %v1926
    %v1928 = vmul.f32 %v1923, %v1927
    %vm1929 = vweird.f32 %v1910
    %vm1930 = vweird.f32 %v1923
    %vm1931 = vmor %vm1929, %vm1930
    %v1932 = vsel %vm1931, %v1923, %v1928
    %v1933 = vrsqrt.pop %v1911
    %v1934 = vmul.f32 %v1933, %v1911
    %v1935 = vmul.f32 %v1934, %v1933
    %v1936 = vmul.f32 0.5, %v1935
    %v1937 = vsub.f32 1.5, %v1936
    %v1938 = vmul.f32 %v1933, %v1937
    %vm1939 = vweird.f32 %v1911
    %vm1940 = vweird.f32 %v1933
    %vm1941 = vmor %vm1939, %vm1940
    %v1942 = vsel %vm1941, %v1933, %v1938
    %v1943 = vrsqrt.pop %v1912
    %v1944 = vmul.f32 %v1943, %v1912
    %v1945 = vmul.f32 %v1944, %v1943
    %v1946 = vmul.f32 0.5, %v1945
    %v1947 = vsub.f32 1.5, %v1946
    %v1948 = vmul.f32 %v1943, %v1947
    %vm1949 = vweird.f32 %v1912
    %vm1950 = vweird.f32 %v1943
    %vm1951 = vmor %vm1949, %vm1950
    %v1952 = vsel %vm1951, %v1943, %v1948
    %v1953 = vmul.f32 %v1885, %v1922
    %v1954 = vmul.f32 %v1886, %v1932
    %v1955 = vmul.f32 %v1887, %v1942
    %v1956 = vmul.f32 %v1888, %v1952
    %v1957 = vld [vmem:[#allocation13] sm:$0x1]
    %v1959 = vperm.slane %v1957, 0
    %v1961 = vmul.f32 %v1953, %v1959
    %v1962 = vmul.f32 %v1954, %v1959
    %v1963 = vmul.f32 %v1955, %v1959
    %v1964 = vmul.f32 %v1956, %v1959
    %v1965 = vld [vmem:[#allocation11] sm:$0x1]
    %v1967 = vperm.slane %v1965, 0
    %v1969 = vadd.f32 %v1961, %v1967
    %v1970 = vadd.f32 %v1962, %v1967
    %v1971 = vadd.f32 %v1963, %v1967
    %v1972 = vadd.f32 %v1964, %v1967
    %v1973 = vld [vmem:[%s77] sm:$0xff]
    %v1974 = vld [vmem:[%s77 + $0x8] sm:$0xff]
    %v1975 = vld [vmem:[%s77 + $0x10] sm:$0xff]
    %v1976 = vld [vmem:[%s77 + $0x18] sm:$0xff]
    %v1977 = vld [vmem:[#allocation19] sm:$0x1]
    %v1979 = vperm.slane %v1977, 0
    %v1982 = vsel %vm714, %v1969, 0
    %v1985 = vsel %vm714, %v1970, 0
    %v1988 = vsel %vm714, %v1971, 0
    %v1991 = vsel %vm714, %v1972, 0
    %1993 = vmatpush.msra.mxu0 0.0
    %1994 = vmatpush.msra.mxu0 0.0
    %1995 = vmatpush.msra.mxu0 0.0
    %1996 = vmatpush.msra.mxu0 0.0
    %1997 = vmatpush.msra.mxu0 0.0
    %1998 = vmatpush.msra.mxu0 0.0
    %1999 = vmatpush.msra.mxu0 0.0
    %2000 = vmatpush.msra.mxu0 0.0
    %2001 = vmatpush.msra.mxu0 0.0
    %2002 = vmatpush.msra.mxu0 0.0
    %2003 = vmatpush.msra.mxu0 0.0
    %2004 = vmatpush.msra.mxu0 0.0
    %2005 = vmatpush.msra.mxu0 %v1976
    %2006 = vmatpush.msra.mxu0 %v1975
    %2007 = vmatpush.msra.mxu0 %v1974
    %2008 = vmatpush.msra.mxu0 %v1973
    %2009 = vmatmul.f32.gmra.mxu0 %v1982
    %v2010 = vpop.f32.mrf.mxu0
    %v2011 = vadd.f32 %v1979, %v2010
    %2012 = vmatmul.f32.gmra.mxu0 %v1985
    %v2013 = vpop.f32.mrf.mxu0
    %v2014 = vadd.f32 %v1979, %v2013
    %2015 = vmatmul.f32.gmra.mxu0 %v1988
    %v2016 = vpop.f32.mrf.mxu0
    %v2017 = vadd.f32 %v1979, %v2016
    %2018 = vmatmul.f32.gmra.mxu0 %v1991
    %v2019 = vpop.f32.mrf.mxu0
    %v2020 = vadd.f32 %v1979, %v2019
    %2021 = vdwg.mxu0
    %2026 = vrot.lane.b32.xlu0 %v2011, 96
    %v2027 = vpop.permute.xlu0 %2026
    %2028 = vrot.lane.b32.xlu0 %v2014, 96
    %v2029 = vpop.permute.xlu0 %2028
    %2030 = vrot.lane.b32.xlu0 %v2017, 96
    %v2031 = vpop.permute.xlu0 %2030
    %2032 = vrot.lane.b32.xlu0 %v2020, 96
    %v2033 = vpop.permute.xlu0 %2032
    %v2034 = vsel %vm995, %v2011, 0
    %v2036 = vsel %vm995, %v2014, 0
    %v2038 = vsel %vm995, %v2017, 0
    %v2040 = vsel %vm995, %v2020, 0
    %v2042 = vsel %vm995, %v2027, 0
    %v2044 = vsel %vm995, %v2029, 0
    %v2046 = vsel %vm995, %v2031, 0
    %v2048 = vsel %vm995, %v2033, 0
    %2050 = vmatpush.xpose.msra.mxu0 0.0
    %2051 = vmatpush.xpose.msra.mxu0 0.0
    %2052 = vmatpush.xpose.msra.mxu0 0.0
    %2053 = vmatpush.xpose.msra.mxu0 0.0
    %2054 = vmatpush.xpose.msra.mxu0 0.0
    %2055 = vmatpush.xpose.msra.mxu0 0.0
    %2056 = vmatpush.xpose.msra.mxu0 0.0
    %2057 = vmatpush.xpose.msra.mxu0 0.0
    %2058 = vmatpush.xpose.msra.mxu0 0.0
    %2059 = vmatpush.xpose.msra.mxu0 0.0
    %2060 = vmatpush.xpose.msra.mxu0 0.0
    %2061 = vmatpush.xpose.msra.mxu0 0.0
    %2062 = vmatpush.xpose.msra.mxu0 %v2048
    %2063 = vmatpush.xpose.msra.mxu0 %v2046
    %2064 = vmatpush.xpose.msra.mxu0 %v2044
    %2065 = vmatpush.xpose.msra.mxu0 %v2042
    %2066 = vmatmul.f32.gmra.mxu0 %v2034
    %v2067 = vpop.f32.mrf.mxu0
    %v2068 = vadd.f32 0.0, %v2067
    %2069 = vmatmul.f32.gmra.mxu0 %v2036
    %v2070 = vpop.f32.mrf.mxu0
    %v2071 = vadd.f32 0.0, %v2070
    %2072 = vmatmul.f32.gmra.mxu0 %v2038
    %v2073 = vpop.f32.mrf.mxu0
    %v2074 = vadd.f32 0.0, %v2073
    %2075 = vmatmul.f32.gmra.mxu0 %v2040
    %v2076 = vpop.f32.mrf.mxu0
    %v2077 = vadd.f32 0.0, %v2076
    %2078 = vdwg.mxu0
    %v2079 = vmul.f32 %v2068, 0.25
    %v2080 = vmul.f32 %v2071, 0.25
    %v2081 = vmul.f32 %v2074, 0.25
    %v2082 = vmul.f32 %v2077, 0.25
    %v2083 = vld [vmem:[%s53] sm:$0xff]
    %v2084 = vld [vmem:[%s53 + $0x8] sm:$0xff]
    %v2085 = vld [vmem:[%s53 + $0x10] sm:$0xff]
    %v2086 = vld [vmem:[%s53 + $0x18] sm:$0xff]
    %v2087 = vadd.f32 %v2079, %v2083
    %v2088 = vadd.f32 %v2080, %v2084
    %v2089 = vadd.f32 %v2081, %v2085
    %v2090 = vadd.f32 %v2082, %v2086
    %v2091 = vsel %vm714, %v2087, -inf
    %2092 = vmax.xlane.f32.xlu0 %v2091
    %v2093 = vpop.xlane.xlu0 %2092
    %v2094 = vsel %vm714, %v2088, -inf
    %2095 = vmax.xlane.f32.xlu0 %v2094
    %v2096 = vpop.xlane.xlu0 %2095
    %v2097 = vsel %vm714, %v2089, -inf
    %2098 = vmax.xlane.f32.xlu0 %v2097
    %v2099 = vpop.xlane.xlu0 %2098
    %v2100 = vsel %vm714, %v2090, -inf
    %2101 = vmax.xlane.f32.xlu0 %v2100
    %v2102 = vpop.xlane.xlu0 %2101
    %v2103 = vsub.f32 %v2087, %v2093
    %v2104 = vsub.f32 %v2088, %v2096
    %v2105 = vsub.f32 %v2089, %v2099
    %v2106 = vsub.f32 %v2090, %v2102
    %v2107 = vmul.f32 %v2103, 1.442695
    %v2108 = vpow.pop %v2107
    %v2109 = vmul.f32 %v2104, 1.442695
    %v2110 = vpow.pop %v2109
    %v2111 = vmul.f32 %v2105, 1.442695
    %v2112 = vpow.pop %v2111
    %v2113 = vmul.f32 %v2106, 1.442695
    %v2114 = vpow.pop %v2113
    %v2115 = vsel %vm714, %v2108, 0.0
    %2116 = vadd.xlane.f32.xlu0 %v2115
    %v2117 = vpop.xlane.xlu0 %2116
    %v2118 = vsel %vm714, %v2110, 0.0
    %2119 = vadd.xlane.f32.xlu0 %v2118
    %v2120 = vpop.xlane.xlu0 %2119
    %v2121 = vsel %vm714, %v2112, 0.0
    %2122 = vadd.xlane.f32.xlu0 %v2121
    %v2123 = vpop.xlane.xlu0 %2122
    %v2124 = vsel %vm714, %v2114, 0.0
    %2125 = vadd.xlane.f32.xlu0 %v2124
    %v2126 = vpop.xlane.xlu0 %2125
    %v2127 = vrcp.pop %v2117
    %v2128 = vmul.f32 %v2117, %v2127
    %v2129 = vsub.f32 1.0, %v2128
    %v2130 = vmul.f32 %v2127, %v2129
    %v2131 = vadd.f32 %v2127, %v2130
    %vm2132 = vweird.f32 %v2117
    %vm2133 = vweird.f32 %v2127
    %vm2134 = vmor %vm2132, %vm2133
    %v2135 = vsel %vm2134, %v2127, %v2131
    %v2136 = vand.u32 2147483647, %v2117
    %vm2137 = vcmp.eq.f32.partialorder %v2136, 8.507059e+37
    %v2138 = vand.u32 %v2117, 2147483648
    %v2139 = vor.u32 1.1754944e-38, %v2138
    %v2140 = vsel %vm2137, %v2139, %v2135
    %v2141 = vmul.f32 %v2108, %v2140
    %v2142 = vrcp.pop %v2120
    %v2143 = vmul.f32 %v2120, %v2142
    %v2144 = vsub.f32 1.0, %v2143
    %v2145 = vmul.f32 %v2142, %v2144
    %v2146 = vadd.f32 %v2142, %v2145
    %vm2147 = vweird.f32 %v2120
    %vm2148 = vweird.f32 %v2142
    %vm2149 = vmor %vm2147, %vm2148
    %v2150 = vsel %vm2149, %v2142, %v2146
    %v2151 = vand.u32 2147483647, %v2120
    %vm2152 = vcmp.eq.f32.partialorder %v2151, 8.507059e+37
    %v2153 = vand.u32 %v2120, 2147483648
    %v2154 = vor.u32 1.1754944e-38, %v2153
    %v2155 = vsel %vm2152, %v2154, %v2150
    %v2156 = vmul.f32 %v2110, %v2155
    %v2157 = vrcp.pop %v2123
    %v2158 = vmul.f32 %v2123, %v2157
    %v2159 = vsub.f32 1.0, %v2158
    %v2160 = vmul.f32 %v2157, %v2159
    %v2161 = vadd.f32 %v2157, %v2160
    %vm2162 = vweird.f32 %v2123
    %vm2163 = vweird.f32 %v2157
    %vm2164 = vmor %vm2162, %vm2163
    %v2165 = vsel %vm2164, %v2157, %v2161
    %v2166 = vand.u32 2147483647, %v2123
    %vm2167 = vcmp.eq.f32.partialorder %v2166, 8.507059e+37
    %v2168 = vand.u32 %v2123, 2147483648
    %v2169 = vor.u32 1.1754944e-38, %v2168
    %v2170 = vsel %vm2167, %v2169, %v2165
    %v2171 = vmul.f32 %v2112, %v2170
    %v2172 = vrcp.pop %v2126
    %v2173 = vmul.f32 %v2126, %v2172
    %v2174 = vsub.f32 1.0, %v2173
    %v2175 = vmul.f32 %v2172, %v2174
    %v2176 = vadd.f32 %v2172, %v2175
    %vm2177 = vweird.f32 %v2126
    %vm2178 = vweird.f32 %v2172
    %vm2179 = vmor %vm2177, %vm2178
    %v2180 = vsel %vm2179, %v2172, %v2176
    %v2181 = vand.u32 2147483647, %v2126
    %vm2182 = vcmp.eq.f32.partialorder %v2181, 8.507059e+37
    %v2183 = vand.u32 %v2126, 2147483648
    %v2184 = vor.u32 1.1754944e-38, %v2183
    %v2185 = vsel %vm2182, %v2184, %v2180
    %v2186 = vmul.f32 %v2114, %v2185
    %2187 = vrot.lane.b32.xlu0 %v2011, 64
    %v2188 = vpop.permute.xlu0 %2187
    %2189 = vrot.lane.b32.xlu0 %v2014, 64
    %v2190 = vpop.permute.xlu0 %2189
    %2191 = vrot.lane.b32.xlu0 %v2017, 64
    %v2192 = vpop.permute.xlu0 %2191
    %2193 = vrot.lane.b32.xlu0 %v2020, 64
    %v2194 = vpop.permute.xlu0 %2193
    %v2200 = vsel %vm714, %v2141, 0
    %v2203 = vsel %vm714, %v2156, 0
    %v2206 = vsel %vm714, %v2171, 0
    %v2209 = vsel %vm714, %v2186, 0
    %2211 = vmatpush.msra.mxu0 0.0
    %2212 = vmatpush.msra.mxu0 0.0
    %2213 = vmatpush.msra.mxu0 0.0
    %2214 = vmatpush.msra.mxu0 0.0
    %2215 = vmatpush.msra.mxu0 0.0
    %2216 = vmatpush.msra.mxu0 0.0
    %2217 = vmatpush.msra.mxu0 0.0
    %2218 = vmatpush.msra.mxu0 0.0
    %2219 = vmatpush.msra.mxu0 0.0
    %2220 = vmatpush.msra.mxu0 0.0
    %2221 = vmatpush.msra.mxu0 0.0
    %2222 = vmatpush.msra.mxu0 0.0
    %2223 = vmatpush.msra.mxu0 %v2194
    %2224 = vmatpush.msra.mxu0 %v2192
    %2225 = vmatpush.msra.mxu0 %v2190
    %2226 = vmatpush.msra.mxu0 %v2188
    %2227 = vmatmul.f32.gmra.mxu0 %v2200
    %v2228 = vpop.f32.mrf.mxu0
    %v2229 = vadd.f32 0.0, %v2228
    %2230 = vmatmul.f32.gmra.mxu0 %v2203
    %v2231 = vpop.f32.mrf.mxu0
    %v2232 = vadd.f32 0.0, %v2231
    %2233 = vmatmul.f32.gmra.mxu0 %v2206
    %v2234 = vpop.f32.mrf.mxu0
    %v2235 = vadd.f32 0.0, %v2234
    %2236 = vmatmul.f32.gmra.mxu0 %v2209
    %v2237 = vpop.f32.mrf.mxu0
    %v2238 = vadd.f32 0.0, %v2237
    %2239 = vdwg.mxu0
    %2240 = vrot.lane.b32.xlu0 %v2011, 112
    %v2241 = vpop.permute.xlu0 %2240
    %2242 = vrot.lane.b32.xlu0 %v2014, 112
    %v2243 = vpop.permute.xlu0 %2242
    %2244 = vrot.lane.b32.xlu0 %v2017, 112
    %v2245 = vpop.permute.xlu0 %2244
    %2246 = vrot.lane.b32.xlu0 %v2020, 112
    %v2247 = vpop.permute.xlu0 %2246
    %2248 = vrot.lane.b32.xlu0 %v2011, 80
    %v2249 = vpop.permute.xlu0 %2248
    %2250 = vrot.lane.b32.xlu0 %v2014, 80
    %v2251 = vpop.permute.xlu0 %2250
    %2252 = vrot.lane.b32.xlu0 %v2017, 80
    %v2253 = vpop.permute.xlu0 %2252
    %2254 = vrot.lane.b32.xlu0 %v2020, 80
    %v2255 = vpop.permute.xlu0 %2254
    %v2256 = vsel %vm995, %v2241, 0
    %v2258 = vsel %vm995, %v2243, 0
    %v2260 = vsel %vm995, %v2245, 0
    %v2262 = vsel %vm995, %v2247, 0
    %v2264 = vsel %vm995, %v2249, 0
    %v2266 = vsel %vm995, %v2251, 0
    %v2268 = vsel %vm995, %v2253, 0
    %v2270 = vsel %vm995, %v2255, 0
    %2272 = vmatpush.xpose.msra.mxu0 0.0
    %2273 = vmatpush.xpose.msra.mxu0 0.0
    %2274 = vmatpush.xpose.msra.mxu0 0.0
    %2275 = vmatpush.xpose.msra.mxu0 0.0
    %2276 = vmatpush.xpose.msra.mxu0 0.0
    %2277 = vmatpush.xpose.msra.mxu0 0.0
    %2278 = vmatpush.xpose.msra.mxu0 0.0
    %2279 = vmatpush.xpose.msra.mxu0 0.0
    %2280 = vmatpush.xpose.msra.mxu0 0.0
    %2281 = vmatpush.xpose.msra.mxu0 0.0
    %2282 = vmatpush.xpose.msra.mxu0 0.0
    %2283 = vmatpush.xpose.msra.mxu0 0.0
    %2284 = vmatpush.xpose.msra.mxu0 %v2270
    %2285 = vmatpush.xpose.msra.mxu0 %v2268
    %2286 = vmatpush.xpose.msra.mxu0 %v2266
    %2287 = vmatpush.xpose.msra.mxu0 %v2264
    %2288 = vmatmul.f32.gmra.mxu0 %v2256
    %v2289 = vpop.f32.mrf.mxu0
    %v2290 = vadd.f32 0.0, %v2289
    %2291 = vmatmul.f32.gmra.mxu0 %v2258
    %v2292 = vpop.f32.mrf.mxu0
    %v2293 = vadd.f32 0.0, %v2292
    %2294 = vmatmul.f32.gmra.mxu0 %v2260
    %v2295 = vpop.f32.mrf.mxu0
    %v2296 = vadd.f32 0.0, %v2295
    %2297 = vmatmul.f32.gmra.mxu0 %v2262
    %v2298 = vpop.f32.mrf.mxu0
    %v2299 = vadd.f32 0.0, %v2298
    %2300 = vdwg.mxu0
    %v2301 = vmul.f32 %v2290, 0.25
    %v2302 = vmul.f32 %v2293, 0.25
    %v2303 = vmul.f32 %v2296, 0.25
    %v2304 = vmul.f32 %v2299, 0.25
    %s2305 = scalar_lea.vmem %s53, 32
    %v2306 = vld [vmem:[%s2305] sm:$0xff]
    %v2307 = vld [vmem:[%s2305 + $0x8] sm:$0xff]
    %v2308 = vld [vmem:[%s2305 + $0x10] sm:$0xff]
    %v2309 = vld [vmem:[%s2305 + $0x18] sm:$0xff]
    %v2310 = vadd.f32 %v2301, %v2306
    %v2311 = vadd.f32 %v2302, %v2307
    %v2312 = vadd.f32 %v2303, %v2308
    %v2313 = vadd.f32 %v2304, %v2309
    %v2314 = vsel %vm714, %v2310, -inf
    %2315 = vmax.xlane.f32.xlu0 %v2314
    %v2316 = vpop.xlane.xlu0 %2315
    %v2317 = vsel %vm714, %v2311, -inf
    %2318 = vmax.xlane.f32.xlu0 %v2317
    %v2319 = vpop.xlane.xlu0 %2318
    %v2320 = vsel %vm714, %v2312, -inf
    %2321 = vmax.xlane.f32.xlu0 %v2320
    %v2322 = vpop.xlane.xlu0 %2321
    %v2323 = vsel %vm714, %v2313, -inf
    %2324 = vmax.xlane.f32.xlu0 %v2323
    %v2325 = vpop.xlane.xlu0 %2324
    %v2326 = vsub.f32 %v2310, %v2316
    %v2327 = vsub.f32 %v2311, %v2319
    %v2328 = vsub.f32 %v2312, %v2322
    %v2329 = vsub.f32 %v2313, %v2325
    %v2330 = vmul.f32 %v2326, 1.442695
    %v2331 = vpow.pop %v2330
    %v2332 = vmul.f32 %v2327, 1.442695
    %v2333 = vpow.pop %v2332
    %v2334 = vmul.f32 %v2328, 1.442695
    %v2335 = vpow.pop %v2334
    %v2336 = vmul.f32 %v2329, 1.442695
    %v2337 = vpow.pop %v2336
    %v2338 = vsel %vm714, %v2331, 0.0
    %2339 = vadd.xlane.f32.xlu0 %v2338
    %v2340 = vpop.xlane.xlu0 %2339
    %v2341 = vsel %vm714, %v2333, 0.0
    %2342 = vadd.xlane.f32.xlu0 %v2341
    %v2343 = vpop.xlane.xlu0 %2342
    %v2344 = vsel %vm714, %v2335, 0.0
    %2345 = vadd.xlane.f32.xlu0 %v2344
    %v2346 = vpop.xlane.xlu0 %2345
    %v2347 = vsel %vm714, %v2337, 0.0
    %2348 = vadd.xlane.f32.xlu0 %v2347
    %v2349 = vpop.xlane.xlu0 %2348
    %v2350 = vrcp.pop %v2340
    %v2351 = vmul.f32 %v2340, %v2350
    %v2352 = vsub.f32 1.0, %v2351
    %v2353 = vmul.f32 %v2350, %v2352
    %v2354 = vadd.f32 %v2350, %v2353
    %vm2355 = vweird.f32 %v2340
    %vm2356 = vweird.f32 %v2350
    %vm2357 = vmor %vm2355, %vm2356
    %v2358 = vsel %vm2357, %v2350, %v2354
    %v2359 = vand.u32 2147483647, %v2340
    %vm2360 = vcmp.eq.f32.partialorder %v2359, 8.507059e+37
    %v2361 = vand.u32 %v2340, 2147483648
    %v2362 = vor.u32 1.1754944e-38, %v2361
    %v2363 = vsel %vm2360, %v2362, %v2358
    %v2364 = vmul.f32 %v2331, %v2363
    %v2365 = vrcp.pop %v2343
    %v2366 = vmul.f32 %v2343, %v2365
    %v2367 = vsub.f32 1.0, %v2366
    %v2368 = vmul.f32 %v2365, %v2367
    %v2369 = vadd.f32 %v2365, %v2368
    %vm2370 = vweird.f32 %v2343
    %vm2371 = vweird.f32 %v2365
    %vm2372 = vmor %vm2370, %vm2371
    %v2373 = vsel %vm2372, %v2365, %v2369
    %v2374 = vand.u32 2147483647, %v2343
    %vm2375 = vcmp.eq.f32.partialorder %v2374, 8.507059e+37
    %v2376 = vand.u32 %v2343, 2147483648
    %v2377 = vor.u32 1.1754944e-38, %v2376
    %v2378 = vsel %vm2375, %v2377, %v2373
    %v2379 = vmul.f32 %v2333, %v2378
    %v2380 = vrcp.pop %v2346
    %v2381 = vmul.f32 %v2346, %v2380
    %v2382 = vsub.f32 1.0, %v2381
    %v2383 = vmul.f32 %v2380, %v2382
    %v2384 = vadd.f32 %v2380, %v2383
    %vm2385 = vweird.f32 %v2346
    %vm2386 = vweird.f32 %v2380
    %vm2387 = vmor %vm2385, %vm2386
    %v2388 = vsel %vm2387, %v2380, %v2384
    %v2389 = vand.u32 2147483647, %v2346
    %vm2390 = vcmp.eq.f32.partialorder %v2389, 8.507059e+37
    %v2391 = vand.u32 %v2346, 2147483648
    %v2392 = vor.u32 1.1754944e-38, %v2391
    %v2393 = vsel %vm2390, %v2392, %v2388
    %v2394 = vmul.f32 %v2335, %v2393
    %v2395 = vrcp.pop %v2349
    %v2396 = vmul.f32 %v2349, %v2395
    %v2397 = vsub.f32 1.0, %v2396
    %v2398 = vmul.f32 %v2395, %v2397
    %v2399 = vadd.f32 %v2395, %v2398
    %vm2400 = vweird.f32 %v2349
    %vm2401 = vweird.f32 %v2395
    %vm2402 = vmor %vm2400, %vm2401
    %v2403 = vsel %vm2402, %v2395, %v2399
    %v2404 = vand.u32 2147483647, %v2349
    %vm2405 = vcmp.eq.f32.partialorder %v2404, 8.507059e+37
    %v2406 = vand.u32 %v2349, 2147483648
    %v2407 = vor.u32 1.1754944e-38, %v2406
    %v2408 = vsel %vm2405, %v2407, %v2403
    %v2409 = vmul.f32 %v2337, %v2408
    %2410 = vrot.lane.b32.xlu0 %v2011, 48
    %v2411 = vpop.permute.xlu0 %2410
    %2412 = vrot.lane.b32.xlu0 %v2014, 48
    %v2413 = vpop.permute.xlu0 %2412
    %2414 = vrot.lane.b32.xlu0 %v2017, 48
    %v2415 = vpop.permute.xlu0 %2414
    %2416 = vrot.lane.b32.xlu0 %v2020, 48
    %v2417 = vpop.permute.xlu0 %2416
    %v2423 = vsel %vm714, %v2364, 0
    %v2426 = vsel %vm714, %v2379, 0
    %v2429 = vsel %vm714, %v2394, 0
    %v2432 = vsel %vm714, %v2409, 0
    %2434 = vmatpush.msra.mxu0 0.0
    %2435 = vmatpush.msra.mxu0 0.0
    %2436 = vmatpush.msra.mxu0 0.0
    %2437 = vmatpush.msra.mxu0 0.0
    %2438 = vmatpush.msra.mxu0 0.0
    %2439 = vmatpush.msra.mxu0 0.0
    %2440 = vmatpush.msra.mxu0 0.0
    %2441 = vmatpush.msra.mxu0 0.0
    %2442 = vmatpush.msra.mxu0 0.0
    %2443 = vmatpush.msra.mxu0 0.0
    %2444 = vmatpush.msra.mxu0 0.0
    %2445 = vmatpush.msra.mxu0 0.0
    %2446 = vmatpush.msra.mxu0 %v2417
    %2447 = vmatpush.msra.mxu0 %v2415
    %2448 = vmatpush.msra.mxu0 %v2413
    %2449 = vmatpush.msra.mxu0 %v2411
    %2450 = vmatmul.f32.gmra.mxu0 %v2423
    %v2451 = vpop.f32.mrf.mxu0
    %v2452 = vadd.f32 0.0, %v2451
    %2453 = vmatmul.f32.gmra.mxu0 %v2426
    %v2454 = vpop.f32.mrf.mxu0
    %v2455 = vadd.f32 0.0, %v2454
    %2456 = vmatmul.f32.gmra.mxu0 %v2429
    %v2457 = vpop.f32.mrf.mxu0
    %v2458 = vadd.f32 0.0, %v2457
    %2459 = vmatmul.f32.gmra.mxu0 %v2432
    %v2460 = vpop.f32.mrf.mxu0
    %v2461 = vadd.f32 0.0, %v2460
    %2462 = vdwg.mxu0
    %2467 = vrot.lane.b32.xlu0 %v2452, 16
    %v2468 = vpop.permute.xlu0 %2467
    %2469 = vrot.lane.b32.xlu0 %v2455, 16
    %v2470 = vpop.permute.xlu0 %2469
    %2471 = vrot.lane.b32.xlu0 %v2458, 16
    %v2472 = vpop.permute.xlu0 %2471
    %2473 = vrot.lane.b32.xlu0 %v2461, 16
    %v2474 = vpop.permute.xlu0 %2473
    %v2479 = vsel %vm995, %v2229, %v2468
    %v2480 = vsel %vm995, %v2232, %v2470
    %v2481 = vsel %vm995, %v2235, %v2472
    %v2482 = vsel %vm995, %v2238, %v2474
    %v2483 = vld [vmem:[%s73] sm:$0xff]
    %v2484 = vld [vmem:[%s73 + $0x8] sm:$0xff]
    %v2485 = vld [vmem:[%s73 + $0x10] sm:$0xff]
    %v2486 = vld [vmem:[%s73 + $0x18] sm:$0xff]
    %v2487 = vld [vmem:[#allocation17] sm:$0x1]
    %v2489 = vperm.slane %v2487, 0
    %v2492 = vsel %vm714, %v2479, 0
    %v2495 = vsel %vm714, %v2480, 0
    %v2498 = vsel %vm714, %v2481, 0
    %v2501 = vsel %vm714, %v2482, 0
    %2503 = vmatpush.msra.mxu0 0.0
    %2504 = vmatpush.msra.mxu0 0.0
    %2505 = vmatpush.msra.mxu0 0.0
    %2506 = vmatpush.msra.mxu0 0.0
    %2507 = vmatpush.msra.mxu0 0.0
    %2508 = vmatpush.msra.mxu0 0.0
    %2509 = vmatpush.msra.mxu0 0.0
    %2510 = vmatpush.msra.mxu0 0.0
    %2511 = vmatpush.msra.mxu0 0.0
    %2512 = vmatpush.msra.mxu0 0.0
    %2513 = vmatpush.msra.mxu0 0.0
    %2514 = vmatpush.msra.mxu0 0.0
    %2515 = vmatpush.msra.mxu0 %v2486
    %2516 = vmatpush.msra.mxu0 %v2485
    %2517 = vmatpush.msra.mxu0 %v2484
    %2518 = vmatpush.msra.mxu0 %v2483
    %2519 = vmatmul.f32.gmra.mxu0 %v2492
    %v2520 = vpop.f32.mrf.mxu0
    %v2521 = vadd.f32 %v2489, %v2520
    %2522 = vmatmul.f32.gmra.mxu0 %v2495
    %v2523 = vpop.f32.mrf.mxu0
    %v2524 = vadd.f32 %v2489, %v2523
    %2525 = vmatmul.f32.gmra.mxu0 %v2498
    %v2526 = vpop.f32.mrf.mxu0
    %v2527 = vadd.f32 %v2489, %v2526
    %2528 = vmatmul.f32.gmra.mxu0 %v2501
    %v2529 = vpop.f32.mrf.mxu0
    %v2530 = vadd.f32 %v2489, %v2529
    %2531 = vdwg.mxu0
    %v2532 = vadd.f32 %v1865, %v2521
    %v2533 = vadd.f32 %v1866, %v2524
    %v2534 = vadd.f32 %v1867, %v2527
    %v2535 = vadd.f32 %v1868, %v2530
    %v2536 = vsel %vm714, %v2532, 0.0
    %2537 = vadd.xlane.f32.xlu0 %v2536
    %v2538 = vpop.xlane.xlu0 %2537
    %v2539 = vsel %vm714, %v2533, 0.0
    %2540 = vadd.xlane.f32.xlu0 %v2539
    %v2541 = vpop.xlane.xlu0 %2540
    %v2542 = vsel %vm714, %v2534, 0.0
    %2543 = vadd.xlane.f32.xlu0 %v2542
    %v2544 = vpop.xlane.xlu0 %2543
    %v2545 = vsel %vm714, %v2535, 0.0
    %2546 = vadd.xlane.f32.xlu0 %v2545
    %v2547 = vpop.xlane.xlu0 %2546
    %v2548 = vmul.f32 %v2538, %v733
    %v2549 = vmul.f32 %v2541, %v733
    %v2550 = vmul.f32 %v2544, %v733
    %v2551 = vmul.f32 %v2547, %v733
    %v2552 = vsub.f32 %v2532, %v2548
    %v2553 = vsub.f32 %v2533, %v2549
    %v2554 = vsub.f32 %v2534, %v2550
    %v2555 = vsub.f32 %v2535, %v2551
    %v2556 = vmul.f32 %v2552, %v2552
    %v2557 = vmul.f32 %v2553, %v2553
    %v2558 = vmul.f32 %v2554, %v2554
    %v2559 = vmul.f32 %v2555, %v2555
    %v2560 = vsel %vm714, %v2556, 0.0
    %2561 = vadd.xlane.f32.xlu0 %v2560
    %v2562 = vpop.xlane.xlu0 %2561
    %v2563 = vsel %vm714, %v2557, 0.0
    %2564 = vadd.xlane.f32.xlu0 %v2563
    %v2565 = vpop.xlane.xlu0 %2564
    %v2566 = vsel %vm714, %v2558, 0.0
    %2567 = vadd.xlane.f32.xlu0 %v2566
    %v2568 = vpop.xlane.xlu0 %2567
    %v2569 = vsel %vm714, %v2559, 0.0
    %2570 = vadd.xlane.f32.xlu0 %v2569
    %v2571 = vpop.xlane.xlu0 %2570
    %v2572 = vmul.f32 %v2562, %v733
    %v2573 = vmul.f32 %v2565, %v733
    %v2574 = vmul.f32 %v2568, %v733
    %v2575 = vmul.f32 %v2571, %v733
    %v2576 = vadd.f32 %v2572, 1e-05
    %v2577 = vadd.f32 %v2573, 1e-05
    %v2578 = vadd.f32 %v2574, 1e-05
    %v2579 = vadd.f32 %v2575, 1e-05
    %v2580 = vrsqrt.pop %v2576
    %v2581 = vmul.f32 %v2580, %v2576
    %v2582 = vmul.f32 %v2581, %v2580
    %v2583 = vmul.f32 0.5, %v2582
    %v2584 = vsub.f32 1.5, %v2583
    %v2585 = vmul.f32 %v2580, %v2584
    %vm2586 = vweird.f32 %v2576
    %vm2587 = vweird.f32 %v2580
    %vm2588 = vmor %vm2586, %vm2587
    %v2589 = vsel %vm2588, %v2580, %v2585
    %v2590 = vrsqrt.pop %v2577
    %v2591 = vmul.f32 %v2590, %v2577
    %v2592 = vmul.f32 %v2591, %v2590
    %v2593 = vmul.f32 0.5, %v2592
    %v2594 = vsub.f32 1.5, %v2593
    %v2595 = vmul.f32 %v2590, %v2594
    %vm2596 = vweird.f32 %v2577
    %vm2597 = vweird.f32 %v2590
    %vm2598 = vmor %vm2596, %vm2597
    %v2599 = vsel %vm2598, %v2590, %v2595
    %v2600 = vrsqrt.pop %v2578
    %v2601 = vmul.f32 %v2600, %v2578
    %v2602 = vmul.f32 %v2601, %v2600
    %v2603 = vmul.f32 0.5, %v2602
    %v2604 = vsub.f32 1.5, %v2603
    %v2605 = vmul.f32 %v2600, %v2604
    %vm2606 = vweird.f32 %v2578
    %vm2607 = vweird.f32 %v2600
    %vm2608 = vmor %vm2606, %vm2607
    %v2609 = vsel %vm2608, %v2600, %v2605
    %v2610 = vrsqrt.pop %v2579
    %v2611 = vmul.f32 %v2610, %v2579
    %v2612 = vmul.f32 %v2611, %v2610
    %v2613 = vmul.f32 0.5, %v2612
    %v2614 = vsub.f32 1.5, %v2613
    %v2615 = vmul.f32 %v2610, %v2614
    %vm2616 = vweird.f32 %v2579
    %vm2617 = vweird.f32 %v2610
    %vm2618 = vmor %vm2616, %vm2617
    %v2619 = vsel %vm2618, %v2610, %v2615
    %v2620 = vmul.f32 %v2552, %v2589
    %v2621 = vmul.f32 %v2553, %v2599
    %v2622 = vmul.f32 %v2554, %v2609
    %v2623 = vmul.f32 %v2555, %v2619
    %v2624 = vld [vmem:[#allocation16] sm:$0x1]
    %v2626 = vperm.slane %v2624, 0
    %v2628 = vmul.f32 %v2620, %v2626
    %v2629 = vmul.f32 %v2621, %v2626
    %v2630 = vmul.f32 %v2622, %v2626
    %v2631 = vmul.f32 %v2623, %v2626
    %v2632 = vld [vmem:[#allocation14] sm:$0x1]
    %v2634 = vperm.slane %v2632, 0
    %v2636 = vadd.f32 %v2628, %v2634
    %v2637 = vadd.f32 %v2629, %v2634
    %v2638 = vadd.f32 %v2630, %v2634
    %v2639 = vadd.f32 %v2631, %v2634
    %v2640 = vld [vmem:[%s57] sm:$0xff]
    %v2641 = vld [vmem:[%s57 + $0x8] sm:$0xff]
    %v2642 = vld [vmem:[%s57 + $0x10] sm:$0xff]
    %v2643 = vld [vmem:[%s57 + $0x18] sm:$0xff]
    %v2644 = vld [vmem:[#allocation8] sm:$0x1]
    %v2646 = vperm.slane %v2644, 0
    %v2649 = vsel %vm714, %v2636, 0
    %v2652 = vsel %vm714, %v2637, 0
    %v2655 = vsel %vm714, %v2638, 0
    %v2658 = vsel %vm714, %v2639, 0
    %2660 = vmatpush.msra.mxu0 0.0
    %2661 = vmatpush.msra.mxu0 0.0
    %2662 = vmatpush.msra.mxu0 0.0
    %2663 = vmatpush.msra.mxu0 0.0
    %2664 = vmatpush.msra.mxu0 0.0
    %2665 = vmatpush.msra.mxu0 0.0
    %2666 = vmatpush.msra.mxu0 0.0
    %2667 = vmatpush.msra.mxu0 0.0
    %2668 = vmatpush.msra.mxu0 0.0
    %2669 = vmatpush.msra.mxu0 0.0
    %2670 = vmatpush.msra.mxu0 0.0
    %2671 = vmatpush.msra.mxu0 0.0
    %2672 = vmatpush.msra.mxu0 %v2643
    %2673 = vmatpush.msra.mxu0 %v2642
    %2674 = vmatpush.msra.mxu0 %v2641
    %2675 = vmatpush.msra.mxu0 %v2640
    %2676 = vmatmul.f32.gmra.mxu0 %v2649
    %v2677 = vpop.f32.mrf.mxu0
    %v2678 = vadd.f32 %v2646, %v2677
    %2679 = vmatmul.f32.gmra.mxu0 %v2652
    %v2680 = vpop.f32.mrf.mxu0
    %v2681 = vadd.f32 %v2646, %v2680
    %2682 = vmatmul.f32.gmra.mxu0 %v2655
    %v2683 = vpop.f32.mrf.mxu0
    %v2684 = vadd.f32 %v2646, %v2683
    %2685 = vmatmul.f32.gmra.mxu0 %v2658
    %v2686 = vpop.f32.mrf.mxu0
    %v2687 = vadd.f32 %v2646, %v2686
    %2688 = vdwg.mxu0
    %v2689 = vmul.f32 %v2678, 0.5
    %v2690 = vmul.f32 %v2681, 0.5
    %v2691 = vmul.f32 %v2684, 0.5
    %v2692 = vmul.f32 %v2687, 0.5
    %v2693 = vmul.f32 %v2678, 0.70710677
    %v2694 = vmul.f32 %v2681, 0.70710677
    %v2695 = vmul.f32 %v2684, 0.70710677
    %v2696 = vmul.f32 %v2687, 0.70710677
    %v2697 = vand.u32 2147483647, %v2693
    %v2698 = vand.u32 2147483647, %v2694
    %v2699 = vand.u32 2147483647, %v2695
    %v2700 = vand.u32 2147483647, %v2696
    %v2701 = vmul.f32 %v2697, 0.3275911
    %v2702 = vmul.f32 %v2698, 0.3275911
    %v2703 = vmul.f32 %v2699, 0.3275911
    %v2704 = vmul.f32 %v2700, 0.3275911
    %v2705 = vadd.f32 %v2701, 1.0
    %v2706 = vadd.f32 %v2702, 1.0
    %v2707 = vadd.f32 %v2703, 1.0
    %v2708 = vadd.f32 %v2704, 1.0
    %v2709 = vrcp.pop %v2705
    %v2710 = vmul.f32 %v2705, %v2709
    %v2711 = vsub.f32 1.0, %v2710
    %v2712 = vmul.f32 %v2709, %v2711
    %v2713 = vadd.f32 %v2709, %v2712
    %vm2714 = vweird.f32 %v2705
    %vm2715 = vweird.f32 %v2709
    %vm2716 = vmor %vm2714, %vm2715
    %v2717 = vsel %vm2716, %v2709, %v2713
    %v2718 = vand.u32 2147483647, %v2705
    %vm2719 = vcmp.eq.f32.partialorder %v2718, 8.507059e+37
    %v2720 = vand.u32 %v2705, 2147483648
    %v2721 = vor.u32 1.1754944e-38, %v2720
    %v2722 = vsel %vm2719, %v2721, %v2717
    %v2723 = vmul.f32 1.0, %v2722
    %v2724 = vrcp.pop %v2706
    %v2725 = vmul.f32 %v2706, %v2724
    %v2726 = vsub.f32 1.0, %v2725
    %v2727 = vmul.f32 %v2724, %v2726
    %v2728 = vadd.f32 %v2724, %v2727
    %vm2729 = vweird.f32 %v2706
    %vm2730 = vweird.f32 %v2724
    %vm2731 = vmor %vm2729, %vm2730
    %v2732 = vsel %vm2731, %v2724, %v2728
    %v2733 = vand.u32 2147483647, %v2706
    %vm2734 = vcmp.eq.f32.partialorder %v2733, 8.507059e+37
    %v2735 = vand.u32 %v2706, 2147483648
    %v2736 = vor.u32 1.1754944e-38, %v2735
    %v2737 = vsel %vm2734, %v2736, %v2732
    %v2738 = vmul.f32 1.0, %v2737
    %v2739 = vrcp.pop %v2707
    %v2740 = vmul.f32 %v2707, %v2739
    %v2741 = vsub.f32 1.0, %v2740
    %v2742 = vmul.f32 %v2739, %v2741
    %v2743 = vadd.f32 %v2739, %v2742
    %vm2744 = vweird.f32 %v2707
    %vm2745 = vweird.f32 %v2739
    %vm2746 = vmor %vm2744, %vm2745
    %v2747 = vsel %vm2746, %v2739, %v2743
    %v2748 = vand.u32 2147483647, %v2707
    %vm2749 = vcmp.eq.f32.partialorder %v2748, 8.507059e+37
    %v2750 = vand.u32 %v2707, 2147483648
    %v2751 = vor.u32 1.1754944e-38, %v2750
    %v2752 = vsel %vm2749, %v2751, %v2747
    %v2753 = vmul.f32 1.0, %v2752
    %v2754 = vrcp.pop %v2708
    %v2755 = vmul.f32 %v2708, %v2754
    %v2756 = vsub.f32 1.0, %v2755
    %v2757 = vmul.f32 %v2754, %v2756
    %v2758 = vadd.f32 %v2754, %v2757
    %vm2759 = vweird.f32 %v2708
    %vm2760 = vweird.f32 %v2754
    %vm2761 = vmor %vm2759, %vm2760
    %v2762 = vsel %vm2761, %v2754, %v2758
    %v2763 = vand.u32 2147483647, %v2708
    %vm2764 = vcmp.eq.f32.partialorder %v2763, 8.507059e+37
    %v2765 = vand.u32 %v2708, 2147483648
    %v2766 = vor.u32 1.1754944e-38, %v2765
    %v2767 = vsel %vm2764, %v2766, %v2762
    %v2768 = vmul.f32 1.0, %v2767
    %v2769 = vmul.f32 %v2723, 1.0614054
    %v2770 = vmul.f32 %v2738, 1.0614054
    %v2771 = vmul.f32 %v2753, 1.0614054
    %v2772 = vmul.f32 %v2768, 1.0614054
    %v2773 = vadd.f32 %v2769, -1.4531521
    %v2774 = vadd.f32 %v2770, -1.4531521
    %v2775 = vadd.f32 %v2771, -1.4531521
    %v2776 = vadd.f32 %v2772, -1.4531521
    %v2777 = vmul.f32 %v2773, %v2723
    %v2778 = vmul.f32 %v2774, %v2738
    %v2779 = vmul.f32 %v2775, %v2753
    %v2780 = vmul.f32 %v2776, %v2768
    %v2781 = vadd.f32 %v2777, 1.4214138
    %v2782 = vadd.f32 %v2778, 1.4214138
    %v2783 = vadd.f32 %v2779, 1.4214138
    %v2784 = vadd.f32 %v2780, 1.4214138
    %v2785 = vmul.f32 %v2781, %v2723
    %v2786 = vmul.f32 %v2782, %v2738
    %v2787 = vmul.f32 %v2783, %v2753
    %v2788 = vmul.f32 %v2784, %v2768
    %v2789 = vadd.f32 %v2785, -0.28449672
    %v2790 = vadd.f32 %v2786, -0.28449672
    %v2791 = vadd.f32 %v2787, -0.28449672
    %v2792 = vadd.f32 %v2788, -0.28449672
    %v2793 = vmul.f32 %v2789, %v2723
    %v2794 = vmul.f32 %v2790, %v2738
    %v2795 = vmul.f32 %v2791, %v2753
    %v2796 = vmul.f32 %v2792, %v2768
    %v2797 = vadd.f32 %v2793, 0.2548296
    %v2798 = vadd.f32 %v2794, 0.2548296
    %v2799 = vadd.f32 %v2795, 0.2548296
    %v2800 = vadd.f32 %v2796, 0.2548296
    %v2801 = vmul.f32 %v2797, %v2723
    %v2802 = vmul.f32 %v2798, %v2738
    %v2803 = vmul.f32 %v2799, %v2753
    %v2804 = vmul.f32 %v2800, %v2768
    %v2805 = vmul.f32 %v2697, %v2697
    %v2806 = vmul.f32 %v2698, %v2698
    %v2807 = vmul.f32 %v2699, %v2699
    %v2808 = vmul.f32 %v2700, %v2700
    %v2809 = vsub.f32 0.0, %v2805
    %v2810 = vsub.f32 0.0, %v2806
    %v2811 = vsub.f32 0.0, %v2807
    %v2812 = vsub.f32 0.0, %v2808
    %v2813 = vmul.f32 %v2809, 1.442695
    %v2814 = vpow.pop %v2813
    %v2815 = vmul.f32 %v2810, 1.442695
    %v2816 = vpow.pop %v2815
    %v2817 = vmul.f32 %v2811, 1.442695
    %v2818 = vpow.pop %v2817
    %v2819 = vmul.f32 %v2812, 1.442695
    %v2820 = vpow.pop %v2819
    %v2821 = vmul.f32 %v2801, %v2814
    %v2822 = vmul.f32 %v2802, %v2816
    %v2823 = vmul.f32 %v2803, %v2818
    %v2824 = vmul.f32 %v2804, %v2820
    %v2825 = vsub.f32 1.0, %v2821
    %v2826 = vsub.f32 1.0, %v2822
    %v2827 = vsub.f32 1.0, %v2823
    %v2828 = vsub.f32 1.0, %v2824
    %vm2829 = vcmp.lt.f32.partialorder %v2693, 0.0
    %vm2830 = vcmp.lt.f32.partialorder %v2694, 0.0
    %vm2831 = vcmp.lt.f32.partialorder %v2695, 0.0
    %vm2832 = vcmp.lt.f32.partialorder %v2696, 0.0
    %v2833 = vsub.f32 0.0, %v2825
    %v2834 = vsub.f32 0.0, %v2826
    %v2835 = vsub.f32 0.0, %v2827
    %v2836 = vsub.f32 0.0, %v2828
    %v2837 = vsel %vm2829, %v2833, %v2825
    %v2838 = vsel %vm2830, %v2834, %v2826
    %v2839 = vsel %vm2831, %v2835, %v2827
    %v2840 = vsel %vm2832, %v2836, %v2828
    %v2841 = vadd.f32 %v2837, 1.0
    %v2842 = vadd.f32 %v2838, 1.0
    %v2843 = vadd.f32 %v2839, 1.0
    %v2844 = vadd.f32 %v2840, 1.0
    %v2845 = vmul.f32 %v2689, %v2841
    %v2846 = vmul.f32 %v2690, %v2842
    %v2847 = vmul.f32 %v2691, %v2843
    %v2848 = vmul.f32 %v2692, %v2844
    %v2849 = vld [vmem:[%s61] sm:$0xff]
    %v2850 = vld [vmem:[%s61 + $0x8] sm:$0xff]
    %v2851 = vld [vmem:[%s61 + $0x10] sm:$0xff]
    %v2852 = vld [vmem:[%s61 + $0x18] sm:$0xff]
    %v2853 = vld [vmem:[%s61 + $0x20] sm:$0xff]
    %v2854 = vld [vmem:[%s61 + $0x28] sm:$0xff]
    %v2855 = vld [vmem:[%s61 + $0x30] sm:$0xff]
    %v2856 = vld [vmem:[%s61 + $0x38] sm:$0xff]
    %v2857 = vld [vmem:[#allocation10] sm:$0x1]
    %v2859 = vperm.slane %v2857, 0
    %v2862 = vsel %vm1823, %v2845, 0
    %v2865 = vsel %vm1823, %v2846, 0
    %v2868 = vsel %vm1823, %v2847, 0
    %v2871 = vsel %vm1823, %v2848, 0
    %2873 = vmatpush.msra.mxu0 0.0
    %2874 = vmatpush.msra.mxu0 0.0
    %2875 = vmatpush.msra.mxu0 0.0
    %2876 = vmatpush.msra.mxu0 0.0
    %2877 = vmatpush.msra.mxu0 0.0
    %2878 = vmatpush.msra.mxu0 0.0
    %2879 = vmatpush.msra.mxu0 0.0
    %2880 = vmatpush.msra.mxu0 0.0
    %2881 = vmatpush.msra.mxu0 %v2856
    %2882 = vmatpush.msra.mxu0 %v2855
    %2883 = vmatpush.msra.mxu0 %v2854
    %2884 = vmatpush.msra.mxu0 %v2853
    %2885 = vmatpush.msra.mxu0 %v2852
    %2886 = vmatpush.msra.mxu0 %v2851
    %2887 = vmatpush.msra.mxu0 %v2850
    %2888 = vmatpush.msra.mxu0 %v2849
    %2889 = vmatmul.f32.gmra.mxu0 %v2862
    %v2890 = vpop.f32.mrf.mxu0
    %v2891 = vadd.f32 %v2859, %v2890
    %2892 = vmatmul.f32.gmra.mxu0 %v2865
    %v2893 = vpop.f32.mrf.mxu0
    %v2894 = vadd.f32 %v2859, %v2893
    %2895 = vmatmul.f32.gmra.mxu0 %v2868
    %v2896 = vpop.f32.mrf.mxu0
    %v2897 = vadd.f32 %v2859, %v2896
    %2898 = vmatmul.f32.gmra.mxu0 %v2871
    %v2899 = vpop.f32.mrf.mxu0
    %v2900 = vadd.f32 %v2859, %v2899
    %2901 = vdwg.mxu0
    %v2902 = vadd.f32 %v2532, %v2891
    %v2903 = vadd.f32 %v2533, %v2894
    %v2904 = vadd.f32 %v2534, %v2897
    %v2905 = vadd.f32 %v2535, %v2900
    %v2906 = vld [vmem:[%s19] sm:$0xff]
    %v2908 = vsel %vm714, %v2906, 0
    %2910 = vmatpush.msra.mxu0 0.0
    %2911 = vmatpush.msra.mxu0 0.0
    %2912 = vmatpush.msra.mxu0 0.0
    %2913 = vmatpush.msra.mxu0 0.0
    %2914 = vmatpush.msra.mxu0 0.0
    %2915 = vmatpush.msra.mxu0 0.0
    %2916 = vmatpush.msra.mxu0 0.0
    %2917 = vmatpush.msra.mxu0 0.0
    %2918 = vmatpush.msra.mxu0 0.0
    %2919 = vmatpush.msra.mxu0 0.0
    %2920 = vmatpush.msra.mxu0 0.0
    %2921 = vmatpush.msra.mxu0 0.0
    %2922 = vmatpush.msra.mxu0 %v2905
    %2923 = vmatpush.msra.mxu0 %v2904
    %2924 = vmatpush.msra.mxu0 %v2903
    %2925 = vmatpush.msra.mxu0 %v2902
    %2926 = vmatmul.f32.gmra.mxu0 %v2908
    %v2927 = vpop.f32.mrf.mxu0
    %v2928 = vadd.f32 0.0, %v2927
    %2929 = vdwg.mxu0
    %s2930 = scalar_lea.vmem %s19, 8
    %v2931 = vld [vmem:[%s2930] sm:$0xff]
    %v2933 = vsel %vm714, %v2931, 0
    %2935 = vmatpush.msra.mxu0 0.0
    %2936 = vmatpush.msra.mxu0 0.0
    %2937 = vmatpush.msra.mxu0 0.0
    %2938 = vmatpush.msra.mxu0 0.0
    %2939 = vmatpush.msra.mxu0 0.0
    %2940 = vmatpush.msra.mxu0 0.0
    %2941 = vmatpush.msra.mxu0 0.0
    %2942 = vmatpush.msra.mxu0 0.0
    %2943 = vmatpush.msra.mxu0 0.0
    %2944 = vmatpush.msra.mxu0 0.0
    %2945 = vmatpush.msra.mxu0 0.0
    %2946 = vmatpush.msra.mxu0 0.0
    %2947 = vmatpush.msra.mxu0 %v2905
    %2948 = vmatpush.msra.mxu0 %v2904
    %2949 = vmatpush.msra.mxu0 %v2903
    %2950 = vmatpush.msra.mxu0 %v2902
    %2951 = vmatmul.f32.gmra.mxu0 %v2933
    %v2952 = vpop.f32.mrf.mxu0
    %v2953 = vadd.f32 0.0, %v2952
    %2954 = vdwg.mxu0
    %s2955 = scalar_lea.vmem %s19, 16
    %v2956 = vld [vmem:[%s2955] sm:$0xff]
    %v2958 = vsel %vm714, %v2956, 0
    %2960 = vmatpush.msra.mxu0 0.0
    %2961 = vmatpush.msra.mxu0 0.0
    %2962 = vmatpush.msra.mxu0 0.0
    %2963 = vmatpush.msra.mxu0 0.0
    %2964 = vmatpush.msra.mxu0 0.0
    %2965 = vmatpush.msra.mxu0 0.0
    %2966 = vmatpush.msra.mxu0 0.0
    %2967 = vmatpush.msra.mxu0 0.0
    %2968 = vmatpush.msra.mxu0 0.0
    %2969 = vmatpush.msra.mxu0 0.0
    %2970 = vmatpush.msra.mxu0 0.0
    %2971 = vmatpush.msra.mxu0 0.0
    %2972 = vmatpush.msra.mxu0 %v2905
    %2973 = vmatpush.msra.mxu0 %v2904
    %2974 = vmatpush.msra.mxu0 %v2903
    %2975 = vmatpush.msra.mxu0 %v2902
    %2976 = vmatmul.f32.gmra.mxu0 %v2958
    %v2977 = vpop.f32.mrf.mxu0
    %v2978 = vadd.f32 0.0, %v2977
    %2979 = vdwg.mxu0
    %s2980 = scalar_lea.vmem %s19, 24
    %v2981 = vld [vmem:[%s2980] sm:$0xff]
    %v2983 = vsel %vm714, %v2981, 0
    %2985 = vmatpush.msra.mxu0 0.0
    %2986 = vmatpush.msra.mxu0 0.0
    %2987 = vmatpush.msra.mxu0 0.0
    %2988 = vmatpush.msra.mxu0 0.0
    %2989 = vmatpush.msra.mxu0 0.0
    %2990 = vmatpush.msra.mxu0 0.0
    %2991 = vmatpush.msra.mxu0 0.0
    %2992 = vmatpush.msra.mxu0 0.0
    %2993 = vmatpush.msra.mxu0 0.0
    %2994 = vmatpush.msra.mxu0 0.0
    %2995 = vmatpush.msra.mxu0 0.0
    %2996 = vmatpush.msra.mxu0 0.0
    %2997 = vmatpush.msra.mxu0 %v2905
    %2998 = vmatpush.msra.mxu0 %v2904
    %2999 = vmatpush.msra.mxu0 %v2903
    %3000 = vmatpush.msra.mxu0 %v2902
    %3001 = vmatmul.f32.gmra.mxu0 %v2983
    %v3002 = vpop.f32.mrf.mxu0
    %v3003 = vadd.f32 0.0, %v3002
    %3004 = vdwg.mxu0
    %3006 = vrot.lane.b32.xlu0 %v2953, 32
    %v3007 = vpop.permute.xlu0 %3006
    %3010 = vrot.lane.b32.xlu0 %v2978, 64
    %v3011 = vpop.permute.xlu0 %3010
    %3014 = vrot.lane.b32.xlu0 %v3003, 96
    %v3015 = vpop.permute.xlu0 %3014
    %v3017 = vsel %vm714, %v2928, %v3007
    %v3018 = vsel %vm1823, %v3017, %v3011
    %vm3019 = vcmask 785408
    %v3020 = vsel %vm3019, %v3018, %v3015
    %3021 = vadd.xlane.f32.xlu0 %v3020
    %v3022 = vpop.xlane.xlu0 %3021
    %v3023 = vrcp.pop 128.0
    %v3024 = vmul.f32 128.0, %v3023
    %v3025 = vsub.f32 1.0, %v3024
    %v3026 = vmul.f32 %v3023, %v3025
    %v3027 = vadd.f32 %v3023, %v3026
    %vm3028 = vweird.f32 %v3023
    %v3029 = vsel %vm3028, %v3023, %v3027
    %v3030 = vmul.f32 %v3022, %v3029
    %v3031 = vsub.f32 %v3020, %v3030
    %v3032 = vmul.f32 %v3031, %v3031
    %3033 = vadd.xlane.f32.xlu0 %v3032
    %v3034 = vpop.xlane.xlu0 %3033
    %v3035 = vmul.f32 %v3034, %v3029
    %v3036 = vadd.f32 %v3035, 1e-05
    %v3037 = vrsqrt.pop %v3036
    %v3038 = vmul.f32 %v3037, %v3036
    %v3039 = vmul.f32 %v3038, %v3037
    %v3040 = vmul.f32 0.5, %v3039
    %v3041 = vsub.f32 1.5, %v3040
    %v3042 = vmul.f32 %v3037, %v3041
    %vm3043 = vweird.f32 %v3036
    %vm3044 = vweird.f32 %v3037
    %vm3045 = vmor %vm3043, %vm3044
    %v3046 = vsel %vm3045, %v3037, %v3042
    %v3047 = vmul.f32 %v3031, %v3046
    %v3048 = vld [vmem:[#allocation22] sm:$0x1]
    %v3050 = vperm.slane %v3048, 0
    %v3052 = vmul.f32 %v3047, %v3050
    %v3053 = vld [vmem:[#allocation20] sm:$0x1]
    %v3055 = vperm.slane %v3053, 0
    %v3057 = vadd.f32 %v3052, %v3055
    %v3058 = vld [vmem:[%s83] sm:$0xff]
    %v3059 = vld [vmem:[%s83 + $0x8] sm:$0xff]
    %v3060 = vld [vmem:[%s83 + $0x10] sm:$0xff]
    %v3061 = vld [vmem:[%s83 + $0x18] sm:$0xff]
    %v3062 = vld [vmem:[%s83 + $0x20] sm:$0xff]
    %v3063 = vld [vmem:[%s83 + $0x28] sm:$0xff]
    %v3064 = vld [vmem:[%s83 + $0x30] sm:$0xff]
    %v3065 = vld [vmem:[%s83 + $0x38] sm:$0xff]
    %v3066 = vld [vmem:[%s83 + $0x40] sm:$0xff]
    %v3067 = vld [vmem:[%s83 + $0x48] sm:$0xff]
    %v3068 = vld [vmem:[%s83 + $0x50] sm:$0xff]
    %v3069 = vld [vmem:[%s83 + $0x58] sm:$0xff]
    %v3070 = vld [vmem:[%s83 + $0x60] sm:$0xff]
    %v3071 = vld [vmem:[%s83 + $0x68] sm:$0xff]
    %v3072 = vld [vmem:[%s83 + $0x70] sm:$0xff]
    %v3073 = vld [vmem:[%s83 + $0x78] sm:$0xff]
    %3074 = vmatpush.msra.mxu0 %v3073
    %3075 = vmatpush.msra.mxu0 %v3072
    %3076 = vmatpush.msra.mxu0 %v3071
    %3077 = vmatpush.msra.mxu0 %v3070
    %3078 = vmatpush.msra.mxu0 %v3069
    %3079 = vmatpush.msra.mxu0 %v3068
    %3080 = vmatpush.msra.mxu0 %v3067
    %3081 = vmatpush.msra.mxu0 %v3066
    %3082 = vmatpush.msra.mxu0 %v3065
    %3083 = vmatpush.msra.mxu0 %v3064
    %3084 = vmatpush.msra.mxu0 %v3063
    %3085 = vmatpush.msra.mxu0 %v3062
    %3086 = vmatpush.msra.mxu0 %v3061
    %3087 = vmatpush.msra.mxu0 %v3060
    %3088 = vmatpush.msra.mxu0 %v3059
    %3089 = vmatpush.msra.mxu0 %v3058
    %3090 = vmatmul.f32.gmra.mxu0 %v3057
    %v3091 = vpop.f32.mrf.mxu0
    %v3092 = vadd.f32 0.0, %v3091
    %3093 = vdwg.mxu0
    %3094 = vst.msk [vmem:[#allocation45] sm:$0xff] %vm1823, %v3092
    %v3095 = vsel %vm1823, %v3092, 0.0
    %3096 = vadd.xlane.f32.xlu0 %v3095
    %v3097 = vpop.xlane.xlu0 %3096
    %v3098 = vrcp.pop 64.0
    %v3099 = vmul.f32 64.0, %v3098
    %v3100 = vsub.f32 1.0, %v3099
    %v3101 = vmul.f32 %v3098, %v3100
    %v3102 = vadd.f32 %v3098, %v3101
    %vm3103 = vweird.f32 %v3098
    %v3104 = vsel %vm3103, %v3098, %v3102
    %v3105 = vmul.f32 %v3097, %v3104
    %v3106 = vsub.f32 %v3092, %v3105
    %v3107 = vmul.f32 %v3106, %v3106
    %v3108 = vsel %vm1823, %v3107, 0.0
    %3109 = vadd.xlane.f32.xlu0 %v3108
    %v3110 = vpop.xlane.xlu0 %3109
    %v3111 = vmul.f32 %v3110, %v3104
    %v3112 = vadd.f32 %v3111, 1e-05
    %v3113 = vrsqrt.pop %v3112
    %v3114 = vmul.f32 %v3113, %v3112
    %v3115 = vmul.f32 %v3114, %v3113
    %v3116 = vmul.f32 0.5, %v3115
    %v3117 = vsub.f32 1.5, %v3116
    %v3118 = vmul.f32 %v3113, %v3117
    %vm3119 = vweird.f32 %v3112
    %vm3120 = vweird.f32 %v3113
    %vm3121 = vmor %vm3119, %vm3120
    %v3122 = vsel %vm3121, %v3113, %v3118
    %v3123 = vmul.f32 %v3106, %v3122
    %v3124 = vld [vmem:[#allocation28] sm:$0x1]
    %v3126 = vperm.slane %v3124, 0
    %v3128 = vmul.f32 %v3123, %v3126
    %v3129 = vld [vmem:[#allocation26] sm:$0x1]
    %v3131 = vperm.slane %v3129, 0
    %v3133 = vadd.f32 %v3128, %v3131
    %v3134 = vld [vmem:[%s109] sm:$0xff]
    %v3135 = vld [vmem:[%s109 + $0x8] sm:$0xff]
    %v3136 = vld [vmem:[%s109 + $0x10] sm:$0xff]
    %v3137 = vld [vmem:[%s109 + $0x18] sm:$0xff]
    %v3138 = vld [vmem:[%s109 + $0x20] sm:$0xff]
    %v3139 = vld [vmem:[%s109 + $0x28] sm:$0xff]
    %v3140 = vld [vmem:[%s109 + $0x30] sm:$0xff]
    %v3141 = vld [vmem:[%s109 + $0x38] sm:$0xff]
    %v3142 = vld [vmem:[%s109 + $0x40] sm:$0xff]
    %v3143 = vld [vmem:[%s109 + $0x48] sm:$0xff]
    %v3144 = vld [vmem:[%s109 + $0x50] sm:$0xff]
    %v3145 = vld [vmem:[%s109 + $0x58] sm:$0xff]
    %v3146 = vld [vmem:[%s109 + $0x60] sm:$0xff]
    %v3147 = vld [vmem:[%s109 + $0x68] sm:$0xff]
    %v3148 = vld [vmem:[%s109 + $0x70] sm:$0xff]
    %v3149 = vld [vmem:[%s109 + $0x78] sm:$0xff]
    %v3150 = vld [vmem:[%s107] sm:$0x3]
    %v3152 = vperm.slane %v3150, 0
    %v3153 = vperm.slane %v3150, 1
    %v3157 = vsel %vm1823, %v3133, 0
    %3159 = vmatpush.msra.mxu0 0.0
    %3160 = vmatpush.msra.mxu0 0.0
    %3161 = vmatpush.msra.mxu0 0.0
    %3162 = vmatpush.msra.mxu0 0.0
    %3163 = vmatpush.msra.mxu0 0.0
    %3164 = vmatpush.msra.mxu0 0.0
    %3165 = vmatpush.msra.mxu0 0.0
    %3166 = vmatpush.msra.mxu0 0.0
    %3167 = vmatpush.msra.mxu0 %v3148
    %3168 = vmatpush.msra.mxu0 %v3146
    %3169 = vmatpush.msra.mxu0 %v3144
    %3170 = vmatpush.msra.mxu0 %v3142
    %3171 = vmatpush.msra.mxu0 %v3140
    %3172 = vmatpush.msra.mxu0 %v3138
    %3173 = vmatpush.msra.mxu0 %v3136
    %3174 = vmatpush.msra.mxu0 %v3134
    %3175 = vmatmul.f32.gmra.mxu0 %v3157
    %v3176 = vpop.f32.mrf.mxu0
    %v3177 = vadd.f32 %v3152, %v3176
    %3178 = vdwg.mxu0
    %3179 = vmatpush.msra.mxu0 0.0
    %3180 = vmatpush.msra.mxu0 0.0
    %3181 = vmatpush.msra.mxu0 0.0
    %3182 = vmatpush.msra.mxu0 0.0
    %3183 = vmatpush.msra.mxu0 0.0
    %3184 = vmatpush.msra.mxu0 0.0
    %3185 = vmatpush.msra.mxu0 0.0
    %3186 = vmatpush.msra.mxu0 0.0
    %3187 = vmatpush.msra.mxu0 %v3149
    %3188 = vmatpush.msra.mxu0 %v3147
    %3189 = vmatpush.msra.mxu0 %v3145
    %3190 = vmatpush.msra.mxu0 %v3143
    %3191 = vmatpush.msra.mxu0 %v3141
    %3192 = vmatpush.msra.mxu0 %v3139
    %3193 = vmatpush.msra.mxu0 %v3137
    %3194 = vmatpush.msra.mxu0 %v3135
    %3195 = vmatmul.f32.gmra.mxu0 %v3157
    %v3196 = vpop.f32.mrf.mxu0
    %v3197 = vadd.f32 %v3153, %v3196
    %3198 = vdwg.mxu0
    %3200 = vrot.lane.b32.xlu0 %v3177, 64
    %v3201 = vpop.permute.xlu0 %3200
    %v3202 = vsel %vm995, %v3177, 0
    %v3204 = vsel %vm995, %v3201, 0
    %3206 = vmatpush.xpose.msra.mxu0 0.0
    %3207 = vmatpush.xpose.msra.mxu0 0.0
    %3208 = vmatpush.xpose.msra.mxu0 0.0
    %3209 = vmatpush.xpose.msra.mxu0 0.0
    %3210 = vmatpush.xpose.msra.mxu0 0.0
    %3211 = vmatpush.xpose.msra.mxu0 0.0
    %3212 = vmatpush.xpose.msra.mxu0 0.0
    %3213 = vmatpush.xpose.msra.mxu0 0.0
    %3214 = vmatpush.xpose.msra.mxu0 0.0
    %3215 = vmatpush.xpose.msra.mxu0 0.0
    %3216 = vmatpush.xpose.msra.mxu0 0.0
    %3217 = vmatpush.xpose.msra.mxu0 0.0
    %3218 = vmatpush.xpose.msra.mxu0 0.0
    %3219 = vmatpush.xpose.msra.mxu0 0.0
    %3220 = vmatpush.xpose.msra.mxu0 0.0
    %3221 = vmatpush.xpose.msra.mxu0 %v3204
    %3222 = vmatmul.f32.gmra.mxu0 %v3202
    %v3223 = vpop.f32.mrf.mxu0
    %v3224 = vadd.f32 0.0, %v3223
    %3225 = vdwg.mxu0
    %v3226 = vmul.f32 %v3224, 0.25
    %v3227 = vld [vmem:[%s85] sm:$0xff]
    %v3228 = vadd.f32 %v3226, %v3227
    %vm3229 = vcmask 64512
    %v3230 = vsel %vm3229, %v3228, -inf
    %3231 = vmax.xlane.f32.xlu0 %v3230
    %v3232 = vpop.xlane.xlu0 %3231
    %v3233 = vsub.f32 %v3228, %v3232
    %v3234 = vmul.f32 %v3233, 1.442695
    %v3235 = vpow.pop %v3234
    %v3236 = vsel %vm3229, %v3235, 0.0
    %3237 = vadd.xlane.f32.xlu0 %v3236
    %v3238 = vpop.xlane.xlu0 %3237
    %v3239 = vrcp.pop %v3238
    %v3240 = vmul.f32 %v3238, %v3239
    %v3241 = vsub.f32 1.0, %v3240
    %v3242 = vmul.f32 %v3239, %v3241
    %v3243 = vadd.f32 %v3239, %v3242
    %vm3244 = vweird.f32 %v3238
    %vm3245 = vweird.f32 %v3239
    %vm3246 = vmor %vm3244, %vm3245
    %v3247 = vsel %vm3246, %v3239, %v3243
    %v3248 = vand.u32 2147483647, %v3238
    %vm3249 = vcmp.eq.f32.partialorder %v3248, 8.507059e+37
    %v3250 = vand.u32 %v3238, 2147483648
    %v3251 = vor.u32 1.1754944e-38, %v3250
    %v3252 = vsel %vm3249, %v3251, %v3247
    %v3253 = vmul.f32 %v3235, %v3252
    %v3255 = vsel %vm3229, %v3253, 0
    %3257 = vmatpush.msra.mxu0 0.0
    %3258 = vmatpush.msra.mxu0 0.0
    %3259 = vmatpush.msra.mxu0 0.0
    %3260 = vmatpush.msra.mxu0 0.0
    %3261 = vmatpush.msra.mxu0 0.0
    %3262 = vmatpush.msra.mxu0 0.0
    %3263 = vmatpush.msra.mxu0 0.0
    %3264 = vmatpush.msra.mxu0 0.0
    %3265 = vmatpush.msra.mxu0 0.0
    %3266 = vmatpush.msra.mxu0 0.0
    %3267 = vmatpush.msra.mxu0 0.0
    %3268 = vmatpush.msra.mxu0 0.0
    %3269 = vmatpush.msra.mxu0 0.0
    %3270 = vmatpush.msra.mxu0 0.0
    %3271 = vmatpush.msra.mxu0 0.0
    %3272 = vmatpush.msra.mxu0 %v3197
    %3273 = vmatmul.f32.gmra.mxu0 %v3255
    %v3274 = vpop.f32.mrf.mxu0
    %v3275 = vadd.f32 0.0, %v3274
    %3276 = vdwg.mxu0
    %3277 = vrot.lane.b32.xlu0 %v3177, 112
    %v3278 = vpop.permute.xlu0 %3277
    %3279 = vrot.lane.b32.xlu0 %v3177, 48
    %v3280 = vpop.permute.xlu0 %3279
    %v3281 = vsel %vm995, %v3278, 0
    %v3283 = vsel %vm995, %v3280, 0
    %3285 = vmatpush.xpose.msra.mxu0 0.0
    %3286 = vmatpush.xpose.msra.mxu0 0.0
    %3287 = vmatpush.xpose.msra.mxu0 0.0
    %3288 = vmatpush.xpose.msra.mxu0 0.0
    %3289 = vmatpush.xpose.msra.mxu0 0.0
    %3290 = vmatpush.xpose.msra.mxu0 0.0
    %3291 = vmatpush.xpose.msra.mxu0 0.0
    %3292 = vmatpush.xpose.msra.mxu0 0.0
    %3293 = vmatpush.xpose.msra.mxu0 0.0
    %3294 = vmatpush.xpose.msra.mxu0 0.0
    %3295 = vmatpush.xpose.msra.mxu0 0.0
    %3296 = vmatpush.xpose.msra.mxu0 0.0
    %3297 = vmatpush.xpose.msra.mxu0 0.0
    %3298 = vmatpush.xpose.msra.mxu0 0.0
    %3299 = vmatpush.xpose.msra.mxu0 0.0
    %3300 = vmatpush.xpose.msra.mxu0 %v3283
    %3301 = vmatmul.f32.gmra.mxu0 %v3281
    %v3302 = vpop.f32.mrf.mxu0
    %v3303 = vadd.f32 0.0, %v3302
    %3304 = vdwg.mxu0
    %v3305 = vmul.f32 %v3303, 0.25
    %s3306 = scalar_lea.vmem %s85, 8
    %v3307 = vld [vmem:[%s3306] sm:$0xff]
    %v3308 = vadd.f32 %v3305, %v3307
    %v3309 = vsel %vm3229, %v3308, -inf
    %3310 = vmax.xlane.f32.xlu0 %v3309
    %v3311 = vpop.xlane.xlu0 %3310
    %v3312 = vsub.f32 %v3308, %v3311
    %v3313 = vmul.f32 %v3312, 1.442695
    %v3314 = vpow.pop %v3313
    %v3315 = vsel %vm3229, %v3314, 0.0
    %3316 = vadd.xlane.f32.xlu0 %v3315
    %v3317 = vpop.xlane.xlu0 %3316
    %v3318 = vrcp.pop %v3317
    %v3319 = vmul.f32 %v3317, %v3318
    %v3320 = vsub.f32 1.0, %v3319
    %v3321 = vmul.f32 %v3318, %v3320
    %v3322 = vadd.f32 %v3318, %v3321
    %vm3323 = vweird.f32 %v3317
    %vm3324 = vweird.f32 %v3318
    %vm3325 = vmor %vm3323, %vm3324
    %v3326 = vsel %vm3325, %v3318, %v3322
    %v3327 = vand.u32 2147483647, %v3317
    %vm3328 = vcmp.eq.f32.partialorder %v3327, 8.507059e+37
    %v3329 = vand.u32 %v3317, 2147483648
    %v3330 = vor.u32 1.1754944e-38, %v3329
    %v3331 = vsel %vm3328, %v3330, %v3326
    %v3332 = vmul.f32 %v3314, %v3331
    %3334 = vrot.lane.b32.xlu0 %v3197, 112
    %v3335 = vpop.permute.xlu0 %3334
    %v3338 = vsel %vm3229, %v3332, 0
    %3340 = vmatpush.msra.mxu0 0.0
    %3341 = vmatpush.msra.mxu0 0.0
    %3342 = vmatpush.msra.mxu0 0.0
    %3343 = vmatpush.msra.mxu0 0.0
    %3344 = vmatpush.msra.mxu0 0.0
    %3345 = vmatpush.msra.mxu0 0.0
    %3346 = vmatpush.msra.mxu0 0.0
    %3347 = vmatpush.msra.mxu0 0.0
    %3348 = vmatpush.msra.mxu0 0.0
    %3349 = vmatpush.msra.mxu0 0.0
    %3350 = vmatpush.msra.mxu0 0.0
    %3351 = vmatpush.msra.mxu0 0.0
    %3352 = vmatpush.msra.mxu0 0.0
    %3353 = vmatpush.msra.mxu0 0.0
    %3354 = vmatpush.msra.mxu0 0.0
    %3355 = vmatpush.msra.mxu0 %v3335
    %3356 = vmatmul.f32.gmra.mxu0 %v3338
    %v3357 = vpop.f32.mrf.mxu0
    %v3358 = vadd.f32 0.0, %v3357
    %3359 = vdwg.mxu0
    %3360 = vrot.lane.b32.xlu0 %v3177, 96
    %v3361 = vpop.permute.xlu0 %3360
    %3362 = vrot.lane.b32.xlu0 %v3177, 32
    %v3363 = vpop.permute.xlu0 %3362
    %v3364 = vsel %vm995, %v3361, 0
    %v3366 = vsel %vm995, %v3363, 0
    %3368 = vmatpush.xpose.msra.mxu0 0.0
    %3369 = vmatpush.xpose.msra.mxu0 0.0
    %3370 = vmatpush.xpose.msra.mxu0 0.0
    %3371 = vmatpush.xpose.msra.mxu0 0.0
    %3372 = vmatpush.xpose.msra.mxu0 0.0
    %3373 = vmatpush.xpose.msra.mxu0 0.0
    %3374 = vmatpush.xpose.msra.mxu0 0.0
    %3375 = vmatpush.xpose.msra.mxu0 0.0
    %3376 = vmatpush.xpose.msra.mxu0 0.0
    %3377 = vmatpush.xpose.msra.mxu0 0.0
    %3378 = vmatpush.xpose.msra.mxu0 0.0
    %3379 = vmatpush.xpose.msra.mxu0 0.0
    %3380 = vmatpush.xpose.msra.mxu0 0.0
    %3381 = vmatpush.xpose.msra.mxu0 0.0
    %3382 = vmatpush.xpose.msra.mxu0 0.0
    %3383 = vmatpush.xpose.msra.mxu0 %v3366
    %3384 = vmatmul.f32.gmra.mxu0 %v3364
    %v3385 = vpop.f32.mrf.mxu0
    %v3386 = vadd.f32 0.0, %v3385
    %3387 = vdwg.mxu0
    %v3388 = vmul.f32 %v3386, 0.25
    %s3389 = scalar_lea.vmem %s85, 16
    %v3390 = vld [vmem:[%s3389] sm:$0xff]
    %v3391 = vadd.f32 %v3388, %v3390
    %v3392 = vsel %vm3229, %v3391, -inf
    %3393 = vmax.xlane.f32.xlu0 %v3392
    %v3394 = vpop.xlane.xlu0 %3393
    %v3395 = vsub.f32 %v3391, %v3394
    %v3396 = vmul.f32 %v3395, 1.442695
    %v3397 = vpow.pop %v3396
    %v3398 = vsel %vm3229, %v3397, 0.0
    %3399 = vadd.xlane.f32.xlu0 %v3398
    %v3400 = vpop.xlane.xlu0 %3399
    %v3401 = vrcp.pop %v3400
    %v3402 = vmul.f32 %v3400, %v3401
    %v3403 = vsub.f32 1.0, %v3402
    %v3404 = vmul.f32 %v3401, %v3403
    %v3405 = vadd.f32 %v3401, %v3404
    %vm3406 = vweird.f32 %v3400
    %vm3407 = vweird.f32 %v3401
    %vm3408 = vmor %vm3406, %vm3407
    %v3409 = vsel %vm3408, %v3401, %v3405
    %v3410 = vand.u32 2147483647, %v3400
    %vm3411 = vcmp.eq.f32.partialorder %v3410, 8.507059e+37
    %v3412 = vand.u32 %v3400, 2147483648
    %v3413 = vor.u32 1.1754944e-38, %v3412
    %v3414 = vsel %vm3411, %v3413, %v3409
    %v3415 = vmul.f32 %v3397, %v3414
    %3416 = vrot.lane.b32.xlu0 %v3197, 96
    %v3417 = vpop.permute.xlu0 %3416
    %v3420 = vsel %vm3229, %v3415, 0
    %3422 = vmatpush.msra.mxu0 0.0
    %3423 = vmatpush.msra.mxu0 0.0
    %3424 = vmatpush.msra.mxu0 0.0
    %3425 = vmatpush.msra.mxu0 0.0
    %3426 = vmatpush.msra.mxu0 0.0
    %3427 = vmatpush.msra.mxu0 0.0
    %3428 = vmatpush.msra.mxu0 0.0
    %3429 = vmatpush.msra.mxu0 0.0
    %3430 = vmatpush.msra.mxu0 0.0
    %3431 = vmatpush.msra.mxu0 0.0
    %3432 = vmatpush.msra.mxu0 0.0
    %3433 = vmatpush.msra.mxu0 0.0
    %3434 = vmatpush.msra.mxu0 0.0
    %3435 = vmatpush.msra.mxu0 0.0
    %3436 = vmatpush.msra.mxu0 0.0
    %3437 = vmatpush.msra.mxu0 %v3417
    %3438 = vmatmul.f32.gmra.mxu0 %v3420
    %v3439 = vpop.f32.mrf.mxu0
    %v3440 = vadd.f32 0.0, %v3439
    %3441 = vdwg.mxu0
    %3442 = vrot.lane.b32.xlu0 %v3177, 80
    %v3443 = vpop.permute.xlu0 %3442
    %3444 = vrot.lane.b32.xlu0 %v3177, 16
    %v3445 = vpop.permute.xlu0 %3444
    %v3446 = vsel %vm995, %v3443, 0
    %v3448 = vsel %vm995, %v3445, 0
    %3450 = vmatpush.xpose.msra.mxu0 0.0
    %3451 = vmatpush.xpose.msra.mxu0 0.0
    %3452 = vmatpush.xpose.msra.mxu0 0.0
    %3453 = vmatpush.xpose.msra.mxu0 0.0
    %3454 = vmatpush.xpose.msra.mxu0 0.0
    %3455 = vmatpush.xpose.msra.mxu0 0.0
    %3456 = vmatpush.xpose.msra.mxu0 0.0
    %3457 = vmatpush.xpose.msra.mxu0 0.0
    %3458 = vmatpush.xpose.msra.mxu0 0.0
    %3459 = vmatpush.xpose.msra.mxu0 0.0
    %3460 = vmatpush.xpose.msra.mxu0 0.0
    %3461 = vmatpush.xpose.msra.mxu0 0.0
    %3462 = vmatpush.xpose.msra.mxu0 0.0
    %3463 = vmatpush.xpose.msra.mxu0 0.0
    %3464 = vmatpush.xpose.msra.mxu0 0.0
    %3465 = vmatpush.xpose.msra.mxu0 %v3448
    %3466 = vmatmul.f32.gmra.mxu0 %v3446
    %v3467 = vpop.f32.mrf.mxu0
    %v3468 = vadd.f32 0.0, %v3467
    %3469 = vdwg.mxu0
    %v3470 = vmul.f32 %v3468, 0.25
    %s3471 = scalar_lea.vmem %s85, 24
    %v3472 = vld [vmem:[%s3471] sm:$0xff]
    %v3473 = vadd.f32 %v3470, %v3472
    %v3474 = vsel %vm3229, %v3473, -inf
    %3475 = vmax.xlane.f32.xlu0 %v3474
    %v3476 = vpop.xlane.xlu0 %3475
    %v3477 = vsub.f32 %v3473, %v3476
    %v3478 = vmul.f32 %v3477, 1.442695
    %v3479 = vpow.pop %v3478
    %v3480 = vsel %vm3229, %v3479, 0.0
    %3481 = vadd.xlane.f32.xlu0 %v3480
    %v3482 = vpop.xlane.xlu0 %3481
    %v3483 = vrcp.pop %v3482
    %v3484 = vmul.f32 %v3482, %v3483
    %v3485 = vsub.f32 1.0, %v3484
    %v3486 = vmul.f32 %v3483, %v3485
    %v3487 = vadd.f32 %v3483, %v3486
    %vm3488 = vweird.f32 %v3482
    %vm3489 = vweird.f32 %v3483
    %vm3490 = vmor %vm3488, %vm3489
    %v3491 = vsel %vm3490, %v3483, %v3487
    %v3492 = vand.u32 2147483647, %v3482
    %vm3493 = vcmp.eq.f32.partialorder %v3492, 8.507059e+37
    %v3494 = vand.u32 %v3482, 2147483648
    %v3495 = vor.u32 1.1754944e-38, %v3494
    %v3496 = vsel %vm3493, %v3495, %v3491
    %v3497 = vmul.f32 %v3479, %v3496
    %3498 = vrot.lane.b32.xlu0 %v3197, 80
    %v3499 = vpop.permute.xlu0 %3498
    %v3502 = vsel %vm3229, %v3497, 0
    %3504 = vmatpush.msra.mxu0 0.0
    %3505 = vmatpush.msra.mxu0 0.0
    %3506 = vmatpush.msra.mxu0 0.0
    %3507 = vmatpush.msra.mxu0 0.0
    %3508 = vmatpush.msra.mxu0 0.0
    %3509 = vmatpush.msra.mxu0 0.0
    %3510 = vmatpush.msra.mxu0 0.0
    %3511 = vmatpush.msra.mxu0 0.0
    %3512 = vmatpush.msra.mxu0 0.0
    %3513 = vmatpush.msra.mxu0 0.0
    %3514 = vmatpush.msra.mxu0 0.0
    %3515 = vmatpush.msra.mxu0 0.0
    %3516 = vmatpush.msra.mxu0 0.0
    %3517 = vmatpush.msra.mxu0 0.0
    %3518 = vmatpush.msra.mxu0 0.0
    %3519 = vmatpush.msra.mxu0 %v3499
    %3520 = vmatmul.f32.gmra.mxu0 %v3502
    %v3521 = vpop.f32.mrf.mxu0
    %v3522 = vadd.f32 0.0, %v3521
    %3523 = vdwg.mxu0
    %3525 = vrot.lane.b32.xlu0 %v3358, 16
    %v3526 = vpop.permute.xlu0 %3525
    %3529 = vrot.lane.b32.xlu0 %v3440, 32
    %v3530 = vpop.permute.xlu0 %3529
    %3533 = vrot.lane.b32.xlu0 %v3522, 48
    %v3534 = vpop.permute.xlu0 %3533
    %v3536 = vsel %vm995, %v3275, %v3526
    %v3537 = vsel %vm714, %v3536, %v3530
    %v3538 = vsel %vm672, %v3537, %v3534
    %v3539 = vld [vmem:[%s105] sm:$0xff]
    %v3540 = vld [vmem:[%s105 + $0x8] sm:$0xff]
    %v3541 = vld [vmem:[%s105 + $0x10] sm:$0xff]
    %v3542 = vld [vmem:[%s105 + $0x18] sm:$0xff]
    %v3543 = vld [vmem:[%s105 + $0x20] sm:$0xff]
    %v3544 = vld [vmem:[%s105 + $0x28] sm:$0xff]
    %v3545 = vld [vmem:[%s105 + $0x30] sm:$0xff]
    %v3546 = vld [vmem:[%s105 + $0x38] sm:$0xff]
    %v3547 = vld [vmem:[#allocation32] sm:$0x1]
    %v3549 = vperm.slane %v3547, 0
    %v3552 = vsel %vm1823, %v3538, 0
    %3554 = vmatpush.msra.mxu0 0.0
    %3555 = vmatpush.msra.mxu0 0.0
    %3556 = vmatpush.msra.mxu0 0.0
    %3557 = vmatpush.msra.mxu0 0.0
    %3558 = vmatpush.msra.mxu0 0.0
    %3559 = vmatpush.msra.mxu0 0.0
    %3560 = vmatpush.msra.mxu0 0.0
    %3561 = vmatpush.msra.mxu0 0.0
    %3562 = vmatpush.msra.mxu0 %v3546
    %3563 = vmatpush.msra.mxu0 %v3545
    %3564 = vmatpush.msra.mxu0 %v3544
    %3565 = vmatpush.msra.mxu0 %v3543
    %3566 = vmatpush.msra.mxu0 %v3542
    %3567 = vmatpush.msra.mxu0 %v3541
    %3568 = vmatpush.msra.mxu0 %v3540
    %3569 = vmatpush.msra.mxu0 %v3539
    %3570 = vmatmul.f32.gmra.mxu0 %v3552
    %v3571 = vpop.f32.mrf.mxu0
    %v3572 = vadd.f32 %v3549, %v3571
    %3573 = vdwg.mxu0
    %v3574 = vadd.f32 %v3092, %v3572
    %v3575 = vsel %vm1823, %v3574, 0.0
    %3576 = vadd.xlane.f32.xlu0 %v3575
    %v3577 = vpop.xlane.xlu0 %3576
    %v3578 = vmul.f32 %v3577, %v3104
    %v3579 = vsub.f32 %v3574, %v3578
    %v3580 = vmul.f32 %v3579, %v3579
    %v3581 = vsel %vm1823, %v3580, 0.0
    %3582 = vadd.xlane.f32.xlu0 %v3581
    %v3583 = vpop.xlane.xlu0 %3582
    %v3584 = vmul.f32 %v3583, %v3104
    %v3585 = vadd.f32 %v3584, 1e-05
    %v3586 = vrsqrt.pop %v3585
    %v3587 = vmul.f32 %v3586, %v3585
    %v3588 = vmul.f32 %v3587, %v3586
    %v3589 = vmul.f32 0.5, %v3588
    %v3590 = vsub.f32 1.5, %v3589
    %v3591 = vmul.f32 %v3586, %v3590
    %vm3592 = vweird.f32 %v3585
    %vm3593 = vweird.f32 %v3586
    %vm3594 = vmor %vm3592, %vm3593
    %v3595 = vsel %vm3594, %v3586, %v3591
    %v3596 = vmul.f32 %v3579, %v3595
    %v3597 = vld [vmem:[#allocation31] sm:$0x1]
    %v3599 = vperm.slane %v3597, 0
    %v3601 = vmul.f32 %v3596, %v3599
    %v3602 = vld [vmem:[#allocation29] sm:$0x1]
    %v3604 = vperm.slane %v3602, 0
    %v3606 = vadd.f32 %v3601, %v3604
    %v3607 = vld [vmem:[%s89] sm:$0xff]
    %v3608 = vld [vmem:[%s89 + $0x8] sm:$0xff]
    %v3609 = vld [vmem:[%s89 + $0x10] sm:$0xff]
    %v3610 = vld [vmem:[%s89 + $0x18] sm:$0xff]
    %v3611 = vld [vmem:[%s89 + $0x20] sm:$0xff]
    %v3612 = vld [vmem:[%s89 + $0x28] sm:$0xff]
    %v3613 = vld [vmem:[%s89 + $0x30] sm:$0xff]
    %v3614 = vld [vmem:[%s89 + $0x38] sm:$0xff]
    %v3615 = vld [vmem:[#allocation23] sm:$0x1]
    %v3617 = vperm.slane %v3615, 0
    %v3620 = vsel %vm1823, %v3606, 0
    %3622 = vmatpush.msra.mxu0 0.0
    %3623 = vmatpush.msra.mxu0 0.0
    %3624 = vmatpush.msra.mxu0 0.0
    %3625 = vmatpush.msra.mxu0 0.0
    %3626 = vmatpush.msra.mxu0 0.0
    %3627 = vmatpush.msra.mxu0 0.0
    %3628 = vmatpush.msra.mxu0 0.0
    %3629 = vmatpush.msra.mxu0 0.0
    %3630 = vmatpush.msra.mxu0 %v3614
    %3631 = vmatpush.msra.mxu0 %v3613
    %3632 = vmatpush.msra.mxu0 %v3612
    %3633 = vmatpush.msra.mxu0 %v3611
    %3634 = vmatpush.msra.mxu0 %v3610
    %3635 = vmatpush.msra.mxu0 %v3609
    %3636 = vmatpush.msra.mxu0 %v3608
    %3637 = vmatpush.msra.mxu0 %v3607
    %3638 = vmatmul.f32.gmra.mxu0 %v3620
    %v3639 = vpop.f32.mrf.mxu0
    %v3640 = vadd.f32 %v3617, %v3639
    %3641 = vdwg.mxu0
    %v3642 = vmul.f32 %v3640, 0.5
    %v3643 = vmul.f32 %v3640, 0.70710677
    %v3644 = vand.u32 2147483647, %v3643
    %v3645 = vmul.f32 %v3644, 0.3275911
    %v3646 = vadd.f32 %v3645, 1.0
    %v3647 = vrcp.pop %v3646
    %v3648 = vmul.f32 %v3646, %v3647
    %v3649 = vsub.f32 1.0, %v3648
    %v3650 = vmul.f32 %v3647, %v3649
    %v3651 = vadd.f32 %v3647, %v3650
    %vm3652 = vweird.f32 %v3646
    %vm3653 = vweird.f32 %v3647
    %vm3654 = vmor %vm3652, %vm3653
    %v3655 = vsel %vm3654, %v3647, %v3651
    %v3656 = vand.u32 2147483647, %v3646
    %vm3657 = vcmp.eq.f32.partialorder %v3656, 8.507059e+37
    %v3658 = vand.u32 %v3646, 2147483648
    %v3659 = vor.u32 1.1754944e-38, %v3658
    %v3660 = vsel %vm3657, %v3659, %v3655
    %v3661 = vmul.f32 1.0, %v3660
    %v3662 = vmul.f32 %v3661, 1.0614054
    %v3663 = vadd.f32 %v3662, -1.4531521
    %v3664 = vmul.f32 %v3663, %v3661
    %v3665 = vadd.f32 %v3664, 1.4214138
    %v3666 = vmul.f32 %v3665, %v3661
    %v3667 = vadd.f32 %v3666, -0.28449672
    %v3668 = vmul.f32 %v3667, %v3661
    %v3669 = vadd.f32 %v3668, 0.2548296
    %v3670 = vmul.f32 %v3669, %v3661
    %v3671 = vmul.f32 %v3644, %v3644
    %v3672 = vsub.f32 0.0, %v3671
    %v3673 = vmul.f32 %v3672, 1.442695
    %v3674 = vpow.pop %v3673
    %v3675 = vmul.f32 %v3670, %v3674
    %v3676 = vsub.f32 1.0, %v3675
    %vm3677 = vcmp.lt.f32.partialorder %v3643, 0.0
    %v3678 = vsub.f32 0.0, %v3676
    %v3679 = vsel %vm3677, %v3678, %v3676
    %v3680 = vadd.f32 %v3679, 1.0
    %v3681 = vmul.f32 %v3642, %v3680
    %v3682 = vld [vmem:[%s93] sm:$0xff]
    %v3683 = vld [vmem:[%s93 + $0x8] sm:$0xff]
    %v3684 = vld [vmem:[%s93 + $0x10] sm:$0xff]
    %v3685 = vld [vmem:[%s93 + $0x18] sm:$0xff]
    %v3686 = vld [vmem:[%s93 + $0x20] sm:$0xff]
    %v3687 = vld [vmem:[%s93 + $0x28] sm:$0xff]
    %v3688 = vld [vmem:[%s93 + $0x30] sm:$0xff]
    %v3689 = vld [vmem:[%s93 + $0x38] sm:$0xff]
    %v3690 = vld [vmem:[%s93 + $0x40] sm:$0xff]
    %v3691 = vld [vmem:[%s93 + $0x48] sm:$0xff]
    %v3692 = vld [vmem:[%s93 + $0x50] sm:$0xff]
    %v3693 = vld [vmem:[%s93 + $0x58] sm:$0xff]
    %v3694 = vld [vmem:[%s93 + $0x60] sm:$0xff]
    %v3695 = vld [vmem:[%s93 + $0x68] sm:$0xff]
    %v3696 = vld [vmem:[%s93 + $0x70] sm:$0xff]
    %v3697 = vld [vmem:[%s93 + $0x78] sm:$0xff]
    %v3698 = vld [vmem:[#allocation25] sm:$0x1]
    %v3700 = vperm.slane %v3698, 0
    %3702 = vmatpush.msra.mxu0 %v3697
    %3703 = vmatpush.msra.mxu0 %v3696
    %3704 = vmatpush.msra.mxu0 %v3695
    %3705 = vmatpush.msra.mxu0 %v3694
    %3706 = vmatpush.msra.mxu0 %v3693
    %3707 = vmatpush.msra.mxu0 %v3692
    %3708 = vmatpush.msra.mxu0 %v3691
    %3709 = vmatpush.msra.mxu0 %v3690
    %3710 = vmatpush.msra.mxu0 %v3689
    %3711 = vmatpush.msra.mxu0 %v3688
    %3712 = vmatpush.msra.mxu0 %v3687
    %3713 = vmatpush.msra.mxu0 %v3686
    %3714 = vmatpush.msra.mxu0 %v3685
    %3715 = vmatpush.msra.mxu0 %v3684
    %3716 = vmatpush.msra.mxu0 %v3683
    %3717 = vmatpush.msra.mxu0 %v3682
    %3718 = vmatmul.f32.gmra.mxu0 %v3681
    %v3719 = vpop.f32.mrf.mxu0
    %v3720 = vadd.f32 %v3700, %v3719
    %3721 = vdwg.mxu0
    %v3722 = vadd.f32 %v3574, %v3720
    %v3723 = vsel %vm1823, %v3722, 0.0
    %3724 = vadd.xlane.f32.xlu0 %v3723
    %v3725 = vpop.xlane.xlu0 %3724
    %v3726 = vmul.f32 %v3725, %v3104
    %v3727 = vsub.f32 %v3722, %v3726
    %v3728 = vmul.f32 %v3727, %v3727
    %v3729 = vsel %vm1823, %v3728, 0.0
    %3730 = vadd.xlane.f32.xlu0 %v3729
    %v3731 = vpop.xlane.xlu0 %3730
    %v3732 = vmul.f32 %v3731, %v3104
    %v3733 = vadd.f32 %v3732, 1e-05
    %v3734 = vrsqrt.pop %v3733
    %v3735 = vmul.f32 %v3734, %v3733
    %v3736 = vmul.f32 %v3735, %v3734
    %v3737 = vmul.f32 0.5, %v3736
    %v3738 = vsub.f32 1.5, %v3737
    %v3739 = vmul.f32 %v3734, %v3738
    %vm3740 = vweird.f32 %v3733
    %vm3741 = vweird.f32 %v3734
    %vm3742 = vmor %vm3740, %vm3741
    %v3743 = vsel %vm3742, %v3734, %v3739
    %v3744 = vmul.f32 %v3727, %v3743
    %v3745 = vld [vmem:[#allocation38] sm:$0x1]
    %v3747 = vperm.slane %v3745, 0
    %v3749 = vmul.f32 %v3744, %v3747
    %v3750 = vld [vmem:[#allocation37] sm:$0x1]
    %v3752 = vperm.slane %v3750, 0
    %v3754 = vadd.f32 %v3749, %v3752
    %v3755 = vld [vmem:[%s135] sm:$0xff]
    %v3756 = vld [vmem:[%s135 + $0x8] sm:$0xff]
    %v3757 = vld [vmem:[%s135 + $0x10] sm:$0xff]
    %v3758 = vld [vmem:[%s135 + $0x18] sm:$0xff]
    %v3759 = vld [vmem:[%s135 + $0x20] sm:$0xff]
    %v3760 = vld [vmem:[%s135 + $0x28] sm:$0xff]
    %v3761 = vld [vmem:[%s135 + $0x30] sm:$0xff]
    %v3762 = vld [vmem:[%s135 + $0x38] sm:$0xff]
    %v3763 = vld [vmem:[%s135 + $0x40] sm:$0xff]
    %v3764 = vld [vmem:[%s135 + $0x48] sm:$0xff]
    %v3765 = vld [vmem:[%s135 + $0x50] sm:$0xff]
    %v3766 = vld [vmem:[%s135 + $0x58] sm:$0xff]
    %v3767 = vld [vmem:[%s135 + $0x60] sm:$0xff]
    %v3768 = vld [vmem:[%s135 + $0x68] sm:$0xff]
    %v3769 = vld [vmem:[%s135 + $0x70] sm:$0xff]
    %v3770 = vld [vmem:[%s135 + $0x78] sm:$0xff]
    %v3771 = vld [vmem:[%s133] sm:$0x3]
    %v3773 = vperm.slane %v3771, 0
    %v3774 = vperm.slane %v3771, 1
    %v3778 = vsel %vm1823, %v3754, 0
    %3780 = vmatpush.msra.mxu0 0.0
    %3781 = vmatpush.msra.mxu0 0.0
    %3782 = vmatpush.msra.mxu0 0.0
    %3783 = vmatpush.msra.mxu0 0.0
    %3784 = vmatpush.msra.mxu0 0.0
    %3785 = vmatpush.msra.mxu0 0.0
    %3786 = vmatpush.msra.mxu0 0.0
    %3787 = vmatpush.msra.mxu0 0.0
    %3788 = vmatpush.msra.mxu0 %v3769
    %3789 = vmatpush.msra.mxu0 %v3767
    %3790 = vmatpush.msra.mxu0 %v3765
    %3791 = vmatpush.msra.mxu0 %v3763
    %3792 = vmatpush.msra.mxu0 %v3761
    %3793 = vmatpush.msra.mxu0 %v3759
    %3794 = vmatpush.msra.mxu0 %v3757
    %3795 = vmatpush.msra.mxu0 %v3755
    %3796 = vmatmul.f32.gmra.mxu0 %v3778
    %v3797 = vpop.f32.mrf.mxu0
    %v3798 = vadd.f32 %v3773, %v3797
    %3799 = vdwg.mxu0
    %3800 = vmatpush.msra.mxu0 0.0
    %3801 = vmatpush.msra.mxu0 0.0
    %3802 = vmatpush.msra.mxu0 0.0
    %3803 = vmatpush.msra.mxu0 0.0
    %3804 = vmatpush.msra.mxu0 0.0
    %3805 = vmatpush.msra.mxu0 0.0
    %3806 = vmatpush.msra.mxu0 0.0
    %3807 = vmatpush.msra.mxu0 0.0
    %3808 = vmatpush.msra.mxu0 %v3770
    %3809 = vmatpush.msra.mxu0 %v3768
    %3810 = vmatpush.msra.mxu0 %v3766
    %3811 = vmatpush.msra.mxu0 %v3764
    %3812 = vmatpush.msra.mxu0 %v3762
    %3813 = vmatpush.msra.mxu0 %v3760
    %3814 = vmatpush.msra.mxu0 %v3758
    %3815 = vmatpush.msra.mxu0 %v3756
    %3816 = vmatmul.f32.gmra.mxu0 %v3778
    %v3817 = vpop.f32.mrf.mxu0
    %v3818 = vadd.f32 %v3774, %v3817
    %3819 = vdwg.mxu0
    %3821 = vrot.lane.b32.xlu0 %v3798, 64
    %v3822 = vpop.permute.xlu0 %3821
    %v3823 = vsel %vm995, %v3798, 0
    %v3825 = vsel %vm995, %v3822, 0
    %3827 = vmatpush.xpose.msra.mxu0 0.0
    %3828 = vmatpush.xpose.msra.mxu0 0.0
    %3829 = vmatpush.xpose.msra.mxu0 0.0
    %3830 = vmatpush.xpose.msra.mxu0 0.0
    %3831 = vmatpush.xpose.msra.mxu0 0.0
    %3832 = vmatpush.xpose.msra.mxu0 0.0
    %3833 = vmatpush.xpose.msra.mxu0 0.0
    %3834 = vmatpush.xpose.msra.mxu0 0.0
    %3835 = vmatpush.xpose.msra.mxu0 0.0
    %3836 = vmatpush.xpose.msra.mxu0 0.0
    %3837 = vmatpush.xpose.msra.mxu0 0.0
    %3838 = vmatpush.xpose.msra.mxu0 0.0
    %3839 = vmatpush.xpose.msra.mxu0 0.0
    %3840 = vmatpush.xpose.msra.mxu0 0.0
    %3841 = vmatpush.xpose.msra.mxu0 0.0
    %3842 = vmatpush.xpose.msra.mxu0 %v3825
    %3843 = vmatmul.f32.gmra.mxu0 %v3823
    %v3844 = vpop.f32.mrf.mxu0
    %v3845 = vadd.f32 0.0, %v3844
    %3846 = vdwg.mxu0
    %v3847 = vmul.f32 %v3845, 0.25
    %v3848 = vld [vmem:[%s111] sm:$0xff]
    %v3849 = vadd.f32 %v3847, %v3848
    %v3850 = vsel %vm3229, %v3849, -inf
    %3851 = vmax.xlane.f32.xlu0 %v3850
    %v3852 = vpop.xlane.xlu0 %3851
    %v3853 = vsub.f32 %v3849, %v3852
    %v3854 = vmul.f32 %v3853, 1.442695
    %v3855 = vpow.pop %v3854
    %v3856 = vsel %vm3229, %v3855, 0.0
    %3857 = vadd.xlane.f32.xlu0 %v3856
    %v3858 = vpop.xlane.xlu0 %3857
    %v3859 = vrcp.pop %v3858
    %v3860 = vmul.f32 %v3858, %v3859
    %v3861 = vsub.f32 1.0, %v3860
    %v3862 = vmul.f32 %v3859, %v3861
    %v3863 = vadd.f32 %v3859, %v3862
    %vm3864 = vweird.f32 %v3858
    %vm3865 = vweird.f32 %v3859
    %vm3866 = vmor %vm3864, %vm3865
    %v3867 = vsel %vm3866, %v3859, %v3863
    %v3868 = vand.u32 2147483647, %v3858
    %vm3869 = vcmp.eq.f32.partialorder %v3868, 8.507059e+37
    %v3870 = vand.u32 %v3858, 2147483648
    %v3871 = vor.u32 1.1754944e-38, %v3870
    %v3872 = vsel %vm3869, %v3871, %v3867
    %v3873 = vmul.f32 %v3855, %v3872
    %v3875 = vsel %vm3229, %v3873, 0
    %3877 = vmatpush.msra.mxu0 0.0
    %3878 = vmatpush.msra.mxu0 0.0
    %3879 = vmatpush.msra.mxu0 0.0
    %3880 = vmatpush.msra.mxu0 0.0
    %3881 = vmatpush.msra.mxu0 0.0
    %3882 = vmatpush.msra.mxu0 0.0
    %3883 = vmatpush.msra.mxu0 0.0
    %3884 = vmatpush.msra.mxu0 0.0
    %3885 = vmatpush.msra.mxu0 0.0
    %3886 = vmatpush.msra.mxu0 0.0
    %3887 = vmatpush.msra.mxu0 0.0
    %3888 = vmatpush.msra.mxu0 0.0
    %3889 = vmatpush.msra.mxu0 0.0
    %3890 = vmatpush.msra.mxu0 0.0
    %3891 = vmatpush.msra.mxu0 0.0
    %3892 = vmatpush.msra.mxu0 %v3818
    %3893 = vmatmul.f32.gmra.mxu0 %v3875
    %v3894 = vpop.f32.mrf.mxu0
    %v3895 = vadd.f32 0.0, %v3894
    %3896 = vdwg.mxu0
    %3897 = vrot.lane.b32.xlu0 %v3798, 112
    %v3898 = vpop.permute.xlu0 %3897
    %3899 = vrot.lane.b32.xlu0 %v3798, 48
    %v3900 = vpop.permute.xlu0 %3899
    %v3901 = vsel %vm995, %v3898, 0
    %v3903 = vsel %vm995, %v3900, 0
    %3905 = vmatpush.xpose.msra.mxu0 0.0
    %3906 = vmatpush.xpose.msra.mxu0 0.0
    %3907 = vmatpush.xpose.msra.mxu0 0.0
    %3908 = vmatpush.xpose.msra.mxu0 0.0
    %3909 = vmatpush.xpose.msra.mxu0 0.0
    %3910 = vmatpush.xpose.msra.mxu0 0.0
    %3911 = vmatpush.xpose.msra.mxu0 0.0
    %3912 = vmatpush.xpose.msra.mxu0 0.0
    %3913 = vmatpush.xpose.msra.mxu0 0.0
    %3914 = vmatpush.xpose.msra.mxu0 0.0
    %3915 = vmatpush.xpose.msra.mxu0 0.0
    %3916 = vmatpush.xpose.msra.mxu0 0.0
    %3917 = vmatpush.xpose.msra.mxu0 0.0
    %3918 = vmatpush.xpose.msra.mxu0 0.0
    %3919 = vmatpush.xpose.msra.mxu0 0.0
    %3920 = vmatpush.xpose.msra.mxu0 %v3903
    %3921 = vmatmul.f32.gmra.mxu0 %v3901
    %v3922 = vpop.f32.mrf.mxu0
    %v3923 = vadd.f32 0.0, %v3922
    %3924 = vdwg.mxu0
    %v3925 = vmul.f32 %v3923, 0.25
    %s3926 = scalar_lea.vmem %s111, 8
    %v3927 = vld [vmem:[%s3926] sm:$0xff]
    %v3928 = vadd.f32 %v3925, %v3927
    %v3929 = vsel %vm3229, %v3928, -inf
    %3930 = vmax.xlane.f32.xlu0 %v3929
    %v3931 = vpop.xlane.xlu0 %3930
    %v3932 = vsub.f32 %v3928, %v3931
    %v3933 = vmul.f32 %v3932, 1.442695
    %v3934 = vpow.pop %v3933
    %v3935 = vsel %vm3229, %v3934, 0.0
    %3936 = vadd.xlane.f32.xlu0 %v3935
    %v3937 = vpop.xlane.xlu0 %3936
    %v3938 = vrcp.pop %v3937
    %v3939 = vmul.f32 %v3937, %v3938
    %v3940 = vsub.f32 1.0, %v3939
    %v3941 = vmul.f32 %v3938, %v3940
    %v3942 = vadd.f32 %v3938, %v3941
    %vm3943 = vweird.f32 %v3937
    %vm3944 = vweird.f32 %v3938
    %vm3945 = vmor %vm3943, %vm3944
    %v3946 = vsel %vm3945, %v3938, %v3942
    %v3947 = vand.u32 2147483647, %v3937
    %vm3948 = vcmp.eq.f32.partialorder %v3947, 8.507059e+37
    %v3949 = vand.u32 %v3937, 2147483648
    %v3950 = vor.u32 1.1754944e-38, %v3949
    %v3951 = vsel %vm3948, %v3950, %v3946
    %v3952 = vmul.f32 %v3934, %v3951
    %3954 = vrot.lane.b32.xlu0 %v3818, 112
    %v3955 = vpop.permute.xlu0 %3954
    %v3958 = vsel %vm3229, %v3952, 0
    %3960 = vmatpush.msra.mxu0 0.0
    %3961 = vmatpush.msra.mxu0 0.0
    %3962 = vmatpush.msra.mxu0 0.0
    %3963 = vmatpush.msra.mxu0 0.0
    %3964 = vmatpush.msra.mxu0 0.0
    %3965 = vmatpush.msra.mxu0 0.0
    %3966 = vmatpush.msra.mxu0 0.0
    %3967 = vmatpush.msra.mxu0 0.0
    %3968 = vmatpush.msra.mxu0 0.0
    %3969 = vmatpush.msra.mxu0 0.0
    %3970 = vmatpush.msra.mxu0 0.0
    %3971 = vmatpush.msra.mxu0 0.0
    %3972 = vmatpush.msra.mxu0 0.0
    %3973 = vmatpush.msra.mxu0 0.0
    %3974 = vmatpush.msra.mxu0 0.0
    %3975 = vmatpush.msra.mxu0 %v3955
    %3976 = vmatmul.f32.gmra.mxu0 %v3958
    %v3977 = vpop.f32.mrf.mxu0
    %v3978 = vadd.f32 0.0, %v3977
    %3979 = vdwg.mxu0
    %3980 = vrot.lane.b32.xlu0 %v3798, 96
    %v3981 = vpop.permute.xlu0 %3980
    %3982 = vrot.lane.b32.xlu0 %v3798, 32
    %v3983 = vpop.permute.xlu0 %3982
    %v3984 = vsel %vm995, %v3981, 0
    %v3986 = vsel %vm995, %v3983, 0
    %3988 = vmatpush.xpose.msra.mxu0 0.0
    %3989 = vmatpush.xpose.msra.mxu0 0.0
    %3990 = vmatpush.xpose.msra.mxu0 0.0
    %3991 = vmatpush.xpose.msra.mxu0 0.0
    %3992 = vmatpush.xpose.msra.mxu0 0.0
    %3993 = vmatpush.xpose.msra.mxu0 0.0
    %3994 = vmatpush.xpose.msra.mxu0 0.0
    %3995 = vmatpush.xpose.msra.mxu0 0.0
    %3996 = vmatpush.xpose.msra.mxu0 0.0
    %3997 = vmatpush.xpose.msra.mxu0 0.0
    %3998 = vmatpush.xpose.msra.mxu0 0.0
    %3999 = vmatpush.xpose.msra.mxu0 0.0
    %4000 = vmatpush.xpose.msra.mxu0 0.0
    %4001 = vmatpush.xpose.msra.mxu0 0.0
    %4002 = vmatpush.xpose.msra.mxu0 0.0
    %4003 = vmatpush.xpose.msra.mxu0 %v3986
    %4004 = vmatmul.f32.gmra.mxu0 %v3984
    %v4005 = vpop.f32.mrf.mxu0
    %v4006 = vadd.f32 0.0, %v4005
    %4007 = vdwg.mxu0
    %v4008 = vmul.f32 %v4006, 0.25
    %s4009 = scalar_lea.vmem %s111, 16
    %v4010 = vld [vmem:[%s4009] sm:$0xff]
    %v4011 = vadd.f32 %v4008, %v4010
    %v4012 = vsel %vm3229, %v4011, -inf
    %4013 = vmax.xlane.f32.xlu0 %v4012
    %v4014 = vpop.xlane.xlu0 %4013
    %v4015 = vsub.f32 %v4011, %v4014
    %v4016 = vmul.f32 %v4015, 1.442695
    %v4017 = vpow.pop %v4016
    %v4018 = vsel %vm3229, %v4017, 0.0
    %4019 = vadd.xlane.f32.xlu0 %v4018
    %v4020 = vpop.xlane.xlu0 %4019
    %v4021 = vrcp.pop %v4020
    %v4022 = vmul.f32 %v4020, %v4021
    %v4023 = vsub.f32 1.0, %v4022
    %v4024 = vmul.f32 %v4021, %v4023
    %v4025 = vadd.f32 %v4021, %v4024
    %vm4026 = vweird.f32 %v4020
    %vm4027 = vweird.f32 %v4021
    %vm4028 = vmor %vm4026, %vm4027
    %v4029 = vsel %vm4028, %v4021, %v4025
    %v4030 = vand.u32 2147483647, %v4020
    %vm4031 = vcmp.eq.f32.partialorder %v4030, 8.507059e+37
    %v4032 = vand.u32 %v4020, 2147483648
    %v4033 = vor.u32 1.1754944e-38, %v4032
    %v4034 = vsel %vm4031, %v4033, %v4029
    %v4035 = vmul.f32 %v4017, %v4034
    %4036 = vrot.lane.b32.xlu0 %v3818, 96
    %v4037 = vpop.permute.xlu0 %4036
    %v4040 = vsel %vm3229, %v4035, 0
    %4042 = vmatpush.msra.mxu0 0.0
    %4043 = vmatpush.msra.mxu0 0.0
    %4044 = vmatpush.msra.mxu0 0.0
    %4045 = vmatpush.msra.mxu0 0.0
    %4046 = vmatpush.msra.mxu0 0.0
    %4047 = vmatpush.msra.mxu0 0.0
    %4048 = vmatpush.msra.mxu0 0.0
    %4049 = vmatpush.msra.mxu0 0.0
    %4050 = vmatpush.msra.mxu0 0.0
    %4051 = vmatpush.msra.mxu0 0.0
    %4052 = vmatpush.msra.mxu0 0.0
    %4053 = vmatpush.msra.mxu0 0.0
    %4054 = vmatpush.msra.mxu0 0.0
    %4055 = vmatpush.msra.mxu0 0.0
    %4056 = vmatpush.msra.mxu0 0.0
    %4057 = vmatpush.msra.mxu0 %v4037
    %4058 = vmatmul.f32.gmra.mxu0 %v4040
    %v4059 = vpop.f32.mrf.mxu0
    %v4060 = vadd.f32 0.0, %v4059
    %4061 = vdwg.mxu0
    %4062 = vrot.lane.b32.xlu0 %v3798, 80
    %v4063 = vpop.permute.xlu0 %4062
    %4064 = vrot.lane.b32.xlu0 %v3798, 16
    %v4065 = vpop.permute.xlu0 %4064
    %v4066 = vsel %vm995, %v4063, 0
    %v4068 = vsel %vm995, %v4065, 0
    %4070 = vmatpush.xpose.msra.mxu0 0.0
    %4071 = vmatpush.xpose.msra.mxu0 0.0
    %4072 = vmatpush.xpose.msra.mxu0 0.0
    %4073 = vmatpush.xpose.msra.mxu0 0.0
    %4074 = vmatpush.xpose.msra.mxu0 0.0
    %4075 = vmatpush.xpose.msra.mxu0 0.0
    %4076 = vmatpush.xpose.msra.mxu0 0.0
    %4077 = vmatpush.xpose.msra.mxu0 0.0
    %4078 = vmatpush.xpose.msra.mxu0 0.0
    %4079 = vmatpush.xpose.msra.mxu0 0.0
    %4080 = vmatpush.xpose.msra.mxu0 0.0
    %4081 = vmatpush.xpose.msra.mxu0 0.0
    %4082 = vmatpush.xpose.msra.mxu0 0.0
    %4083 = vmatpush.xpose.msra.mxu0 0.0
    %4084 = vmatpush.xpose.msra.mxu0 0.0
    %4085 = vmatpush.xpose.msra.mxu0 %v4068
    %4086 = vmatmul.f32.gmra.mxu0 %v4066
    %v4087 = vpop.f32.mrf.mxu0
    %v4088 = vadd.f32 0.0, %v4087
    %4089 = vdwg.mxu0
    %v4090 = vmul.f32 %v4088, 0.25
    %s4091 = scalar_lea.vmem %s111, 24
    %v4092 = vld [vmem:[%s4091] sm:$0xff]
    %v4093 = vadd.f32 %v4090, %v4092
    %v4094 = vsel %vm3229, %v4093, -inf
    %4095 = vmax.xlane.f32.xlu0 %v4094
    %v4096 = vpop.xlane.xlu0 %4095
    %v4097 = vsub.f32 %v4093, %v4096
    %v4098 = vmul.f32 %v4097, 1.442695
    %v4099 = vpow.pop %v4098
    %v4100 = vsel %vm3229, %v4099, 0.0
    %4101 = vadd.xlane.f32.xlu0 %v4100
    %v4102 = vpop.xlane.xlu0 %4101
    %v4103 = vrcp.pop %v4102
    %v4104 = vmul.f32 %v4102, %v4103
    %v4105 = vsub.f32 1.0, %v4104
    %v4106 = vmul.f32 %v4103, %v4105
    %v4107 = vadd.f32 %v4103, %v4106
    %vm4108 = vweird.f32 %v4102
    %vm4109 = vweird.f32 %v4103
    %vm4110 = vmor %vm4108, %vm4109
    %v4111 = vsel %vm4110, %v4103, %v4107
    %v4112 = vand.u32 2147483647, %v4102
    %vm4113 = vcmp.eq.f32.partialorder %v4112, 8.507059e+37
    %v4114 = vand.u32 %v4102, 2147483648
    %v4115 = vor.u32 1.1754944e-38, %v4114
    %v4116 = vsel %vm4113, %v4115, %v4111
    %v4117 = vmul.f32 %v4099, %v4116
    %4118 = vrot.lane.b32.xlu0 %v3818, 80
    %v4119 = vpop.permute.xlu0 %4118
    %v4122 = vsel %vm3229, %v4117, 0
    %4124 = vmatpush.msra.mxu0 0.0
    %4125 = vmatpush.msra.mxu0 0.0
    %4126 = vmatpush.msra.mxu0 0.0
    %4127 = vmatpush.msra.mxu0 0.0
    %4128 = vmatpush.msra.mxu0 0.0
    %4129 = vmatpush.msra.mxu0 0.0
    %4130 = vmatpush.msra.mxu0 0.0
    %4131 = vmatpush.msra.mxu0 0.0
    %4132 = vmatpush.msra.mxu0 0.0
    %4133 = vmatpush.msra.mxu0 0.0
    %4134 = vmatpush.msra.mxu0 0.0
    %4135 = vmatpush.msra.mxu0 0.0
    %4136 = vmatpush.msra.mxu0 0.0
    %4137 = vmatpush.msra.mxu0 0.0
    %4138 = vmatpush.msra.mxu0 0.0
    %4139 = vmatpush.msra.mxu0 %v4119
    %4140 = vmatmul.f32.gmra.mxu0 %v4122
    %v4141 = vpop.f32.mrf.mxu0
    %v4142 = vadd.f32 0.0, %v4141
    %4143 = vdwg.mxu0
    %4145 = vrot.lane.b32.xlu0 %v3978, 16
    %v4146 = vpop.permute.xlu0 %4145
    %4149 = vrot.lane.b32.xlu0 %v4060, 32
    %v4150 = vpop.permute.xlu0 %4149
    %4153 = vrot.lane.b32.xlu0 %v4142, 48
    %v4154 = vpop.permute.xlu0 %4153
    %v4156 = vsel %vm995, %v3895, %v4146
    %v4157 = vsel %vm714, %v4156, %v4150
    %v4158 = vsel %vm672, %v4157, %v4154
    %v4159 = vld [vmem:[%s131] sm:$0xff]
    %v4160 = vld [vmem:[%s131 + $0x8] sm:$0xff]
    %v4161 = vld [vmem:[%s131 + $0x10] sm:$0xff]
    %v4162 = vld [vmem:[%s131 + $0x18] sm:$0xff]
    %v4163 = vld [vmem:[%s131 + $0x20] sm:$0xff]
    %v4164 = vld [vmem:[%s131 + $0x28] sm:$0xff]
    %v4165 = vld [vmem:[%s131 + $0x30] sm:$0xff]
    %v4166 = vld [vmem:[%s131 + $0x38] sm:$0xff]
    %v4167 = vld [vmem:[#allocation43] sm:$0x1]
    %v4169 = vperm.slane %v4167, 0
    %v4172 = vsel %vm1823, %v4158, 0
    %4174 = vmatpush.msra.mxu0 0.0
    %4175 = vmatpush.msra.mxu0 0.0
    %4176 = vmatpush.msra.mxu0 0.0
    %4177 = vmatpush.msra.mxu0 0.0
    %4178 = vmatpush.msra.mxu0 0.0
    %4179 = vmatpush.msra.mxu0 0.0
    %4180 = vmatpush.msra.mxu0 0.0
    %4181 = vmatpush.msra.mxu0 0.0
    %4182 = vmatpush.msra.mxu0 %v4166
    %4183 = vmatpush.msra.mxu0 %v4165
    %4184 = vmatpush.msra.mxu0 %v4164
    %4185 = vmatpush.msra.mxu0 %v4163
    %4186 = vmatpush.msra.mxu0 %v4162
    %4187 = vmatpush.msra.mxu0 %v4161
    %4188 = vmatpush.msra.mxu0 %v4160
    %4189 = vmatpush.msra.mxu0 %v4159
    %4190 = vmatmul.f32.gmra.mxu0 %v4172
    %v4191 = vpop.f32.mrf.mxu0
    %v4192 = vadd.f32 %v4169, %v4191
    %4193 = vdwg.mxu0
    %v4194 = vadd.f32 %v3722, %v4192
    %v4195 = vsel %vm1823, %v4194, 0.0
    %4196 = vadd.xlane.f32.xlu0 %v4195
    %v4197 = vpop.xlane.xlu0 %4196
    %v4198 = vmul.f32 %v4197, %v3104
    %v4199 = vsub.f32 %v4194, %v4198
    %v4200 = vmul.f32 %v4199, %v4199
    %v4201 = vsel %vm1823, %v4200, 0.0
    %4202 = vadd.xlane.f32.xlu0 %v4201
    %v4203 = vpop.xlane.xlu0 %4202
    %v4204 = vmul.f32 %v4203, %v3104
    %v4205 = vadd.f32 %v4204, 1e-05
    %v4206 = vrsqrt.pop %v4205
    %v4207 = vmul.f32 %v4206, %v4205
    %v4208 = vmul.f32 %v4207, %v4206
    %v4209 = vmul.f32 0.5, %v4208
    %v4210 = vsub.f32 1.5, %v4209
    %v4211 = vmul.f32 %v4206, %v4210
    %vm4212 = vweird.f32 %v4205
    %vm4213 = vweird.f32 %v4206
    %vm4214 = vmor %vm4212, %vm4213
    %v4215 = vsel %vm4214, %v4206, %v4211
    %v4216 = vmul.f32 %v4199, %v4215
    %v4217 = vld [vmem:[#allocation41] sm:$0x1]
    %v4219 = vperm.slane %v4217, 0
    %v4221 = vmul.f32 %v4216, %v4219
    %v4222 = vld [vmem:[#allocation40] sm:$0x1]
    %v4224 = vperm.slane %v4222, 0
    %v4226 = vadd.f32 %v4221, %v4224
    %v4227 = vld [vmem:[%s115] sm:$0xff]
    %v4228 = vld [vmem:[%s115 + $0x8] sm:$0xff]
    %v4229 = vld [vmem:[%s115 + $0x10] sm:$0xff]
    %v4230 = vld [vmem:[%s115 + $0x18] sm:$0xff]
    %v4231 = vld [vmem:[%s115 + $0x20] sm:$0xff]
    %v4232 = vld [vmem:[%s115 + $0x28] sm:$0xff]
    %v4233 = vld [vmem:[%s115 + $0x30] sm:$0xff]
    %v4234 = vld [vmem:[%s115 + $0x38] sm:$0xff]
    %v4235 = vld [vmem:[#allocation34] sm:$0x1]
    %v4237 = vperm.slane %v4235, 0
    %v4240 = vsel %vm1823, %v4226, 0
    %4242 = vmatpush.msra.mxu0 0.0
    %4243 = vmatpush.msra.mxu0 0.0
    %4244 = vmatpush.msra.mxu0 0.0
    %4245 = vmatpush.msra.mxu0 0.0
    %4246 = vmatpush.msra.mxu0 0.0
    %4247 = vmatpush.msra.mxu0 0.0
    %4248 = vmatpush.msra.mxu0 0.0
    %4249 = vmatpush.msra.mxu0 0.0
    %4250 = vmatpush.msra.mxu0 %v4234
    %4251 = vmatpush.msra.mxu0 %v4233
    %4252 = vmatpush.msra.mxu0 %v4232
    %4253 = vmatpush.msra.mxu0 %v4231
    %4254 = vmatpush.msra.mxu0 %v4230
    %4255 = vmatpush.msra.mxu0 %v4229
    %4256 = vmatpush.msra.mxu0 %v4228
    %4257 = vmatpush.msra.mxu0 %v4227
    %4258 = vmatmul.f32.gmra.mxu0 %v4240
    %v4259 = vpop.f32.mrf.mxu0
    %v4260 = vadd.f32 %v4237, %v4259
    %4261 = vdwg.mxu0
    %v4262 = vmul.f32 %v4260, 0.5
    %v4263 = vmul.f32 %v4260, 0.70710677
    %v4264 = vand.u32 2147483647, %v4263
    %v4265 = vmul.f32 %v4264, 0.3275911
    %v4266 = vadd.f32 %v4265, 1.0
    %v4267 = vrcp.pop %v4266
    %v4268 = vmul.f32 %v4266, %v4267
    %v4269 = vsub.f32 1.0, %v4268
    %v4270 = vmul.f32 %v4267, %v4269
    %v4271 = vadd.f32 %v4267, %v4270
    %vm4272 = vweird.f32 %v4266
    %vm4273 = vweird.f32 %v4267
    %vm4274 = vmor %vm4272, %vm4273
    %v4275 = vsel %vm4274, %v4267, %v4271
    %v4276 = vand.u32 2147483647, %v4266
    %vm4277 = vcmp.eq.f32.partialorder %v4276, 8.507059e+37
    %v4278 = vand.u32 %v4266, 2147483648
    %v4279 = vor.u32 1.1754944e-38, %v4278
    %v4280 = vsel %vm4277, %v4279, %v4275
    %v4281 = vmul.f32 1.0, %v4280
    %v4282 = vmul.f32 %v4281, 1.0614054
    %v4283 = vadd.f32 %v4282, -1.4531521
    %v4284 = vmul.f32 %v4283, %v4281
    %v4285 = vadd.f32 %v4284, 1.4214138
    %v4286 = vmul.f32 %v4285, %v4281
    %v4287 = vadd.f32 %v4286, -0.28449672
    %v4288 = vmul.f32 %v4287, %v4281
    %v4289 = vadd.f32 %v4288, 0.2548296
    %v4290 = vmul.f32 %v4289, %v4281
    %v4291 = vmul.f32 %v4264, %v4264
    %v4292 = vsub.f32 0.0, %v4291
    %v4293 = vmul.f32 %v4292, 1.442695
    %v4294 = vpow.pop %v4293
    %v4295 = vmul.f32 %v4290, %v4294
    %v4296 = vsub.f32 1.0, %v4295
    %vm4297 = vcmp.lt.f32.partialorder %v4263, 0.0
    %v4298 = vsub.f32 0.0, %v4296
    %v4299 = vsel %vm4297, %v4298, %v4296
    %v4300 = vadd.f32 %v4299, 1.0
    %v4301 = vmul.f32 %v4262, %v4300
    %v4302 = vld [vmem:[%s119] sm:$0xff]
    %v4303 = vld [vmem:[%s119 + $0x8] sm:$0xff]
    %v4304 = vld [vmem:[%s119 + $0x10] sm:$0xff]
    %v4305 = vld [vmem:[%s119 + $0x18] sm:$0xff]
    %v4306 = vld [vmem:[%s119 + $0x20] sm:$0xff]
    %v4307 = vld [vmem:[%s119 + $0x28] sm:$0xff]
    %v4308 = vld [vmem:[%s119 + $0x30] sm:$0xff]
    %v4309 = vld [vmem:[%s119 + $0x38] sm:$0xff]
    %v4310 = vld [vmem:[%s119 + $0x40] sm:$0xff]
    %v4311 = vld [vmem:[%s119 + $0x48] sm:$0xff]
    %v4312 = vld [vmem:[%s119 + $0x50] sm:$0xff]
    %v4313 = vld [vmem:[%s119 + $0x58] sm:$0xff]
    %v4314 = vld [vmem:[%s119 + $0x60] sm:$0xff]
    %v4315 = vld [vmem:[%s119 + $0x68] sm:$0xff]
    %v4316 = vld [vmem:[%s119 + $0x70] sm:$0xff]
    %v4317 = vld [vmem:[%s119 + $0x78] sm:$0xff]
    %v4318 = vld [vmem:[#allocation35] sm:$0x1]
    %v4320 = vperm.slane %v4318, 0
    %4322 = vmatpush.msra.mxu0 %v4317
    %4323 = vmatpush.msra.mxu0 %v4316
    %4324 = vmatpush.msra.mxu0 %v4315
    %4325 = vmatpush.msra.mxu0 %v4314
    %4326 = vmatpush.msra.mxu0 %v4313
    %4327 = vmatpush.msra.mxu0 %v4312
    %4328 = vmatpush.msra.mxu0 %v4311
    %4329 = vmatpush.msra.mxu0 %v4310
    %4330 = vmatpush.msra.mxu0 %v4309
    %4331 = vmatpush.msra.mxu0 %v4308
    %4332 = vmatpush.msra.mxu0 %v4307
    %4333 = vmatpush.msra.mxu0 %v4306
    %4334 = vmatpush.msra.mxu0 %v4305
    %4335 = vmatpush.msra.mxu0 %v4304
    %4336 = vmatpush.msra.mxu0 %v4303
    %4337 = vmatpush.msra.mxu0 %v4302
    %4338 = vmatmul.f32.gmra.mxu0 %v4301
    %v4339 = vpop.f32.mrf.mxu0
    %v4340 = vadd.f32 %v4320, %v4339
    %4341 = vdwg.mxu0
    %v4342 = vadd.f32 %v4194, %v4340
    %4343 = vst.msk [vmem:[#allocation47] sm:$0xff] %vm1823, %v4342
    %v4344 = vsel %vm1823, %v4342, 0.0
    %4345 = vadd.xlane.f32.xlu0 %v4344
    %v4346 = vpop.xlane.xlu0 %4345
    %v4347 = vmul.f32 %v4346, %v3104
    %v4348 = vsub.f32 %v4342, %v4347
    %v4349 = vmul.f32 %v4348, %v4348
    %v4350 = vsel %vm1823, %v4349, 0.0
    %4351 = vadd.xlane.f32.xlu0 %v4350
    %v4352 = vpop.xlane.xlu0 %4351
    %v4353 = vmul.f32 %v4352, %v3104
    %v4354 = vadd.f32 %v4353, 1e-05
    %v4355 = vrsqrt.pop %v4354
    %v4356 = vmul.f32 %v4355, %v4354
    %v4357 = vmul.f32 %v4356, %v4355
    %v4358 = vmul.f32 0.5, %v4357
    %v4359 = vsub.f32 1.5, %v4358
    %v4360 = vmul.f32 %v4355, %v4359
    %vm4361 = vweird.f32 %v4354
    %vm4362 = vweird.f32 %v4355
    %vm4363 = vmor %vm4361, %vm4362
    %v4364 = vsel %vm4363, %v4355, %v4360
    %v4365 = vmul.f32 %v4348, %v4364
    %v4366 = vld [vmem:[%s17] sm:$0x1]
    %v4368 = vperm.slane %v4366, 0
    %v4370 = vmul.f32 %v4365, %v4368
    %v4371 = vld [vmem:[%s15] sm:$0x1]
    %v4373 = vperm.slane %v4371, 0
    %v4375 = vadd.f32 %v4370, %v4373
    %4376 = vst.msk [vmem:[#allocation48] sm:$0xff] %vm1823, %v4375
    %v4377 = vld [vmem:[%s25] sm:$0x3]
    %v4379 = vsel %vm3229, %v4377, 0
    %4381 = vmatpush.msra.mxu0 0.0
    %4382 = vmatpush.msra.mxu0 0.0
    %4383 = vmatpush.msra.mxu0 0.0
    %4384 = vmatpush.msra.mxu0 0.0
    %4385 = vmatpush.msra.mxu0 0.0
    %4386 = vmatpush.msra.mxu0 0.0
    %4387 = vmatpush.msra.mxu0 0.0
    %4388 = vmatpush.msra.mxu0 0.0
    %4389 = vmatpush.msra.mxu0 0.0
    %4390 = vmatpush.msra.mxu0 0.0
    %4391 = vmatpush.msra.mxu0 0.0
    %4392 = vmatpush.msra.mxu0 0.0
    %4393 = vmatpush.msra.mxu0 0.0
    %4394 = vmatpush.msra.mxu0 0.0
    %4395 = vmatpush.msra.mxu0 0.0
    %4396 = vmatpush.msra.mxu0 %v4375
    %4397 = vmatmul.f32.gmra.mxu0 %v4379
    %v4398 = vpop.f32.mrf.mxu0
    %v4399 = vadd.f32 0.0, %v4398
    %4400 = vdwg.mxu0
    %vm4401 = vcmask 517120
    %4402 = vst.msk [vmem:[#allocation50] sm:$0x3] %vm4401, %v4399
    %v4403 = vld [vmem:[%s7] sm:$0x3]
    %v4405 = vsel %vm3229, %v4403, 0
    %4407 = vmatpush.msra.mxu0 0.0
    %4408 = vmatpush.msra.mxu0 0.0
    %4409 = vmatpush.msra.mxu0 0.0
    %4410 = vmatpush.msra.mxu0 0.0
    %4411 = vmatpush.msra.mxu0 0.0
    %4412 = vmatpush.msra.mxu0 0.0
    %4413 = vmatpush.msra.mxu0 0.0
    %4414 = vmatpush.msra.mxu0 0.0
    %4415 = vmatpush.msra.mxu0 0.0
    %4416 = vmatpush.msra.mxu0 0.0
    %4417 = vmatpush.msra.mxu0 0.0
    %4418 = vmatpush.msra.mxu0 0.0
    %4419 = vmatpush.msra.mxu0 0.0
    %4420 = vmatpush.msra.mxu0 0.0
    %4421 = vmatpush.msra.mxu0 0.0
    %4422 = vmatpush.msra.mxu0 %v4342
    %4423 = vmatmul.f32.gmra.mxu0 %v4405
    %v4424 = vpop.f32.mrf.mxu0
    %v4425 = vadd.f32 0.0, %v4424
    %4426 = vdwg.mxu0
    %s4427 = scalar_lea.vmem %s7, 2
    %v4428 = vld [vmem:[%s4427] sm:$0x3]
    %v4430 = vsel %vm3229, %v4428, 0
    %4432 = vmatpush.msra.mxu0 0.0
    %4433 = vmatpush.msra.mxu0 0.0
    %4434 = vmatpush.msra.mxu0 0.0
    %4435 = vmatpush.msra.mxu0 0.0
    %4436 = vmatpush.msra.mxu0 0.0
    %4437 = vmatpush.msra.mxu0 0.0
    %4438 = vmatpush.msra.mxu0 0.0
    %4439 = vmatpush.msra.mxu0 0.0
    %4440 = vmatpush.msra.mxu0 0.0
    %4441 = vmatpush.msra.mxu0 0.0
    %4442 = vmatpush.msra.mxu0 0.0
    %4443 = vmatpush.msra.mxu0 0.0
    %4444 = vmatpush.msra.mxu0 0.0
    %4445 = vmatpush.msra.mxu0 0.0
    %4446 = vmatpush.msra.mxu0 0.0
    %4447 = vmatpush.msra.mxu0 %v4342
    %4448 = vmatmul.f32.gmra.mxu0 %v4430
    %v4449 = vpop.f32.mrf.mxu0
    %v4450 = vadd.f32 0.0, %v4449
    %4451 = vdwg.mxu0
    %s4452 = scalar_lea.vmem %s7, 4
    %v4453 = vld [vmem:[%s4452] sm:$0x3]
    %v4455 = vsel %vm3229, %v4453, 0
    %4457 = vmatpush.msra.mxu0 0.0
    %4458 = vmatpush.msra.mxu0 0.0
    %4459 = vmatpush.msra.mxu0 0.0
    %4460 = vmatpush.msra.mxu0 0.0
    %4461 = vmatpush.msra.mxu0 0.0
    %4462 = vmatpush.msra.mxu0 0.0
    %4463 = vmatpush.msra.mxu0 0.0
    %4464 = vmatpush.msra.mxu0 0.0
    %4465 = vmatpush.msra.mxu0 0.0
    %4466 = vmatpush.msra.mxu0 0.0
    %4467 = vmatpush.msra.mxu0 0.0
    %4468 = vmatpush.msra.mxu0 0.0
    %4469 = vmatpush.msra.mxu0 0.0
    %4470 = vmatpush.msra.mxu0 0.0
    %4471 = vmatpush.msra.mxu0 0.0
    %4472 = vmatpush.msra.mxu0 %v4342
    %4473 = vmatmul.f32.gmra.mxu0 %v4455
    %v4474 = vpop.f32.mrf.mxu0
    %v4475 = vadd.f32 0.0, %v4474
    %4476 = vdwg.mxu0
    %s4477 = scalar_lea.vmem %s7, 6
    %v4478 = vld [vmem:[%s4477] sm:$0x3]
    %v4480 = vsel %vm3229, %v4478, 0
    %4482 = vmatpush.msra.mxu0 0.0
    %4483 = vmatpush.msra.mxu0 0.0
    %4484 = vmatpush.msra.mxu0 0.0
    %4485 = vmatpush.msra.mxu0 0.0
    %4486 = vmatpush.msra.mxu0 0.0
    %4487 = vmatpush.msra.mxu0 0.0
    %4488 = vmatpush.msra.mxu0 0.0
    %4489 = vmatpush.msra.mxu0 0.0
    %4490 = vmatpush.msra.mxu0 0.0
    %4491 = vmatpush.msra.mxu0 0.0
    %4492 = vmatpush.msra.mxu0 0.0
    %4493 = vmatpush.msra.mxu0 0.0
    %4494 = vmatpush.msra.mxu0 0.0
    %4495 = vmatpush.msra.mxu0 0.0
    %4496 = vmatpush.msra.mxu0 0.0
    %4497 = vmatpush.msra.mxu0 %v4342
    %4498 = vmatmul.f32.gmra.mxu0 %v4480
    %v4499 = vpop.f32.mrf.mxu0
    %v4500 = vadd.f32 0.0, %v4499
    %4501 = vdwg.mxu0
    %4503 = vrot.lane.b32.xlu0 %v4450, 64
    %v4504 = vpop.permute.xlu0 %4503
    %4507 = vrot.lane.b32.xlu0 %v4500, 64
    %v4508 = vpop.permute.xlu0 %4507
    %v4510 = vsel %vm1823, %v4425, %v4504
    %v4511 = vsel %vm1823, %v4475, %v4508
    %vm4512 = vcmask 1041408
    %v4513 = vsel %vm4512, %v4510, 0.0
    %v4514 = vsel %vm4512, %v4511, 0.0
    %v4515 = vadd.f32 %v4513, %v4514
    %4516 = vadd.xlane.f32.xlu0 %v4515
    %v4517 = vpop.xlane.xlu0 %4516
    %v4518 = vrcp.pop 256.0
    %v4519 = vmul.f32 256.0, %v4518
    %v4520 = vsub.f32 1.0, %v4519
    %v4521 = vmul.f32 %v4518, %v4520
    %v4522 = vadd.f32 %v4518, %v4521
    %vm4523 = vweird.f32 %v4518
    %v4524 = vsel %vm4523, %v4518, %v4522
    %v4525 = vmul.f32 %v4517, %v4524
    %v4526 = vsub.f32 %v4510, %v4525
    %v4527 = vsub.f32 %v4511, %v4525
    %v4528 = vmul.f32 %v4526, %v4526
    %v4529 = vmul.f32 %v4527, %v4527
    %v4530 = vsel %vm4512, %v4528, 0.0
    %v4531 = vsel %vm4512, %v4529, 0.0
    %v4532 = vadd.f32 %v4530, %v4531
    %4533 = vadd.xlane.f32.xlu0 %v4532
    %v4534 = vpop.xlane.xlu0 %4533
    %v4535 = vmul.f32 %v4534, %v4524
    %v4536 = vadd.f32 %v4535, 1e-05
    %v4537 = vrsqrt.pop %v4536
    %v4538 = vmul.f32 %v4537, %v4536
    %v4539 = vmul.f32 %v4538, %v4537
    %v4540 = vmul.f32 0.5, %v4539
    %v4541 = vsub.f32 1.5, %v4540
    %v4542 = vmul.f32 %v4537, %v4541
    %vm4543 = vweird.f32 %v4536
    %vm4544 = vweird.f32 %v4537
    %vm4545 = vmor %vm4543, %vm4544
    %v4546 = vsel %vm4545, %v4537, %v4542
    %v4547 = vmul.f32 %v4526, %v4546
    %v4548 = vmul.f32 %v4527, %v4546
    %v4549 = vld [vmem:[%s5] sm:$0x3]
    %v4551 = vperm.slane %v4549, 0
    %v4552 = vperm.slane %v4549, 1
    %v4555 = vmul.f32 %v4547, %v4551
    %v4556 = vmul.f32 %v4548, %v4552
    %v4557 = vld [vmem:[%s3] sm:$0x3]
    %v4559 = vperm.slane %v4557, 0
    %v4560 = vperm.slane %v4557, 1
    %v4563 = vadd.f32 %v4555, %v4559
    %v4564 = vadd.f32 %v4556, %v4560
    %v4565 = vld [vmem:[%s9] sm:$0xff]
    %v4566 = vld [vmem:[%s9 + $0x8] sm:$0xff]
    %v4567 = vld [vmem:[%s9 + $0x10] sm:$0xff]
    %v4568 = vld [vmem:[%s9 + $0x18] sm:$0xff]
    %v4569 = vld [vmem:[%s9 + $0x20] sm:$0xff]
    %v4570 = vld [vmem:[%s9 + $0x28] sm:$0xff]
    %v4571 = vld [vmem:[%s9 + $0x30] sm:$0xff]
    %v4572 = vld [vmem:[%s9 + $0x38] sm:$0xff]
    %v4573 = vld [vmem:[%s9 + $0x40] sm:$0xff]
    %v4574 = vld [vmem:[%s9 + $0x48] sm:$0xff]
    %v4575 = vld [vmem:[%s9 + $0x50] sm:$0xff]
    %v4576 = vld [vmem:[%s9 + $0x58] sm:$0xff]
    %v4577 = vld [vmem:[%s9 + $0x60] sm:$0xff]
    %v4578 = vld [vmem:[%s9 + $0x68] sm:$0xff]
    %v4579 = vld [vmem:[%s9 + $0x70] sm:$0xff]
    %v4580 = vld [vmem:[%s9 + $0x78] sm:$0xff]
    %v4581 = vld [vmem:[%s9 + $0x80] sm:$0xff]
    %v4582 = vld [vmem:[%s9 + $0x88] sm:$0xff]
    %v4583 = vld [vmem:[%s9 + $0x90] sm:$0xff]
    %v4584 = vld [vmem:[%s9 + $0x98] sm:$0xff]
    %v4585 = vld [vmem:[%s9 + $0xa0] sm:$0xff]
    %v4586 = vld [vmem:[%s9 + $0xa8] sm:$0xff]
    %v4587 = vld [vmem:[%s9 + $0xb0] sm:$0xff]
    %v4588 = vld [vmem:[%s9 + $0xb8] sm:$0xff]
    %v4589 = vld [vmem:[%s9 + $0xc0] sm:$0xff]
    %v4590 = vld [vmem:[%s9 + $0xc8] sm:$0xff]
    %v4591 = vld [vmem:[%s9 + $0xd0] sm:$0xff]
    %v4592 = vld [vmem:[%s9 + $0xd8] sm:$0xff]
    %v4593 = vld [vmem:[%s9 + $0xe0] sm:$0xff]
    %v4594 = vld [vmem:[%s9 + $0xe8] sm:$0xff]
    %v4595 = vld [vmem:[%s9 + $0xf0] sm:$0xff]
    %v4596 = vld [vmem:[%s9 + $0xf8] sm:$0xff]
    %4597 = vmatpush.msra.mxu0 %v4580
    %4598 = vmatpush.msra.mxu0 %v4579
    %4599 = vmatpush.msra.mxu0 %v4578
    %4600 = vmatpush.msra.mxu0 %v4577
    %4601 = vmatpush.msra.mxu0 %v4576
    %4602 = vmatpush.msra.mxu0 %v4575
    %4603 = vmatpush.msra.mxu0 %v4574
    %4604 = vmatpush.msra.mxu0 %v4573
    %4605 = vmatpush.msra.mxu0 %v4572
    %4606 = vmatpush.msra.mxu0 %v4571
    %4607 = vmatpush.msra.mxu0 %v4570
    %4608 = vmatpush.msra.mxu0 %v4569
    %4609 = vmatpush.msra.mxu0 %v4568
    %4610 = vmatpush.msra.mxu0 %v4567
    %4611 = vmatpush.msra.mxu0 %v4566
    %4612 = vmatpush.msra.mxu0 %v4565
    %4613 = vmatmul.f32.gmra.mxu0 %v4563
    %v4614 = vpop.f32.mrf.mxu0
    %v4615 = vadd.f32 0.0, %v4614
    %4616 = vdwg.mxu0
    %4617 = vmatpush.msra.mxu0 %v4596
    %4618 = vmatpush.msra.mxu0 %v4595
    %4619 = vmatpush.msra.mxu0 %v4594
    %4620 = vmatpush.msra.mxu0 %v4593
    %4621 = vmatpush.msra.mxu0 %v4592
    %4622 = vmatpush.msra.mxu0 %v4591
    %4623 = vmatpush.msra.mxu0 %v4590
    %4624 = vmatpush.msra.mxu0 %v4589
    %4625 = vmatpush.msra.mxu0 %v4588
    %4626 = vmatpush.msra.mxu0 %v4587
    %4627 = vmatpush.msra.mxu0 %v4586
    %4628 = vmatpush.msra.mxu0 %v4585
    %4629 = vmatpush.msra.mxu0 %v4584
    %4630 = vmatpush.msra.mxu0 %v4583
    %4631 = vmatpush.msra.mxu0 %v4582
    %4632 = vmatpush.msra.mxu0 %v4581
    %4633 = vmatmul.f32.gmra.mxu0 %v4564
    %v4634 = vpop.f32.mrf.mxu0
    %v4635 = vadd.f32 %v4615, %v4634
    %4636 = vdwg.mxu0
    %4637 = vst [vmem:[#allocation51] sm:$0x3] %v4635
    // Predicated region
    $region382: #{swin_forward.1} parent=1 // pred_check
      _
    $region383: #{swin_forward.1} parent=1 // pred_check_branch
      %4639 = sbr.rel (0) target = $region385
    $region384: #{swin_forward.1} parent=1 // pred_region
      %4641 = vsyncadd [#allocation4], 0
      %s4642 = sshll.u32 [#allocation44], 4
      %s4643 = int_to_ptr.vmem [resolvable:$true] %s4642
      %s4644 = sshll.u32 %s137, 4
      %s4645 = int_to_ptr.hbm [resolvable:$true] %s4644
      %4650 = dma.vmem_to_hbm [thread:$0]  %s4643, 512, %s4645, [#allocation4], 128, 128, 8
    $region385: #{swin_forward.1} parent=1 // pred_fallthru
      _
    // Predicated region
    $region386: #{swin_forward.1} parent=1 // pred_check
      _
    $region387: #{swin_forward.1} parent=1 // pred_check_branch
      %4652 = sbr.rel (0) target = $region389
    $region388: #{swin_forward.1} parent=1 // pred_region
      %4654 = vsyncadd [#allocation46], 0
      %s4656 = sshll.u32 [#allocation45], 4
      %s4657 = int_to_ptr.vmem [resolvable:$true] %s4656
      %s4658 = sshll.u32 %s139, 4
      %s4659 = int_to_ptr.hbm [resolvable:$true] %s4658
      %4661 = dma.vmem_to_hbm [thread:$0]  %s4657, 128, %s4659, [#allocation46]
    $region389: #{swin_forward.1} parent=1 // pred_fallthru
      _
    // Predicated region
    $region390: #{swin_forward.1} parent=1 // pred_check
      _
    $region391: #{swin_forward.1} parent=1 // pred_check_branch
      %4663 = sbr.rel (0) target = $region393
    $region392: #{swin_forward.1} parent=1 // pred_region
      %4665 = vsyncadd [#allocation46], 0
      %s4667 = sshll.u32 [#allocation47], 4
      %s4668 = int_to_ptr.vmem [resolvable:$true] %s4667
      %s4669 = sshll.u32 %s141, 4
      %s4670 = int_to_ptr.hbm [resolvable:$true] %s4669
      %4672 = dma.vmem_to_hbm [thread:$0]  %s4668, 128, %s4670, [#allocation46]
    $region393: #{swin_forward.1} parent=1 // pred_fallthru
      _
    // Predicated region
    $region394: #{swin_forward.1} parent=1 // pred_check
      _
    $region395: #{swin_forward.1} parent=1 // pred_check_branch
      %4674 = sbr.rel (0) target = $region397
    $region396: #{swin_forward.1} parent=1 // pred_region
      %4676 = vsyncadd [#allocation49], 0
      %s4678 = sshll.u32 [#allocation48], 4
      %s4679 = int_to_ptr.vmem [resolvable:$true] %s4678
      %s4680 = sshll.u32 %s143, 4
      %s4681 = int_to_ptr.hbm [resolvable:$true] %s4680
      %4683 = dma.vmem_to_hbm [thread:$0]  %s4679, 128, %s4681, [#allocation49]
    $region397: #{swin_forward.1} parent=1 // pred_fallthru
      _
    // Predicated region
    $region398: #{swin_forward.1} parent=1 // pred_check
      _
    $region399: #{swin_forward.1} parent=1 // pred_check_branch
      %4685 = sbr.rel (0) target = $region401
    $region400: #{swin_forward.1} parent=1 // pred_region
      %4687 = vsyncadd [#allocation49], 0
      %s4689 = sshll.u32 [#allocation50], 4
      %s4690 = int_to_ptr.vmem [resolvable:$true] %s4689
      %s4691 = sshll.u32 %s145, 4
      %s4692 = int_to_ptr.hbm [resolvable:$true] %s4691
      %4694 = dma.vmem_to_hbm [thread:$0]  %s4690, 32, %s4692, [#allocation49]
    $region401: #{swin_forward.1} parent=1 // pred_fallthru
      _
    // Predicated region
    $region402: #{swin_forward.1} parent=1 // pred_check
      _
    $region403: #{swin_forward.1} parent=1 // pred_check_branch
      %4696 = sbr.rel (0) target = $region405
    $region404: #{swin_forward.1} parent=1 // pred_region
      %4698 = vsyncadd [#allocation52], 0
      %s4700 = sshll.u32 [#allocation51], 4
      %s4701 = int_to_ptr.vmem [resolvable:$true] %s4700
      %s4702 = sshll.u32 %s147, 4
      %s4703 = int_to_ptr.hbm [resolvable:$true] %s4702
      %4705 = dma.vmem_to_hbm [thread:$0]  %s4701, 32, %s4703, [#allocation52]
    $region405: #{swin_forward.1} parent=1 // pred_fallthru
      _
    // Predicated region
    $region406: #{swin_forward.1} parent=1 // pred_check
      _
    $region407: #{swin_forward.1} parent=1 // pred_check_branch
      %4707 = sbr.rel (0) target = $region409
    $region408: #{swin_forward.1} parent=1 // pred_region
      %4709 = dma.done [#allocation4], 512
    $region409: #{swin_forward.1} parent=1 // pred_fallthru
      _
    // Predicated region
    $region410: #{swin_forward.1} parent=1 // pred_check
      _
    $region411: #{swin_forward.1} parent=1 // pred_check_branch
      %4711 = sbr.rel (0) target = $region413
    $region412: #{swin_forward.1} parent=1 // pred_region
      %4713 = dma.done [#allocation46], 128
    $region413: #{swin_forward.1} parent=1 // pred_fallthru
      _
    // Predicated region
    $region414: #{swin_forward.1} parent=1 // pred_check
      _
    $region415: #{swin_forward.1} parent=1 // pred_check_branch
      %4715 = sbr.rel (0) target = $region417
    $region416: #{swin_forward.1} parent=1 // pred_region
      %4717 = dma.done [#allocation46], 128
    $region417: #{swin_forward.1} parent=1 // pred_fallthru
      _
    // Predicated region
    $region418: #{swin_forward.1} parent=1 // pred_check
      _
    $region419: #{swin_forward.1} parent=1 // pred_check_branch
      %4719 = sbr.rel (0) target = $region421
    $region420: #{swin_forward.1} parent=1 // pred_region
      %4721 = dma.done [#allocation49], 128
    $region421: #{swin_forward.1} parent=1 // pred_fallthru
      _
    // Predicated region
    $region422: #{swin_forward.1} parent=1 // pred_check
      _
    $region423: #{swin_forward.1} parent=1 // pred_check_branch
      %4723 = sbr.rel (0) target = $region425
    $region424: #{swin_forward.1} parent=1 // pred_region
      %4725 = dma.done [#allocation49], 32
    $region425: #{swin_forward.1} parent=1 // pred_fallthru
      _
    // Predicated region
    $region426: #{swin_forward.1} parent=1 // pred_check
      _
    $region427: #{swin_forward.1} parent=1 // pred_check_branch
      %4727 = sbr.rel (0) target = $region429
    $region428: #{swin_forward.1} parent=1 // pred_region
      %4729 = dma.done [#allocation52], 32
    $region429: #{swin_forward.1} parent=1 // pred_fallthru
      _
    %4730 = vsyncpa [#allocation3], 1
    %4731 = vsyncpa [#allocation6], 1
    %4732 = vsyncpa [#allocation9], 1
    %4733 = vsyncpa [#allocation12], 1
    %4734 = vsyncpa [#allocation15], 1
    %4735 = vsyncpa [#allocation18], 1
    %4736 = vsyncpa [#allocation21], 1
    %4737 = vsyncpa [#allocation24], 1
    %4738 = vsyncpa [#allocation27], 1
    %4739 = vsyncpa [#allocation30], 1
    %4740 = vsyncpa [#allocation33], 1
    %4741 = vsyncpa [#allocation36], 1
    %4742 = vsyncpa [#allocation39], 1
    %4743 = vsyncpa [#allocation42], 1
    %4744 = vsyncpa [#allocation4], 1
    %4745 = vsyncpa [#allocation46], 1
    %4746 = vsyncpa [#allocation49], 1
    %4747 = vsyncpa [#allocation52], 1

</llo_original>
